<compile_context>
chip_gen: v5e
topology: v5e:2x2
jax: 0.10.0
libtpu: 0.0.40
codegen_flags: <defaults>
</compile_context>

<pallas_src>
import jax
import jax.numpy as jnp
from jax.experimental import pallas as pl
from jax.experimental.pallas import tpu as pltpu

LINER_NUM1 = 1536   # efficientnet_b3 feature channels
LINER_NUM2 = 480
NUM_CLASSES = 5
PATCH = 32          # backbone stub downsample factor (matches effnet_b3's /32)


def _sigmoid(x):
    return 1.0 / (1.0 + jnp.exp(-x))


# --------------------------------------------------------------------------
# Kernel 1: backbone stub = stride-32 patchify conv as an im2col matmul + SiLU.
# p_ref: (N, K) bf16; w_ref: (K, tn) bf16; b_ref: (1, tn) f32; o_ref: (N, tn) f32
# --------------------------------------------------------------------------
def stem_matmul_kernel(p_ref, w_ref, b_ref, o_ref):
    acc = jnp.dot(p_ref[...], w_ref[...], preferred_element_type=jnp.float32)
    acc = acc + b_ref[...]
    o_ref[...] = acc * _sigmoid(acc)                  # SiLU


def effnet_stub(x, wmat_bf16, b_row, *, patch=PATCH, tn=256):
    # TODO(synk): the full timm efficientnet_b3 MBConv stack (children()[:-2]) is not
    # reproduced; it is stubbed with one stride-32 patchify conv + SiLU that honors the
    # (B,3,H,W) -> (B*Hp*Wp, 1536) shape contract.  Features are kept channel-last
    # (lane-dense C1) so the head can pool without a transpose round trip through HBM.
    B, Cin, H, W = x.shape
    Hp, Wp = H // patch, W // patch
    K, Cout = wmat_bf16.shape
    # im2col (glue): (B, Cin, H, W) -> (B*Hp*Wp, Cin*patch*patch)
    patches = x.reshape(B, Cin, Hp, patch, Wp, patch)
    patches = patches.transpose(0, 2, 4, 1, 3, 5).reshape(B * Hp * Wp, K)
    patches = patches.astype(jnp.bfloat16)            # bf16 MXU operands, f32 accumulate
    N = patches.shape[0]
    out = pl.pallas_call(
        stem_matmul_kernel,
        out_shape=jax.ShapeDtypeStruct((N, Cout), jnp.float32),
        grid=(Cout // tn,),                           # 1536/256 = 6 tiles (even v7x split)
        in_specs=[
            pl.BlockSpec((N, K), lambda j: (0, 0)),
            pl.BlockSpec((K, tn), lambda j: (0, j)),
            pl.BlockSpec((1, tn), lambda j: (0, j)),
        ],
        out_specs=pl.BlockSpec((N, tn), lambda j: (0, j)),
        compiler_params=pltpu.CompilerParams(
            dimension_semantics=("parallel",),
            vmem_limit_bytes=32 << 20,
        ),
    )(patches, wmat_bf16, b_row)
    return out.reshape(B, Hp * Wp, Cout)              # (B, HWf, C1)  — contiguous, no copy


# --------------------------------------------------------------------------
# Kernel 2: GlobalAvgPool2d + the three classifier heads (fused).
# f_ref: (B, HWf, C1) f32; w1_ref: (3, C1, M); b1_ref: (3, 1, M);
# w2_ref: (3, M, ncls); b2_ref: (3, 1, ncls); o{1,2,3}_ref: (B, ncls)
# --------------------------------------------------------------------------
def head_kernel(f_ref, w1_ref, b1_ref, w2_ref, b2_ref, o1_ref, o2_ref, o3_ref):
    # Global average pool over the spatial rows: sublane reduce, C1 stays lane-dense.
    pooled = jnp.mean(f_ref[...], axis=1)             # (B, C1)
    outs = (o1_ref, o2_ref, o3_ref)
    for i in range(3):                                # static unroll over the 3 classifiers
        h = jnp.dot(pooled, w1_ref[i], preferred_element_type=jnp.float32) + b1_ref[i]
        h = jnp.maximum(h, 0.0)                       # ReLU; Dropout(0.5) == identity at inference
        outs[i][...] = (jnp.dot(h, w2_ref[i], preferred_element_type=jnp.float32)
                        + b2_ref[i])


def head(feat, w1s, b1s, w2s, b2s):
    B, HWf, C1 = feat.shape
    M = w1s.shape[2]
    ncls = w2s.shape[2]
    out_shape = tuple(jax.ShapeDtypeStruct((B, ncls), jnp.float32) for _ in range(3))
    out_specs = tuple(pl.BlockSpec((B, ncls), lambda i: (0, 0)) for _ in range(3))
    return pl.pallas_call(
        head_kernel,
        out_shape=out_shape,
        grid=(1,),
        in_specs=[
            pl.BlockSpec((B, HWf, C1), lambda i: (0, 0, 0)),
            pl.BlockSpec((3, C1, M), lambda i: (0, 0, 0)),
            pl.BlockSpec((3, 1, M), lambda i: (0, 0, 0)),
            pl.BlockSpec((3, M, ncls), lambda i: (0, 0, 0)),
            pl.BlockSpec((3, 1, ncls), lambda i: (0, 0, 0)),
        ],
        out_specs=out_specs,
        compiler_params=pltpu.CompilerParams(vmem_limit_bytes=32 << 20),
    )(feat, w1s, b1s, w2s, b2s)


# --------------------------------------------------------------------------
# Parameters (deterministic synthetic init; shapes follow the nn.Module __init__).
# --------------------------------------------------------------------------
def init_params(key):
    ks = jax.random.split(key, 10)
    f32 = jnp.float32
    p = {
        # backbone stub conv: (Cout, Cin, kh, kw) = (1536, 3, 32, 32)
        "stem_w": 0.02 * jax.random.normal(ks[0], (LINER_NUM1, 3, PATCH, PATCH), f32),
        "stem_b": jnp.zeros((LINER_NUM1,), f32),
    }
    # classifier{1,2,3}: Linear(1536,480) + ReLU + Dropout + Linear(480,5)
    for idx in range(3):
        p[f"cls{idx + 1}_w1"] = 0.02 * jax.random.normal(ks[1 + 3 * idx], (LINER_NUM2, LINER_NUM1), f32)
        p[f"cls{idx + 1}_b1"] = jnp.zeros((LINER_NUM2,), f32)
        p[f"cls{idx + 1}_w2"] = 0.02 * jax.random.normal(ks[2 + 3 * idx], (NUM_CLASSES, LINER_NUM2), f32)
        p[f"cls{idx + 1}_b2"] = jnp.zeros((NUM_CLASSES,), f32)
    return p


def pack_params(p):
    """One-time layout prep: transpose Linear weights to (in, out), stack the three
    classifiers, and store the stem im2col matrix in bf16 (halves its HBM DMA)."""
    K = 3 * PATCH * PATCH
    return {
        "stem_wmat": p["stem_w"].reshape(LINER_NUM1, K).T.astype(jnp.bfloat16),  # (K, 1536)
        "stem_b": p["stem_b"].reshape(1, LINER_NUM1),
        "cls_w1": jnp.stack([p[f"cls{i}_w1"].T for i in (1, 2, 3)]),             # (3, 1536, 480)
        "cls_b1": jnp.stack([p[f"cls{i}_b1"].reshape(1, -1) for i in (1, 2, 3)]),  # (3, 1, 480)
        "cls_w2": jnp.stack([p[f"cls{i}_w2"].T for i in (1, 2, 3)]),             # (3, 480, 5)
        "cls_b2": jnp.stack([p[f"cls{i}_b2"].reshape(1, -1) for i in (1, 2, 3)]),  # (3, 1, 5)
    }


@jax.jit
def forward(params, im):
    feat = effnet_stub(im, params["stem_wmat"], params["stem_b"])   # effnet backbone (stub)
    pred1, pred2, pred3 = head(feat, params["cls_w1"], params["cls_b1"],
                               params["cls_w2"], params["cls_b2"])  # avg_pool + 3 classifiers
    return pred1, pred2, pred3


if __name__ == "__main__":
    key = jax.random.PRNGKey(0)
    k_im, k_par = jax.random.split(key)
    # Small input consistent with the module: NCHW, 3 channels, spatial divisible by 32.
    im = jax.random.normal(k_im, (2, 3, 64, 64), jnp.float32)
    params = pack_params(init_params(k_par))
    preds = forward(params, im)
    preds = jax.block_until_ready(preds)
    assert len(preds) == 3
    assert all(p.shape == (2, NUM_CLASSES) and p.dtype == jnp.float32 for p in preds)
    print("KERNEL_OK")
</pallas_src>

<mosaic_0001>
module attributes {stable_mosaic.version = 11 : i64} {
  func.func @stem_matmul_kernel(%arg0: i32, %arg1: memref<8x3072xbf16, #tpu.memory_space<vmem>>, %arg2: memref<3072x256xbf16, #tpu.memory_space<vmem>>, %arg3: memref<1x256xf32, #tpu.memory_space<vmem>>, %arg4: memref<8x256xf32, #tpu.memory_space<vmem>>) attributes {dimension_semantics = [#tpu.dimension_semantics<parallel>], iteration_bounds = array<i64: 6>, scalar_prefetch = 0 : i64, scratch_operands = 0 : i64, tpu.core_type = #tpu.core_type<tc>, window_params = [{pipeline_mode = #tpu.pipeline_mode<synchronous>, transform_indices = @transform_0, window_bounds = array<i64: 8, 3072>}, {transform_indices = @transform_1, window_bounds = array<i64: 3072, 256>}, {transform_indices = @transform_2, window_bounds = array<i64: 1, 256>}, {transform_indices = @transform_3, window_bounds = array<i64: 8, 256>}]} {
    %c0 = arith.constant 0 : index
    %c0_0 = arith.constant 0 : index
    %0 = vector.load %arg1[%c0, %c0_0] : memref<8x3072xbf16, #tpu.memory_space<vmem>>, vector<8x3072xbf16>
    %c0_1 = arith.constant 0 : index
    %c0_2 = arith.constant 0 : index
    %1 = vector.load %arg2[%c0_1, %c0_2] : memref<3072x256xbf16, #tpu.memory_space<vmem>>, vector<3072x256xbf16>
    %cst = arith.constant dense<0.000000e+00> : vector<8x256xf32>
    %2 = tpu.matmul %0, %1, %cst {dimension_numbers = #tpu.dot_dimension_numbers<[1], [0], [0], [1], [0, 0, 1, 1], [], []>} : vector<8x3072xbf16>, vector<3072x256xbf16>, vector<8x256xf32> -> vector<8x256xf32>
    %c0_3 = arith.constant 0 : index
    %c0_4 = arith.constant 0 : index
    %3 = vector.load %arg3[%c0_3, %c0_4] : memref<1x256xf32, #tpu.memory_space<vmem>>, vector<1x256xf32>
    %4 = vector.broadcast %3 : vector<1x256xf32> to vector<8x256xf32>
    %5 = arith.addf %2, %4 : vector<8x256xf32>
    %cst_5 = arith.constant 0.000000e+00 : f32
    %6 = vector.broadcast %cst_5 : f32 to vector<8x256xf32>
    %7 = arith.subf %6, %5 : vector<8x256xf32>
    %8 = math.exp %7 : vector<8x256xf32>
    %cst_6 = arith.constant 1.000000e+00 : f32
    %9 = vector.broadcast %cst_6 : f32 to vector<8x256xf32>
    %10 = arith.addf %9, %8 : vector<8x256xf32>
    %cst_7 = arith.constant 1.000000e+00 : f32
    %11 = vector.broadcast %cst_7 : f32 to vector<8x256xf32>
    %12 = arith.divf %11, %10 : vector<8x256xf32>
    %13 = arith.mulf %5, %12 : vector<8x256xf32>
    %c0_8 = arith.constant 0 : index
    %c0_9 = arith.constant 0 : index
    %14 = vector.load %arg4[%c0_8, %c0_9] : memref<8x256xf32, #tpu.memory_space<vmem>>, vector<8x256xf32>
    tpu.vector_store %arg4[%c0_8, %c0_9], %13 {strides = array<i32>} : memref<8x256xf32, #tpu.memory_space<vmem>>, vector<8x256xf32>,
    return
  }
  func.func @transform_0(%arg0: i32) -> (i32, i32) {
    %c0_i32 = arith.constant 0 : i32
    %c0_i32_0 = arith.constant 0 : i32
    %c0_i32_1 = arith.constant 0 : i32
    return %c0_i32, %c0_i32_0 : i32, i32
  }
  func.func @transform_1(%arg0: i32) -> (i32, i32) {
    %c0_i32 = arith.constant 0 : i32
    %c0_i32_0 = arith.constant 0 : i32
    return %c0_i32, %arg0 : i32, i32
  }
  func.func @transform_2(%arg0: i32) -> (i32, i32) {
    %c0_i32 = arith.constant 0 : i32
    %c0_i32_0 = arith.constant 0 : i32
    return %c0_i32, %arg0 : i32, i32
  }
  func.func @transform_3(%arg0: i32) -> (i32, i32) {
    %c0_i32 = arith.constant 0 : i32
    %c0_i32_0 = arith.constant 0 : i32
    return %c0_i32, %arg0 : i32, i32
  }
}

module attributes {stable_mosaic.version = 11 : i64} {
  func.func @head_kernel(%arg0: i32, %arg1: memref<2x4x1536xf32, #tpu.memory_space<vmem>>, %arg2: memref<3x1536x480xf32, #tpu.memory_space<vmem>>, %arg3: memref<3x1x480xf32, #tpu.memory_space<vmem>>, %arg4: memref<3x480x5xf32, #tpu.memory_space<vmem>>, %arg5: memref<3x1x5xf32, #tpu.memory_space<vmem>>, %arg6: memref<2x5xf32, #tpu.memory_space<vmem>>, %arg7: memref<2x5xf32, #tpu.memory_space<vmem>>, %arg8: memref<2x5xf32, #tpu.memory_space<vmem>>) attributes {dimension_semantics = [#tpu.dimension_semantics<arbitrary>], iteration_bounds = array<i64: 1>, scalar_prefetch = 0 : i64, scratch_operands = 0 : i64, tpu.core_type = #tpu.core_type<tc>, window_params = [{pipeline_mode = #tpu.pipeline_mode<synchronous>, transform_indices = @transform_0, window_bounds = array<i64: 2, 4, 1536>}, {pipeline_mode = #tpu.pipeline_mode<synchronous>, transform_indices = @transform_1, window_bounds = array<i64: 3, 1536, 480>}, {pipeline_mode = #tpu.pipeline_mode<synchronous>, transform_indices = @transform_2, window_bounds = array<i64: 3, 1, 480>}, {pipeline_mode = #tpu.pipeline_mode<synchronous>, transform_indices = @transform_3, window_bounds = array<i64: 3, 480, 5>}, {pipeline_mode = #tpu.pipeline_mode<synchronous>, transform_indices = @transform_4, window_bounds = array<i64: 3, 1, 5>}, {pipeline_mode = #tpu.pipeline_mode<synchronous>, transform_indices = @transform_5, window_bounds = array<i64: 2, 5>}, {pipeline_mode = #tpu.pipeline_mode<synchronous>, transform_indices = @transform_6, window_bounds = array<i64: 2, 5>}, {pipeline_mode = #tpu.pipeline_mode<synchronous>, transform_indices = @transform_7, window_bounds = array<i64: 2, 5>}]} {
    %c0 = arith.constant 0 : index
    %c0_0 = arith.constant 0 : index
    %c0_1 = arith.constant 0 : index
    %0 = vector.load %arg1[%c0, %c0_0, %c0_1] : memref<2x4x1536xf32, #tpu.memory_space<vmem>>, vector<2x4x1536xf32>
    %cst = arith.constant dense<0.000000e+00> : vector<2x1536xf32>
    %1 = vector.multi_reduction <add>, %0, %cst [1] : vector<2x4x1536xf32> to vector<2x1536xf32>
    %cst_2 = arith.constant 4.000000e+00 : f32
    %2 = vector.broadcast %cst_2 : f32 to vector<2x1536xf32>
    %3 = arith.divf %1, %2 : vector<2x1536xf32>
    %c0_3 = arith.constant 0 : index
    %c0_4 = arith.constant 0 : index
    %c0_5 = arith.constant 0 : index
    %4 = vector.load %arg2[%c0_3, %c0_4, %c0_5] : memref<3x1536x480xf32, #tpu.memory_space<vmem>>, vector<1x1536x480xf32>
    %5 = vector.shape_cast %4 : vector<1x1536x480xf32> to vector<1536x480xf32>
    %cst_6 = arith.constant dense<0.000000e+00> : vector<2x480xf32>
    %6 = tpu.matmul %3, %5, %cst_6 {dimension_numbers = #tpu.dot_dimension_numbers<[1], [0], [0], [1], [0, 0, 1, 1], [], []>} : vector<2x1536xf32>, vector<1536x480xf32>, vector<2x480xf32> -> vector<2x480xf32>
    %c0_7 = arith.constant 0 : index
    %c0_8 = arith.constant 0 : index
    %c0_9 = arith.constant 0 : index
    %7 = vector.load %arg3[%c0_7, %c0_8, %c0_9] : memref<3x1x480xf32, #tpu.memory_space<vmem>>, vector<1x1x480xf32>
    %8 = vector.shape_cast %7 : vector<1x1x480xf32> to vector<1x480xf32>
    %9 = vector.broadcast %8 : vector<1x480xf32> to vector<2x480xf32>
    %10 = arith.addf %6, %9 : vector<2x480xf32>
    %cst_10 = arith.constant 0.000000e+00 : f32
    %11 = vector.broadcast %cst_10 : f32 to vector<2x480xf32>
    %12 = arith.maximumf %10, %11 : vector<2x480xf32>
    %c0_11 = arith.constant 0 : index
    %c0_12 = arith.constant 0 : index
    %c0_13 = arith.constant 0 : index
    %13 = vector.load %arg4[%c0_11, %c0_12, %c0_13] : memref<3x480x5xf32, #tpu.memory_space<vmem>>, vector<1x480x5xf32>
    %14 = vector.shape_cast %13 : vector<1x480x5xf32> to vector<480x5xf32>
    %cst_14 = arith.constant dense<0.000000e+00> : vector<2x5xf32>
    %15 = tpu.matmul %12, %14, %cst_14 {dimension_numbers = #tpu.dot_dimension_numbers<[1], [0], [0], [1], [0, 0, 1, 1], [], []>} : vector<2x480xf32>, vector<480x5xf32>, vector<2x5xf32> -> vector<2x5xf32>
    %c0_15 = arith.constant 0 : index
    %c0_16 = arith.constant 0 : index
    %c0_17 = arith.constant 0 : index
    %16 = vector.load %arg5[%c0_15, %c0_16, %c0_17] : memref<3x1x5xf32, #tpu.memory_space<vmem>>, vector<1x1x5xf32>
    %17 = vector.shape_cast %16 : vector<1x1x5xf32> to vector<1x5xf32>
    %18 = vector.broadcast %17 : vector<1x5xf32> to vector<2x5xf32>
    %19 = arith.addf %15, %18 : vector<2x5xf32>
    %c0_18 = arith.constant 0 : index
    %c0_19 = arith.constant 0 : index
    %20 = vector.load %arg6[%c0_18, %c0_19] : memref<2x5xf32, #tpu.memory_space<vmem>>, vector<2x5xf32>
    tpu.vector_store %arg6[%c0_18, %c0_19], %19 {strides = array<i32>} : memref<2x5xf32, #tpu.memory_space<vmem>>, vector<2x5xf32>,
    %c1 = arith.constant 1 : index
    %c0_20 = arith.constant 0 : index
    %c0_21 = arith.constant 0 : index
    %21 = vector.load %arg2[%c1, %c0_20, %c0_21] : memref<3x1536x480xf32, #tpu.memory_space<vmem>>, vector<1x1536x480xf32>
    %22 = vector.shape_cast %21 : vector<1x1536x480xf32> to vector<1536x480xf32>
    %cst_22 = arith.constant dense<0.000000e+00> : vector<2x480xf32>
    %23 = tpu.matmul %3, %22, %cst_22 {dimension_numbers = #tpu.dot_dimension_numbers<[1], [0], [0], [1], [0, 0, 1, 1], [], []>} : vector<2x1536xf32>, vector<1536x480xf32>, vector<2x480xf32> -> vector<2x480xf32>
    %c1_23 = arith.constant 1 : index
    %c0_24 = arith.constant 0 : index
    %c0_25 = arith.constant 0 : index
    %24 = vector.load %arg3[%c1_23, %c0_24, %c0_25] : memref<3x1x480xf32, #tpu.memory_space<vmem>>, vector<1x1x480xf32>
    %25 = vector.shape_cast %24 : vector<1x1x480xf32> to vector<1x480xf32>
    %26 = vector.broadcast %25 : vector<1x480xf32> to vector<2x480xf32>
    %27 = arith.addf %23, %26 : vector<2x480xf32>
    %cst_26 = arith.constant 0.000000e+00 : f32
    %28 = vector.broadcast %cst_26 : f32 to vector<2x480xf32>
    %29 = arith.maximumf %27, %28 : vector<2x480xf32>
    %c1_27 = arith.constant 1 : index
    %c0_28 = arith.constant 0 : index
    %c0_29 = arith.constant 0 : index
    %30 = vector.load %arg4[%c1_27, %c0_28, %c0_29] : memref<3x480x5xf32, #tpu.memory_space<vmem>>, vector<1x480x5xf32>
    %31 = vector.shape_cast %30 : vector<1x480x5xf32> to vector<480x5xf32>
    %cst_30 = arith.constant dense<0.000000e+00> : vector<2x5xf32>
    %32 = tpu.matmul %29, %31, %cst_30 {dimension_numbers = #tpu.dot_dimension_numbers<[1], [0], [0], [1], [0, 0, 1, 1], [], []>} : vector<2x480xf32>, vector<480x5xf32>, vector<2x5xf32> -> vector<2x5xf32>
    %c1_31 = arith.constant 1 : index
    %c0_32 = arith.constant 0 : index
    %c0_33 = arith.constant 0 : index
    %33 = vector.load %arg5[%c1_31, %c0_32, %c0_33] : memref<3x1x5xf32, #tpu.memory_space<vmem>>, vector<1x1x5xf32>
    %34 = vector.shape_cast %33 : vector<1x1x5xf32> to vector<1x5xf32>
    %35 = vector.broadcast %34 : vector<1x5xf32> to vector<2x5xf32>
    %36 = arith.addf %32, %35 : vector<2x5xf32>
    %c0_34 = arith.constant 0 : index
    %c0_35 = arith.constant 0 : index
    %37 = vector.load %arg7[%c0_34, %c0_35] : memref<2x5xf32, #tpu.memory_space<vmem>>, vector<2x5xf32>
    tpu.vector_store %arg7[%c0_34, %c0_35], %36 {strides = array<i32>} : memref<2x5xf32, #tpu.memory_space<vmem>>, vector<2x5xf32>,
    %c2 = arith.constant 2 : index
    %c0_36 = arith.constant 0 : index
    %c0_37 = arith.constant 0 : index
    %38 = vector.load %arg2[%c2, %c0_36, %c0_37] : memref<3x1536x480xf32, #tpu.memory_space<vmem>>, vector<1x1536x480xf32>
    %39 = vector.shape_cast %38 : vector<1x1536x480xf32> to vector<1536x480xf32>
    %cst_38 = arith.constant dense<0.000000e+00> : vector<2x480xf32>
    %40 = tpu.matmul %3, %39, %cst_38 {dimension_numbers = #tpu.dot_dimension_numbers<[1], [0], [0], [1], [0, 0, 1, 1], [], []>} : vector<2x1536xf32>, vector<1536x480xf32>, vector<2x480xf32> -> vector<2x480xf32>
    %c2_39 = arith.constant 2 : index
    %c0_40 = arith.constant 0 : index
    %c0_41 = arith.constant 0 : index
    %41 = vector.load %arg3[%c2_39, %c0_40, %c0_41] : memref<3x1x480xf32, #tpu.memory_space<vmem>>, vector<1x1x480xf32>
    %42 = vector.shape_cast %41 : vector<1x1x480xf32> to vector<1x480xf32>
    %43 = vector.broadcast %42 : vector<1x480xf32> to vector<2x480xf32>
    %44 = arith.addf %40, %43 : vector<2x480xf32>
    %cst_42 = arith.constant 0.000000e+00 : f32
    %45 = vector.broadcast %cst_42 : f32 to vector<2x480xf32>
    %46 = arith.maximumf %44, %45 : vector<2x480xf32>
    %c2_43 = arith.constant 2 : index
    %c0_44 = arith.constant 0 : index
    %c0_45 = arith.constant 0 : index
    %47 = vector.load %arg4[%c2_43, %c0_44, %c0_45] : memref<3x480x5xf32, #tpu.memory_space<vmem>>, vector<1x480x5xf32>
    %48 = vector.shape_cast %47 : vector<1x480x5xf32> to vector<480x5xf32>
    %cst_46 = arith.constant dense<0.000000e+00> : vector<2x5xf32>
    %49 = tpu.matmul %46, %48, %cst_46 {dimension_numbers = #tpu.dot_dimension_numbers<[1], [0], [0], [1], [0, 0, 1, 1], [], []>} : vector<2x480xf32>, vector<480x5xf32>, vector<2x5xf32> -> vector<2x5xf32>
    %c2_47 = arith.constant 2 : index
    %c0_48 = arith.constant 0 : index
    %c0_49 = arith.constant 0 : index
    %50 = vector.load %arg5[%c2_47, %c0_48, %c0_49] : memref<3x1x5xf32, #tpu.memory_space<vmem>>, vector<1x1x5xf32>
    %51 = vector.shape_cast %50 : vector<1x1x5xf32> to vector<1x5xf32>
    %52 = vector.broadcast %51 : vector<1x5xf32> to vector<2x5xf32>
    %53 = arith.addf %49, %52 : vector<2x5xf32>
    %c0_50 = arith.constant 0 : index
    %c0_51 = arith.constant 0 : index
    %54 = vector.load %arg8[%c0_50, %c0_51] : memref<2x5xf32, #tpu.memory_space<vmem>>, vector<2x5xf32>
    tpu.vector_store %arg8[%c0_50, %c0_51], %53 {strides = array<i32>} : memref<2x5xf32, #tpu.memory_space<vmem>>, vector<2x5xf32>,
    return
  }
  func.func @transform_0(%arg0: i32) -> (i32, i32, i32) {
    %c0_i32 = arith.constant 0 : i32
    %c0_i32_0 = arith.constant 0 : i32
    %c0_i32_1 = arith.constant 0 : i32
    %c0_i32_2 = arith.constant 0 : i32
    return %c0_i32, %c0_i32_0, %c0_i32_1 : i32, i32, i32
  }
  func.func @transform_1(%arg0: i32) -> (i32, i32, i32) {
    %c0_i32 = arith.constant 0 : i32
    %c0_i32_0 = arith.constant 0 : i32
    %c0_i32_1 = arith.constant 0 : i32
    %c0_i32_2 = arith.constant 0 : i32
    return %c0_i32, %c0_i32_0, %c0_i32_1 : i32, i32, i32
  }
  func.func @transform_2(%arg0: i32) -> (i32, i32, i32) {
    %c0_i32 = arith.constant 0 : i32
    %c0_i32_0 = arith.constant 0 : i32
    %c0_i32_1 = arith.constant 0 : i32
    %c0_i32_2 = arith.constant 0 : i32
    return %c0_i32, %c0_i32_0, %c0_i32_1 : i32, i32, i32
  }
  func.func @transform_3(%arg0: i32) -> (i32, i32, i32) {
    %c0_i32 = arith.constant 0 : i32
    %c0_i32_0 = arith.constant 0 : i32
    %c0_i32_1 = arith.constant 0 : i32
    %c0_i32_2 = arith.constant 0 : i32
    return %c0_i32, %c0_i32_0, %c0_i32_1 : i32, i32, i32
  }
  func.func @transform_4(%arg0: i32) -> (i32, i32, i32) {
    %c0_i32 = arith.constant 0 : i32
    %c0_i32_0 = arith.constant 0 : i32
    %c0_i32_1 = arith.constant 0 : i32
    %c0_i32_2 = arith.constant 0 : i32
    return %c0_i32, %c0_i32_0, %c0_i32_1 : i32, i32, i32
  }
  func.func @transform_5(%arg0: i32) -> (i32, i32) {
    %c0_i32 = arith.constant 0 : i32
    %c0_i32_0 = arith.constant 0 : i32
    %c0_i32_1 = arith.constant 0 : i32
    return %c0_i32, %c0_i32_0 : i32, i32
  }
  func.func @transform_6(%arg0: i32) -> (i32, i32) {
    %c0_i32 = arith.constant 0 : i32
    %c0_i32_0 = arith.constant 0 : i32
    %c0_i32_1 = arith.constant 0 : i32
    return %c0_i32, %c0_i32_0 : i32, i32
  }
  func.func @transform_7(%arg0: i32) -> (i32, i32) {
    %c0_i32 = arith.constant 0 : i32
    %c0_i32_0 = arith.constant 0 : i32
    %c0_i32_1 = arith.constant 0 : i32
    return %c0_i32, %c0_i32_0 : i32, i32
  }
}

</mosaic_0001>

<llo_original>
// kernel: forward.2
$region0: #{forward.2}
  #allocation0 [shape = 'u32[]', space=smem, size = 0x4, offset = 0x4, fixed_abs, tag = 'smem constant byte address 0x4 - core index']
  #allocation1 [shape = 'u32[72,128]{1,0:T(1,128)}', space=vmem, size = 0x9000, scoped, tag = 'internal scratch']
  %s0 = inlined_call_operand.vmem [shape: bf16[8,3072], index: 0, kind: input, shape index: {}]
  %s1 = inlined_call_operand.hbm [shape: bf16[3072,1536], index: 1, kind: input, shape index: {}]
  %s2 = inlined_call_operand.hbm [shape: f32[1,1536], index: 2, kind: input, shape index: {}]
  %s3 = inlined_call_operand.vmem [shape: f32[8,1536], index: 3, kind: output, shape index: {}]
  %s4 = sld [smem:[#allocation0]]
  $region53: #{forward.2} parent=0
    _
  %s6 = ssub.s32 1, %s4
  %s7 = scalar_select 0, %s6, %s4
  $region1: #{forward.2} parent=0
    #allocation2 [shape = 'u8[3145728]{0}', space=vmem, size = 0x300000, scoped, tag = 'input window, operand 1']
    #allocation3 [shape = 's32[2]{0}', space=sflag, size = 0x8, scoped, tag = 'scoped memory for forward.2']
    #allocation4 [shape = 'u8[2048]{0}', space=vmem, size = 0x800, scoped, tag = 'input window, operand 2']
    #allocation5 [shape = 's32[2]{0}', space=sflag, size = 0x8, scoped, tag = 'scoped memory for forward.2']
    %8 = vsyncpa [#allocation3], 0
    %s9 = scalar_lea.sflag [#allocation3], 1
    %10 = vsyncpa %s9, 0
    %11 = vsyncpa [#allocation5], 0
    %s12 = scalar_lea.sflag [#allocation5], 1
    %13 = vsyncpa %s12, 0
    loop: start=0, step=1, limit=8
    $region2: #{forward.2} parent=1 // loop_pre_header
      _
    $region3: #{forward.2} parent=1 // loop_header
      %s15 = sphi 0, %s19
      %p16 = scmp.ge.s32.totalorder %s15, 8
      %s23 = sphi 0, %s23
      %s25 = sphi 0, %s23
      %s26 = sphi 0, %s25
      %s40 = sphi 0, %s26
      %s46 = sphi 0, %s48
      %s49 = sphi 0, %s46
      %s50 = sphi 0, %s49
      %s66 = sphi 0, %s50
      %s72 = sphi 0, %s74
      %s75 = sphi 0, %s72
      %s76 = sphi 0, %s75
      %s92 = sphi 0, %s76
      %s98 = sphi 0, %s100
      %s101 = sphi 0, %s98
      %s102 = sphi 0, %s101
      %s118 = sphi 0, %s102
    $region4: #{forward.2} parent=1 // loop_header_branch
      %18 = sbr.rel (%p16) target = $region8
    $region5: #{forward.2} parent=1 // loop_body
      %s20 = ssub.s32 %s15, 1
      %s21 = ssub.s32 %s15, 2
      %s22 = sadd.s32 %s15, 1
      %s24 = sadd.s32 %s23, 1
      %p27 = scmp.eq.s32.totalorder %s15, 5
      %p28 = scmp.ne.s32.totalorder %s23, %s25
      %p29 = scmp.eq.s32.totalorder %s15, 0
      %p30 = por %p28, %p29
      %p31 = scmp.ne.s32.totalorder %s23, %s25
      %p32 = scmp.eq.s32.totalorder %s20, 5
      %p33 = por %p31, %p32
      %p34 = scmp.ne.s32.totalorder %s25, %s26
      %p35 = scmp.eq.s32.totalorder %s20, 0
      %p36 = por %p34, %p35
      %p37 = scmp.ne.s32.totalorder %s25, %s26
      %p38 = scmp.eq.s32.totalorder %s21, 5
      %p39 = por %p37, %p38
      %p41 = scmp.ne.s32.totalorder %s26, %s40
      %p42 = scmp.eq.s32.totalorder %s21, 0
      %p43 = por %p41, %p42
      %s44 = ssub.s32 %s15, %s22
      %p45 = scmp.eq.s32.totalorder %s44, 0
      %s47 = sadd.s32 %s46, 1
      %s48 = scalar_select %p45, %s46, %s47
      %p51 = pneg %p45
      %p52 = scmp.eq.s32.totalorder %s15, 5
      %p53 = por %p51, %p52
      %p54 = scmp.ne.s32.totalorder %s46, %s49
      %p55 = scmp.eq.s32.totalorder %s15, 0
      %p56 = por %p54, %p55
      %p57 = scmp.ne.s32.totalorder %s46, %s49
      %p58 = scmp.eq.s32.totalorder %s20, 5
      %p59 = por %p57, %p58
      %p60 = scmp.ne.s32.totalorder %s49, %s50
      %p61 = scmp.eq.s32.totalorder %s20, 0
      %p62 = por %p60, %p61
      %p63 = scmp.ne.s32.totalorder %s49, %s50
      %p64 = scmp.eq.s32.totalorder %s21, 5
      %p65 = por %p63, %p64
      %p67 = scmp.ne.s32.totalorder %s50, %s66
      %p68 = scmp.eq.s32.totalorder %s21, 0
      %p69 = por %p67, %p68
      %s70 = ssub.s32 %s15, %s22
      %p71 = scmp.eq.s32.totalorder %s70, 0
      %s73 = sadd.s32 %s72, 1
      %s74 = scalar_select %p71, %s72, %s73
      %p77 = pneg %p71
      %p78 = scmp.eq.s32.totalorder %s15, 5
      %p79 = por %p77, %p78
      %p80 = scmp.ne.s32.totalorder %s72, %s75
      %p81 = scmp.eq.s32.totalorder %s15, 0
      %p82 = por %p80, %p81
      %p83 = scmp.ne.s32.totalorder %s72, %s75
      %p84 = scmp.eq.s32.totalorder %s20, 5
      %p85 = por %p83, %p84
      %p86 = scmp.ne.s32.totalorder %s75, %s76
      %p87 = scmp.eq.s32.totalorder %s20, 0
      %p88 = por %p86, %p87
      %p89 = scmp.ne.s32.totalorder %s75, %s76
      %p90 = scmp.eq.s32.totalorder %s21, 5
      %p91 = por %p89, %p90
      %p93 = scmp.ne.s32.totalorder %s76, %s92
      %p94 = scmp.eq.s32.totalorder %s21, 0
      %p95 = por %p93, %p94
      %s96 = ssub.s32 %s15, %s22
      %p97 = scmp.eq.s32.totalorder %s96, 0
      %s99 = sadd.s32 %s98, 1
      %s100 = scalar_select %p97, %s98, %s99
      %p103 = pneg %p97
      %p104 = scmp.eq.s32.totalorder %s15, 5
      %p105 = por %p103, %p104
      %p106 = scmp.ne.s32.totalorder %s98, %s101
      %p107 = scmp.eq.s32.totalorder %s15, 0
      %p108 = por %p106, %p107
      %p109 = scmp.ne.s32.totalorder %s98, %s101
      %p110 = scmp.eq.s32.totalorder %s20, 5
      %p111 = por %p109, %p110
      %p112 = scmp.ne.s32.totalorder %s101, %s102
      %p113 = scmp.eq.s32.totalorder %s20, 0
      %p114 = por %p112, %p113
      %p115 = scmp.ne.s32.totalorder %s101, %s102
      %p116 = scmp.eq.s32.totalorder %s21, 5
      %p117 = por %p115, %p116
      %p119 = scmp.ne.s32.totalorder %s102, %s118
      %p120 = scmp.eq.s32.totalorder %s21, 0
      %p121 = por %p119, %p120
      %p122 = scmp.le.s32.totalorder 1, %s15
      %p123 = scmp.lt.s32.totalorder %s15, 7
      %p124 = pnand %p122, %p123
      %p125 = pneg %p124
      // Predicated region
      $region9: #{forward.2} parent=5 // pred_check
        _
      $region10: #{forward.2} parent=5 // pred_check_branch
        %127 = sbr.rel (%p124) target = $region12
      $region11: #{forward.2} parent=5 // pred_region
        %s128 = ssub.s32 %s15, 1
        // Predicated region
        $region13: #{forward.2} parent=11 // pred_check
          %p129 = pneg %p36
        $region14: #{forward.2} parent=11 // pred_check_branch
          %131 = sbr.rel (%p129) target = $region16
        $region15: #{forward.2} parent=11 // pred_region
          _
        $region16: #{forward.2} parent=11 // pred_fallthru
          _
      $region12: #{forward.2} parent=5 // pred_fallthru
        _
      %p132 = scmp.lt.s32.totalorder %s15, 6
      // Predicated region
      $region17: #{forward.2} parent=5 // pred_check
        %p133 = pneg %p132
      $region18: #{forward.2} parent=5 // pred_check_branch
        %135 = sbr.rel (%p133) target = $region20
      $region19: #{forward.2} parent=5 // pred_region
        // Predicated region
        $region21: #{forward.2} parent=19 // pred_check
          %p136 = pneg %p56
        $region22: #{forward.2} parent=19 // pred_check_branch
          %138 = sbr.rel (%p136) target = $region24
        $region23: #{forward.2} parent=19 // pred_region
          %s139 = sand.u32 %s46, 1
          %s140 = scalar_lea.sflag [#allocation3], %s139
          %s141 = sand.u32 %s46, 1
          %s142 = smul.addr %s141, 3072
          %s143 = scalar_lea.vmem [#allocation2], %s142
          %s144 = smul.u32 2, %s15
          %146 = vsyncadd %s140, 0
          %s147 = smul.addr %s144, 4
          %s148 = scalar_lea.hbm %s1, %s147
          %s149 = sshll.u32 %s148, 4
          %s150 = int_to_ptr.hbm [resolvable:$true] %s149
          %s151 = sshll.u32 %s143, 4
          %s152 = int_to_ptr.vmem [resolvable:$true] %s151
          %157 = dma.hbm_to_vmem [thread:$0]  %s150, 49152, %s152, %s140, 768, 128, 8
        $region24: #{forward.2} parent=19 // pred_fallthru
          _
        // Predicated region
        $region25: #{forward.2} parent=19 // pred_check
          %p158 = pneg %p82
        $region26: #{forward.2} parent=19 // pred_check_branch
          %160 = sbr.rel (%p158) target = $region28
        $region27: #{forward.2} parent=19 // pred_region
          %s161 = sand.u32 %s72, 1
          %s162 = scalar_lea.sflag [#allocation5], %s161
          %s163 = sand.u32 %s72, 1
          %s164 = smul.addr %s163, 2
          %s165 = scalar_lea.vmem [#allocation4], %s164
          %s166 = smul.u32 2, %s15
          %168 = vsyncadd %s162, 0
          %s169 = scalar_lea.hbm %s2, %s166
          %s171 = sshll.u32 %s169, 4
          %s172 = int_to_ptr.hbm [resolvable:$true] %s171
          %s173 = sshll.u32 %s165, 4
          %s174 = int_to_ptr.vmem [resolvable:$true] %s173
          %176 = dma.hbm_to_vmem [thread:$0]  %s172, 32, %s174, %s162
        $region28: #{forward.2} parent=19 // pred_fallthru
          _
      $region20: #{forward.2} parent=5 // pred_fallthru
        _
      %p177 = scmp.le.s32.totalorder 1, %s15
      %p178 = scmp.lt.s32.totalorder %s15, 7
      %p179 = pnand %p177, %p178
      %p180 = pneg %p179
      // Predicated region
      $region29: #{forward.2} parent=5 // pred_check
        _
      $region30: #{forward.2} parent=5 // pred_check_branch
        %182 = sbr.rel (%p179) target = $region32
      $region31: #{forward.2} parent=5 // pred_region
        %s183 = ssub.s32 %s15, 1
        %s184 = sand.u32 %s49, 1
        %s185 = scalar_lea.sflag [#allocation3], %s184
        %s186 = sand.u32 %s49, 1
        %s187 = smul.addr %s186, 3072
        %s188 = scalar_lea.vmem [#allocation2], %s187
        // Predicated region
        $region33: #{forward.2} parent=31 // pred_check
          %p189 = pneg %p62
        $region34: #{forward.2} parent=31 // pred_check_branch
          %191 = sbr.rel (%p189) target = $region36
        $region35: #{forward.2} parent=31 // pred_region
          %193 = dma.done %s185, 49152
        $region36: #{forward.2} parent=31 // pred_fallthru
          _
        %s194 = sand.u32 %s75, 1
        %s195 = scalar_lea.sflag [#allocation5], %s194
        %s196 = sand.u32 %s75, 1
        %s197 = smul.addr %s196, 2
        %s198 = scalar_lea.vmem [#allocation4], %s197
        // Predicated region
        $region37: #{forward.2} parent=31 // pred_check
          %p199 = pneg %p88
        $region38: #{forward.2} parent=31 // pred_check_branch
          %201 = sbr.rel (%p199) target = $region40
        $region39: #{forward.2} parent=31 // pred_region
          %203 = dma.done %s195, 32
        $region40: #{forward.2} parent=31 // pred_fallthru
          _
        %p204 = pneg %p36
        %p205 = pneg %p33
        %s206 = sand.u32 %s49, 1
        %s207 = scalar_lea.sflag [#allocation3], %s206
        %s208 = sand.u32 %s49, 1
        %s209 = smul.addr %s208, 3072
        %s210 = scalar_lea.vmem [#allocation2], %s209
        %p211 = pneg %p62
        %p212 = pneg %p59
        %s213 = sand.u32 %s75, 1
        %s214 = scalar_lea.sflag [#allocation5], %s213
        %s215 = sand.u32 %s75, 1
        %s216 = smul.addr %s215, 2
        %s217 = scalar_lea.vmem [#allocation4], %s216
        %p218 = pneg %p88
        %p219 = pneg %p85
        %p220 = pneg %p114
        %p221 = pneg %p111
        %s222 = smul.u32 2, %s20
        %p223 = scmp.lt.s32.totalorder %s222, 11
        %s224 = scalar_select %p223, %s222, 11
        %s225 = smul.addr %s224, 8
        %s226 = scalar_lea.vmem %s3, %s225
        %s227 = smul.u32 2, %s20
        %s228 = smul.u32 2, %s20
        %s229 = smul.u32 2, %s20
        %p230 = scmp.lt.s32.totalorder %s229, 11
        %s231 = scalar_select %p230, %s229, 11
        %s232 = smul.addr %s231, 8
        %s233 = scalar_lea.vmem %s3, %s232
        %s234 = smul.u32 2, %s20
        %v235 = vld [vmem:[%s0] sm:$0xff]
        %v236 = vld [vmem:[%s0 + $0x8] sm:$0xff]
        %v237 = vld [vmem:[%s0 + $0x10] sm:$0xff]
        %v238 = vld [vmem:[%s0 + $0x18] sm:$0xff]
        %v239 = vld [vmem:[%s0 + $0x20] sm:$0xff]
        %v240 = vld [vmem:[%s0 + $0x28] sm:$0xff]
        %v241 = vld [vmem:[%s0 + $0x30] sm:$0xff]
        %v242 = vld [vmem:[%s0 + $0x38] sm:$0xff]
        %v243 = vld [vmem:[%s0 + $0x40] sm:$0xff]
        %v244 = vld [vmem:[%s0 + $0x48] sm:$0xff]
        %v245 = vld [vmem:[%s0 + $0x50] sm:$0xff]
        %v246 = vld [vmem:[%s0 + $0x58] sm:$0xff]
        %v247 = vld [vmem:[%s188] sm:$0xff]
        %v248 = vld [vmem:[%s188 + $0x8] sm:$0xff]
        %v249 = vld [vmem:[%s188 + $0x10] sm:$0xff]
        %v250 = vld [vmem:[%s188 + $0x18] sm:$0xff]
        %v251 = vld [vmem:[%s188 + $0x20] sm:$0xff]
        %v252 = vld [vmem:[%s188 + $0x28] sm:$0xff]
        %v253 = vld [vmem:[%s188 + $0x30] sm:$0xff]
        %v254 = vld [vmem:[%s188 + $0x38] sm:$0xff]
        %v255 = vld [vmem:[%s188 + $0x40] sm:$0xff]
        %v256 = vld [vmem:[%s188 + $0x48] sm:$0xff]
        %v257 = vld [vmem:[%s188 + $0x50] sm:$0xff]
        %v258 = vld [vmem:[%s188 + $0x58] sm:$0xff]
        %v259 = vld [vmem:[%s188 + $0x60] sm:$0xff]
        %v260 = vld [vmem:[%s188 + $0x68] sm:$0xff]
        %v261 = vld [vmem:[%s188 + $0x70] sm:$0xff]
        %v262 = vld [vmem:[%s188 + $0x78] sm:$0xff]
        %v263 = vld [vmem:[%s188 + $0x80] sm:$0xff]
        %v264 = vld [vmem:[%s188 + $0x88] sm:$0xff]
        %v265 = vld [vmem:[%s188 + $0x90] sm:$0xff]
        %v266 = vld [vmem:[%s188 + $0x98] sm:$0xff]
        %v267 = vld [vmem:[%s188 + $0xa0] sm:$0xff]
        %v268 = vld [vmem:[%s188 + $0xa8] sm:$0xff]
        %v269 = vld [vmem:[%s188 + $0xb0] sm:$0xff]
        %v270 = vld [vmem:[%s188 + $0xb8] sm:$0xff]
        %v271 = vld [vmem:[%s188 + $0xc0] sm:$0xff]
        %v272 = vld [vmem:[%s188 + $0xc8] sm:$0xff]
        %v273 = vld [vmem:[%s188 + $0xd0] sm:$0xff]
        %v274 = vld [vmem:[%s188 + $0xd8] sm:$0xff]
        %v275 = vld [vmem:[%s188 + $0xe0] sm:$0xff]
        %v276 = vld [vmem:[%s188 + $0xe8] sm:$0xff]
        %v277 = vld [vmem:[%s188 + $0xf0] sm:$0xff]
        %v278 = vld [vmem:[%s188 + $0xf8] sm:$0xff]
        %v279 = vld [vmem:[%s188 + $0x100] sm:$0xff]
        %v280 = vld [vmem:[%s188 + $0x108] sm:$0xff]
        %v281 = vld [vmem:[%s188 + $0x110] sm:$0xff]
        %v282 = vld [vmem:[%s188 + $0x118] sm:$0xff]
        %v283 = vld [vmem:[%s188 + $0x120] sm:$0xff]
        %v284 = vld [vmem:[%s188 + $0x128] sm:$0xff]
        %v285 = vld [vmem:[%s188 + $0x130] sm:$0xff]
        %v286 = vld [vmem:[%s188 + $0x138] sm:$0xff]
        %v287 = vld [vmem:[%s188 + $0x140] sm:$0xff]
        %v288 = vld [vmem:[%s188 + $0x148] sm:$0xff]
        %v289 = vld [vmem:[%s188 + $0x150] sm:$0xff]
        %v290 = vld [vmem:[%s188 + $0x158] sm:$0xff]
        %v291 = vld [vmem:[%s188 + $0x160] sm:$0xff]
        %v292 = vld [vmem:[%s188 + $0x168] sm:$0xff]
        %v293 = vld [vmem:[%s188 + $0x170] sm:$0xff]
        %v294 = vld [vmem:[%s188 + $0x178] sm:$0xff]
        %v295 = vld [vmem:[%s188 + $0x180] sm:$0xff]
        %v296 = vld [vmem:[%s188 + $0x188] sm:$0xff]
        %v297 = vld [vmem:[%s188 + $0x190] sm:$0xff]
        %v298 = vld [vmem:[%s188 + $0x198] sm:$0xff]
        %v299 = vld [vmem:[%s188 + $0x1a0] sm:$0xff]
        %v300 = vld [vmem:[%s188 + $0x1a8] sm:$0xff]
        %v301 = vld [vmem:[%s188 + $0x1b0] sm:$0xff]
        %v302 = vld [vmem:[%s188 + $0x1b8] sm:$0xff]
        %v303 = vld [vmem:[%s188 + $0x1c0] sm:$0xff]
        %v304 = vld [vmem:[%s188 + $0x1c8] sm:$0xff]
        %v305 = vld [vmem:[%s188 + $0x1d0] sm:$0xff]
        %v306 = vld [vmem:[%s188 + $0x1d8] sm:$0xff]
        %v307 = vld [vmem:[%s188 + $0x1e0] sm:$0xff]
        %v308 = vld [vmem:[%s188 + $0x1e8] sm:$0xff]
        %v309 = vld [vmem:[%s188 + $0x1f0] sm:$0xff]
        %v310 = vld [vmem:[%s188 + $0x1f8] sm:$0xff]
        %v311 = vld [vmem:[%s188 + $0x200] sm:$0xff]
        %v312 = vld [vmem:[%s188 + $0x208] sm:$0xff]
        %v313 = vld [vmem:[%s188 + $0x210] sm:$0xff]
        %v314 = vld [vmem:[%s188 + $0x218] sm:$0xff]
        %v315 = vld [vmem:[%s188 + $0x220] sm:$0xff]
        %v316 = vld [vmem:[%s188 + $0x228] sm:$0xff]
        %v317 = vld [vmem:[%s188 + $0x230] sm:$0xff]
        %v318 = vld [vmem:[%s188 + $0x238] sm:$0xff]
        %v319 = vld [vmem:[%s188 + $0x240] sm:$0xff]
        %v320 = vld [vmem:[%s188 + $0x248] sm:$0xff]
        %v321 = vld [vmem:[%s188 + $0x250] sm:$0xff]
        %v322 = vld [vmem:[%s188 + $0x258] sm:$0xff]
        %v323 = vld [vmem:[%s188 + $0x260] sm:$0xff]
        %v324 = vld [vmem:[%s188 + $0x268] sm:$0xff]
        %v325 = vld [vmem:[%s188 + $0x270] sm:$0xff]
        %v326 = vld [vmem:[%s188 + $0x278] sm:$0xff]
        %v327 = vld [vmem:[%s188 + $0x280] sm:$0xff]
        %v328 = vld [vmem:[%s188 + $0x288] sm:$0xff]
        %v329 = vld [vmem:[%s188 + $0x290] sm:$0xff]
        %v330 = vld [vmem:[%s188 + $0x298] sm:$0xff]
        %v331 = vld [vmem:[%s188 + $0x2a0] sm:$0xff]
        %v332 = vld [vmem:[%s188 + $0x2a8] sm:$0xff]
        %v333 = vld [vmem:[%s188 + $0x2b0] sm:$0xff]
        %v334 = vld [vmem:[%s188 + $0x2b8] sm:$0xff]
        %v335 = vld [vmem:[%s188 + $0x2c0] sm:$0xff]
        %v336 = vld [vmem:[%s188 + $0x2c8] sm:$0xff]
        %v337 = vld [vmem:[%s188 + $0x2d0] sm:$0xff]
        %v338 = vld [vmem:[%s188 + $0x2d8] sm:$0xff]
        %v339 = vld [vmem:[%s188 + $0x2e0] sm:$0xff]
        %v340 = vld [vmem:[%s188 + $0x2e8] sm:$0xff]
        %v341 = vld [vmem:[%s188 + $0x2f0] sm:$0xff]
        %v342 = vld [vmem:[%s188 + $0x2f8] sm:$0xff]
        %v343 = vld [vmem:[%s188 + $0x300] sm:$0xff]
        %v344 = vld [vmem:[%s188 + $0x308] sm:$0xff]
        %v345 = vld [vmem:[%s188 + $0x310] sm:$0xff]
        %v346 = vld [vmem:[%s188 + $0x318] sm:$0xff]
        %v347 = vld [vmem:[%s188 + $0x320] sm:$0xff]
        %v348 = vld [vmem:[%s188 + $0x328] sm:$0xff]
        %v349 = vld [vmem:[%s188 + $0x330] sm:$0xff]
        %v350 = vld [vmem:[%s188 + $0x338] sm:$0xff]
        %v351 = vld [vmem:[%s188 + $0x340] sm:$0xff]
        %v352 = vld [vmem:[%s188 + $0x348] sm:$0xff]
        %v353 = vld [vmem:[%s188 + $0x350] sm:$0xff]
        %v354 = vld [vmem:[%s188 + $0x358] sm:$0xff]
        %v355 = vld [vmem:[%s188 + $0x360] sm:$0xff]
        %v356 = vld [vmem:[%s188 + $0x368] sm:$0xff]
        %v357 = vld [vmem:[%s188 + $0x370] sm:$0xff]
        %v358 = vld [vmem:[%s188 + $0x378] sm:$0xff]
        %v359 = vld [vmem:[%s188 + $0x380] sm:$0xff]
        %v360 = vld [vmem:[%s188 + $0x388] sm:$0xff]
        %v361 = vld [vmem:[%s188 + $0x390] sm:$0xff]
        %v362 = vld [vmem:[%s188 + $0x398] sm:$0xff]
        %v363 = vld [vmem:[%s188 + $0x3a0] sm:$0xff]
        %v364 = vld [vmem:[%s188 + $0x3a8] sm:$0xff]
        %v365 = vld [vmem:[%s188 + $0x3b0] sm:$0xff]
        %v366 = vld [vmem:[%s188 + $0x3b8] sm:$0xff]
        %v367 = vld [vmem:[%s188 + $0x3c0] sm:$0xff]
        %v368 = vld [vmem:[%s188 + $0x3c8] sm:$0xff]
        %v369 = vld [vmem:[%s188 + $0x3d0] sm:$0xff]
        %v370 = vld [vmem:[%s188 + $0x3d8] sm:$0xff]
        %v371 = vld [vmem:[%s188 + $0x3e0] sm:$0xff]
        %v372 = vld [vmem:[%s188 + $0x3e8] sm:$0xff]
        %v373 = vld [vmem:[%s188 + $0x3f0] sm:$0xff]
        %v374 = vld [vmem:[%s188 + $0x3f8] sm:$0xff]
        %v375 = vld [vmem:[%s188 + $0x400] sm:$0xff]
        %v376 = vld [vmem:[%s188 + $0x408] sm:$0xff]
        %v377 = vld [vmem:[%s188 + $0x410] sm:$0xff]
        %v378 = vld [vmem:[%s188 + $0x418] sm:$0xff]
        %v379 = vld [vmem:[%s188 + $0x420] sm:$0xff]
        %v380 = vld [vmem:[%s188 + $0x428] sm:$0xff]
        %v381 = vld [vmem:[%s188 + $0x430] sm:$0xff]
        %v382 = vld [vmem:[%s188 + $0x438] sm:$0xff]
        %v383 = vld [vmem:[%s188 + $0x440] sm:$0xff]
        %v384 = vld [vmem:[%s188 + $0x448] sm:$0xff]
        %v385 = vld [vmem:[%s188 + $0x450] sm:$0xff]
        %v386 = vld [vmem:[%s188 + $0x458] sm:$0xff]
        %v387 = vld [vmem:[%s188 + $0x460] sm:$0xff]
        %v388 = vld [vmem:[%s188 + $0x468] sm:$0xff]
        %v389 = vld [vmem:[%s188 + $0x470] sm:$0xff]
        %v390 = vld [vmem:[%s188 + $0x478] sm:$0xff]
        %v391 = vld [vmem:[%s188 + $0x480] sm:$0xff]
        %v392 = vld [vmem:[%s188 + $0x488] sm:$0xff]
        %v393 = vld [vmem:[%s188 + $0x490] sm:$0xff]
        %v394 = vld [vmem:[%s188 + $0x498] sm:$0xff]
        %v395 = vld [vmem:[%s188 + $0x4a0] sm:$0xff]
        %v396 = vld [vmem:[%s188 + $0x4a8] sm:$0xff]
        %v397 = vld [vmem:[%s188 + $0x4b0] sm:$0xff]
        %v398 = vld [vmem:[%s188 + $0x4b8] sm:$0xff]
        %v399 = vld [vmem:[%s188 + $0x4c0] sm:$0xff]
        %v400 = vld [vmem:[%s188 + $0x4c8] sm:$0xff]
        %v401 = vld [vmem:[%s188 + $0x4d0] sm:$0xff]
        %v402 = vld [vmem:[%s188 + $0x4d8] sm:$0xff]
        %v403 = vld [vmem:[%s188 + $0x4e0] sm:$0xff]
        %v404 = vld [vmem:[%s188 + $0x4e8] sm:$0xff]
        %v405 = vld [vmem:[%s188 + $0x4f0] sm:$0xff]
        %v406 = vld [vmem:[%s188 + $0x4f8] sm:$0xff]
        %v407 = vld [vmem:[%s188 + $0x500] sm:$0xff]
        %v408 = vld [vmem:[%s188 + $0x508] sm:$0xff]
        %v409 = vld [vmem:[%s188 + $0x510] sm:$0xff]
        %v410 = vld [vmem:[%s188 + $0x518] sm:$0xff]
        %v411 = vld [vmem:[%s188 + $0x520] sm:$0xff]
        %v412 = vld [vmem:[%s188 + $0x528] sm:$0xff]
        %v413 = vld [vmem:[%s188 + $0x530] sm:$0xff]
        %v414 = vld [vmem:[%s188 + $0x538] sm:$0xff]
        %v415 = vld [vmem:[%s188 + $0x540] sm:$0xff]
        %v416 = vld [vmem:[%s188 + $0x548] sm:$0xff]
        %v417 = vld [vmem:[%s188 + $0x550] sm:$0xff]
        %v418 = vld [vmem:[%s188 + $0x558] sm:$0xff]
        %v419 = vld [vmem:[%s188 + $0x560] sm:$0xff]
        %v420 = vld [vmem:[%s188 + $0x568] sm:$0xff]
        %v421 = vld [vmem:[%s188 + $0x570] sm:$0xff]
        %v422 = vld [vmem:[%s188 + $0x578] sm:$0xff]
        %v423 = vld [vmem:[%s188 + $0x580] sm:$0xff]
        %v424 = vld [vmem:[%s188 + $0x588] sm:$0xff]
        %v425 = vld [vmem:[%s188 + $0x590] sm:$0xff]
        %v426 = vld [vmem:[%s188 + $0x598] sm:$0xff]
        %v427 = vld [vmem:[%s188 + $0x5a0] sm:$0xff]
        %v428 = vld [vmem:[%s188 + $0x5a8] sm:$0xff]
        %v429 = vld [vmem:[%s188 + $0x5b0] sm:$0xff]
        %v430 = vld [vmem:[%s188 + $0x5b8] sm:$0xff]
        %v431 = vld [vmem:[%s188 + $0x5c0] sm:$0xff]
        %v432 = vld [vmem:[%s188 + $0x5c8] sm:$0xff]
        %v433 = vld [vmem:[%s188 + $0x5d0] sm:$0xff]
        %v434 = vld [vmem:[%s188 + $0x5d8] sm:$0xff]
        %v435 = vld [vmem:[%s188 + $0x5e0] sm:$0xff]
        %v436 = vld [vmem:[%s188 + $0x5e8] sm:$0xff]
        %v437 = vld [vmem:[%s188 + $0x5f0] sm:$0xff]
        %v438 = vld [vmem:[%s188 + $0x5f8] sm:$0xff]
        %v439 = vld [vmem:[%s188 + $0x600] sm:$0xff]
        %v440 = vld [vmem:[%s188 + $0x608] sm:$0xff]
        %v441 = vld [vmem:[%s188 + $0x610] sm:$0xff]
        %v442 = vld [vmem:[%s188 + $0x618] sm:$0xff]
        %v443 = vld [vmem:[%s188 + $0x620] sm:$0xff]
        %v444 = vld [vmem:[%s188 + $0x628] sm:$0xff]
        %v445 = vld [vmem:[%s188 + $0x630] sm:$0xff]
        %v446 = vld [vmem:[%s188 + $0x638] sm:$0xff]
        %v447 = vld [vmem:[%s188 + $0x640] sm:$0xff]
        %v448 = vld [vmem:[%s188 + $0x648] sm:$0xff]
        %v449 = vld [vmem:[%s188 + $0x650] sm:$0xff]
        %v450 = vld [vmem:[%s188 + $0x658] sm:$0xff]
        %v451 = vld [vmem:[%s188 + $0x660] sm:$0xff]
        %v452 = vld [vmem:[%s188 + $0x668] sm:$0xff]
        %v453 = vld [vmem:[%s188 + $0x670] sm:$0xff]
        %v454 = vld [vmem:[%s188 + $0x678] sm:$0xff]
        %v455 = vld [vmem:[%s188 + $0x680] sm:$0xff]
        %v456 = vld [vmem:[%s188 + $0x688] sm:$0xff]
        %v457 = vld [vmem:[%s188 + $0x690] sm:$0xff]
        %v458 = vld [vmem:[%s188 + $0x698] sm:$0xff]
        %v459 = vld [vmem:[%s188 + $0x6a0] sm:$0xff]
        %v460 = vld [vmem:[%s188 + $0x6a8] sm:$0xff]
        %v461 = vld [vmem:[%s188 + $0x6b0] sm:$0xff]
        %v462 = vld [vmem:[%s188 + $0x6b8] sm:$0xff]
        %v463 = vld [vmem:[%s188 + $0x6c0] sm:$0xff]
        %v464 = vld [vmem:[%s188 + $0x6c8] sm:$0xff]
        %v465 = vld [vmem:[%s188 + $0x6d0] sm:$0xff]
        %v466 = vld [vmem:[%s188 + $0x6d8] sm:$0xff]
        %v467 = vld [vmem:[%s188 + $0x6e0] sm:$0xff]
        %v468 = vld [vmem:[%s188 + $0x6e8] sm:$0xff]
        %v469 = vld [vmem:[%s188 + $0x6f0] sm:$0xff]
        %v470 = vld [vmem:[%s188 + $0x6f8] sm:$0xff]
        %v471 = vld [vmem:[%s188 + $0x700] sm:$0xff]
        %v472 = vld [vmem:[%s188 + $0x708] sm:$0xff]
        %v473 = vld [vmem:[%s188 + $0x710] sm:$0xff]
        %v474 = vld [vmem:[%s188 + $0x718] sm:$0xff]
        %v475 = vld [vmem:[%s188 + $0x720] sm:$0xff]
        %v476 = vld [vmem:[%s188 + $0x728] sm:$0xff]
        %v477 = vld [vmem:[%s188 + $0x730] sm:$0xff]
        %v478 = vld [vmem:[%s188 + $0x738] sm:$0xff]
        %v479 = vld [vmem:[%s188 + $0x740] sm:$0xff]
        %v480 = vld [vmem:[%s188 + $0x748] sm:$0xff]
        %v481 = vld [vmem:[%s188 + $0x750] sm:$0xff]
        %v482 = vld [vmem:[%s188 + $0x758] sm:$0xff]
        %v483 = vld [vmem:[%s188 + $0x760] sm:$0xff]
        %v484 = vld [vmem:[%s188 + $0x768] sm:$0xff]
        %v485 = vld [vmem:[%s188 + $0x770] sm:$0xff]
        %v486 = vld [vmem:[%s188 + $0x778] sm:$0xff]
        %v487 = vld [vmem:[%s188 + $0x780] sm:$0xff]
        %v488 = vld [vmem:[%s188 + $0x788] sm:$0xff]
        %v489 = vld [vmem:[%s188 + $0x790] sm:$0xff]
        %v490 = vld [vmem:[%s188 + $0x798] sm:$0xff]
        %v491 = vld [vmem:[%s188 + $0x7a0] sm:$0xff]
        %v492 = vld [vmem:[%s188 + $0x7a8] sm:$0xff]
        %v493 = vld [vmem:[%s188 + $0x7b0] sm:$0xff]
        %v494 = vld [vmem:[%s188 + $0x7b8] sm:$0xff]
        %v495 = vld [vmem:[%s188 + $0x7c0] sm:$0xff]
        %v496 = vld [vmem:[%s188 + $0x7c8] sm:$0xff]
        %v497 = vld [vmem:[%s188 + $0x7d0] sm:$0xff]
        %v498 = vld [vmem:[%s188 + $0x7d8] sm:$0xff]
        %v499 = vld [vmem:[%s188 + $0x7e0] sm:$0xff]
        %v500 = vld [vmem:[%s188 + $0x7e8] sm:$0xff]
        %v501 = vld [vmem:[%s188 + $0x7f0] sm:$0xff]
        %v502 = vld [vmem:[%s188 + $0x7f8] sm:$0xff]
        %v503 = vld [vmem:[%s188 + $0x800] sm:$0xff]
        %v504 = vld [vmem:[%s188 + $0x808] sm:$0xff]
        %v505 = vld [vmem:[%s188 + $0x810] sm:$0xff]
        %v506 = vld [vmem:[%s188 + $0x818] sm:$0xff]
        %v507 = vld [vmem:[%s188 + $0x820] sm:$0xff]
        %v508 = vld [vmem:[%s188 + $0x828] sm:$0xff]
        %v509 = vld [vmem:[%s188 + $0x830] sm:$0xff]
        %v510 = vld [vmem:[%s188 + $0x838] sm:$0xff]
        %v511 = vld [vmem:[%s188 + $0x840] sm:$0xff]
        %v512 = vld [vmem:[%s188 + $0x848] sm:$0xff]
        %v513 = vld [vmem:[%s188 + $0x850] sm:$0xff]
        %v514 = vld [vmem:[%s188 + $0x858] sm:$0xff]
        %v515 = vld [vmem:[%s188 + $0x860] sm:$0xff]
        %v516 = vld [vmem:[%s188 + $0x868] sm:$0xff]
        %v517 = vld [vmem:[%s188 + $0x870] sm:$0xff]
        %v518 = vld [vmem:[%s188 + $0x878] sm:$0xff]
        %v519 = vld [vmem:[%s188 + $0x880] sm:$0xff]
        %v520 = vld [vmem:[%s188 + $0x888] sm:$0xff]
        %v521 = vld [vmem:[%s188 + $0x890] sm:$0xff]
        %v522 = vld [vmem:[%s188 + $0x898] sm:$0xff]
        %v523 = vld [vmem:[%s188 + $0x8a0] sm:$0xff]
        %v524 = vld [vmem:[%s188 + $0x8a8] sm:$0xff]
        %v525 = vld [vmem:[%s188 + $0x8b0] sm:$0xff]
        %v526 = vld [vmem:[%s188 + $0x8b8] sm:$0xff]
        %v527 = vld [vmem:[%s188 + $0x8c0] sm:$0xff]
        %v528 = vld [vmem:[%s188 + $0x8c8] sm:$0xff]
        %v529 = vld [vmem:[%s188 + $0x8d0] sm:$0xff]
        %v530 = vld [vmem:[%s188 + $0x8d8] sm:$0xff]
        %v531 = vld [vmem:[%s188 + $0x8e0] sm:$0xff]
        %v532 = vld [vmem:[%s188 + $0x8e8] sm:$0xff]
        %v533 = vld [vmem:[%s188 + $0x8f0] sm:$0xff]
        %v534 = vld [vmem:[%s188 + $0x8f8] sm:$0xff]
        %v535 = vld [vmem:[%s188 + $0x900] sm:$0xff]
        %v536 = vld [vmem:[%s188 + $0x908] sm:$0xff]
        %v537 = vld [vmem:[%s188 + $0x910] sm:$0xff]
        %v538 = vld [vmem:[%s188 + $0x918] sm:$0xff]
        %v539 = vld [vmem:[%s188 + $0x920] sm:$0xff]
        %v540 = vld [vmem:[%s188 + $0x928] sm:$0xff]
        %v541 = vld [vmem:[%s188 + $0x930] sm:$0xff]
        %v542 = vld [vmem:[%s188 + $0x938] sm:$0xff]
        %v543 = vld [vmem:[%s188 + $0x940] sm:$0xff]
        %v544 = vld [vmem:[%s188 + $0x948] sm:$0xff]
        %v545 = vld [vmem:[%s188 + $0x950] sm:$0xff]
        %v546 = vld [vmem:[%s188 + $0x958] sm:$0xff]
        %v547 = vld [vmem:[%s188 + $0x960] sm:$0xff]
        %v548 = vld [vmem:[%s188 + $0x968] sm:$0xff]
        %v549 = vld [vmem:[%s188 + $0x970] sm:$0xff]
        %v550 = vld [vmem:[%s188 + $0x978] sm:$0xff]
        %v551 = vld [vmem:[%s188 + $0x980] sm:$0xff]
        %v552 = vld [vmem:[%s188 + $0x988] sm:$0xff]
        %v553 = vld [vmem:[%s188 + $0x990] sm:$0xff]
        %v554 = vld [vmem:[%s188 + $0x998] sm:$0xff]
        %v555 = vld [vmem:[%s188 + $0x9a0] sm:$0xff]
        %v556 = vld [vmem:[%s188 + $0x9a8] sm:$0xff]
        %v557 = vld [vmem:[%s188 + $0x9b0] sm:$0xff]
        %v558 = vld [vmem:[%s188 + $0x9b8] sm:$0xff]
        %v559 = vld [vmem:[%s188 + $0x9c0] sm:$0xff]
        %v560 = vld [vmem:[%s188 + $0x9c8] sm:$0xff]
        %v561 = vld [vmem:[%s188 + $0x9d0] sm:$0xff]
        %v562 = vld [vmem:[%s188 + $0x9d8] sm:$0xff]
        %v563 = vld [vmem:[%s188 + $0x9e0] sm:$0xff]
        %v564 = vld [vmem:[%s188 + $0x9e8] sm:$0xff]
        %v565 = vld [vmem:[%s188 + $0x9f0] sm:$0xff]
        %v566 = vld [vmem:[%s188 + $0x9f8] sm:$0xff]
        %v567 = vld [vmem:[%s188 + $0xa00] sm:$0xff]
        %v568 = vld [vmem:[%s188 + $0xa08] sm:$0xff]
        %v569 = vld [vmem:[%s188 + $0xa10] sm:$0xff]
        %v570 = vld [vmem:[%s188 + $0xa18] sm:$0xff]
        %v571 = vld [vmem:[%s188 + $0xa20] sm:$0xff]
        %v572 = vld [vmem:[%s188 + $0xa28] sm:$0xff]
        %v573 = vld [vmem:[%s188 + $0xa30] sm:$0xff]
        %v574 = vld [vmem:[%s188 + $0xa38] sm:$0xff]
        %v575 = vld [vmem:[%s188 + $0xa40] sm:$0xff]
        %v576 = vld [vmem:[%s188 + $0xa48] sm:$0xff]
        %v577 = vld [vmem:[%s188 + $0xa50] sm:$0xff]
        %v578 = vld [vmem:[%s188 + $0xa58] sm:$0xff]
        %v579 = vld [vmem:[%s188 + $0xa60] sm:$0xff]
        %v580 = vld [vmem:[%s188 + $0xa68] sm:$0xff]
        %v581 = vld [vmem:[%s188 + $0xa70] sm:$0xff]
        %v582 = vld [vmem:[%s188 + $0xa78] sm:$0xff]
        %v583 = vld [vmem:[%s188 + $0xa80] sm:$0xff]
        %v584 = vld [vmem:[%s188 + $0xa88] sm:$0xff]
        %v585 = vld [vmem:[%s188 + $0xa90] sm:$0xff]
        %v586 = vld [vmem:[%s188 + $0xa98] sm:$0xff]
        %v587 = vld [vmem:[%s188 + $0xaa0] sm:$0xff]
        %v588 = vld [vmem:[%s188 + $0xaa8] sm:$0xff]
        %v589 = vld [vmem:[%s188 + $0xab0] sm:$0xff]
        %v590 = vld [vmem:[%s188 + $0xab8] sm:$0xff]
        %v591 = vld [vmem:[%s188 + $0xac0] sm:$0xff]
        %v592 = vld [vmem:[%s188 + $0xac8] sm:$0xff]
        %v593 = vld [vmem:[%s188 + $0xad0] sm:$0xff]
        %v594 = vld [vmem:[%s188 + $0xad8] sm:$0xff]
        %v595 = vld [vmem:[%s188 + $0xae0] sm:$0xff]
        %v596 = vld [vmem:[%s188 + $0xae8] sm:$0xff]
        %v597 = vld [vmem:[%s188 + $0xaf0] sm:$0xff]
        %v598 = vld [vmem:[%s188 + $0xaf8] sm:$0xff]
        %v599 = vld [vmem:[%s188 + $0xb00] sm:$0xff]
        %v600 = vld [vmem:[%s188 + $0xb08] sm:$0xff]
        %v601 = vld [vmem:[%s188 + $0xb10] sm:$0xff]
        %v602 = vld [vmem:[%s188 + $0xb18] sm:$0xff]
        %v603 = vld [vmem:[%s188 + $0xb20] sm:$0xff]
        %v604 = vld [vmem:[%s188 + $0xb28] sm:$0xff]
        %v605 = vld [vmem:[%s188 + $0xb30] sm:$0xff]
        %v606 = vld [vmem:[%s188 + $0xb38] sm:$0xff]
        %v607 = vld [vmem:[%s188 + $0xb40] sm:$0xff]
        %v608 = vld [vmem:[%s188 + $0xb48] sm:$0xff]
        %v609 = vld [vmem:[%s188 + $0xb50] sm:$0xff]
        %v610 = vld [vmem:[%s188 + $0xb58] sm:$0xff]
        %v611 = vld [vmem:[%s188 + $0xb60] sm:$0xff]
        %v612 = vld [vmem:[%s188 + $0xb68] sm:$0xff]
        %v613 = vld [vmem:[%s188 + $0xb70] sm:$0xff]
        %v614 = vld [vmem:[%s188 + $0xb78] sm:$0xff]
        %v615 = vld [vmem:[%s188 + $0xb80] sm:$0xff]
        %v616 = vld [vmem:[%s188 + $0xb88] sm:$0xff]
        %v617 = vld [vmem:[%s188 + $0xb90] sm:$0xff]
        %v618 = vld [vmem:[%s188 + $0xb98] sm:$0xff]
        %v619 = vld [vmem:[%s188 + $0xba0] sm:$0xff]
        %v620 = vld [vmem:[%s188 + $0xba8] sm:$0xff]
        %v621 = vld [vmem:[%s188 + $0xbb0] sm:$0xff]
        %v622 = vld [vmem:[%s188 + $0xbb8] sm:$0xff]
        %v623 = vld [vmem:[%s188 + $0xbc0] sm:$0xff]
        %v624 = vld [vmem:[%s188 + $0xbc8] sm:$0xff]
        %v625 = vld [vmem:[%s188 + $0xbd0] sm:$0xff]
        %v626 = vld [vmem:[%s188 + $0xbd8] sm:$0xff]
        %v627 = vld [vmem:[%s188 + $0xbe0] sm:$0xff]
        %v628 = vld [vmem:[%s188 + $0xbe8] sm:$0xff]
        %v629 = vld [vmem:[%s188 + $0xbf0] sm:$0xff]
        %v630 = vld [vmem:[%s188 + $0xbf8] sm:$0xff]
        %v631 = vld [vmem:[%s198] sm:$0x3]
        %v633 = vperm.slane %v631, 0
        %v634 = vperm.slane %v631, 1
        %v649 = vunpack.c.l.b16 %v235
        %v650 = vunpack.c.h.b16 %v235
        %v651 = vunpack.c.l.b16 %v236
        %v652 = vunpack.c.h.b16 %v236
        %v653 = vunpack.c.l.b16 %v237
        %v654 = vunpack.c.h.b16 %v237
        %v655 = vunpack.c.l.b16 %v238
        %v656 = vunpack.c.h.b16 %v238
        %v657 = vunpack.c.l.b16 %v239
        %v658 = vunpack.c.h.b16 %v239
        %v659 = vunpack.c.l.b16 %v240
        %v660 = vunpack.c.h.b16 %v240
        %v661 = vunpack.c.l.b16 %v241
        %v662 = vunpack.c.h.b16 %v241
        %v663 = vunpack.c.l.b16 %v242
        %v664 = vunpack.c.h.b16 %v242
        %v665 = vunpack.c.l.b16 %v243
        %v666 = vunpack.c.h.b16 %v243
        %v667 = vunpack.c.l.b16 %v244
        %v668 = vunpack.c.h.b16 %v244
        %v669 = vunpack.c.l.b16 %v245
        %v670 = vunpack.c.h.b16 %v245
        %v671 = vunpack.c.l.b16 %v246
        %v672 = vunpack.c.h.b16 %v246
        %v673 = vpack.c.b16 %v649, %v649
        %v674 = vpack.c.b16 %v650, %v650
        %v675 = vpack.c.b16 %v651, %v651
        %v676 = vpack.c.b16 %v652, %v652
        %v677 = vpack.c.b16 %v653, %v653
        %v678 = vpack.c.b16 %v654, %v654
        %v679 = vpack.c.b16 %v655, %v655
        %v680 = vpack.c.b16 %v656, %v656
        %v681 = vpack.c.b16 %v657, %v657
        %v682 = vpack.c.b16 %v658, %v658
        %v683 = vpack.c.b16 %v659, %v659
        %v684 = vpack.c.b16 %v660, %v660
        %v685 = vpack.c.b16 %v661, %v661
        %v686 = vpack.c.b16 %v662, %v662
        %v687 = vpack.c.b16 %v663, %v663
        %v688 = vpack.c.b16 %v664, %v664
        %v689 = vpack.c.b16 %v665, %v665
        %v690 = vpack.c.b16 %v666, %v666
        %v691 = vpack.c.b16 %v667, %v667
        %v692 = vpack.c.b16 %v668, %v668
        %v693 = vpack.c.b16 %v669, %v669
        %v694 = vpack.c.b16 %v670, %v670
        %v695 = vpack.c.b16 %v671, %v671
        %v696 = vpack.c.b16 %v672, %v672
        %v1105 = vunpack.c.l.b16 %v247
        %v1106 = vunpack.c.h.b16 %v247
        %v1107 = vunpack.c.l.b16 %v248
        %v1108 = vunpack.c.h.b16 %v248
        %v1109 = vunpack.c.l.b16 %v249
        %v1110 = vunpack.c.h.b16 %v249
        %v1111 = vunpack.c.l.b16 %v250
        %v1112 = vunpack.c.h.b16 %v250
        %v1113 = vunpack.c.l.b16 %v251
        %v1114 = vunpack.c.h.b16 %v251
        %v1115 = vunpack.c.l.b16 %v252
        %v1116 = vunpack.c.h.b16 %v252
        %v1117 = vunpack.c.l.b16 %v253
        %v1118 = vunpack.c.h.b16 %v253
        %v1119 = vunpack.c.l.b16 %v254
        %v1120 = vunpack.c.h.b16 %v254
        %v1121 = vunpack.c.l.b16 %v255
        %v1122 = vunpack.c.h.b16 %v255
        %v1123 = vunpack.c.l.b16 %v256
        %v1124 = vunpack.c.h.b16 %v256
        %v1125 = vunpack.c.l.b16 %v257
        %v1126 = vunpack.c.h.b16 %v257
        %v1127 = vunpack.c.l.b16 %v258
        %v1128 = vunpack.c.h.b16 %v258
        %v1129 = vunpack.c.l.b16 %v259
        %v1130 = vunpack.c.h.b16 %v259
        %v1131 = vunpack.c.l.b16 %v260
        %v1132 = vunpack.c.h.b16 %v260
        %v1133 = vunpack.c.l.b16 %v261
        %v1134 = vunpack.c.h.b16 %v261
        %v1135 = vunpack.c.l.b16 %v262
        %v1136 = vunpack.c.h.b16 %v262
        %v1137 = vunpack.c.l.b16 %v263
        %v1138 = vunpack.c.h.b16 %v263
        %v1139 = vunpack.c.l.b16 %v264
        %v1140 = vunpack.c.h.b16 %v264
        %v1141 = vunpack.c.l.b16 %v265
        %v1142 = vunpack.c.h.b16 %v265
        %v1143 = vunpack.c.l.b16 %v266
        %v1144 = vunpack.c.h.b16 %v266
        %v1145 = vunpack.c.l.b16 %v267
        %v1146 = vunpack.c.h.b16 %v267
        %v1147 = vunpack.c.l.b16 %v268
        %v1148 = vunpack.c.h.b16 %v268
        %v1149 = vunpack.c.l.b16 %v269
        %v1150 = vunpack.c.h.b16 %v269
        %v1151 = vunpack.c.l.b16 %v270
        %v1152 = vunpack.c.h.b16 %v270
        %v1153 = vunpack.c.l.b16 %v271
        %v1154 = vunpack.c.h.b16 %v271
        %v1155 = vunpack.c.l.b16 %v272
        %v1156 = vunpack.c.h.b16 %v272
        %v1157 = vunpack.c.l.b16 %v273
        %v1158 = vunpack.c.h.b16 %v273
        %v1159 = vunpack.c.l.b16 %v274
        %v1160 = vunpack.c.h.b16 %v274
        %v1161 = vunpack.c.l.b16 %v275
        %v1162 = vunpack.c.h.b16 %v275
        %v1163 = vunpack.c.l.b16 %v276
        %v1164 = vunpack.c.h.b16 %v276
        %v1165 = vunpack.c.l.b16 %v277
        %v1166 = vunpack.c.h.b16 %v277
        %v1167 = vunpack.c.l.b16 %v278
        %v1168 = vunpack.c.h.b16 %v278
        %v1169 = vunpack.c.l.b16 %v279
        %v1170 = vunpack.c.h.b16 %v279
        %v1171 = vunpack.c.l.b16 %v280
        %v1172 = vunpack.c.h.b16 %v280
        %v1173 = vunpack.c.l.b16 %v281
        %v1174 = vunpack.c.h.b16 %v281
        %v1175 = vunpack.c.l.b16 %v282
        %v1176 = vunpack.c.h.b16 %v282
        %v1177 = vunpack.c.l.b16 %v283
        %v1178 = vunpack.c.h.b16 %v283
        %v1179 = vunpack.c.l.b16 %v284
        %v1180 = vunpack.c.h.b16 %v284
        %v1181 = vunpack.c.l.b16 %v285
        %v1182 = vunpack.c.h.b16 %v285
        %v1183 = vunpack.c.l.b16 %v286
        %v1184 = vunpack.c.h.b16 %v286
        %v1185 = vunpack.c.l.b16 %v287
        %v1186 = vunpack.c.h.b16 %v287
        %v1187 = vunpack.c.l.b16 %v288
        %v1188 = vunpack.c.h.b16 %v288
        %v1189 = vunpack.c.l.b16 %v289
        %v1190 = vunpack.c.h.b16 %v289
        %v1191 = vunpack.c.l.b16 %v290
        %v1192 = vunpack.c.h.b16 %v290
        %v1193 = vunpack.c.l.b16 %v291
        %v1194 = vunpack.c.h.b16 %v291
        %v1195 = vunpack.c.l.b16 %v292
        %v1196 = vunpack.c.h.b16 %v292
        %v1197 = vunpack.c.l.b16 %v293
        %v1198 = vunpack.c.h.b16 %v293
        %v1199 = vunpack.c.l.b16 %v294
        %v1200 = vunpack.c.h.b16 %v294
        %v1201 = vunpack.c.l.b16 %v295
        %v1202 = vunpack.c.h.b16 %v295
        %v1203 = vunpack.c.l.b16 %v296
        %v1204 = vunpack.c.h.b16 %v296
        %v1205 = vunpack.c.l.b16 %v297
        %v1206 = vunpack.c.h.b16 %v297
        %v1207 = vunpack.c.l.b16 %v298
        %v1208 = vunpack.c.h.b16 %v298
        %v1209 = vunpack.c.l.b16 %v299
        %v1210 = vunpack.c.h.b16 %v299
        %v1211 = vunpack.c.l.b16 %v300
        %v1212 = vunpack.c.h.b16 %v300
        %v1213 = vunpack.c.l.b16 %v301
        %v1214 = vunpack.c.h.b16 %v301
        %v1215 = vunpack.c.l.b16 %v302
        %v1216 = vunpack.c.h.b16 %v302
        %v1217 = vunpack.c.l.b16 %v303
        %v1218 = vunpack.c.h.b16 %v303
        %v1219 = vunpack.c.l.b16 %v304
        %v1220 = vunpack.c.h.b16 %v304
        %v1221 = vunpack.c.l.b16 %v305
        %v1222 = vunpack.c.h.b16 %v305
        %v1223 = vunpack.c.l.b16 %v306
        %v1224 = vunpack.c.h.b16 %v306
        %v1225 = vunpack.c.l.b16 %v307
        %v1226 = vunpack.c.h.b16 %v307
        %v1227 = vunpack.c.l.b16 %v308
        %v1228 = vunpack.c.h.b16 %v308
        %v1229 = vunpack.c.l.b16 %v309
        %v1230 = vunpack.c.h.b16 %v309
        %v1231 = vunpack.c.l.b16 %v310
        %v1232 = vunpack.c.h.b16 %v310
        %v1233 = vunpack.c.l.b16 %v311
        %v1234 = vunpack.c.h.b16 %v311
        %v1235 = vunpack.c.l.b16 %v312
        %v1236 = vunpack.c.h.b16 %v312
        %v1237 = vunpack.c.l.b16 %v313
        %v1238 = vunpack.c.h.b16 %v313
        %v1239 = vunpack.c.l.b16 %v314
        %v1240 = vunpack.c.h.b16 %v314
        %v1241 = vunpack.c.l.b16 %v315
        %v1242 = vunpack.c.h.b16 %v315
        %v1243 = vunpack.c.l.b16 %v316
        %v1244 = vunpack.c.h.b16 %v316
        %v1245 = vunpack.c.l.b16 %v317
        %v1246 = vunpack.c.h.b16 %v317
        %v1247 = vunpack.c.l.b16 %v318
        %v1248 = vunpack.c.h.b16 %v318
        %v1249 = vunpack.c.l.b16 %v319
        %v1250 = vunpack.c.h.b16 %v319
        %v1251 = vunpack.c.l.b16 %v320
        %v1252 = vunpack.c.h.b16 %v320
        %v1253 = vunpack.c.l.b16 %v321
        %v1254 = vunpack.c.h.b16 %v321
        %v1255 = vunpack.c.l.b16 %v322
        %v1256 = vunpack.c.h.b16 %v322
        %v1257 = vunpack.c.l.b16 %v323
        %v1258 = vunpack.c.h.b16 %v323
        %v1259 = vunpack.c.l.b16 %v324
        %v1260 = vunpack.c.h.b16 %v324
        %v1261 = vunpack.c.l.b16 %v325
        %v1262 = vunpack.c.h.b16 %v325
        %v1263 = vunpack.c.l.b16 %v326
        %v1264 = vunpack.c.h.b16 %v326
        %v1265 = vunpack.c.l.b16 %v327
        %v1266 = vunpack.c.h.b16 %v327
        %v1267 = vunpack.c.l.b16 %v328
        %v1268 = vunpack.c.h.b16 %v328
        %v1269 = vunpack.c.l.b16 %v329
        %v1270 = vunpack.c.h.b16 %v329
        %v1271 = vunpack.c.l.b16 %v330
        %v1272 = vunpack.c.h.b16 %v330
        %v1273 = vunpack.c.l.b16 %v331
        %v1274 = vunpack.c.h.b16 %v331
        %v1275 = vunpack.c.l.b16 %v332
        %v1276 = vunpack.c.h.b16 %v332
        %v1277 = vunpack.c.l.b16 %v333
        %v1278 = vunpack.c.h.b16 %v333
        %v1279 = vunpack.c.l.b16 %v334
        %v1280 = vunpack.c.h.b16 %v334
        %v1281 = vunpack.c.l.b16 %v335
        %v1282 = vunpack.c.h.b16 %v335
        %v1283 = vunpack.c.l.b16 %v336
        %v1284 = vunpack.c.h.b16 %v336
        %v1285 = vunpack.c.l.b16 %v337
        %v1286 = vunpack.c.h.b16 %v337
        %v1287 = vunpack.c.l.b16 %v338
        %v1288 = vunpack.c.h.b16 %v338
        %v1289 = vunpack.c.l.b16 %v339
        %v1290 = vunpack.c.h.b16 %v339
        %v1291 = vunpack.c.l.b16 %v340
        %v1292 = vunpack.c.h.b16 %v340
        %v1293 = vunpack.c.l.b16 %v341
        %v1294 = vunpack.c.h.b16 %v341
        %v1295 = vunpack.c.l.b16 %v342
        %v1296 = vunpack.c.h.b16 %v342
        %v1297 = vunpack.c.l.b16 %v343
        %v1298 = vunpack.c.h.b16 %v343
        %v1299 = vunpack.c.l.b16 %v344
        %v1300 = vunpack.c.h.b16 %v344
        %v1301 = vunpack.c.l.b16 %v345
        %v1302 = vunpack.c.h.b16 %v345
        %v1303 = vunpack.c.l.b16 %v346
        %v1304 = vunpack.c.h.b16 %v346
        %v1305 = vunpack.c.l.b16 %v347
        %v1306 = vunpack.c.h.b16 %v347
        %v1307 = vunpack.c.l.b16 %v348
        %v1308 = vunpack.c.h.b16 %v348
        %v1309 = vunpack.c.l.b16 %v349
        %v1310 = vunpack.c.h.b16 %v349
        %v1311 = vunpack.c.l.b16 %v350
        %v1312 = vunpack.c.h.b16 %v350
        %v1313 = vunpack.c.l.b16 %v351
        %v1314 = vunpack.c.h.b16 %v351
        %v1315 = vunpack.c.l.b16 %v352
        %v1316 = vunpack.c.h.b16 %v352
        %v1317 = vunpack.c.l.b16 %v353
        %v1318 = vunpack.c.h.b16 %v353
        %v1319 = vunpack.c.l.b16 %v354
        %v1320 = vunpack.c.h.b16 %v354
        %v1321 = vunpack.c.l.b16 %v355
        %v1322 = vunpack.c.h.b16 %v355
        %v1323 = vunpack.c.l.b16 %v356
        %v1324 = vunpack.c.h.b16 %v356
        %v1325 = vunpack.c.l.b16 %v357
        %v1326 = vunpack.c.h.b16 %v357
        %v1327 = vunpack.c.l.b16 %v358
        %v1328 = vunpack.c.h.b16 %v358
        %v1329 = vunpack.c.l.b16 %v359
        %v1330 = vunpack.c.h.b16 %v359
        %v1331 = vunpack.c.l.b16 %v360
        %v1332 = vunpack.c.h.b16 %v360
        %v1333 = vunpack.c.l.b16 %v361
        %v1334 = vunpack.c.h.b16 %v361
        %v1335 = vunpack.c.l.b16 %v362
        %v1336 = vunpack.c.h.b16 %v362
        %v1337 = vunpack.c.l.b16 %v363
        %v1338 = vunpack.c.h.b16 %v363
        %v1339 = vunpack.c.l.b16 %v364
        %v1340 = vunpack.c.h.b16 %v364
        %v1341 = vunpack.c.l.b16 %v365
        %v1342 = vunpack.c.h.b16 %v365
        %v1343 = vunpack.c.l.b16 %v366
        %v1344 = vunpack.c.h.b16 %v366
        %v1345 = vunpack.c.l.b16 %v367
        %v1346 = vunpack.c.h.b16 %v367
        %v1347 = vunpack.c.l.b16 %v368
        %v1348 = vunpack.c.h.b16 %v368
        %v1349 = vunpack.c.l.b16 %v369
        %v1350 = vunpack.c.h.b16 %v369
        %v1351 = vunpack.c.l.b16 %v370
        %v1352 = vunpack.c.h.b16 %v370
        %v1353 = vunpack.c.l.b16 %v371
        %v1354 = vunpack.c.h.b16 %v371
        %v1355 = vunpack.c.l.b16 %v372
        %v1356 = vunpack.c.h.b16 %v372
        %v1357 = vunpack.c.l.b16 %v373
        %v1358 = vunpack.c.h.b16 %v373
        %v1359 = vunpack.c.l.b16 %v374
        %v1360 = vunpack.c.h.b16 %v374
        %v1361 = vunpack.c.l.b16 %v375
        %v1362 = vunpack.c.h.b16 %v375
        %v1363 = vunpack.c.l.b16 %v376
        %v1364 = vunpack.c.h.b16 %v376
        %v1365 = vunpack.c.l.b16 %v377
        %v1366 = vunpack.c.h.b16 %v377
        %v1367 = vunpack.c.l.b16 %v378
        %v1368 = vunpack.c.h.b16 %v378
        %v1369 = vunpack.c.l.b16 %v379
        %v1370 = vunpack.c.h.b16 %v379
        %v1371 = vunpack.c.l.b16 %v380
        %v1372 = vunpack.c.h.b16 %v380
        %v1373 = vunpack.c.l.b16 %v381
        %v1374 = vunpack.c.h.b16 %v381
        %v1375 = vunpack.c.l.b16 %v382
        %v1376 = vunpack.c.h.b16 %v382
        %v1377 = vunpack.c.l.b16 %v383
        %v1378 = vunpack.c.h.b16 %v383
        %v1379 = vunpack.c.l.b16 %v384
        %v1380 = vunpack.c.h.b16 %v384
        %v1381 = vunpack.c.l.b16 %v385
        %v1382 = vunpack.c.h.b16 %v385
        %v1383 = vunpack.c.l.b16 %v386
        %v1384 = vunpack.c.h.b16 %v386
        %v1385 = vunpack.c.l.b16 %v387
        %v1386 = vunpack.c.h.b16 %v387
        %v1387 = vunpack.c.l.b16 %v388
        %v1388 = vunpack.c.h.b16 %v388
        %v1389 = vunpack.c.l.b16 %v389
        %v1390 = vunpack.c.h.b16 %v389
        %v1391 = vunpack.c.l.b16 %v390
        %v1392 = vunpack.c.h.b16 %v390
        %v1393 = vunpack.c.l.b16 %v391
        %v1394 = vunpack.c.h.b16 %v391
        %v1395 = vunpack.c.l.b16 %v392
        %v1396 = vunpack.c.h.b16 %v392
        %v1397 = vunpack.c.l.b16 %v393
        %v1398 = vunpack.c.h.b16 %v393
        %v1399 = vunpack.c.l.b16 %v394
        %v1400 = vunpack.c.h.b16 %v394
        %v1401 = vunpack.c.l.b16 %v395
        %v1402 = vunpack.c.h.b16 %v395
        %v1403 = vunpack.c.l.b16 %v396
        %v1404 = vunpack.c.h.b16 %v396
        %v1405 = vunpack.c.l.b16 %v397
        %v1406 = vunpack.c.h.b16 %v397
        %v1407 = vunpack.c.l.b16 %v398
        %v1408 = vunpack.c.h.b16 %v398
        %v1409 = vunpack.c.l.b16 %v399
        %v1410 = vunpack.c.h.b16 %v399
        %v1411 = vunpack.c.l.b16 %v400
        %v1412 = vunpack.c.h.b16 %v400
        %v1413 = vunpack.c.l.b16 %v401
        %v1414 = vunpack.c.h.b16 %v401
        %v1415 = vunpack.c.l.b16 %v402
        %v1416 = vunpack.c.h.b16 %v402
        %v1417 = vunpack.c.l.b16 %v403
        %v1418 = vunpack.c.h.b16 %v403
        %v1419 = vunpack.c.l.b16 %v404
        %v1420 = vunpack.c.h.b16 %v404
        %v1421 = vunpack.c.l.b16 %v405
        %v1422 = vunpack.c.h.b16 %v405
        %v1423 = vunpack.c.l.b16 %v406
        %v1424 = vunpack.c.h.b16 %v406
        %v1425 = vunpack.c.l.b16 %v407
        %v1426 = vunpack.c.h.b16 %v407
        %v1427 = vunpack.c.l.b16 %v408
        %v1428 = vunpack.c.h.b16 %v408
        %v1429 = vunpack.c.l.b16 %v409
        %v1430 = vunpack.c.h.b16 %v409
        %v1431 = vunpack.c.l.b16 %v410
        %v1432 = vunpack.c.h.b16 %v410
        %v1433 = vunpack.c.l.b16 %v411
        %v1434 = vunpack.c.h.b16 %v411
        %v1435 = vunpack.c.l.b16 %v412
        %v1436 = vunpack.c.h.b16 %v412
        %v1437 = vunpack.c.l.b16 %v413
        %v1438 = vunpack.c.h.b16 %v413
        %v1439 = vunpack.c.l.b16 %v414
        %v1440 = vunpack.c.h.b16 %v414
        %v1441 = vunpack.c.l.b16 %v415
        %v1442 = vunpack.c.h.b16 %v415
        %v1443 = vunpack.c.l.b16 %v416
        %v1444 = vunpack.c.h.b16 %v416
        %v1445 = vunpack.c.l.b16 %v417
        %v1446 = vunpack.c.h.b16 %v417
        %v1447 = vunpack.c.l.b16 %v418
        %v1448 = vunpack.c.h.b16 %v418
        %v1449 = vunpack.c.l.b16 %v419
        %v1450 = vunpack.c.h.b16 %v419
        %v1451 = vunpack.c.l.b16 %v420
        %v1452 = vunpack.c.h.b16 %v420
        %v1453 = vunpack.c.l.b16 %v421
        %v1454 = vunpack.c.h.b16 %v421
        %v1455 = vunpack.c.l.b16 %v422
        %v1456 = vunpack.c.h.b16 %v422
        %v1457 = vunpack.c.l.b16 %v423
        %v1458 = vunpack.c.h.b16 %v423
        %v1459 = vunpack.c.l.b16 %v424
        %v1460 = vunpack.c.h.b16 %v424
        %v1461 = vunpack.c.l.b16 %v425
        %v1462 = vunpack.c.h.b16 %v425
        %v1463 = vunpack.c.l.b16 %v426
        %v1464 = vunpack.c.h.b16 %v426
        %v1465 = vunpack.c.l.b16 %v427
        %v1466 = vunpack.c.h.b16 %v427
        %v1467 = vunpack.c.l.b16 %v428
        %v1468 = vunpack.c.h.b16 %v428
        %v1469 = vunpack.c.l.b16 %v429
        %v1470 = vunpack.c.h.b16 %v429
        %v1471 = vunpack.c.l.b16 %v430
        %v1472 = vunpack.c.h.b16 %v430
        %v1473 = vunpack.c.l.b16 %v431
        %v1474 = vunpack.c.h.b16 %v431
        %v1475 = vunpack.c.l.b16 %v432
        %v1476 = vunpack.c.h.b16 %v432
        %v1477 = vunpack.c.l.b16 %v433
        %v1478 = vunpack.c.h.b16 %v433
        %v1479 = vunpack.c.l.b16 %v434
        %v1480 = vunpack.c.h.b16 %v434
        %v1481 = vunpack.c.l.b16 %v435
        %v1482 = vunpack.c.h.b16 %v435
        %v1483 = vunpack.c.l.b16 %v436
        %v1484 = vunpack.c.h.b16 %v436
        %v1485 = vunpack.c.l.b16 %v437
        %v1486 = vunpack.c.h.b16 %v437
        %v1487 = vunpack.c.l.b16 %v438
        %v1488 = vunpack.c.h.b16 %v438
        %v1489 = vunpack.c.l.b16 %v439
        %v1490 = vunpack.c.h.b16 %v439
        %v1491 = vunpack.c.l.b16 %v440
        %v1492 = vunpack.c.h.b16 %v440
        %v1493 = vunpack.c.l.b16 %v441
        %v1494 = vunpack.c.h.b16 %v441
        %v1495 = vunpack.c.l.b16 %v442
        %v1496 = vunpack.c.h.b16 %v442
        %v1497 = vunpack.c.l.b16 %v443
        %v1498 = vunpack.c.h.b16 %v443
        %v1499 = vunpack.c.l.b16 %v444
        %v1500 = vunpack.c.h.b16 %v444
        %v1501 = vunpack.c.l.b16 %v445
        %v1502 = vunpack.c.h.b16 %v445
        %v1503 = vunpack.c.l.b16 %v446
        %v1504 = vunpack.c.h.b16 %v446
        %v1505 = vunpack.c.l.b16 %v447
        %v1506 = vunpack.c.h.b16 %v447
        %v1507 = vunpack.c.l.b16 %v448
        %v1508 = vunpack.c.h.b16 %v448
        %v1509 = vunpack.c.l.b16 %v449
        %v1510 = vunpack.c.h.b16 %v449
        %v1511 = vunpack.c.l.b16 %v450
        %v1512 = vunpack.c.h.b16 %v450
        %v1513 = vunpack.c.l.b16 %v451
        %v1514 = vunpack.c.h.b16 %v451
        %v1515 = vunpack.c.l.b16 %v452
        %v1516 = vunpack.c.h.b16 %v452
        %v1517 = vunpack.c.l.b16 %v453
        %v1518 = vunpack.c.h.b16 %v453
        %v1519 = vunpack.c.l.b16 %v454
        %v1520 = vunpack.c.h.b16 %v454
        %v1521 = vunpack.c.l.b16 %v455
        %v1522 = vunpack.c.h.b16 %v455
        %v1523 = vunpack.c.l.b16 %v456
        %v1524 = vunpack.c.h.b16 %v456
        %v1525 = vunpack.c.l.b16 %v457
        %v1526 = vunpack.c.h.b16 %v457
        %v1527 = vunpack.c.l.b16 %v458
        %v1528 = vunpack.c.h.b16 %v458
        %v1529 = vunpack.c.l.b16 %v459
        %v1530 = vunpack.c.h.b16 %v459
        %v1531 = vunpack.c.l.b16 %v460
        %v1532 = vunpack.c.h.b16 %v460
        %v1533 = vunpack.c.l.b16 %v461
        %v1534 = vunpack.c.h.b16 %v461
        %v1535 = vunpack.c.l.b16 %v462
        %v1536 = vunpack.c.h.b16 %v462
        %v1537 = vunpack.c.l.b16 %v463
        %v1538 = vunpack.c.h.b16 %v463
        %v1539 = vunpack.c.l.b16 %v464
        %v1540 = vunpack.c.h.b16 %v464
        %v1541 = vunpack.c.l.b16 %v465
        %v1542 = vunpack.c.h.b16 %v465
        %v1543 = vunpack.c.l.b16 %v466
        %v1544 = vunpack.c.h.b16 %v466
        %v1545 = vunpack.c.l.b16 %v467
        %v1546 = vunpack.c.h.b16 %v467
        %v1547 = vunpack.c.l.b16 %v468
        %v1548 = vunpack.c.h.b16 %v468
        %v1549 = vunpack.c.l.b16 %v469
        %v1550 = vunpack.c.h.b16 %v469
        %v1551 = vunpack.c.l.b16 %v470
        %v1552 = vunpack.c.h.b16 %v470
        %v1553 = vunpack.c.l.b16 %v471
        %v1554 = vunpack.c.h.b16 %v471
        %v1555 = vunpack.c.l.b16 %v472
        %v1556 = vunpack.c.h.b16 %v472
        %v1557 = vunpack.c.l.b16 %v473
        %v1558 = vunpack.c.h.b16 %v473
        %v1559 = vunpack.c.l.b16 %v474
        %v1560 = vunpack.c.h.b16 %v474
        %v1561 = vunpack.c.l.b16 %v475
        %v1562 = vunpack.c.h.b16 %v475
        %v1563 = vunpack.c.l.b16 %v476
        %v1564 = vunpack.c.h.b16 %v476
        %v1565 = vunpack.c.l.b16 %v477
        %v1566 = vunpack.c.h.b16 %v477
        %v1567 = vunpack.c.l.b16 %v478
        %v1568 = vunpack.c.h.b16 %v478
        %v1569 = vunpack.c.l.b16 %v479
        %v1570 = vunpack.c.h.b16 %v479
        %v1571 = vunpack.c.l.b16 %v480
        %v1572 = vunpack.c.h.b16 %v480
        %v1573 = vunpack.c.l.b16 %v481
        %v1574 = vunpack.c.h.b16 %v481
        %v1575 = vunpack.c.l.b16 %v482
        %v1576 = vunpack.c.h.b16 %v482
        %v1577 = vunpack.c.l.b16 %v483
        %v1578 = vunpack.c.h.b16 %v483
        %v1579 = vunpack.c.l.b16 %v484
        %v1580 = vunpack.c.h.b16 %v484
        %v1581 = vunpack.c.l.b16 %v485
        %v1582 = vunpack.c.h.b16 %v485
        %v1583 = vunpack.c.l.b16 %v486
        %v1584 = vunpack.c.h.b16 %v486
        %v1585 = vunpack.c.l.b16 %v487
        %v1586 = vunpack.c.h.b16 %v487
        %v1587 = vunpack.c.l.b16 %v488
        %v1588 = vunpack.c.h.b16 %v488
        %v1589 = vunpack.c.l.b16 %v489
        %v1590 = vunpack.c.h.b16 %v489
        %v1591 = vunpack.c.l.b16 %v490
        %v1592 = vunpack.c.h.b16 %v490
        %v1593 = vunpack.c.l.b16 %v491
        %v1594 = vunpack.c.h.b16 %v491
        %v1595 = vunpack.c.l.b16 %v492
        %v1596 = vunpack.c.h.b16 %v492
        %v1597 = vunpack.c.l.b16 %v493
        %v1598 = vunpack.c.h.b16 %v493
        %v1599 = vunpack.c.l.b16 %v494
        %v1600 = vunpack.c.h.b16 %v494
        %v1601 = vunpack.c.l.b16 %v495
        %v1602 = vunpack.c.h.b16 %v495
        %v1603 = vunpack.c.l.b16 %v496
        %v1604 = vunpack.c.h.b16 %v496
        %v1605 = vunpack.c.l.b16 %v497
        %v1606 = vunpack.c.h.b16 %v497
        %v1607 = vunpack.c.l.b16 %v498
        %v1608 = vunpack.c.h.b16 %v498
        %v1609 = vunpack.c.l.b16 %v499
        %v1610 = vunpack.c.h.b16 %v499
        %v1611 = vunpack.c.l.b16 %v500
        %v1612 = vunpack.c.h.b16 %v500
        %v1613 = vunpack.c.l.b16 %v501
        %v1614 = vunpack.c.h.b16 %v501
        %v1615 = vunpack.c.l.b16 %v502
        %v1616 = vunpack.c.h.b16 %v502
        %v1617 = vunpack.c.l.b16 %v503
        %v1618 = vunpack.c.h.b16 %v503
        %v1619 = vunpack.c.l.b16 %v504
        %v1620 = vunpack.c.h.b16 %v504
        %v1621 = vunpack.c.l.b16 %v505
        %v1622 = vunpack.c.h.b16 %v505
        %v1623 = vunpack.c.l.b16 %v506
        %v1624 = vunpack.c.h.b16 %v506
        %v1625 = vunpack.c.l.b16 %v507
        %v1626 = vunpack.c.h.b16 %v507
        %v1627 = vunpack.c.l.b16 %v508
        %v1628 = vunpack.c.h.b16 %v508
        %v1629 = vunpack.c.l.b16 %v509
        %v1630 = vunpack.c.h.b16 %v509
        %v1631 = vunpack.c.l.b16 %v510
        %v1632 = vunpack.c.h.b16 %v510
        %v1633 = vunpack.c.l.b16 %v511
        %v1634 = vunpack.c.h.b16 %v511
        %v1635 = vunpack.c.l.b16 %v512
        %v1636 = vunpack.c.h.b16 %v512
        %v1637 = vunpack.c.l.b16 %v513
        %v1638 = vunpack.c.h.b16 %v513
        %v1639 = vunpack.c.l.b16 %v514
        %v1640 = vunpack.c.h.b16 %v514
        %v1641 = vunpack.c.l.b16 %v515
        %v1642 = vunpack.c.h.b16 %v515
        %v1643 = vunpack.c.l.b16 %v516
        %v1644 = vunpack.c.h.b16 %v516
        %v1645 = vunpack.c.l.b16 %v517
        %v1646 = vunpack.c.h.b16 %v517
        %v1647 = vunpack.c.l.b16 %v518
        %v1648 = vunpack.c.h.b16 %v518
        %v1649 = vunpack.c.l.b16 %v519
        %v1650 = vunpack.c.h.b16 %v519
        %v1651 = vunpack.c.l.b16 %v520
        %v1652 = vunpack.c.h.b16 %v520
        %v1653 = vunpack.c.l.b16 %v521
        %v1654 = vunpack.c.h.b16 %v521
        %v1655 = vunpack.c.l.b16 %v522
        %v1656 = vunpack.c.h.b16 %v522
        %v1657 = vunpack.c.l.b16 %v523
        %v1658 = vunpack.c.h.b16 %v523
        %v1659 = vunpack.c.l.b16 %v524
        %v1660 = vunpack.c.h.b16 %v524
        %v1661 = vunpack.c.l.b16 %v525
        %v1662 = vunpack.c.h.b16 %v525
        %v1663 = vunpack.c.l.b16 %v526
        %v1664 = vunpack.c.h.b16 %v526
        %v1665 = vunpack.c.l.b16 %v527
        %v1666 = vunpack.c.h.b16 %v527
        %v1667 = vunpack.c.l.b16 %v528
        %v1668 = vunpack.c.h.b16 %v528
        %v1669 = vunpack.c.l.b16 %v529
        %v1670 = vunpack.c.h.b16 %v529
        %v1671 = vunpack.c.l.b16 %v530
        %v1672 = vunpack.c.h.b16 %v530
        %v1673 = vunpack.c.l.b16 %v531
        %v1674 = vunpack.c.h.b16 %v531
        %v1675 = vunpack.c.l.b16 %v532
        %v1676 = vunpack.c.h.b16 %v532
        %v1677 = vunpack.c.l.b16 %v533
        %v1678 = vunpack.c.h.b16 %v533
        %v1679 = vunpack.c.l.b16 %v534
        %v1680 = vunpack.c.h.b16 %v534
        %v1681 = vunpack.c.l.b16 %v535
        %v1682 = vunpack.c.h.b16 %v535
        %v1683 = vunpack.c.l.b16 %v536
        %v1684 = vunpack.c.h.b16 %v536
        %v1685 = vunpack.c.l.b16 %v537
        %v1686 = vunpack.c.h.b16 %v537
        %v1687 = vunpack.c.l.b16 %v538
        %v1688 = vunpack.c.h.b16 %v538
        %v1689 = vunpack.c.l.b16 %v539
        %v1690 = vunpack.c.h.b16 %v539
        %v1691 = vunpack.c.l.b16 %v540
        %v1692 = vunpack.c.h.b16 %v540
        %v1693 = vunpack.c.l.b16 %v541
        %v1694 = vunpack.c.h.b16 %v541
        %v1695 = vunpack.c.l.b16 %v542
        %v1696 = vunpack.c.h.b16 %v542
        %v1697 = vunpack.c.l.b16 %v543
        %v1698 = vunpack.c.h.b16 %v543
        %v1699 = vunpack.c.l.b16 %v544
        %v1700 = vunpack.c.h.b16 %v544
        %v1701 = vunpack.c.l.b16 %v545
        %v1702 = vunpack.c.h.b16 %v545
        %v1703 = vunpack.c.l.b16 %v546
        %v1704 = vunpack.c.h.b16 %v546
        %v1705 = vunpack.c.l.b16 %v547
        %v1706 = vunpack.c.h.b16 %v547
        %v1707 = vunpack.c.l.b16 %v548
        %v1708 = vunpack.c.h.b16 %v548
        %v1709 = vunpack.c.l.b16 %v549
        %v1710 = vunpack.c.h.b16 %v549
        %v1711 = vunpack.c.l.b16 %v550
        %v1712 = vunpack.c.h.b16 %v550
        %v1713 = vunpack.c.l.b16 %v551
        %v1714 = vunpack.c.h.b16 %v551
        %v1715 = vunpack.c.l.b16 %v552
        %v1716 = vunpack.c.h.b16 %v552
        %v1717 = vunpack.c.l.b16 %v553
        %v1718 = vunpack.c.h.b16 %v553
        %v1719 = vunpack.c.l.b16 %v554
        %v1720 = vunpack.c.h.b16 %v554
        %v1721 = vunpack.c.l.b16 %v555
        %v1722 = vunpack.c.h.b16 %v555
        %v1723 = vunpack.c.l.b16 %v556
        %v1724 = vunpack.c.h.b16 %v556
        %v1725 = vunpack.c.l.b16 %v557
        %v1726 = vunpack.c.h.b16 %v557
        %v1727 = vunpack.c.l.b16 %v558
        %v1728 = vunpack.c.h.b16 %v558
        %v1729 = vunpack.c.l.b16 %v559
        %v1730 = vunpack.c.h.b16 %v559
        %v1731 = vunpack.c.l.b16 %v560
        %v1732 = vunpack.c.h.b16 %v560
        %v1733 = vunpack.c.l.b16 %v561
        %v1734 = vunpack.c.h.b16 %v561
        %v1735 = vunpack.c.l.b16 %v562
        %v1736 = vunpack.c.h.b16 %v562
        %v1737 = vunpack.c.l.b16 %v563
        %v1738 = vunpack.c.h.b16 %v563
        %v1739 = vunpack.c.l.b16 %v564
        %v1740 = vunpack.c.h.b16 %v564
        %v1741 = vunpack.c.l.b16 %v565
        %v1742 = vunpack.c.h.b16 %v565
        %v1743 = vunpack.c.l.b16 %v566
        %v1744 = vunpack.c.h.b16 %v566
        %v1745 = vunpack.c.l.b16 %v567
        %v1746 = vunpack.c.h.b16 %v567
        %v1747 = vunpack.c.l.b16 %v568
        %v1748 = vunpack.c.h.b16 %v568
        %v1749 = vunpack.c.l.b16 %v569
        %v1750 = vunpack.c.h.b16 %v569
        %v1751 = vunpack.c.l.b16 %v570
        %v1752 = vunpack.c.h.b16 %v570
        %v1753 = vunpack.c.l.b16 %v571
        %v1754 = vunpack.c.h.b16 %v571
        %v1755 = vunpack.c.l.b16 %v572
        %v1756 = vunpack.c.h.b16 %v572
        %v1757 = vunpack.c.l.b16 %v573
        %v1758 = vunpack.c.h.b16 %v573
        %v1759 = vunpack.c.l.b16 %v574
        %v1760 = vunpack.c.h.b16 %v574
        %v1761 = vunpack.c.l.b16 %v575
        %v1762 = vunpack.c.h.b16 %v575
        %v1763 = vunpack.c.l.b16 %v576
        %v1764 = vunpack.c.h.b16 %v576
        %v1765 = vunpack.c.l.b16 %v577
        %v1766 = vunpack.c.h.b16 %v577
        %v1767 = vunpack.c.l.b16 %v578
        %v1768 = vunpack.c.h.b16 %v578
        %v1769 = vunpack.c.l.b16 %v579
        %v1770 = vunpack.c.h.b16 %v579
        %v1771 = vunpack.c.l.b16 %v580
        %v1772 = vunpack.c.h.b16 %v580
        %v1773 = vunpack.c.l.b16 %v581
        %v1774 = vunpack.c.h.b16 %v581
        %v1775 = vunpack.c.l.b16 %v582
        %v1776 = vunpack.c.h.b16 %v582
        %v1777 = vunpack.c.l.b16 %v583
        %v1778 = vunpack.c.h.b16 %v583
        %v1779 = vunpack.c.l.b16 %v584
        %v1780 = vunpack.c.h.b16 %v584
        %v1781 = vunpack.c.l.b16 %v585
        %v1782 = vunpack.c.h.b16 %v585
        %v1783 = vunpack.c.l.b16 %v586
        %v1784 = vunpack.c.h.b16 %v586
        %v1785 = vunpack.c.l.b16 %v587
        %v1786 = vunpack.c.h.b16 %v587
        %v1787 = vunpack.c.l.b16 %v588
        %v1788 = vunpack.c.h.b16 %v588
        %v1789 = vunpack.c.l.b16 %v589
        %v1790 = vunpack.c.h.b16 %v589
        %v1791 = vunpack.c.l.b16 %v590
        %v1792 = vunpack.c.h.b16 %v590
        %v1793 = vunpack.c.l.b16 %v591
        %v1794 = vunpack.c.h.b16 %v591
        %v1795 = vunpack.c.l.b16 %v592
        %v1796 = vunpack.c.h.b16 %v592
        %v1797 = vunpack.c.l.b16 %v593
        %v1798 = vunpack.c.h.b16 %v593
        %v1799 = vunpack.c.l.b16 %v594
        %v1800 = vunpack.c.h.b16 %v594
        %v1801 = vunpack.c.l.b16 %v595
        %v1802 = vunpack.c.h.b16 %v595
        %v1803 = vunpack.c.l.b16 %v596
        %v1804 = vunpack.c.h.b16 %v596
        %v1805 = vunpack.c.l.b16 %v597
        %v1806 = vunpack.c.h.b16 %v597
        %v1807 = vunpack.c.l.b16 %v598
        %v1808 = vunpack.c.h.b16 %v598
        %v1809 = vunpack.c.l.b16 %v599
        %v1810 = vunpack.c.h.b16 %v599
        %v1811 = vunpack.c.l.b16 %v600
        %v1812 = vunpack.c.h.b16 %v600
        %v1813 = vunpack.c.l.b16 %v601
        %v1814 = vunpack.c.h.b16 %v601
        %v1815 = vunpack.c.l.b16 %v602
        %v1816 = vunpack.c.h.b16 %v602
        %v1817 = vunpack.c.l.b16 %v603
        %v1818 = vunpack.c.h.b16 %v603
        %v1819 = vunpack.c.l.b16 %v604
        %v1820 = vunpack.c.h.b16 %v604
        %v1821 = vunpack.c.l.b16 %v605
        %v1822 = vunpack.c.h.b16 %v605
        %v1823 = vunpack.c.l.b16 %v606
        %v1824 = vunpack.c.h.b16 %v606
        %v1825 = vunpack.c.l.b16 %v607
        %v1826 = vunpack.c.h.b16 %v607
        %v1827 = vunpack.c.l.b16 %v608
        %v1828 = vunpack.c.h.b16 %v608
        %v1829 = vunpack.c.l.b16 %v609
        %v1830 = vunpack.c.h.b16 %v609
        %v1831 = vunpack.c.l.b16 %v610
        %v1832 = vunpack.c.h.b16 %v610
        %v1833 = vunpack.c.l.b16 %v611
        %v1834 = vunpack.c.h.b16 %v611
        %v1835 = vunpack.c.l.b16 %v612
        %v1836 = vunpack.c.h.b16 %v612
        %v1837 = vunpack.c.l.b16 %v613
        %v1838 = vunpack.c.h.b16 %v613
        %v1839 = vunpack.c.l.b16 %v614
        %v1840 = vunpack.c.h.b16 %v614
        %v1841 = vunpack.c.l.b16 %v615
        %v1842 = vunpack.c.h.b16 %v615
        %v1843 = vunpack.c.l.b16 %v616
        %v1844 = vunpack.c.h.b16 %v616
        %v1845 = vunpack.c.l.b16 %v617
        %v1846 = vunpack.c.h.b16 %v617
        %v1847 = vunpack.c.l.b16 %v618
        %v1848 = vunpack.c.h.b16 %v618
        %v1849 = vunpack.c.l.b16 %v619
        %v1850 = vunpack.c.h.b16 %v619
        %v1851 = vunpack.c.l.b16 %v620
        %v1852 = vunpack.c.h.b16 %v620
        %v1853 = vunpack.c.l.b16 %v621
        %v1854 = vunpack.c.h.b16 %v621
        %v1855 = vunpack.c.l.b16 %v622
        %v1856 = vunpack.c.h.b16 %v622
        %v1857 = vunpack.c.l.b16 %v623
        %v1858 = vunpack.c.h.b16 %v623
        %v1859 = vunpack.c.l.b16 %v624
        %v1860 = vunpack.c.h.b16 %v624
        %v1861 = vunpack.c.l.b16 %v625
        %v1862 = vunpack.c.h.b16 %v625
        %v1863 = vunpack.c.l.b16 %v626
        %v1864 = vunpack.c.h.b16 %v626
        %v1865 = vunpack.c.l.b16 %v627
        %v1866 = vunpack.c.h.b16 %v627
        %v1867 = vunpack.c.l.b16 %v628
        %v1868 = vunpack.c.h.b16 %v628
        %v1869 = vunpack.c.l.b16 %v629
        %v1870 = vunpack.c.h.b16 %v629
        %v1871 = vunpack.c.l.b16 %v630
        %v1872 = vunpack.c.h.b16 %v630
        %v1873 = vpack.c.b16 %v1107, %v1105
        %v1874 = vpack.c.b16 %v1108, %v1106
        %v1875 = vpack.c.b16 %v1111, %v1109
        %v1876 = vpack.c.b16 %v1112, %v1110
        %v1877 = vpack.c.b16 %v1115, %v1113
        %v1878 = vpack.c.b16 %v1116, %v1114
        %v1879 = vpack.c.b16 %v1119, %v1117
        %v1880 = vpack.c.b16 %v1120, %v1118
        %v1881 = vpack.c.b16 %v1123, %v1121
        %v1882 = vpack.c.b16 %v1124, %v1122
        %v1883 = vpack.c.b16 %v1127, %v1125
        %v1884 = vpack.c.b16 %v1128, %v1126
        %v1885 = vpack.c.b16 %v1131, %v1129
        %v1886 = vpack.c.b16 %v1132, %v1130
        %v1887 = vpack.c.b16 %v1135, %v1133
        %v1888 = vpack.c.b16 %v1136, %v1134
        %v1889 = vpack.c.b16 %v1139, %v1137
        %v1890 = vpack.c.b16 %v1140, %v1138
        %v1891 = vpack.c.b16 %v1143, %v1141
        %v1892 = vpack.c.b16 %v1144, %v1142
        %v1893 = vpack.c.b16 %v1147, %v1145
        %v1894 = vpack.c.b16 %v1148, %v1146
        %v1895 = vpack.c.b16 %v1151, %v1149
        %v1896 = vpack.c.b16 %v1152, %v1150
        %v1897 = vpack.c.b16 %v1155, %v1153
        %v1898 = vpack.c.b16 %v1156, %v1154
        %v1899 = vpack.c.b16 %v1159, %v1157
        %v1900 = vpack.c.b16 %v1160, %v1158
        %v1901 = vpack.c.b16 %v1163, %v1161
        %v1902 = vpack.c.b16 %v1164, %v1162
        %v1903 = vpack.c.b16 %v1167, %v1165
        %v1904 = vpack.c.b16 %v1168, %v1166
        %v1905 = vpack.c.b16 %v1171, %v1169
        %v1906 = vpack.c.b16 %v1172, %v1170
        %v1907 = vpack.c.b16 %v1175, %v1173
        %v1908 = vpack.c.b16 %v1176, %v1174
        %v1909 = vpack.c.b16 %v1179, %v1177
        %v1910 = vpack.c.b16 %v1180, %v1178
        %v1911 = vpack.c.b16 %v1183, %v1181
        %v1912 = vpack.c.b16 %v1184, %v1182
        %v1913 = vpack.c.b16 %v1187, %v1185
        %v1914 = vpack.c.b16 %v1188, %v1186
        %v1915 = vpack.c.b16 %v1191, %v1189
        %v1916 = vpack.c.b16 %v1192, %v1190
        %v1917 = vpack.c.b16 %v1195, %v1193
        %v1918 = vpack.c.b16 %v1196, %v1194
        %v1919 = vpack.c.b16 %v1199, %v1197
        %v1920 = vpack.c.b16 %v1200, %v1198
        %v1921 = vpack.c.b16 %v1203, %v1201
        %v1922 = vpack.c.b16 %v1204, %v1202
        %v1923 = vpack.c.b16 %v1207, %v1205
        %v1924 = vpack.c.b16 %v1208, %v1206
        %v1925 = vpack.c.b16 %v1211, %v1209
        %v1926 = vpack.c.b16 %v1212, %v1210
        %v1927 = vpack.c.b16 %v1215, %v1213
        %v1928 = vpack.c.b16 %v1216, %v1214
        %v1929 = vpack.c.b16 %v1219, %v1217
        %v1930 = vpack.c.b16 %v1220, %v1218
        %v1931 = vpack.c.b16 %v1223, %v1221
        %v1932 = vpack.c.b16 %v1224, %v1222
        %v1933 = vpack.c.b16 %v1227, %v1225
        %v1934 = vpack.c.b16 %v1228, %v1226
        %v1935 = vpack.c.b16 %v1231, %v1229
        %v1936 = vpack.c.b16 %v1232, %v1230
        %v1937 = vpack.c.b16 %v1235, %v1233
        %v1938 = vpack.c.b16 %v1236, %v1234
        %v1939 = vpack.c.b16 %v1239, %v1237
        %v1940 = vpack.c.b16 %v1240, %v1238
        %v1941 = vpack.c.b16 %v1243, %v1241
        %v1942 = vpack.c.b16 %v1244, %v1242
        %v1943 = vpack.c.b16 %v1247, %v1245
        %v1944 = vpack.c.b16 %v1248, %v1246
        %v1945 = vpack.c.b16 %v1251, %v1249
        %v1946 = vpack.c.b16 %v1252, %v1250
        %v1947 = vpack.c.b16 %v1255, %v1253
        %v1948 = vpack.c.b16 %v1256, %v1254
        %v1949 = vpack.c.b16 %v1259, %v1257
        %v1950 = vpack.c.b16 %v1260, %v1258
        %v1951 = vpack.c.b16 %v1263, %v1261
        %v1952 = vpack.c.b16 %v1264, %v1262
        %v1953 = vpack.c.b16 %v1267, %v1265
        %v1954 = vpack.c.b16 %v1268, %v1266
        %v1955 = vpack.c.b16 %v1271, %v1269
        %v1956 = vpack.c.b16 %v1272, %v1270
        %v1957 = vpack.c.b16 %v1275, %v1273
        %v1958 = vpack.c.b16 %v1276, %v1274
        %v1959 = vpack.c.b16 %v1279, %v1277
        %v1960 = vpack.c.b16 %v1280, %v1278
        %v1961 = vpack.c.b16 %v1283, %v1281
        %v1962 = vpack.c.b16 %v1284, %v1282
        %v1963 = vpack.c.b16 %v1287, %v1285
        %v1964 = vpack.c.b16 %v1288, %v1286
        %v1965 = vpack.c.b16 %v1291, %v1289
        %v1966 = vpack.c.b16 %v1292, %v1290
        %v1967 = vpack.c.b16 %v1295, %v1293
        %v1968 = vpack.c.b16 %v1296, %v1294
        %v1969 = vpack.c.b16 %v1299, %v1297
        %v1970 = vpack.c.b16 %v1300, %v1298
        %v1971 = vpack.c.b16 %v1303, %v1301
        %v1972 = vpack.c.b16 %v1304, %v1302
        %v1973 = vpack.c.b16 %v1307, %v1305
        %v1974 = vpack.c.b16 %v1308, %v1306
        %v1975 = vpack.c.b16 %v1311, %v1309
        %v1976 = vpack.c.b16 %v1312, %v1310
        %v1977 = vpack.c.b16 %v1315, %v1313
        %v1978 = vpack.c.b16 %v1316, %v1314
        %v1979 = vpack.c.b16 %v1319, %v1317
        %v1980 = vpack.c.b16 %v1320, %v1318
        %v1981 = vpack.c.b16 %v1323, %v1321
        %v1982 = vpack.c.b16 %v1324, %v1322
        %v1983 = vpack.c.b16 %v1327, %v1325
        %v1984 = vpack.c.b16 %v1328, %v1326
        %v1985 = vpack.c.b16 %v1331, %v1329
        %v1986 = vpack.c.b16 %v1332, %v1330
        %v1987 = vpack.c.b16 %v1335, %v1333
        %v1988 = vpack.c.b16 %v1336, %v1334
        %v1989 = vpack.c.b16 %v1339, %v1337
        %v1990 = vpack.c.b16 %v1340, %v1338
        %v1991 = vpack.c.b16 %v1343, %v1341
        %v1992 = vpack.c.b16 %v1344, %v1342
        %v1993 = vpack.c.b16 %v1347, %v1345
        %v1994 = vpack.c.b16 %v1348, %v1346
        %v1995 = vpack.c.b16 %v1351, %v1349
        %v1996 = vpack.c.b16 %v1352, %v1350
        %v1997 = vpack.c.b16 %v1355, %v1353
        %v1998 = vpack.c.b16 %v1356, %v1354
        %v1999 = vpack.c.b16 %v1359, %v1357
        %v2000 = vpack.c.b16 %v1360, %v1358
        %v2001 = vpack.c.b16 %v1363, %v1361
        %v2002 = vpack.c.b16 %v1364, %v1362
        %v2003 = vpack.c.b16 %v1367, %v1365
        %v2004 = vpack.c.b16 %v1368, %v1366
        %v2005 = vpack.c.b16 %v1371, %v1369
        %v2006 = vpack.c.b16 %v1372, %v1370
        %v2007 = vpack.c.b16 %v1375, %v1373
        %v2008 = vpack.c.b16 %v1376, %v1374
        %v2009 = vpack.c.b16 %v1379, %v1377
        %v2010 = vpack.c.b16 %v1380, %v1378
        %v2011 = vpack.c.b16 %v1383, %v1381
        %v2012 = vpack.c.b16 %v1384, %v1382
        %v2013 = vpack.c.b16 %v1387, %v1385
        %v2014 = vpack.c.b16 %v1388, %v1386
        %v2015 = vpack.c.b16 %v1391, %v1389
        %v2016 = vpack.c.b16 %v1392, %v1390
        %v2017 = vpack.c.b16 %v1395, %v1393
        %v2018 = vpack.c.b16 %v1396, %v1394
        %v2019 = vpack.c.b16 %v1399, %v1397
        %v2020 = vpack.c.b16 %v1400, %v1398
        %v2021 = vpack.c.b16 %v1403, %v1401
        %v2022 = vpack.c.b16 %v1404, %v1402
        %v2023 = vpack.c.b16 %v1407, %v1405
        %v2024 = vpack.c.b16 %v1408, %v1406
        %v2025 = vpack.c.b16 %v1411, %v1409
        %v2026 = vpack.c.b16 %v1412, %v1410
        %v2027 = vpack.c.b16 %v1415, %v1413
        %v2028 = vpack.c.b16 %v1416, %v1414
        %v2029 = vpack.c.b16 %v1419, %v1417
        %v2030 = vpack.c.b16 %v1420, %v1418
        %v2031 = vpack.c.b16 %v1423, %v1421
        %v2032 = vpack.c.b16 %v1424, %v1422
        %v2033 = vpack.c.b16 %v1427, %v1425
        %v2034 = vpack.c.b16 %v1428, %v1426
        %v2035 = vpack.c.b16 %v1431, %v1429
        %v2036 = vpack.c.b16 %v1432, %v1430
        %v2037 = vpack.c.b16 %v1435, %v1433
        %v2038 = vpack.c.b16 %v1436, %v1434
        %v2039 = vpack.c.b16 %v1439, %v1437
        %v2040 = vpack.c.b16 %v1440, %v1438
        %v2041 = vpack.c.b16 %v1443, %v1441
        %v2042 = vpack.c.b16 %v1444, %v1442
        %v2043 = vpack.c.b16 %v1447, %v1445
        %v2044 = vpack.c.b16 %v1448, %v1446
        %v2045 = vpack.c.b16 %v1451, %v1449
        %v2046 = vpack.c.b16 %v1452, %v1450
        %v2047 = vpack.c.b16 %v1455, %v1453
        %v2048 = vpack.c.b16 %v1456, %v1454
        %v2049 = vpack.c.b16 %v1459, %v1457
        %v2050 = vpack.c.b16 %v1460, %v1458
        %v2051 = vpack.c.b16 %v1463, %v1461
        %v2052 = vpack.c.b16 %v1464, %v1462
        %v2053 = vpack.c.b16 %v1467, %v1465
        %v2054 = vpack.c.b16 %v1468, %v1466
        %v2055 = vpack.c.b16 %v1471, %v1469
        %v2056 = vpack.c.b16 %v1472, %v1470
        %v2057 = vpack.c.b16 %v1475, %v1473
        %v2058 = vpack.c.b16 %v1476, %v1474
        %v2059 = vpack.c.b16 %v1479, %v1477
        %v2060 = vpack.c.b16 %v1480, %v1478
        %v2061 = vpack.c.b16 %v1483, %v1481
        %v2062 = vpack.c.b16 %v1484, %v1482
        %v2063 = vpack.c.b16 %v1487, %v1485
        %v2064 = vpack.c.b16 %v1488, %v1486
        %v2065 = vpack.c.b16 %v1491, %v1489
        %v2066 = vpack.c.b16 %v1492, %v1490
        %v2067 = vpack.c.b16 %v1495, %v1493
        %v2068 = vpack.c.b16 %v1496, %v1494
        %v2069 = vpack.c.b16 %v1499, %v1497
        %v2070 = vpack.c.b16 %v1500, %v1498
        %v2071 = vpack.c.b16 %v1503, %v1501
        %v2072 = vpack.c.b16 %v1504, %v1502
        %v2073 = vpack.c.b16 %v1507, %v1505
        %v2074 = vpack.c.b16 %v1508, %v1506
        %v2075 = vpack.c.b16 %v1511, %v1509
        %v2076 = vpack.c.b16 %v1512, %v1510
        %v2077 = vpack.c.b16 %v1515, %v1513
        %v2078 = vpack.c.b16 %v1516, %v1514
        %v2079 = vpack.c.b16 %v1519, %v1517
        %v2080 = vpack.c.b16 %v1520, %v1518
        %v2081 = vpack.c.b16 %v1523, %v1521
        %v2082 = vpack.c.b16 %v1524, %v1522
        %v2083 = vpack.c.b16 %v1527, %v1525
        %v2084 = vpack.c.b16 %v1528, %v1526
        %v2085 = vpack.c.b16 %v1531, %v1529
        %v2086 = vpack.c.b16 %v1532, %v1530
        %v2087 = vpack.c.b16 %v1535, %v1533
        %v2088 = vpack.c.b16 %v1536, %v1534
        %v2089 = vpack.c.b16 %v1539, %v1537
        %v2090 = vpack.c.b16 %v1540, %v1538
        %v2091 = vpack.c.b16 %v1543, %v1541
        %v2092 = vpack.c.b16 %v1544, %v1542
        %v2093 = vpack.c.b16 %v1547, %v1545
        %v2094 = vpack.c.b16 %v1548, %v1546
        %v2095 = vpack.c.b16 %v1551, %v1549
        %v2096 = vpack.c.b16 %v1552, %v1550
        %v2097 = vpack.c.b16 %v1555, %v1553
        %v2098 = vpack.c.b16 %v1556, %v1554
        %v2099 = vpack.c.b16 %v1559, %v1557
        %v2100 = vpack.c.b16 %v1560, %v1558
        %v2101 = vpack.c.b16 %v1563, %v1561
        %v2102 = vpack.c.b16 %v1564, %v1562
        %v2103 = vpack.c.b16 %v1567, %v1565
        %v2104 = vpack.c.b16 %v1568, %v1566
        %v2105 = vpack.c.b16 %v1571, %v1569
        %v2106 = vpack.c.b16 %v1572, %v1570
        %v2107 = vpack.c.b16 %v1575, %v1573
        %v2108 = vpack.c.b16 %v1576, %v1574
        %v2109 = vpack.c.b16 %v1579, %v1577
        %v2110 = vpack.c.b16 %v1580, %v1578
        %v2111 = vpack.c.b16 %v1583, %v1581
        %v2112 = vpack.c.b16 %v1584, %v1582
        %v2113 = vpack.c.b16 %v1587, %v1585
        %v2114 = vpack.c.b16 %v1588, %v1586
        %v2115 = vpack.c.b16 %v1591, %v1589
        %v2116 = vpack.c.b16 %v1592, %v1590
        %v2117 = vpack.c.b16 %v1595, %v1593
        %v2118 = vpack.c.b16 %v1596, %v1594
        %v2119 = vpack.c.b16 %v1599, %v1597
        %v2120 = vpack.c.b16 %v1600, %v1598
        %v2121 = vpack.c.b16 %v1603, %v1601
        %v2122 = vpack.c.b16 %v1604, %v1602
        %v2123 = vpack.c.b16 %v1607, %v1605
        %v2124 = vpack.c.b16 %v1608, %v1606
        %v2125 = vpack.c.b16 %v1611, %v1609
        %v2126 = vpack.c.b16 %v1612, %v1610
        %v2127 = vpack.c.b16 %v1615, %v1613
        %v2128 = vpack.c.b16 %v1616, %v1614
        %v2129 = vpack.c.b16 %v1619, %v1617
        %v2130 = vpack.c.b16 %v1620, %v1618
        %v2131 = vpack.c.b16 %v1623, %v1621
        %v2132 = vpack.c.b16 %v1624, %v1622
        %v2133 = vpack.c.b16 %v1627, %v1625
        %v2134 = vpack.c.b16 %v1628, %v1626
        %v2135 = vpack.c.b16 %v1631, %v1629
        %v2136 = vpack.c.b16 %v1632, %v1630
        %v2137 = vpack.c.b16 %v1635, %v1633
        %v2138 = vpack.c.b16 %v1636, %v1634
        %v2139 = vpack.c.b16 %v1639, %v1637
        %v2140 = vpack.c.b16 %v1640, %v1638
        %v2141 = vpack.c.b16 %v1643, %v1641
        %v2142 = vpack.c.b16 %v1644, %v1642
        %v2143 = vpack.c.b16 %v1647, %v1645
        %v2144 = vpack.c.b16 %v1648, %v1646
        %v2145 = vpack.c.b16 %v1651, %v1649
        %v2146 = vpack.c.b16 %v1652, %v1650
        %v2147 = vpack.c.b16 %v1655, %v1653
        %v2148 = vpack.c.b16 %v1656, %v1654
        %v2149 = vpack.c.b16 %v1659, %v1657
        %v2150 = vpack.c.b16 %v1660, %v1658
        %v2151 = vpack.c.b16 %v1663, %v1661
        %v2152 = vpack.c.b16 %v1664, %v1662
        %v2153 = vpack.c.b16 %v1667, %v1665
        %v2154 = vpack.c.b16 %v1668, %v1666
        %v2155 = vpack.c.b16 %v1671, %v1669
        %v2156 = vpack.c.b16 %v1672, %v1670
        %v2157 = vpack.c.b16 %v1675, %v1673
        %v2158 = vpack.c.b16 %v1676, %v1674
        %v2159 = vpack.c.b16 %v1679, %v1677
        %v2160 = vpack.c.b16 %v1680, %v1678
        %v2161 = vpack.c.b16 %v1683, %v1681
        %v2162 = vpack.c.b16 %v1684, %v1682
        %v2163 = vpack.c.b16 %v1687, %v1685
        %v2164 = vpack.c.b16 %v1688, %v1686
        %v2165 = vpack.c.b16 %v1691, %v1689
        %v2166 = vpack.c.b16 %v1692, %v1690
        %v2167 = vpack.c.b16 %v1695, %v1693
        %v2168 = vpack.c.b16 %v1696, %v1694
        %v2169 = vpack.c.b16 %v1699, %v1697
        %v2170 = vpack.c.b16 %v1700, %v1698
        %v2171 = vpack.c.b16 %v1703, %v1701
        %v2172 = vpack.c.b16 %v1704, %v1702
        %v2173 = vpack.c.b16 %v1707, %v1705
        %v2174 = vpack.c.b16 %v1708, %v1706
        %v2175 = vpack.c.b16 %v1711, %v1709
        %v2176 = vpack.c.b16 %v1712, %v1710
        %v2177 = vpack.c.b16 %v1715, %v1713
        %v2178 = vpack.c.b16 %v1716, %v1714
        %v2179 = vpack.c.b16 %v1719, %v1717
        %v2180 = vpack.c.b16 %v1720, %v1718
        %v2181 = vpack.c.b16 %v1723, %v1721
        %v2182 = vpack.c.b16 %v1724, %v1722
        %v2183 = vpack.c.b16 %v1727, %v1725
        %v2184 = vpack.c.b16 %v1728, %v1726
        %v2185 = vpack.c.b16 %v1731, %v1729
        %v2186 = vpack.c.b16 %v1732, %v1730
        %v2187 = vpack.c.b16 %v1735, %v1733
        %v2188 = vpack.c.b16 %v1736, %v1734
        %v2189 = vpack.c.b16 %v1739, %v1737
        %v2190 = vpack.c.b16 %v1740, %v1738
        %v2191 = vpack.c.b16 %v1743, %v1741
        %v2192 = vpack.c.b16 %v1744, %v1742
        %v2193 = vpack.c.b16 %v1747, %v1745
        %v2194 = vpack.c.b16 %v1748, %v1746
        %v2195 = vpack.c.b16 %v1751, %v1749
        %v2196 = vpack.c.b16 %v1752, %v1750
        %v2197 = vpack.c.b16 %v1755, %v1753
        %v2198 = vpack.c.b16 %v1756, %v1754
        %v2199 = vpack.c.b16 %v1759, %v1757
        %v2200 = vpack.c.b16 %v1760, %v1758
        %v2201 = vpack.c.b16 %v1763, %v1761
        %v2202 = vpack.c.b16 %v1764, %v1762
        %v2203 = vpack.c.b16 %v1767, %v1765
        %v2204 = vpack.c.b16 %v1768, %v1766
        %v2205 = vpack.c.b16 %v1771, %v1769
        %v2206 = vpack.c.b16 %v1772, %v1770
        %v2207 = vpack.c.b16 %v1775, %v1773
        %v2208 = vpack.c.b16 %v1776, %v1774
        %v2209 = vpack.c.b16 %v1779, %v1777
        %v2210 = vpack.c.b16 %v1780, %v1778
        %v2211 = vpack.c.b16 %v1783, %v1781
        %v2212 = vpack.c.b16 %v1784, %v1782
        %v2213 = vpack.c.b16 %v1787, %v1785
        %v2214 = vpack.c.b16 %v1788, %v1786
        %v2215 = vpack.c.b16 %v1791, %v1789
        %v2216 = vpack.c.b16 %v1792, %v1790
        %v2217 = vpack.c.b16 %v1795, %v1793
        %v2218 = vpack.c.b16 %v1796, %v1794
        %v2219 = vpack.c.b16 %v1799, %v1797
        %v2220 = vpack.c.b16 %v1800, %v1798
        %v2221 = vpack.c.b16 %v1803, %v1801
        %v2222 = vpack.c.b16 %v1804, %v1802
        %v2223 = vpack.c.b16 %v1807, %v1805
        %v2224 = vpack.c.b16 %v1808, %v1806
        %v2225 = vpack.c.b16 %v1811, %v1809
        %v2226 = vpack.c.b16 %v1812, %v1810
        %v2227 = vpack.c.b16 %v1815, %v1813
        %v2228 = vpack.c.b16 %v1816, %v1814
        %v2229 = vpack.c.b16 %v1819, %v1817
        %v2230 = vpack.c.b16 %v1820, %v1818
        %v2231 = vpack.c.b16 %v1823, %v1821
        %v2232 = vpack.c.b16 %v1824, %v1822
        %v2233 = vpack.c.b16 %v1827, %v1825
        %v2234 = vpack.c.b16 %v1828, %v1826
        %v2235 = vpack.c.b16 %v1831, %v1829
        %v2236 = vpack.c.b16 %v1832, %v1830
        %v2237 = vpack.c.b16 %v1835, %v1833
        %v2238 = vpack.c.b16 %v1836, %v1834
        %v2239 = vpack.c.b16 %v1839, %v1837
        %v2240 = vpack.c.b16 %v1840, %v1838
        %v2241 = vpack.c.b16 %v1843, %v1841
        %v2242 = vpack.c.b16 %v1844, %v1842
        %v2243 = vpack.c.b16 %v1847, %v1845
        %v2244 = vpack.c.b16 %v1848, %v1846
        %v2245 = vpack.c.b16 %v1851, %v1849
        %v2246 = vpack.c.b16 %v1852, %v1850
        %v2247 = vpack.c.b16 %v1855, %v1853
        %v2248 = vpack.c.b16 %v1856, %v1854
        %v2249 = vpack.c.b16 %v1859, %v1857
        %v2250 = vpack.c.b16 %v1860, %v1858
        %v2251 = vpack.c.b16 %v1863, %v1861
        %v2252 = vpack.c.b16 %v1864, %v1862
        %v2253 = vpack.c.b16 %v1867, %v1865
        %v2254 = vpack.c.b16 %v1868, %v1866
        %v2255 = vpack.c.b16 %v1871, %v1869
        %v2256 = vpack.c.b16 %v1872, %v1870
        %2641 = vmatpush.bf16.msra.mxu0 %v1887
        %2642 = vmatpush.bf16.msra.mxu0 %v1885
        %2643 = vmatpush.bf16.msra.mxu0 %v1883
        %2644 = vmatpush.bf16.msra.mxu0 %v1881
        %2645 = vmatpush.bf16.msra.mxu0 %v1879
        %2646 = vmatpush.bf16.msra.mxu0 %v1877
        %2647 = vmatpush.bf16.msra.mxu0 %v1875
        %2648 = vmatpush.bf16.msra.mxu0 %v1873
        %2649 = vmatmul.bf16.gmra.mxu0 %v673
        %v2650 = vpop.f32.mrf.mxu0
        %v2651 = vadd.f32 %v633, %v2650
        %v2652 = vpop.f32.mrf.mxu0
        %2653 = vdwg.mxu0
        %2654 = vmatpush.bf16.msra.mxu0 %v1903
        %2655 = vmatpush.bf16.msra.mxu0 %v1901
        %2656 = vmatpush.bf16.msra.mxu0 %v1899
        %2657 = vmatpush.bf16.msra.mxu0 %v1897
        %2658 = vmatpush.bf16.msra.mxu0 %v1895
        %2659 = vmatpush.bf16.msra.mxu0 %v1893
        %2660 = vmatpush.bf16.msra.mxu0 %v1891
        %2661 = vmatpush.bf16.msra.mxu0 %v1889
        %2662 = vmatmul.bf16.gmra.mxu0 %v674
        %v2663 = vpop.f32.mrf.mxu0
        %v2664 = vadd.f32 %v2651, %v2663
        %v2665 = vpop.f32.mrf.mxu0
        %2666 = vdwg.mxu0
        %2667 = vmatpush.bf16.msra.mxu0 %v1919
        %2668 = vmatpush.bf16.msra.mxu0 %v1917
        %2669 = vmatpush.bf16.msra.mxu0 %v1915
        %2670 = vmatpush.bf16.msra.mxu0 %v1913
        %2671 = vmatpush.bf16.msra.mxu0 %v1911
        %2672 = vmatpush.bf16.msra.mxu0 %v1909
        %2673 = vmatpush.bf16.msra.mxu0 %v1907
        %2674 = vmatpush.bf16.msra.mxu0 %v1905
        %2675 = vmatmul.bf16.gmra.mxu0 %v675
        %v2676 = vpop.f32.mrf.mxu0
        %v2677 = vadd.f32 %v2664, %v2676
        %v2678 = vpop.f32.mrf.mxu0
        %2679 = vdwg.mxu0
        %2680 = vmatpush.bf16.msra.mxu0 %v1935
        %2681 = vmatpush.bf16.msra.mxu0 %v1933
        %2682 = vmatpush.bf16.msra.mxu0 %v1931
        %2683 = vmatpush.bf16.msra.mxu0 %v1929
        %2684 = vmatpush.bf16.msra.mxu0 %v1927
        %2685 = vmatpush.bf16.msra.mxu0 %v1925
        %2686 = vmatpush.bf16.msra.mxu0 %v1923
        %2687 = vmatpush.bf16.msra.mxu0 %v1921
        %2688 = vmatmul.bf16.gmra.mxu0 %v676
        %v2689 = vpop.f32.mrf.mxu0
        %v2690 = vadd.f32 %v2677, %v2689
        %v2691 = vpop.f32.mrf.mxu0
        %2692 = vdwg.mxu0
        %2693 = vmatpush.bf16.msra.mxu0 %v1951
        %2694 = vmatpush.bf16.msra.mxu0 %v1949
        %2695 = vmatpush.bf16.msra.mxu0 %v1947
        %2696 = vmatpush.bf16.msra.mxu0 %v1945
        %2697 = vmatpush.bf16.msra.mxu0 %v1943
        %2698 = vmatpush.bf16.msra.mxu0 %v1941
        %2699 = vmatpush.bf16.msra.mxu0 %v1939
        %2700 = vmatpush.bf16.msra.mxu0 %v1937
        %2701 = vmatmul.bf16.gmra.mxu0 %v677
        %v2702 = vpop.f32.mrf.mxu0
        %v2703 = vadd.f32 %v2690, %v2702
        %v2704 = vpop.f32.mrf.mxu0
        %2705 = vdwg.mxu0
        %2706 = vmatpush.bf16.msra.mxu0 %v1967
        %2707 = vmatpush.bf16.msra.mxu0 %v1965
        %2708 = vmatpush.bf16.msra.mxu0 %v1963
        %2709 = vmatpush.bf16.msra.mxu0 %v1961
        %2710 = vmatpush.bf16.msra.mxu0 %v1959
        %2711 = vmatpush.bf16.msra.mxu0 %v1957
        %2712 = vmatpush.bf16.msra.mxu0 %v1955
        %2713 = vmatpush.bf16.msra.mxu0 %v1953
        %2714 = vmatmul.bf16.gmra.mxu0 %v678
        %v2715 = vpop.f32.mrf.mxu0
        %v2716 = vadd.f32 %v2703, %v2715
        %v2717 = vpop.f32.mrf.mxu0
        %2718 = vdwg.mxu0
        %2719 = vmatpush.bf16.msra.mxu0 %v1983
        %2720 = vmatpush.bf16.msra.mxu0 %v1981
        %2721 = vmatpush.bf16.msra.mxu0 %v1979
        %2722 = vmatpush.bf16.msra.mxu0 %v1977
        %2723 = vmatpush.bf16.msra.mxu0 %v1975
        %2724 = vmatpush.bf16.msra.mxu0 %v1973
        %2725 = vmatpush.bf16.msra.mxu0 %v1971
        %2726 = vmatpush.bf16.msra.mxu0 %v1969
        %2727 = vmatmul.bf16.gmra.mxu0 %v679
        %v2728 = vpop.f32.mrf.mxu0
        %v2729 = vadd.f32 %v2716, %v2728
        %v2730 = vpop.f32.mrf.mxu0
        %2731 = vdwg.mxu0
        %2732 = vmatpush.bf16.msra.mxu0 %v1999
        %2733 = vmatpush.bf16.msra.mxu0 %v1997
        %2734 = vmatpush.bf16.msra.mxu0 %v1995
        %2735 = vmatpush.bf16.msra.mxu0 %v1993
        %2736 = vmatpush.bf16.msra.mxu0 %v1991
        %2737 = vmatpush.bf16.msra.mxu0 %v1989
        %2738 = vmatpush.bf16.msra.mxu0 %v1987
        %2739 = vmatpush.bf16.msra.mxu0 %v1985
        %2740 = vmatmul.bf16.gmra.mxu0 %v680
        %v2741 = vpop.f32.mrf.mxu0
        %v2742 = vadd.f32 %v2729, %v2741
        %v2743 = vpop.f32.mrf.mxu0
        %2744 = vdwg.mxu0
        %2745 = vmatpush.bf16.msra.mxu0 %v2015
        %2746 = vmatpush.bf16.msra.mxu0 %v2013
        %2747 = vmatpush.bf16.msra.mxu0 %v2011
        %2748 = vmatpush.bf16.msra.mxu0 %v2009
        %2749 = vmatpush.bf16.msra.mxu0 %v2007
        %2750 = vmatpush.bf16.msra.mxu0 %v2005
        %2751 = vmatpush.bf16.msra.mxu0 %v2003
        %2752 = vmatpush.bf16.msra.mxu0 %v2001
        %2753 = vmatmul.bf16.gmra.mxu0 %v681
        %v2754 = vpop.f32.mrf.mxu0
        %v2755 = vadd.f32 %v2742, %v2754
        %v2756 = vpop.f32.mrf.mxu0
        %2757 = vdwg.mxu0
        %2758 = vmatpush.bf16.msra.mxu0 %v2031
        %2759 = vmatpush.bf16.msra.mxu0 %v2029
        %2760 = vmatpush.bf16.msra.mxu0 %v2027
        %2761 = vmatpush.bf16.msra.mxu0 %v2025
        %2762 = vmatpush.bf16.msra.mxu0 %v2023
        %2763 = vmatpush.bf16.msra.mxu0 %v2021
        %2764 = vmatpush.bf16.msra.mxu0 %v2019
        %2765 = vmatpush.bf16.msra.mxu0 %v2017
        %2766 = vmatmul.bf16.gmra.mxu0 %v682
        %v2767 = vpop.f32.mrf.mxu0
        %v2768 = vadd.f32 %v2755, %v2767
        %v2769 = vpop.f32.mrf.mxu0
        %2770 = vdwg.mxu0
        %2771 = vmatpush.bf16.msra.mxu0 %v2047
        %2772 = vmatpush.bf16.msra.mxu0 %v2045
        %2773 = vmatpush.bf16.msra.mxu0 %v2043
        %2774 = vmatpush.bf16.msra.mxu0 %v2041
        %2775 = vmatpush.bf16.msra.mxu0 %v2039
        %2776 = vmatpush.bf16.msra.mxu0 %v2037
        %2777 = vmatpush.bf16.msra.mxu0 %v2035
        %2778 = vmatpush.bf16.msra.mxu0 %v2033
        %2779 = vmatmul.bf16.gmra.mxu0 %v683
        %v2780 = vpop.f32.mrf.mxu0
        %v2781 = vadd.f32 %v2768, %v2780
        %v2782 = vpop.f32.mrf.mxu0
        %2783 = vdwg.mxu0
        %2784 = vmatpush.bf16.msra.mxu0 %v2063
        %2785 = vmatpush.bf16.msra.mxu0 %v2061
        %2786 = vmatpush.bf16.msra.mxu0 %v2059
        %2787 = vmatpush.bf16.msra.mxu0 %v2057
        %2788 = vmatpush.bf16.msra.mxu0 %v2055
        %2789 = vmatpush.bf16.msra.mxu0 %v2053
        %2790 = vmatpush.bf16.msra.mxu0 %v2051
        %2791 = vmatpush.bf16.msra.mxu0 %v2049
        %2792 = vmatmul.bf16.gmra.mxu0 %v684
        %v2793 = vpop.f32.mrf.mxu0
        %v2794 = vadd.f32 %v2781, %v2793
        %v2795 = vpop.f32.mrf.mxu0
        %2796 = vdwg.mxu0
        %2797 = vmatpush.bf16.msra.mxu0 %v2079
        %2798 = vmatpush.bf16.msra.mxu0 %v2077
        %2799 = vmatpush.bf16.msra.mxu0 %v2075
        %2800 = vmatpush.bf16.msra.mxu0 %v2073
        %2801 = vmatpush.bf16.msra.mxu0 %v2071
        %2802 = vmatpush.bf16.msra.mxu0 %v2069
        %2803 = vmatpush.bf16.msra.mxu0 %v2067
        %2804 = vmatpush.bf16.msra.mxu0 %v2065
        %2805 = vmatmul.bf16.gmra.mxu0 %v685
        %v2806 = vpop.f32.mrf.mxu0
        %v2807 = vadd.f32 %v2794, %v2806
        %v2808 = vpop.f32.mrf.mxu0
        %2809 = vdwg.mxu0
        %2810 = vmatpush.bf16.msra.mxu0 %v2095
        %2811 = vmatpush.bf16.msra.mxu0 %v2093
        %2812 = vmatpush.bf16.msra.mxu0 %v2091
        %2813 = vmatpush.bf16.msra.mxu0 %v2089
        %2814 = vmatpush.bf16.msra.mxu0 %v2087
        %2815 = vmatpush.bf16.msra.mxu0 %v2085
        %2816 = vmatpush.bf16.msra.mxu0 %v2083
        %2817 = vmatpush.bf16.msra.mxu0 %v2081
        %2818 = vmatmul.bf16.gmra.mxu0 %v686
        %v2819 = vpop.f32.mrf.mxu0
        %v2820 = vadd.f32 %v2807, %v2819
        %v2821 = vpop.f32.mrf.mxu0
        %2822 = vdwg.mxu0
        %2823 = vmatpush.bf16.msra.mxu0 %v2111
        %2824 = vmatpush.bf16.msra.mxu0 %v2109
        %2825 = vmatpush.bf16.msra.mxu0 %v2107
        %2826 = vmatpush.bf16.msra.mxu0 %v2105
        %2827 = vmatpush.bf16.msra.mxu0 %v2103
        %2828 = vmatpush.bf16.msra.mxu0 %v2101
        %2829 = vmatpush.bf16.msra.mxu0 %v2099
        %2830 = vmatpush.bf16.msra.mxu0 %v2097
        %2831 = vmatmul.bf16.gmra.mxu0 %v687
        %v2832 = vpop.f32.mrf.mxu0
        %v2833 = vadd.f32 %v2820, %v2832
        %v2834 = vpop.f32.mrf.mxu0
        %2835 = vdwg.mxu0
        %2836 = vmatpush.bf16.msra.mxu0 %v2127
        %2837 = vmatpush.bf16.msra.mxu0 %v2125
        %2838 = vmatpush.bf16.msra.mxu0 %v2123
        %2839 = vmatpush.bf16.msra.mxu0 %v2121
        %2840 = vmatpush.bf16.msra.mxu0 %v2119
        %2841 = vmatpush.bf16.msra.mxu0 %v2117
        %2842 = vmatpush.bf16.msra.mxu0 %v2115
        %2843 = vmatpush.bf16.msra.mxu0 %v2113
        %2844 = vmatmul.bf16.gmra.mxu0 %v688
        %v2845 = vpop.f32.mrf.mxu0
        %v2846 = vadd.f32 %v2833, %v2845
        %v2847 = vpop.f32.mrf.mxu0
        %2848 = vdwg.mxu0
        %2849 = vmatpush.bf16.msra.mxu0 %v2143
        %2850 = vmatpush.bf16.msra.mxu0 %v2141
        %2851 = vmatpush.bf16.msra.mxu0 %v2139
        %2852 = vmatpush.bf16.msra.mxu0 %v2137
        %2853 = vmatpush.bf16.msra.mxu0 %v2135
        %2854 = vmatpush.bf16.msra.mxu0 %v2133
        %2855 = vmatpush.bf16.msra.mxu0 %v2131
        %2856 = vmatpush.bf16.msra.mxu0 %v2129
        %2857 = vmatmul.bf16.gmra.mxu0 %v689
        %v2858 = vpop.f32.mrf.mxu0
        %v2859 = vadd.f32 %v2846, %v2858
        %v2860 = vpop.f32.mrf.mxu0
        %2861 = vdwg.mxu0
        %2862 = vmatpush.bf16.msra.mxu0 %v2159
        %2863 = vmatpush.bf16.msra.mxu0 %v2157
        %2864 = vmatpush.bf16.msra.mxu0 %v2155
        %2865 = vmatpush.bf16.msra.mxu0 %v2153
        %2866 = vmatpush.bf16.msra.mxu0 %v2151
        %2867 = vmatpush.bf16.msra.mxu0 %v2149
        %2868 = vmatpush.bf16.msra.mxu0 %v2147
        %2869 = vmatpush.bf16.msra.mxu0 %v2145
        %2870 = vmatmul.bf16.gmra.mxu0 %v690
        %v2871 = vpop.f32.mrf.mxu0
        %v2872 = vadd.f32 %v2859, %v2871
        %v2873 = vpop.f32.mrf.mxu0
        %2874 = vdwg.mxu0
        %2875 = vmatpush.bf16.msra.mxu0 %v2175
        %2876 = vmatpush.bf16.msra.mxu0 %v2173
        %2877 = vmatpush.bf16.msra.mxu0 %v2171
        %2878 = vmatpush.bf16.msra.mxu0 %v2169
        %2879 = vmatpush.bf16.msra.mxu0 %v2167
        %2880 = vmatpush.bf16.msra.mxu0 %v2165
        %2881 = vmatpush.bf16.msra.mxu0 %v2163
        %2882 = vmatpush.bf16.msra.mxu0 %v2161
        %2883 = vmatmul.bf16.gmra.mxu0 %v691
        %v2884 = vpop.f32.mrf.mxu0
        %v2885 = vadd.f32 %v2872, %v2884
        %v2886 = vpop.f32.mrf.mxu0
        %2887 = vdwg.mxu0
        %2888 = vmatpush.bf16.msra.mxu0 %v2191
        %2889 = vmatpush.bf16.msra.mxu0 %v2189
        %2890 = vmatpush.bf16.msra.mxu0 %v2187
        %2891 = vmatpush.bf16.msra.mxu0 %v2185
        %2892 = vmatpush.bf16.msra.mxu0 %v2183
        %2893 = vmatpush.bf16.msra.mxu0 %v2181
        %2894 = vmatpush.bf16.msra.mxu0 %v2179
        %2895 = vmatpush.bf16.msra.mxu0 %v2177
        %2896 = vmatmul.bf16.gmra.mxu0 %v692
        %v2897 = vpop.f32.mrf.mxu0
        %v2898 = vadd.f32 %v2885, %v2897
        %v2899 = vpop.f32.mrf.mxu0
        %2900 = vdwg.mxu0
        %2901 = vmatpush.bf16.msra.mxu0 %v2207
        %2902 = vmatpush.bf16.msra.mxu0 %v2205
        %2903 = vmatpush.bf16.msra.mxu0 %v2203
        %2904 = vmatpush.bf16.msra.mxu0 %v2201
        %2905 = vmatpush.bf16.msra.mxu0 %v2199
        %2906 = vmatpush.bf16.msra.mxu0 %v2197
        %2907 = vmatpush.bf16.msra.mxu0 %v2195
        %2908 = vmatpush.bf16.msra.mxu0 %v2193
        %2909 = vmatmul.bf16.gmra.mxu0 %v693
        %v2910 = vpop.f32.mrf.mxu0
        %v2911 = vadd.f32 %v2898, %v2910
        %v2912 = vpop.f32.mrf.mxu0
        %2913 = vdwg.mxu0
        %2914 = vmatpush.bf16.msra.mxu0 %v2223
        %2915 = vmatpush.bf16.msra.mxu0 %v2221
        %2916 = vmatpush.bf16.msra.mxu0 %v2219
        %2917 = vmatpush.bf16.msra.mxu0 %v2217
        %2918 = vmatpush.bf16.msra.mxu0 %v2215
        %2919 = vmatpush.bf16.msra.mxu0 %v2213
        %2920 = vmatpush.bf16.msra.mxu0 %v2211
        %2921 = vmatpush.bf16.msra.mxu0 %v2209
        %2922 = vmatmul.bf16.gmra.mxu0 %v694
        %v2923 = vpop.f32.mrf.mxu0
        %v2924 = vadd.f32 %v2911, %v2923
        %v2925 = vpop.f32.mrf.mxu0
        %2926 = vdwg.mxu0
        %2927 = vmatpush.bf16.msra.mxu0 %v2239
        %2928 = vmatpush.bf16.msra.mxu0 %v2237
        %2929 = vmatpush.bf16.msra.mxu0 %v2235
        %2930 = vmatpush.bf16.msra.mxu0 %v2233
        %2931 = vmatpush.bf16.msra.mxu0 %v2231
        %2932 = vmatpush.bf16.msra.mxu0 %v2229
        %2933 = vmatpush.bf16.msra.mxu0 %v2227
        %2934 = vmatpush.bf16.msra.mxu0 %v2225
        %2935 = vmatmul.bf16.gmra.mxu0 %v695
        %v2936 = vpop.f32.mrf.mxu0
        %v2937 = vadd.f32 %v2924, %v2936
        %v2938 = vpop.f32.mrf.mxu0
        %2939 = vdwg.mxu0
        %2940 = vmatpush.bf16.msra.mxu0 %v2255
        %2941 = vmatpush.bf16.msra.mxu0 %v2253
        %2942 = vmatpush.bf16.msra.mxu0 %v2251
        %2943 = vmatpush.bf16.msra.mxu0 %v2249
        %2944 = vmatpush.bf16.msra.mxu0 %v2247
        %2945 = vmatpush.bf16.msra.mxu0 %v2245
        %2946 = vmatpush.bf16.msra.mxu0 %v2243
        %2947 = vmatpush.bf16.msra.mxu0 %v2241
        %2948 = vmatmul.bf16.gmra.mxu0 %v696
        %v2949 = vpop.f32.mrf.mxu0
        %v2950 = vadd.f32 %v2937, %v2949
        %v2951 = vpop.f32.mrf.mxu0
        %2952 = vdwg.mxu0
        %2953 = vmatpush.bf16.msra.mxu0 %v1888
        %2954 = vmatpush.bf16.msra.mxu0 %v1886
        %2955 = vmatpush.bf16.msra.mxu0 %v1884
        %2956 = vmatpush.bf16.msra.mxu0 %v1882
        %2957 = vmatpush.bf16.msra.mxu0 %v1880
        %2958 = vmatpush.bf16.msra.mxu0 %v1878
        %2959 = vmatpush.bf16.msra.mxu0 %v1876
        %2960 = vmatpush.bf16.msra.mxu0 %v1874
        %2961 = vmatmul.bf16.gmra.mxu0 %v673
        %v2962 = vpop.f32.mrf.mxu0
        %v2963 = vadd.f32 %v634, %v2962
        %v2964 = vpop.f32.mrf.mxu0
        %2965 = vdwg.mxu0
        %2966 = vmatpush.bf16.msra.mxu0 %v1904
        %2967 = vmatpush.bf16.msra.mxu0 %v1902
        %2968 = vmatpush.bf16.msra.mxu0 %v1900
        %2969 = vmatpush.bf16.msra.mxu0 %v1898
        %2970 = vmatpush.bf16.msra.mxu0 %v1896
        %2971 = vmatpush.bf16.msra.mxu0 %v1894
        %2972 = vmatpush.bf16.msra.mxu0 %v1892
        %2973 = vmatpush.bf16.msra.mxu0 %v1890
        %2974 = vmatmul.bf16.gmra.mxu0 %v674
        %v2975 = vpop.f32.mrf.mxu0
        %v2976 = vadd.f32 %v2963, %v2975
        %v2977 = vpop.f32.mrf.mxu0
        %2978 = vdwg.mxu0
        %2979 = vmatpush.bf16.msra.mxu0 %v1920
        %2980 = vmatpush.bf16.msra.mxu0 %v1918
        %2981 = vmatpush.bf16.msra.mxu0 %v1916
        %2982 = vmatpush.bf16.msra.mxu0 %v1914
        %2983 = vmatpush.bf16.msra.mxu0 %v1912
        %2984 = vmatpush.bf16.msra.mxu0 %v1910
        %2985 = vmatpush.bf16.msra.mxu0 %v1908
        %2986 = vmatpush.bf16.msra.mxu0 %v1906
        %2987 = vmatmul.bf16.gmra.mxu0 %v675
        %v2988 = vpop.f32.mrf.mxu0
        %v2989 = vadd.f32 %v2976, %v2988
        %v2990 = vpop.f32.mrf.mxu0
        %2991 = vdwg.mxu0
        %2992 = vmatpush.bf16.msra.mxu0 %v1936
        %2993 = vmatpush.bf16.msra.mxu0 %v1934
        %2994 = vmatpush.bf16.msra.mxu0 %v1932
        %2995 = vmatpush.bf16.msra.mxu0 %v1930
        %2996 = vmatpush.bf16.msra.mxu0 %v1928
        %2997 = vmatpush.bf16.msra.mxu0 %v1926
        %2998 = vmatpush.bf16.msra.mxu0 %v1924
        %2999 = vmatpush.bf16.msra.mxu0 %v1922
        %3000 = vmatmul.bf16.gmra.mxu0 %v676
        %v3001 = vpop.f32.mrf.mxu0
        %v3002 = vadd.f32 %v2989, %v3001
        %v3003 = vpop.f32.mrf.mxu0
        %3004 = vdwg.mxu0
        %3005 = vmatpush.bf16.msra.mxu0 %v1952
        %3006 = vmatpush.bf16.msra.mxu0 %v1950
        %3007 = vmatpush.bf16.msra.mxu0 %v1948
        %3008 = vmatpush.bf16.msra.mxu0 %v1946
        %3009 = vmatpush.bf16.msra.mxu0 %v1944
        %3010 = vmatpush.bf16.msra.mxu0 %v1942
        %3011 = vmatpush.bf16.msra.mxu0 %v1940
        %3012 = vmatpush.bf16.msra.mxu0 %v1938
        %3013 = vmatmul.bf16.gmra.mxu0 %v677
        %v3014 = vpop.f32.mrf.mxu0
        %v3015 = vadd.f32 %v3002, %v3014
        %v3016 = vpop.f32.mrf.mxu0
        %3017 = vdwg.mxu0
        %3018 = vmatpush.bf16.msra.mxu0 %v1968
        %3019 = vmatpush.bf16.msra.mxu0 %v1966
        %3020 = vmatpush.bf16.msra.mxu0 %v1964
        %3021 = vmatpush.bf16.msra.mxu0 %v1962
        %3022 = vmatpush.bf16.msra.mxu0 %v1960
        %3023 = vmatpush.bf16.msra.mxu0 %v1958
        %3024 = vmatpush.bf16.msra.mxu0 %v1956
        %3025 = vmatpush.bf16.msra.mxu0 %v1954
        %3026 = vmatmul.bf16.gmra.mxu0 %v678
        %v3027 = vpop.f32.mrf.mxu0
        %v3028 = vadd.f32 %v3015, %v3027
        %v3029 = vpop.f32.mrf.mxu0
        %3030 = vdwg.mxu0
        %3031 = vmatpush.bf16.msra.mxu0 %v1984
        %3032 = vmatpush.bf16.msra.mxu0 %v1982
        %3033 = vmatpush.bf16.msra.mxu0 %v1980
        %3034 = vmatpush.bf16.msra.mxu0 %v1978
        %3035 = vmatpush.bf16.msra.mxu0 %v1976
        %3036 = vmatpush.bf16.msra.mxu0 %v1974
        %3037 = vmatpush.bf16.msra.mxu0 %v1972
        %3038 = vmatpush.bf16.msra.mxu0 %v1970
        %3039 = vmatmul.bf16.gmra.mxu0 %v679
        %v3040 = vpop.f32.mrf.mxu0
        %v3041 = vadd.f32 %v3028, %v3040
        %v3042 = vpop.f32.mrf.mxu0
        %3043 = vdwg.mxu0
        %3044 = vmatpush.bf16.msra.mxu0 %v2000
        %3045 = vmatpush.bf16.msra.mxu0 %v1998
        %3046 = vmatpush.bf16.msra.mxu0 %v1996
        %3047 = vmatpush.bf16.msra.mxu0 %v1994
        %3048 = vmatpush.bf16.msra.mxu0 %v1992
        %3049 = vmatpush.bf16.msra.mxu0 %v1990
        %3050 = vmatpush.bf16.msra.mxu0 %v1988
        %3051 = vmatpush.bf16.msra.mxu0 %v1986
        %3052 = vmatmul.bf16.gmra.mxu0 %v680
        %v3053 = vpop.f32.mrf.mxu0
        %v3054 = vadd.f32 %v3041, %v3053
        %v3055 = vpop.f32.mrf.mxu0
        %3056 = vdwg.mxu0
        %3057 = vmatpush.bf16.msra.mxu0 %v2016
        %3058 = vmatpush.bf16.msra.mxu0 %v2014
        %3059 = vmatpush.bf16.msra.mxu0 %v2012
        %3060 = vmatpush.bf16.msra.mxu0 %v2010
        %3061 = vmatpush.bf16.msra.mxu0 %v2008
        %3062 = vmatpush.bf16.msra.mxu0 %v2006
        %3063 = vmatpush.bf16.msra.mxu0 %v2004
        %3064 = vmatpush.bf16.msra.mxu0 %v2002
        %3065 = vmatmul.bf16.gmra.mxu0 %v681
        %v3066 = vpop.f32.mrf.mxu0
        %v3067 = vadd.f32 %v3054, %v3066
        %v3068 = vpop.f32.mrf.mxu0
        %3069 = vdwg.mxu0
        %3070 = vmatpush.bf16.msra.mxu0 %v2032
        %3071 = vmatpush.bf16.msra.mxu0 %v2030
        %3072 = vmatpush.bf16.msra.mxu0 %v2028
        %3073 = vmatpush.bf16.msra.mxu0 %v2026
        %3074 = vmatpush.bf16.msra.mxu0 %v2024
        %3075 = vmatpush.bf16.msra.mxu0 %v2022
        %3076 = vmatpush.bf16.msra.mxu0 %v2020
        %3077 = vmatpush.bf16.msra.mxu0 %v2018
        %3078 = vmatmul.bf16.gmra.mxu0 %v682
        %v3079 = vpop.f32.mrf.mxu0
        %v3080 = vadd.f32 %v3067, %v3079
        %v3081 = vpop.f32.mrf.mxu0
        %3082 = vdwg.mxu0
        %3083 = vmatpush.bf16.msra.mxu0 %v2048
        %3084 = vmatpush.bf16.msra.mxu0 %v2046
        %3085 = vmatpush.bf16.msra.mxu0 %v2044
        %3086 = vmatpush.bf16.msra.mxu0 %v2042
        %3087 = vmatpush.bf16.msra.mxu0 %v2040
        %3088 = vmatpush.bf16.msra.mxu0 %v2038
        %3089 = vmatpush.bf16.msra.mxu0 %v2036
        %3090 = vmatpush.bf16.msra.mxu0 %v2034
        %3091 = vmatmul.bf16.gmra.mxu0 %v683
        %v3092 = vpop.f32.mrf.mxu0
        %v3093 = vadd.f32 %v3080, %v3092
        %v3094 = vpop.f32.mrf.mxu0
        %3095 = vdwg.mxu0
        %3096 = vmatpush.bf16.msra.mxu0 %v2064
        %3097 = vmatpush.bf16.msra.mxu0 %v2062
        %3098 = vmatpush.bf16.msra.mxu0 %v2060
        %3099 = vmatpush.bf16.msra.mxu0 %v2058
        %3100 = vmatpush.bf16.msra.mxu0 %v2056
        %3101 = vmatpush.bf16.msra.mxu0 %v2054
        %3102 = vmatpush.bf16.msra.mxu0 %v2052
        %3103 = vmatpush.bf16.msra.mxu0 %v2050
        %3104 = vmatmul.bf16.gmra.mxu0 %v684
        %v3105 = vpop.f32.mrf.mxu0
        %v3106 = vadd.f32 %v3093, %v3105
        %v3107 = vpop.f32.mrf.mxu0
        %3108 = vdwg.mxu0
        %3109 = vmatpush.bf16.msra.mxu0 %v2080
        %3110 = vmatpush.bf16.msra.mxu0 %v2078
        %3111 = vmatpush.bf16.msra.mxu0 %v2076
        %3112 = vmatpush.bf16.msra.mxu0 %v2074
        %3113 = vmatpush.bf16.msra.mxu0 %v2072
        %3114 = vmatpush.bf16.msra.mxu0 %v2070
        %3115 = vmatpush.bf16.msra.mxu0 %v2068
        %3116 = vmatpush.bf16.msra.mxu0 %v2066
        %3117 = vmatmul.bf16.gmra.mxu0 %v685
        %v3118 = vpop.f32.mrf.mxu0
        %v3119 = vadd.f32 %v3106, %v3118
        %v3120 = vpop.f32.mrf.mxu0
        %3121 = vdwg.mxu0
        %3122 = vmatpush.bf16.msra.mxu0 %v2096
        %3123 = vmatpush.bf16.msra.mxu0 %v2094
        %3124 = vmatpush.bf16.msra.mxu0 %v2092
        %3125 = vmatpush.bf16.msra.mxu0 %v2090
        %3126 = vmatpush.bf16.msra.mxu0 %v2088
        %3127 = vmatpush.bf16.msra.mxu0 %v2086
        %3128 = vmatpush.bf16.msra.mxu0 %v2084
        %3129 = vmatpush.bf16.msra.mxu0 %v2082
        %3130 = vmatmul.bf16.gmra.mxu0 %v686
        %v3131 = vpop.f32.mrf.mxu0
        %v3132 = vadd.f32 %v3119, %v3131
        %v3133 = vpop.f32.mrf.mxu0
        %3134 = vdwg.mxu0
        %3135 = vmatpush.bf16.msra.mxu0 %v2112
        %3136 = vmatpush.bf16.msra.mxu0 %v2110
        %3137 = vmatpush.bf16.msra.mxu0 %v2108
        %3138 = vmatpush.bf16.msra.mxu0 %v2106
        %3139 = vmatpush.bf16.msra.mxu0 %v2104
        %3140 = vmatpush.bf16.msra.mxu0 %v2102
        %3141 = vmatpush.bf16.msra.mxu0 %v2100
        %3142 = vmatpush.bf16.msra.mxu0 %v2098
        %3143 = vmatmul.bf16.gmra.mxu0 %v687
        %v3144 = vpop.f32.mrf.mxu0
        %v3145 = vadd.f32 %v3132, %v3144
        %v3146 = vpop.f32.mrf.mxu0
        %3147 = vdwg.mxu0
        %3148 = vmatpush.bf16.msra.mxu0 %v2128
        %3149 = vmatpush.bf16.msra.mxu0 %v2126
        %3150 = vmatpush.bf16.msra.mxu0 %v2124
        %3151 = vmatpush.bf16.msra.mxu0 %v2122
        %3152 = vmatpush.bf16.msra.mxu0 %v2120
        %3153 = vmatpush.bf16.msra.mxu0 %v2118
        %3154 = vmatpush.bf16.msra.mxu0 %v2116
        %3155 = vmatpush.bf16.msra.mxu0 %v2114
        %3156 = vmatmul.bf16.gmra.mxu0 %v688
        %v3157 = vpop.f32.mrf.mxu0
        %v3158 = vadd.f32 %v3145, %v3157
        %v3159 = vpop.f32.mrf.mxu0
        %3160 = vdwg.mxu0
        %3161 = vmatpush.bf16.msra.mxu0 %v2144
        %3162 = vmatpush.bf16.msra.mxu0 %v2142
        %3163 = vmatpush.bf16.msra.mxu0 %v2140
        %3164 = vmatpush.bf16.msra.mxu0 %v2138
        %3165 = vmatpush.bf16.msra.mxu0 %v2136
        %3166 = vmatpush.bf16.msra.mxu0 %v2134
        %3167 = vmatpush.bf16.msra.mxu0 %v2132
        %3168 = vmatpush.bf16.msra.mxu0 %v2130
        %3169 = vmatmul.bf16.gmra.mxu0 %v689
        %v3170 = vpop.f32.mrf.mxu0
        %v3171 = vadd.f32 %v3158, %v3170
        %v3172 = vpop.f32.mrf.mxu0
        %3173 = vdwg.mxu0
        %3174 = vmatpush.bf16.msra.mxu0 %v2160
        %3175 = vmatpush.bf16.msra.mxu0 %v2158
        %3176 = vmatpush.bf16.msra.mxu0 %v2156
        %3177 = vmatpush.bf16.msra.mxu0 %v2154
        %3178 = vmatpush.bf16.msra.mxu0 %v2152
        %3179 = vmatpush.bf16.msra.mxu0 %v2150
        %3180 = vmatpush.bf16.msra.mxu0 %v2148
        %3181 = vmatpush.bf16.msra.mxu0 %v2146
        %3182 = vmatmul.bf16.gmra.mxu0 %v690
        %v3183 = vpop.f32.mrf.mxu0
        %v3184 = vadd.f32 %v3171, %v3183
        %v3185 = vpop.f32.mrf.mxu0
        %3186 = vdwg.mxu0
        %3187 = vmatpush.bf16.msra.mxu0 %v2176
        %3188 = vmatpush.bf16.msra.mxu0 %v2174
        %3189 = vmatpush.bf16.msra.mxu0 %v2172
        %3190 = vmatpush.bf16.msra.mxu0 %v2170
        %3191 = vmatpush.bf16.msra.mxu0 %v2168
        %3192 = vmatpush.bf16.msra.mxu0 %v2166
        %3193 = vmatpush.bf16.msra.mxu0 %v2164
        %3194 = vmatpush.bf16.msra.mxu0 %v2162
        %3195 = vmatmul.bf16.gmra.mxu0 %v691
        %v3196 = vpop.f32.mrf.mxu0
        %v3197 = vadd.f32 %v3184, %v3196
        %v3198 = vpop.f32.mrf.mxu0
        %3199 = vdwg.mxu0
        %3200 = vmatpush.bf16.msra.mxu0 %v2192
        %3201 = vmatpush.bf16.msra.mxu0 %v2190
        %3202 = vmatpush.bf16.msra.mxu0 %v2188
        %3203 = vmatpush.bf16.msra.mxu0 %v2186
        %3204 = vmatpush.bf16.msra.mxu0 %v2184
        %3205 = vmatpush.bf16.msra.mxu0 %v2182
        %3206 = vmatpush.bf16.msra.mxu0 %v2180
        %3207 = vmatpush.bf16.msra.mxu0 %v2178
        %3208 = vmatmul.bf16.gmra.mxu0 %v692
        %v3209 = vpop.f32.mrf.mxu0
        %v3210 = vadd.f32 %v3197, %v3209
        %v3211 = vpop.f32.mrf.mxu0
        %3212 = vdwg.mxu0
        %3213 = vmatpush.bf16.msra.mxu0 %v2208
        %3214 = vmatpush.bf16.msra.mxu0 %v2206
        %3215 = vmatpush.bf16.msra.mxu0 %v2204
        %3216 = vmatpush.bf16.msra.mxu0 %v2202
        %3217 = vmatpush.bf16.msra.mxu0 %v2200
        %3218 = vmatpush.bf16.msra.mxu0 %v2198
        %3219 = vmatpush.bf16.msra.mxu0 %v2196
        %3220 = vmatpush.bf16.msra.mxu0 %v2194
        %3221 = vmatmul.bf16.gmra.mxu0 %v693
        %v3222 = vpop.f32.mrf.mxu0
        %v3223 = vadd.f32 %v3210, %v3222
        %v3224 = vpop.f32.mrf.mxu0
        %3225 = vdwg.mxu0
        %3226 = vmatpush.bf16.msra.mxu0 %v2224
        %3227 = vmatpush.bf16.msra.mxu0 %v2222
        %3228 = vmatpush.bf16.msra.mxu0 %v2220
        %3229 = vmatpush.bf16.msra.mxu0 %v2218
        %3230 = vmatpush.bf16.msra.mxu0 %v2216
        %3231 = vmatpush.bf16.msra.mxu0 %v2214
        %3232 = vmatpush.bf16.msra.mxu0 %v2212
        %3233 = vmatpush.bf16.msra.mxu0 %v2210
        %3234 = vmatmul.bf16.gmra.mxu0 %v694
        %v3235 = vpop.f32.mrf.mxu0
        %v3236 = vadd.f32 %v3223, %v3235
        %v3237 = vpop.f32.mrf.mxu0
        %3238 = vdwg.mxu0
        %3239 = vmatpush.bf16.msra.mxu0 %v2240
        %3240 = vmatpush.bf16.msra.mxu0 %v2238
        %3241 = vmatpush.bf16.msra.mxu0 %v2236
        %3242 = vmatpush.bf16.msra.mxu0 %v2234
        %3243 = vmatpush.bf16.msra.mxu0 %v2232
        %3244 = vmatpush.bf16.msra.mxu0 %v2230
        %3245 = vmatpush.bf16.msra.mxu0 %v2228
        %3246 = vmatpush.bf16.msra.mxu0 %v2226
        %3247 = vmatmul.bf16.gmra.mxu0 %v695
        %v3248 = vpop.f32.mrf.mxu0
        %v3249 = vadd.f32 %v3236, %v3248
        %v3250 = vpop.f32.mrf.mxu0
        %3251 = vdwg.mxu0
        %3252 = vmatpush.bf16.msra.mxu0 %v2256
        %3253 = vmatpush.bf16.msra.mxu0 %v2254
        %3254 = vmatpush.bf16.msra.mxu0 %v2252
        %3255 = vmatpush.bf16.msra.mxu0 %v2250
        %3256 = vmatpush.bf16.msra.mxu0 %v2248
        %3257 = vmatpush.bf16.msra.mxu0 %v2246
        %3258 = vmatpush.bf16.msra.mxu0 %v2244
        %3259 = vmatpush.bf16.msra.mxu0 %v2242
        %3260 = vmatmul.bf16.gmra.mxu0 %v696
        %v3261 = vpop.f32.mrf.mxu0
        %v3262 = vadd.f32 %v3249, %v3261
        %v3263 = vpop.f32.mrf.mxu0
        %3264 = vdwg.mxu0
        %v3265 = vsub.f32 0.0, %v2950
        %v3266 = vsub.f32 0.0, %v3262
        %v3267 = vmul.f32 %v3265, 1.442695
        %v3268 = vpow.pop %v3267
        %v3269 = vmul.f32 %v3266, 1.442695
        %v3270 = vpow.pop %v3269
        %v3271 = vadd.f32 %v3268, 1.0
        %v3272 = vadd.f32 %v3270, 1.0
        %v3273 = vrcp.pop %v3271
        %v3274 = vmul.f32 %v3271, %v3273
        %v3275 = vsub.f32 1.0, %v3274
        %v3276 = vmul.f32 %v3273, %v3275
        %v3277 = vadd.f32 %v3273, %v3276
        %vm3278 = vweird.f32 %v3271
        %vm3279 = vweird.f32 %v3273
        %vm3280 = vmor %vm3278, %vm3279
        %v3281 = vsel %vm3280, %v3273, %v3277
        %v3282 = vand.u32 2147483647, %v3271
        %vm3283 = vcmp.eq.f32.partialorder %v3282, 8.507059e+37
        %v3284 = vand.u32 %v3271, 2147483648
        %v3285 = vor.u32 1.1754944e-38, %v3284
        %v3286 = vsel %vm3283, %v3285, %v3281
        %v3287 = vmul.f32 1.0, %v3286
        %v3288 = vrcp.pop %v3272
        %v3289 = vmul.f32 %v3272, %v3288
        %v3290 = vsub.f32 1.0, %v3289
        %v3291 = vmul.f32 %v3288, %v3290
        %v3292 = vadd.f32 %v3288, %v3291
        %vm3293 = vweird.f32 %v3272
        %vm3294 = vweird.f32 %v3288
        %vm3295 = vmor %vm3293, %vm3294
        %v3296 = vsel %vm3295, %v3288, %v3292
        %v3297 = vand.u32 2147483647, %v3272
        %vm3298 = vcmp.eq.f32.partialorder %v3297, 8.507059e+37
        %v3299 = vand.u32 %v3272, 2147483648
        %v3300 = vor.u32 1.1754944e-38, %v3299
        %v3301 = vsel %vm3298, %v3300, %v3296
        %v3302 = vmul.f32 1.0, %v3301
        %v3303 = vmul.f32 %v2950, %v3287
        %v3304 = vmul.f32 %v3262, %v3302
        %3305 = vst [vmem:[%s233] sm:$0xff] %v3303
        %3306 = vst [vmem:[%s233 + $0x8] sm:$0xff] %v3304
        %s3307 = smul.u32 2, %s20
        %p3308 = scmp.lt.s32.totalorder %s3307, 11
        %s3309 = scalar_select %p3308, %s3307, 11
        %s3310 = smul.addr %s3309, 8
        %s3311 = scalar_lea.vmem %s3, %s3310
        // Predicated region
        $region41: #{forward.2} parent=31 // pred_check
          %p3312 = pneg %p111
        $region42: #{forward.2} parent=31 // pred_check_branch
          %3314 = sbr.rel (%p3312) target = $region44
        $region43: #{forward.2} parent=31 // pred_region
          %s3315 = smul.u32 2, %s20
        $region44: #{forward.2} parent=31 // pred_fallthru
          _
      $region32: #{forward.2} parent=5 // pred_fallthru
        _
      %p3316 = scmp.le.s32.totalorder 2, %s15
      // Predicated region
      $region45: #{forward.2} parent=5 // pred_check
        %p3317 = pneg %p3316
      $region46: #{forward.2} parent=5 // pred_check_branch
        %3319 = sbr.rel (%p3317) target = $region48
      $region47: #{forward.2} parent=5 // pred_region
        %s3320 = ssub.s32 %s15, 2
        // Predicated region
        $region49: #{forward.2} parent=47 // pred_check
          %p3321 = pneg %p117
        $region50: #{forward.2} parent=47 // pred_check_branch
          %3323 = sbr.rel (%p3321) target = $region52
        $region51: #{forward.2} parent=47 // pred_region
          %s3324 = smul.u32 2, %s21
          %p3325 = scmp.lt.s32.totalorder %s3324, 11
          %s3326 = scalar_select %p3325, %s3324, 11
          %s3327 = smul.addr %s3326, 8
          %s3328 = scalar_lea.vmem %s3, %s3327
        $region52: #{forward.2} parent=47 // pred_fallthru
          _
      $region48: #{forward.2} parent=5 // pred_fallthru
        _
    $region6: #{forward.2} parent=1 // loop_footer
      %s19 = sadd.s32 1, %s15
    $region7: #{forward.2} parent=1 // loop_footer_branch
      %14 = sbr.rel target = $region3
    $region8: #{forward.2} parent=1 // loop_exit
      _
    %3329 = vsyncpa [#allocation3], 1
    %s3330 = scalar_lea.sflag [#allocation3], 1
    %3331 = vsyncpa %s3330, 1
    %3332 = vsyncpa [#allocation5], 1
    %s3333 = scalar_lea.sflag [#allocation5], 1
    %3334 = vsyncpa %s3333, 1

// kernel: forward.3
$region0: #{forward.3}
  #allocation0 [shape = 'u32[]', space=smem, size = 0x4, offset = 0x4, fixed_abs, tag = 'smem constant byte address 0x4 - core index']
  #allocation1 [shape = 'u32[72,128]{1,0:T(1,128)}', space=vmem, size = 0x9000, scoped, tag = 'internal scratch']
  %s0 = inlined_call_operand.vmem [shape: f32[2,4,1536], index: 0, kind: input, shape index: {}]
  %s1 = inlined_call_operand.vmem [shape: f32[3,1536,480], index: 1, kind: input, shape index: {}]
  %s2 = inlined_call_operand.vmem [shape: f32[3,1,480], index: 2, kind: input, shape index: {}]
  %s3 = inlined_call_operand.vmem [shape: f32[3,480,5], index: 3, kind: input, shape index: {}]
  %s4 = inlined_call_operand.vmem [shape: f32[3,1,5], index: 4, kind: input, shape index: {}]
  %s5 = inlined_call_operand.hbm [shape: f32[2,5], index: 5, kind: output, shape index: {0}]
  %s6 = inlined_call_operand.hbm [shape: f32[2,5], index: 6, kind: output, shape index: {1}]
  %s7 = inlined_call_operand.hbm [shape: f32[2,5], index: 7, kind: output, shape index: {2}]
  %8 = xla_tuple %s5, %s6, %s7
  %s9 = sld [smem:[#allocation0]]
  $region46: #{forward.3} parent=0
    _
  %s11 = ssub.s32 1, %s9
  %s12 = scalar_select 0, %s11, %s9
  $region1: #{forward.3} parent=0
    #allocation2 [shape = 'u8[1024]{0}', space=vmem, size = 0x400, scoped, tag = 'output window, operand 0, single buffered']
    #allocation3 [shape = 's32[1]{0}', space=sflag, size = 0x4, scoped, tag = 'scoped memory for forward.3']
    #allocation4 [shape = 'u8[1024]{0}', space=vmem, size = 0x400, scoped, tag = 'output window, operand 1, single buffered']
    #allocation5 [shape = 's32[1]{0}', space=sflag, size = 0x4, scoped, tag = 'scoped memory for forward.3']
    #allocation6 [shape = 'u8[1024]{0}', space=vmem, size = 0x400, scoped, tag = 'output window, operand 2, single buffered']
    %13 = vsyncpa [#allocation3], 0
    %14 = vsyncpa [#allocation5], 0
    // Predicated region
    $region2: #{forward.3} parent=1 // pred_check
      _
    $region3: #{forward.3} parent=1 // pred_check_branch
      %16 = sbr.rel (0) target = $region5
    $region4: #{forward.3} parent=1 // pred_region
      _
    $region5: #{forward.3} parent=1 // pred_fallthru
      _
    // Predicated region
    $region6: #{forward.3} parent=1 // pred_check
      _
    $region7: #{forward.3} parent=1 // pred_check_branch
      %18 = sbr.rel (0) target = $region9
    $region8: #{forward.3} parent=1 // pred_region
      _
    $region9: #{forward.3} parent=1 // pred_fallthru
      _
    // Predicated region
    $region10: #{forward.3} parent=1 // pred_check
      _
    $region11: #{forward.3} parent=1 // pred_check_branch
      %20 = sbr.rel (0) target = $region13
    $region12: #{forward.3} parent=1 // pred_region
      _
    $region13: #{forward.3} parent=1 // pred_fallthru
      _
    // Predicated region
    $region14: #{forward.3} parent=1 // pred_check
      _
    $region15: #{forward.3} parent=1 // pred_check_branch
      %22 = sbr.rel (0) target = $region17
    $region16: #{forward.3} parent=1 // pred_region
      _
    $region17: #{forward.3} parent=1 // pred_fallthru
      _
    // Predicated region
    $region18: #{forward.3} parent=1 // pred_check
      _
    $region19: #{forward.3} parent=1 // pred_check_branch
      %24 = sbr.rel (0) target = $region21
    $region20: #{forward.3} parent=1 // pred_region
      _
    $region21: #{forward.3} parent=1 // pred_fallthru
      _
    %v25 = vld [vmem:[%s0] sm:$0xff]
    %v26 = vld [vmem:[%s0 + $0x8] sm:$0xff]
    %v27 = vld [vmem:[%s0 + $0x10] sm:$0xff]
    %v28 = vld [vmem:[%s0 + $0x18] sm:$0xff]
    %v29 = vld [vmem:[%s0 + $0x20] sm:$0xff]
    %v30 = vld [vmem:[%s0 + $0x28] sm:$0xff]
    %v31 = vld [vmem:[%s0 + $0x30] sm:$0xff]
    %v32 = vld [vmem:[%s0 + $0x38] sm:$0xff]
    %v33 = vld [vmem:[%s0 + $0x40] sm:$0xff]
    %v34 = vld [vmem:[%s0 + $0x48] sm:$0xff]
    %v35 = vld [vmem:[%s0 + $0x50] sm:$0xff]
    %v36 = vld [vmem:[%s0 + $0x58] sm:$0xff]
    %49 = vst [vmem:[#allocation1] ss:$2 sm:$0xff] %v25
    %s50 = scalar_lea.vmem [#allocation1], 16
    %51 = vst [vmem:[%s50] ss:$2 sm:$0xff] %v26
    %s52 = scalar_lea.vmem [#allocation1], 32
    %53 = vst [vmem:[%s52] ss:$2 sm:$0xff] %v27
    %s54 = scalar_lea.vmem [#allocation1], 48
    %55 = vst [vmem:[%s54] ss:$2 sm:$0xff] %v28
    %v56 = vld.sshfl [vmem:[#allocation1] sm:$0xff pattern:$0x75316420]
    %v57 = vld.sshfl [vmem:[#allocation1 + $0x8] sm:$0xff pattern:$0x75316420]
    %v58 = vld.sshfl [vmem:[#allocation1 + $0x10] sm:$0xff pattern:$0x75316420]
    %v59 = vld.sshfl [vmem:[#allocation1 + $0x18] sm:$0xff pattern:$0x75316420]
    %v60 = vld.sshfl [vmem:[#allocation1 + $0x20] sm:$0xff pattern:$0x75316420]
    %v61 = vld.sshfl [vmem:[#allocation1 + $0x28] sm:$0xff pattern:$0x75316420]
    %v62 = vld.sshfl [vmem:[#allocation1 + $0x30] sm:$0xff pattern:$0x75316420]
    %v63 = vld.sshfl [vmem:[#allocation1 + $0x38] sm:$0xff pattern:$0x75316420]
    %64 = vst [vmem:[#allocation1] ss:$2 sm:$0xff] %v29
    %65 = vst [vmem:[%s50] ss:$2 sm:$0xff] %v30
    %v66 = vld.sshfl [vmem:[#allocation1] sm:$0xff pattern:$0x75316420]
    %v67 = vld.sshfl [vmem:[#allocation1 + $0x8] sm:$0xff pattern:$0x75316420]
    %v68 = vld.sshfl [vmem:[#allocation1 + $0x10] sm:$0xff pattern:$0x75316420]
    %v69 = vld.sshfl [vmem:[#allocation1 + $0x18] sm:$0xff pattern:$0x75316420]
    %70 = vst [vmem:[%s52] ss:$2 sm:$0xff] %v31
    %71 = vst [vmem:[%s54] ss:$2 sm:$0xff] %v32
    %v72 = vld.sshfl [vmem:[#allocation1 + $0x20] sm:$0xff pattern:$0x75316420]
    %v73 = vld.sshfl [vmem:[#allocation1 + $0x28] sm:$0xff pattern:$0x75316420]
    %v74 = vld.sshfl [vmem:[#allocation1 + $0x30] sm:$0xff pattern:$0x75316420]
    %v75 = vld.sshfl [vmem:[#allocation1 + $0x38] sm:$0xff pattern:$0x75316420]
    %76 = vst [vmem:[#allocation1] ss:$2 sm:$0xff] %v33
    %77 = vst [vmem:[%s50] ss:$2 sm:$0xff] %v34
    %78 = vst [vmem:[%s52] ss:$2 sm:$0xff] %v35
    %79 = vst [vmem:[%s54] ss:$2 sm:$0xff] %v36
    %v80 = vld.sshfl [vmem:[#allocation1] sm:$0xff pattern:$0x75316420]
    %v81 = vld.sshfl [vmem:[#allocation1 + $0x8] sm:$0xff pattern:$0x75316420]
    %v82 = vld.sshfl [vmem:[#allocation1 + $0x10] sm:$0xff pattern:$0x75316420]
    %v83 = vld.sshfl [vmem:[#allocation1 + $0x18] sm:$0xff pattern:$0x75316420]
    %v84 = vld.sshfl [vmem:[#allocation1 + $0x20] sm:$0xff pattern:$0x75316420]
    %v85 = vld.sshfl [vmem:[#allocation1 + $0x28] sm:$0xff pattern:$0x75316420]
    %v86 = vld.sshfl [vmem:[#allocation1 + $0x30] sm:$0xff pattern:$0x75316420]
    %v87 = vld.sshfl [vmem:[#allocation1 + $0x38] sm:$0xff pattern:$0x75316420]
    %vm112 = vcmask 1043456
    %v113 = vsel %vm112, %v56, 0.0
    %v114 = vrot.slane %v113, 4
    %v115 = vadd.f32 %v113, %v114
    %v116 = vrot.slane %v115, 2
    %v117 = vadd.f32 %v115, %v116
    %v118 = vrot.slane %v117, 1
    %v119 = vadd.f32 %v117, %v118
    %v120 = vsel %vm112, %v57, 0.0
    %v121 = vrot.slane %v120, 4
    %v122 = vadd.f32 %v120, %v121
    %v123 = vrot.slane %v122, 2
    %v124 = vadd.f32 %v122, %v123
    %v125 = vrot.slane %v124, 1
    %v126 = vadd.f32 %v124, %v125
    %v127 = vsel %vm112, %v58, 0.0
    %v128 = vrot.slane %v127, 4
    %v129 = vadd.f32 %v127, %v128
    %v130 = vrot.slane %v129, 2
    %v131 = vadd.f32 %v129, %v130
    %v132 = vrot.slane %v131, 1
    %v133 = vadd.f32 %v131, %v132
    %v134 = vsel %vm112, %v59, 0.0
    %v135 = vrot.slane %v134, 4
    %v136 = vadd.f32 %v134, %v135
    %v137 = vrot.slane %v136, 2
    %v138 = vadd.f32 %v136, %v137
    %v139 = vrot.slane %v138, 1
    %v140 = vadd.f32 %v138, %v139
    %v141 = vsel %vm112, %v60, 0.0
    %v142 = vrot.slane %v141, 4
    %v143 = vadd.f32 %v141, %v142
    %v144 = vrot.slane %v143, 2
    %v145 = vadd.f32 %v143, %v144
    %v146 = vrot.slane %v145, 1
    %v147 = vadd.f32 %v145, %v146
    %v148 = vsel %vm112, %v61, 0.0
    %v149 = vrot.slane %v148, 4
    %v150 = vadd.f32 %v148, %v149
    %v151 = vrot.slane %v150, 2
    %v152 = vadd.f32 %v150, %v151
    %v153 = vrot.slane %v152, 1
    %v154 = vadd.f32 %v152, %v153
    %v155 = vsel %vm112, %v62, 0.0
    %v156 = vrot.slane %v155, 4
    %v157 = vadd.f32 %v155, %v156
    %v158 = vrot.slane %v157, 2
    %v159 = vadd.f32 %v157, %v158
    %v160 = vrot.slane %v159, 1
    %v161 = vadd.f32 %v159, %v160
    %v162 = vsel %vm112, %v63, 0.0
    %v163 = vrot.slane %v162, 4
    %v164 = vadd.f32 %v162, %v163
    %v165 = vrot.slane %v164, 2
    %v166 = vadd.f32 %v164, %v165
    %v167 = vrot.slane %v166, 1
    %v168 = vadd.f32 %v166, %v167
    %v169 = vsel %vm112, %v66, 0.0
    %v170 = vrot.slane %v169, 4
    %v171 = vadd.f32 %v169, %v170
    %v172 = vrot.slane %v171, 2
    %v173 = vadd.f32 %v171, %v172
    %v174 = vrot.slane %v173, 1
    %v175 = vadd.f32 %v173, %v174
    %v176 = vsel %vm112, %v67, 0.0
    %v177 = vrot.slane %v176, 4
    %v178 = vadd.f32 %v176, %v177
    %v179 = vrot.slane %v178, 2
    %v180 = vadd.f32 %v178, %v179
    %v181 = vrot.slane %v180, 1
    %v182 = vadd.f32 %v180, %v181
    %v183 = vsel %vm112, %v68, 0.0
    %v184 = vrot.slane %v183, 4
    %v185 = vadd.f32 %v183, %v184
    %v186 = vrot.slane %v185, 2
    %v187 = vadd.f32 %v185, %v186
    %v188 = vrot.slane %v187, 1
    %v189 = vadd.f32 %v187, %v188
    %v190 = vsel %vm112, %v69, 0.0
    %v191 = vrot.slane %v190, 4
    %v192 = vadd.f32 %v190, %v191
    %v193 = vrot.slane %v192, 2
    %v194 = vadd.f32 %v192, %v193
    %v195 = vrot.slane %v194, 1
    %v196 = vadd.f32 %v194, %v195
    %v197 = vsel %vm112, %v72, 0.0
    %v198 = vrot.slane %v197, 4
    %v199 = vadd.f32 %v197, %v198
    %v200 = vrot.slane %v199, 2
    %v201 = vadd.f32 %v199, %v200
    %v202 = vrot.slane %v201, 1
    %v203 = vadd.f32 %v201, %v202
    %v204 = vsel %vm112, %v73, 0.0
    %v205 = vrot.slane %v204, 4
    %v206 = vadd.f32 %v204, %v205
    %v207 = vrot.slane %v206, 2
    %v208 = vadd.f32 %v206, %v207
    %v209 = vrot.slane %v208, 1
    %v210 = vadd.f32 %v208, %v209
    %v211 = vsel %vm112, %v74, 0.0
    %v212 = vrot.slane %v211, 4
    %v213 = vadd.f32 %v211, %v212
    %v214 = vrot.slane %v213, 2
    %v215 = vadd.f32 %v213, %v214
    %v216 = vrot.slane %v215, 1
    %v217 = vadd.f32 %v215, %v216
    %v218 = vsel %vm112, %v75, 0.0
    %v219 = vrot.slane %v218, 4
    %v220 = vadd.f32 %v218, %v219
    %v221 = vrot.slane %v220, 2
    %v222 = vadd.f32 %v220, %v221
    %v223 = vrot.slane %v222, 1
    %v224 = vadd.f32 %v222, %v223
    %v225 = vsel %vm112, %v80, 0.0
    %v226 = vrot.slane %v225, 4
    %v227 = vadd.f32 %v225, %v226
    %v228 = vrot.slane %v227, 2
    %v229 = vadd.f32 %v227, %v228
    %v230 = vrot.slane %v229, 1
    %v231 = vadd.f32 %v229, %v230
    %v232 = vsel %vm112, %v81, 0.0
    %v233 = vrot.slane %v232, 4
    %v234 = vadd.f32 %v232, %v233
    %v235 = vrot.slane %v234, 2
    %v236 = vadd.f32 %v234, %v235
    %v237 = vrot.slane %v236, 1
    %v238 = vadd.f32 %v236, %v237
    %v239 = vsel %vm112, %v82, 0.0
    %v240 = vrot.slane %v239, 4
    %v241 = vadd.f32 %v239, %v240
    %v242 = vrot.slane %v241, 2
    %v243 = vadd.f32 %v241, %v242
    %v244 = vrot.slane %v243, 1
    %v245 = vadd.f32 %v243, %v244
    %v246 = vsel %vm112, %v83, 0.0
    %v247 = vrot.slane %v246, 4
    %v248 = vadd.f32 %v246, %v247
    %v249 = vrot.slane %v248, 2
    %v250 = vadd.f32 %v248, %v249
    %v251 = vrot.slane %v250, 1
    %v252 = vadd.f32 %v250, %v251
    %v253 = vsel %vm112, %v84, 0.0
    %v254 = vrot.slane %v253, 4
    %v255 = vadd.f32 %v253, %v254
    %v256 = vrot.slane %v255, 2
    %v257 = vadd.f32 %v255, %v256
    %v258 = vrot.slane %v257, 1
    %v259 = vadd.f32 %v257, %v258
    %v260 = vsel %vm112, %v85, 0.0
    %v261 = vrot.slane %v260, 4
    %v262 = vadd.f32 %v260, %v261
    %v263 = vrot.slane %v262, 2
    %v264 = vadd.f32 %v262, %v263
    %v265 = vrot.slane %v264, 1
    %v266 = vadd.f32 %v264, %v265
    %v267 = vsel %vm112, %v86, 0.0
    %v268 = vrot.slane %v267, 4
    %v269 = vadd.f32 %v267, %v268
    %v270 = vrot.slane %v269, 2
    %v271 = vadd.f32 %v269, %v270
    %v272 = vrot.slane %v271, 1
    %v273 = vadd.f32 %v271, %v272
    %v274 = vsel %vm112, %v87, 0.0
    %v275 = vrot.slane %v274, 4
    %v276 = vadd.f32 %v274, %v275
    %v277 = vrot.slane %v276, 2
    %v278 = vadd.f32 %v276, %v277
    %v279 = vrot.slane %v278, 1
    %v280 = vadd.f32 %v278, %v279
    %v281 = vrcp.pop 4.0
    %v282 = vmul.f32 4.0, %v281
    %v283 = vsub.f32 1.0, %v282
    %v284 = vmul.f32 %v281, %v283
    %v285 = vadd.f32 %v281, %v284
    %vm286 = vweird.f32 %v281
    %v287 = vsel %vm286, %v281, %v285
    %v288 = vmul.f32 %v119, %v287
    %v289 = vmul.f32 %v126, %v287
    %v290 = vmul.f32 %v133, %v287
    %v291 = vmul.f32 %v140, %v287
    %v292 = vmul.f32 %v147, %v287
    %v293 = vmul.f32 %v154, %v287
    %v294 = vmul.f32 %v161, %v287
    %v295 = vmul.f32 %v168, %v287
    %v296 = vmul.f32 %v175, %v287
    %v297 = vmul.f32 %v182, %v287
    %v298 = vmul.f32 %v189, %v287
    %v299 = vmul.f32 %v196, %v287
    %v300 = vmul.f32 %v203, %v287
    %v301 = vmul.f32 %v210, %v287
    %v302 = vmul.f32 %v217, %v287
    %v303 = vmul.f32 %v224, %v287
    %v304 = vmul.f32 %v231, %v287
    %v305 = vmul.f32 %v238, %v287
    %v306 = vmul.f32 %v245, %v287
    %v307 = vmul.f32 %v252, %v287
    %v308 = vmul.f32 %v259, %v287
    %v309 = vmul.f32 %v266, %v287
    %v310 = vmul.f32 %v273, %v287
    %v311 = vmul.f32 %v280, %v287
    %v312 = vld [vmem:[%s1] sm:$0xff]
    %v313 = vld [vmem:[%s1 + $0x8] sm:$0xff]
    %v314 = vld [vmem:[%s1 + $0x10] sm:$0xff]
    %v315 = vld [vmem:[%s1 + $0x18] sm:$0xff]
    %v316 = vld [vmem:[%s1 + $0x20] sm:$0xff]
    %v317 = vld [vmem:[%s1 + $0x28] sm:$0xff]
    %v318 = vld [vmem:[%s1 + $0x30] sm:$0xff]
    %v319 = vld [vmem:[%s1 + $0x38] sm:$0xff]
    %v320 = vld [vmem:[%s1 + $0x40] sm:$0xff]
    %v321 = vld [vmem:[%s1 + $0x48] sm:$0xff]
    %v322 = vld [vmem:[%s1 + $0x50] sm:$0xff]
    %v323 = vld [vmem:[%s1 + $0x58] sm:$0xff]
    %v324 = vld [vmem:[%s1 + $0x60] sm:$0xff]
    %v325 = vld [vmem:[%s1 + $0x68] sm:$0xff]
    %v326 = vld [vmem:[%s1 + $0x70] sm:$0xff]
    %v327 = vld [vmem:[%s1 + $0x78] sm:$0xff]
    %v328 = vld [vmem:[%s1 + $0x80] sm:$0xff]
    %v329 = vld [vmem:[%s1 + $0x88] sm:$0xff]
    %v330 = vld [vmem:[%s1 + $0x90] sm:$0xff]
    %v331 = vld [vmem:[%s1 + $0x98] sm:$0xff]
    %v332 = vld [vmem:[%s1 + $0xa0] sm:$0xff]
    %v333 = vld [vmem:[%s1 + $0xa8] sm:$0xff]
    %v334 = vld [vmem:[%s1 + $0xb0] sm:$0xff]
    %v335 = vld [vmem:[%s1 + $0xb8] sm:$0xff]
    %v336 = vld [vmem:[%s1 + $0xc0] sm:$0xff]
    %v337 = vld [vmem:[%s1 + $0xc8] sm:$0xff]
    %v338 = vld [vmem:[%s1 + $0xd0] sm:$0xff]
    %v339 = vld [vmem:[%s1 + $0xd8] sm:$0xff]
    %v340 = vld [vmem:[%s1 + $0xe0] sm:$0xff]
    %v341 = vld [vmem:[%s1 + $0xe8] sm:$0xff]
    %v342 = vld [vmem:[%s1 + $0xf0] sm:$0xff]
    %v343 = vld [vmem:[%s1 + $0xf8] sm:$0xff]
    %v344 = vld [vmem:[%s1 + $0x100] sm:$0xff]
    %v345 = vld [vmem:[%s1 + $0x108] sm:$0xff]
    %v346 = vld [vmem:[%s1 + $0x110] sm:$0xff]
    %v347 = vld [vmem:[%s1 + $0x118] sm:$0xff]
    %v348 = vld [vmem:[%s1 + $0x120] sm:$0xff]
    %v349 = vld [vmem:[%s1 + $0x128] sm:$0xff]
    %v350 = vld [vmem:[%s1 + $0x130] sm:$0xff]
    %v351 = vld [vmem:[%s1 + $0x138] sm:$0xff]
    %v352 = vld [vmem:[%s1 + $0x140] sm:$0xff]
    %v353 = vld [vmem:[%s1 + $0x148] sm:$0xff]
    %v354 = vld [vmem:[%s1 + $0x150] sm:$0xff]
    %v355 = vld [vmem:[%s1 + $0x158] sm:$0xff]
    %v356 = vld [vmem:[%s1 + $0x160] sm:$0xff]
    %v357 = vld [vmem:[%s1 + $0x168] sm:$0xff]
    %v358 = vld [vmem:[%s1 + $0x170] sm:$0xff]
    %v359 = vld [vmem:[%s1 + $0x178] sm:$0xff]
    %v360 = vld [vmem:[%s1 + $0x180] sm:$0xff]
    %v361 = vld [vmem:[%s1 + $0x188] sm:$0xff]
    %v362 = vld [vmem:[%s1 + $0x190] sm:$0xff]
    %v363 = vld [vmem:[%s1 + $0x198] sm:$0xff]
    %v364 = vld [vmem:[%s1 + $0x1a0] sm:$0xff]
    %v365 = vld [vmem:[%s1 + $0x1a8] sm:$0xff]
    %v366 = vld [vmem:[%s1 + $0x1b0] sm:$0xff]
    %v367 = vld [vmem:[%s1 + $0x1b8] sm:$0xff]
    %v368 = vld [vmem:[%s1 + $0x1c0] sm:$0xff]
    %v369 = vld [vmem:[%s1 + $0x1c8] sm:$0xff]
    %v370 = vld [vmem:[%s1 + $0x1d0] sm:$0xff]
    %v371 = vld [vmem:[%s1 + $0x1d8] sm:$0xff]
    %v372 = vld [vmem:[%s1 + $0x1e0] sm:$0xff]
    %v373 = vld [vmem:[%s1 + $0x1e8] sm:$0xff]
    %v374 = vld [vmem:[%s1 + $0x1f0] sm:$0xff]
    %v375 = vld [vmem:[%s1 + $0x1f8] sm:$0xff]
    %v376 = vld [vmem:[%s1 + $0x200] sm:$0xff]
    %v377 = vld [vmem:[%s1 + $0x208] sm:$0xff]
    %v378 = vld [vmem:[%s1 + $0x210] sm:$0xff]
    %v379 = vld [vmem:[%s1 + $0x218] sm:$0xff]
    %v380 = vld [vmem:[%s1 + $0x220] sm:$0xff]
    %v381 = vld [vmem:[%s1 + $0x228] sm:$0xff]
    %v382 = vld [vmem:[%s1 + $0x230] sm:$0xff]
    %v383 = vld [vmem:[%s1 + $0x238] sm:$0xff]
    %v384 = vld [vmem:[%s1 + $0x240] sm:$0xff]
    %v385 = vld [vmem:[%s1 + $0x248] sm:$0xff]
    %v386 = vld [vmem:[%s1 + $0x250] sm:$0xff]
    %v387 = vld [vmem:[%s1 + $0x258] sm:$0xff]
    %v388 = vld [vmem:[%s1 + $0x260] sm:$0xff]
    %v389 = vld [vmem:[%s1 + $0x268] sm:$0xff]
    %v390 = vld [vmem:[%s1 + $0x270] sm:$0xff]
    %v391 = vld [vmem:[%s1 + $0x278] sm:$0xff]
    %v392 = vld [vmem:[%s1 + $0x280] sm:$0xff]
    %v393 = vld [vmem:[%s1 + $0x288] sm:$0xff]
    %v394 = vld [vmem:[%s1 + $0x290] sm:$0xff]
    %v395 = vld [vmem:[%s1 + $0x298] sm:$0xff]
    %v396 = vld [vmem:[%s1 + $0x2a0] sm:$0xff]
    %v397 = vld [vmem:[%s1 + $0x2a8] sm:$0xff]
    %v398 = vld [vmem:[%s1 + $0x2b0] sm:$0xff]
    %v399 = vld [vmem:[%s1 + $0x2b8] sm:$0xff]
    %v400 = vld [vmem:[%s1 + $0x2c0] sm:$0xff]
    %v401 = vld [vmem:[%s1 + $0x2c8] sm:$0xff]
    %v402 = vld [vmem:[%s1 + $0x2d0] sm:$0xff]
    %v403 = vld [vmem:[%s1 + $0x2d8] sm:$0xff]
    %v404 = vld [vmem:[%s1 + $0x2e0] sm:$0xff]
    %v405 = vld [vmem:[%s1 + $0x2e8] sm:$0xff]
    %v406 = vld [vmem:[%s1 + $0x2f0] sm:$0xff]
    %v407 = vld [vmem:[%s1 + $0x2f8] sm:$0xff]
    %v408 = vld [vmem:[%s1 + $0x300] sm:$0xff]
    %v409 = vld [vmem:[%s1 + $0x308] sm:$0xff]
    %v410 = vld [vmem:[%s1 + $0x310] sm:$0xff]
    %v411 = vld [vmem:[%s1 + $0x318] sm:$0xff]
    %v412 = vld [vmem:[%s1 + $0x320] sm:$0xff]
    %v413 = vld [vmem:[%s1 + $0x328] sm:$0xff]
    %v414 = vld [vmem:[%s1 + $0x330] sm:$0xff]
    %v415 = vld [vmem:[%s1 + $0x338] sm:$0xff]
    %v416 = vld [vmem:[%s1 + $0x340] sm:$0xff]
    %v417 = vld [vmem:[%s1 + $0x348] sm:$0xff]
    %v418 = vld [vmem:[%s1 + $0x350] sm:$0xff]
    %v419 = vld [vmem:[%s1 + $0x358] sm:$0xff]
    %v420 = vld [vmem:[%s1 + $0x360] sm:$0xff]
    %v421 = vld [vmem:[%s1 + $0x368] sm:$0xff]
    %v422 = vld [vmem:[%s1 + $0x370] sm:$0xff]
    %v423 = vld [vmem:[%s1 + $0x378] sm:$0xff]
    %v424 = vld [vmem:[%s1 + $0x380] sm:$0xff]
    %v425 = vld [vmem:[%s1 + $0x388] sm:$0xff]
    %v426 = vld [vmem:[%s1 + $0x390] sm:$0xff]
    %v427 = vld [vmem:[%s1 + $0x398] sm:$0xff]
    %v428 = vld [vmem:[%s1 + $0x3a0] sm:$0xff]
    %v429 = vld [vmem:[%s1 + $0x3a8] sm:$0xff]
    %v430 = vld [vmem:[%s1 + $0x3b0] sm:$0xff]
    %v431 = vld [vmem:[%s1 + $0x3b8] sm:$0xff]
    %v432 = vld [vmem:[%s1 + $0x3c0] sm:$0xff]
    %v433 = vld [vmem:[%s1 + $0x3c8] sm:$0xff]
    %v434 = vld [vmem:[%s1 + $0x3d0] sm:$0xff]
    %v435 = vld [vmem:[%s1 + $0x3d8] sm:$0xff]
    %v436 = vld [vmem:[%s1 + $0x3e0] sm:$0xff]
    %v437 = vld [vmem:[%s1 + $0x3e8] sm:$0xff]
    %v438 = vld [vmem:[%s1 + $0x3f0] sm:$0xff]
    %v439 = vld [vmem:[%s1 + $0x3f8] sm:$0xff]
    %v440 = vld [vmem:[%s1 + $0x400] sm:$0xff]
    %v441 = vld [vmem:[%s1 + $0x408] sm:$0xff]
    %v442 = vld [vmem:[%s1 + $0x410] sm:$0xff]
    %v443 = vld [vmem:[%s1 + $0x418] sm:$0xff]
    %v444 = vld [vmem:[%s1 + $0x420] sm:$0xff]
    %v445 = vld [vmem:[%s1 + $0x428] sm:$0xff]
    %v446 = vld [vmem:[%s1 + $0x430] sm:$0xff]
    %v447 = vld [vmem:[%s1 + $0x438] sm:$0xff]
    %v448 = vld [vmem:[%s1 + $0x440] sm:$0xff]
    %v449 = vld [vmem:[%s1 + $0x448] sm:$0xff]
    %v450 = vld [vmem:[%s1 + $0x450] sm:$0xff]
    %v451 = vld [vmem:[%s1 + $0x458] sm:$0xff]
    %v452 = vld [vmem:[%s1 + $0x460] sm:$0xff]
    %v453 = vld [vmem:[%s1 + $0x468] sm:$0xff]
    %v454 = vld [vmem:[%s1 + $0x470] sm:$0xff]
    %v455 = vld [vmem:[%s1 + $0x478] sm:$0xff]
    %v456 = vld [vmem:[%s1 + $0x480] sm:$0xff]
    %v457 = vld [vmem:[%s1 + $0x488] sm:$0xff]
    %v458 = vld [vmem:[%s1 + $0x490] sm:$0xff]
    %v459 = vld [vmem:[%s1 + $0x498] sm:$0xff]
    %v460 = vld [vmem:[%s1 + $0x4a0] sm:$0xff]
    %v461 = vld [vmem:[%s1 + $0x4a8] sm:$0xff]
    %v462 = vld [vmem:[%s1 + $0x4b0] sm:$0xff]
    %v463 = vld [vmem:[%s1 + $0x4b8] sm:$0xff]
    %v464 = vld [vmem:[%s1 + $0x4c0] sm:$0xff]
    %v465 = vld [vmem:[%s1 + $0x4c8] sm:$0xff]
    %v466 = vld [vmem:[%s1 + $0x4d0] sm:$0xff]
    %v467 = vld [vmem:[%s1 + $0x4d8] sm:$0xff]
    %v468 = vld [vmem:[%s1 + $0x4e0] sm:$0xff]
    %v469 = vld [vmem:[%s1 + $0x4e8] sm:$0xff]
    %v470 = vld [vmem:[%s1 + $0x4f0] sm:$0xff]
    %v471 = vld [vmem:[%s1 + $0x4f8] sm:$0xff]
    %v472 = vld [vmem:[%s1 + $0x500] sm:$0xff]
    %v473 = vld [vmem:[%s1 + $0x508] sm:$0xff]
    %v474 = vld [vmem:[%s1 + $0x510] sm:$0xff]
    %v475 = vld [vmem:[%s1 + $0x518] sm:$0xff]
    %v476 = vld [vmem:[%s1 + $0x520] sm:$0xff]
    %v477 = vld [vmem:[%s1 + $0x528] sm:$0xff]
    %v478 = vld [vmem:[%s1 + $0x530] sm:$0xff]
    %v479 = vld [vmem:[%s1 + $0x538] sm:$0xff]
    %v480 = vld [vmem:[%s1 + $0x540] sm:$0xff]
    %v481 = vld [vmem:[%s1 + $0x548] sm:$0xff]
    %v482 = vld [vmem:[%s1 + $0x550] sm:$0xff]
    %v483 = vld [vmem:[%s1 + $0x558] sm:$0xff]
    %v484 = vld [vmem:[%s1 + $0x560] sm:$0xff]
    %v485 = vld [vmem:[%s1 + $0x568] sm:$0xff]
    %v486 = vld [vmem:[%s1 + $0x570] sm:$0xff]
    %v487 = vld [vmem:[%s1 + $0x578] sm:$0xff]
    %v488 = vld [vmem:[%s1 + $0x580] sm:$0xff]
    %v489 = vld [vmem:[%s1 + $0x588] sm:$0xff]
    %v490 = vld [vmem:[%s1 + $0x590] sm:$0xff]
    %v491 = vld [vmem:[%s1 + $0x598] sm:$0xff]
    %v492 = vld [vmem:[%s1 + $0x5a0] sm:$0xff]
    %v493 = vld [vmem:[%s1 + $0x5a8] sm:$0xff]
    %v494 = vld [vmem:[%s1 + $0x5b0] sm:$0xff]
    %v495 = vld [vmem:[%s1 + $0x5b8] sm:$0xff]
    %v496 = vld [vmem:[%s1 + $0x5c0] sm:$0xff]
    %v497 = vld [vmem:[%s1 + $0x5c8] sm:$0xff]
    %v498 = vld [vmem:[%s1 + $0x5d0] sm:$0xff]
    %v499 = vld [vmem:[%s1 + $0x5d8] sm:$0xff]
    %v500 = vld [vmem:[%s1 + $0x5e0] sm:$0xff]
    %v501 = vld [vmem:[%s1 + $0x5e8] sm:$0xff]
    %v502 = vld [vmem:[%s1 + $0x5f0] sm:$0xff]
    %v503 = vld [vmem:[%s1 + $0x5f8] sm:$0xff]
    %v504 = vld [vmem:[%s1 + $0x600] sm:$0xff]
    %v505 = vld [vmem:[%s1 + $0x608] sm:$0xff]
    %v506 = vld [vmem:[%s1 + $0x610] sm:$0xff]
    %v507 = vld [vmem:[%s1 + $0x618] sm:$0xff]
    %v508 = vld [vmem:[%s1 + $0x620] sm:$0xff]
    %v509 = vld [vmem:[%s1 + $0x628] sm:$0xff]
    %v510 = vld [vmem:[%s1 + $0x630] sm:$0xff]
    %v511 = vld [vmem:[%s1 + $0x638] sm:$0xff]
    %v512 = vld [vmem:[%s1 + $0x640] sm:$0xff]
    %v513 = vld [vmem:[%s1 + $0x648] sm:$0xff]
    %v514 = vld [vmem:[%s1 + $0x650] sm:$0xff]
    %v515 = vld [vmem:[%s1 + $0x658] sm:$0xff]
    %v516 = vld [vmem:[%s1 + $0x660] sm:$0xff]
    %v517 = vld [vmem:[%s1 + $0x668] sm:$0xff]
    %v518 = vld [vmem:[%s1 + $0x670] sm:$0xff]
    %v519 = vld [vmem:[%s1 + $0x678] sm:$0xff]
    %v520 = vld [vmem:[%s1 + $0x680] sm:$0xff]
    %v521 = vld [vmem:[%s1 + $0x688] sm:$0xff]
    %v522 = vld [vmem:[%s1 + $0x690] sm:$0xff]
    %v523 = vld [vmem:[%s1 + $0x698] sm:$0xff]
    %v524 = vld [vmem:[%s1 + $0x6a0] sm:$0xff]
    %v525 = vld [vmem:[%s1 + $0x6a8] sm:$0xff]
    %v526 = vld [vmem:[%s1 + $0x6b0] sm:$0xff]
    %v527 = vld [vmem:[%s1 + $0x6b8] sm:$0xff]
    %v528 = vld [vmem:[%s1 + $0x6c0] sm:$0xff]
    %v529 = vld [vmem:[%s1 + $0x6c8] sm:$0xff]
    %v530 = vld [vmem:[%s1 + $0x6d0] sm:$0xff]
    %v531 = vld [vmem:[%s1 + $0x6d8] sm:$0xff]
    %v532 = vld [vmem:[%s1 + $0x6e0] sm:$0xff]
    %v533 = vld [vmem:[%s1 + $0x6e8] sm:$0xff]
    %v534 = vld [vmem:[%s1 + $0x6f0] sm:$0xff]
    %v535 = vld [vmem:[%s1 + $0x6f8] sm:$0xff]
    %v536 = vld [vmem:[%s1 + $0x700] sm:$0xff]
    %v537 = vld [vmem:[%s1 + $0x708] sm:$0xff]
    %v538 = vld [vmem:[%s1 + $0x710] sm:$0xff]
    %v539 = vld [vmem:[%s1 + $0x718] sm:$0xff]
    %v540 = vld [vmem:[%s1 + $0x720] sm:$0xff]
    %v541 = vld [vmem:[%s1 + $0x728] sm:$0xff]
    %v542 = vld [vmem:[%s1 + $0x730] sm:$0xff]
    %v543 = vld [vmem:[%s1 + $0x738] sm:$0xff]
    %v544 = vld [vmem:[%s1 + $0x740] sm:$0xff]
    %v545 = vld [vmem:[%s1 + $0x748] sm:$0xff]
    %v546 = vld [vmem:[%s1 + $0x750] sm:$0xff]
    %v547 = vld [vmem:[%s1 + $0x758] sm:$0xff]
    %v548 = vld [vmem:[%s1 + $0x760] sm:$0xff]
    %v549 = vld [vmem:[%s1 + $0x768] sm:$0xff]
    %v550 = vld [vmem:[%s1 + $0x770] sm:$0xff]
    %v551 = vld [vmem:[%s1 + $0x778] sm:$0xff]
    %v552 = vld [vmem:[%s1 + $0x780] sm:$0xff]
    %v553 = vld [vmem:[%s1 + $0x788] sm:$0xff]
    %v554 = vld [vmem:[%s1 + $0x790] sm:$0xff]
    %v555 = vld [vmem:[%s1 + $0x798] sm:$0xff]
    %v556 = vld [vmem:[%s1 + $0x7a0] sm:$0xff]
    %v557 = vld [vmem:[%s1 + $0x7a8] sm:$0xff]
    %v558 = vld [vmem:[%s1 + $0x7b0] sm:$0xff]
    %v559 = vld [vmem:[%s1 + $0x7b8] sm:$0xff]
    %v560 = vld [vmem:[%s1 + $0x7c0] sm:$0xff]
    %v561 = vld [vmem:[%s1 + $0x7c8] sm:$0xff]
    %v562 = vld [vmem:[%s1 + $0x7d0] sm:$0xff]
    %v563 = vld [vmem:[%s1 + $0x7d8] sm:$0xff]
    %v564 = vld [vmem:[%s1 + $0x7e0] sm:$0xff]
    %v565 = vld [vmem:[%s1 + $0x7e8] sm:$0xff]
    %v566 = vld [vmem:[%s1 + $0x7f0] sm:$0xff]
    %v567 = vld [vmem:[%s1 + $0x7f8] sm:$0xff]
    %v568 = vld [vmem:[%s1 + $0x800] sm:$0xff]
    %v569 = vld [vmem:[%s1 + $0x808] sm:$0xff]
    %v570 = vld [vmem:[%s1 + $0x810] sm:$0xff]
    %v571 = vld [vmem:[%s1 + $0x818] sm:$0xff]
    %v572 = vld [vmem:[%s1 + $0x820] sm:$0xff]
    %v573 = vld [vmem:[%s1 + $0x828] sm:$0xff]
    %v574 = vld [vmem:[%s1 + $0x830] sm:$0xff]
    %v575 = vld [vmem:[%s1 + $0x838] sm:$0xff]
    %v576 = vld [vmem:[%s1 + $0x840] sm:$0xff]
    %v577 = vld [vmem:[%s1 + $0x848] sm:$0xff]
    %v578 = vld [vmem:[%s1 + $0x850] sm:$0xff]
    %v579 = vld [vmem:[%s1 + $0x858] sm:$0xff]
    %v580 = vld [vmem:[%s1 + $0x860] sm:$0xff]
    %v581 = vld [vmem:[%s1 + $0x868] sm:$0xff]
    %v582 = vld [vmem:[%s1 + $0x870] sm:$0xff]
    %v583 = vld [vmem:[%s1 + $0x878] sm:$0xff]
    %v584 = vld [vmem:[%s1 + $0x880] sm:$0xff]
    %v585 = vld [vmem:[%s1 + $0x888] sm:$0xff]
    %v586 = vld [vmem:[%s1 + $0x890] sm:$0xff]
    %v587 = vld [vmem:[%s1 + $0x898] sm:$0xff]
    %v588 = vld [vmem:[%s1 + $0x8a0] sm:$0xff]
    %v589 = vld [vmem:[%s1 + $0x8a8] sm:$0xff]
    %v590 = vld [vmem:[%s1 + $0x8b0] sm:$0xff]
    %v591 = vld [vmem:[%s1 + $0x8b8] sm:$0xff]
    %v592 = vld [vmem:[%s1 + $0x8c0] sm:$0xff]
    %v593 = vld [vmem:[%s1 + $0x8c8] sm:$0xff]
    %v594 = vld [vmem:[%s1 + $0x8d0] sm:$0xff]
    %v595 = vld [vmem:[%s1 + $0x8d8] sm:$0xff]
    %v596 = vld [vmem:[%s1 + $0x8e0] sm:$0xff]
    %v597 = vld [vmem:[%s1 + $0x8e8] sm:$0xff]
    %v598 = vld [vmem:[%s1 + $0x8f0] sm:$0xff]
    %v599 = vld [vmem:[%s1 + $0x8f8] sm:$0xff]
    %v600 = vld [vmem:[%s1 + $0x900] sm:$0xff]
    %v601 = vld [vmem:[%s1 + $0x908] sm:$0xff]
    %v602 = vld [vmem:[%s1 + $0x910] sm:$0xff]
    %v603 = vld [vmem:[%s1 + $0x918] sm:$0xff]
    %v604 = vld [vmem:[%s1 + $0x920] sm:$0xff]
    %v605 = vld [vmem:[%s1 + $0x928] sm:$0xff]
    %v606 = vld [vmem:[%s1 + $0x930] sm:$0xff]
    %v607 = vld [vmem:[%s1 + $0x938] sm:$0xff]
    %v608 = vld [vmem:[%s1 + $0x940] sm:$0xff]
    %v609 = vld [vmem:[%s1 + $0x948] sm:$0xff]
    %v610 = vld [vmem:[%s1 + $0x950] sm:$0xff]
    %v611 = vld [vmem:[%s1 + $0x958] sm:$0xff]
    %v612 = vld [vmem:[%s1 + $0x960] sm:$0xff]
    %v613 = vld [vmem:[%s1 + $0x968] sm:$0xff]
    %v614 = vld [vmem:[%s1 + $0x970] sm:$0xff]
    %v615 = vld [vmem:[%s1 + $0x978] sm:$0xff]
    %v616 = vld [vmem:[%s1 + $0x980] sm:$0xff]
    %v617 = vld [vmem:[%s1 + $0x988] sm:$0xff]
    %v618 = vld [vmem:[%s1 + $0x990] sm:$0xff]
    %v619 = vld [vmem:[%s1 + $0x998] sm:$0xff]
    %v620 = vld [vmem:[%s1 + $0x9a0] sm:$0xff]
    %v621 = vld [vmem:[%s1 + $0x9a8] sm:$0xff]
    %v622 = vld [vmem:[%s1 + $0x9b0] sm:$0xff]
    %v623 = vld [vmem:[%s1 + $0x9b8] sm:$0xff]
    %v624 = vld [vmem:[%s1 + $0x9c0] sm:$0xff]
    %v625 = vld [vmem:[%s1 + $0x9c8] sm:$0xff]
    %v626 = vld [vmem:[%s1 + $0x9d0] sm:$0xff]
    %v627 = vld [vmem:[%s1 + $0x9d8] sm:$0xff]
    %v628 = vld [vmem:[%s1 + $0x9e0] sm:$0xff]
    %v629 = vld [vmem:[%s1 + $0x9e8] sm:$0xff]
    %v630 = vld [vmem:[%s1 + $0x9f0] sm:$0xff]
    %v631 = vld [vmem:[%s1 + $0x9f8] sm:$0xff]
    %v632 = vld [vmem:[%s1 + $0xa00] sm:$0xff]
    %v633 = vld [vmem:[%s1 + $0xa08] sm:$0xff]
    %v634 = vld [vmem:[%s1 + $0xa10] sm:$0xff]
    %v635 = vld [vmem:[%s1 + $0xa18] sm:$0xff]
    %v636 = vld [vmem:[%s1 + $0xa20] sm:$0xff]
    %v637 = vld [vmem:[%s1 + $0xa28] sm:$0xff]
    %v638 = vld [vmem:[%s1 + $0xa30] sm:$0xff]
    %v639 = vld [vmem:[%s1 + $0xa38] sm:$0xff]
    %v640 = vld [vmem:[%s1 + $0xa40] sm:$0xff]
    %v641 = vld [vmem:[%s1 + $0xa48] sm:$0xff]
    %v642 = vld [vmem:[%s1 + $0xa50] sm:$0xff]
    %v643 = vld [vmem:[%s1 + $0xa58] sm:$0xff]
    %v644 = vld [vmem:[%s1 + $0xa60] sm:$0xff]
    %v645 = vld [vmem:[%s1 + $0xa68] sm:$0xff]
    %v646 = vld [vmem:[%s1 + $0xa70] sm:$0xff]
    %v647 = vld [vmem:[%s1 + $0xa78] sm:$0xff]
    %v648 = vld [vmem:[%s1 + $0xa80] sm:$0xff]
    %v649 = vld [vmem:[%s1 + $0xa88] sm:$0xff]
    %v650 = vld [vmem:[%s1 + $0xa90] sm:$0xff]
    %v651 = vld [vmem:[%s1 + $0xa98] sm:$0xff]
    %v652 = vld [vmem:[%s1 + $0xaa0] sm:$0xff]
    %v653 = vld [vmem:[%s1 + $0xaa8] sm:$0xff]
    %v654 = vld [vmem:[%s1 + $0xab0] sm:$0xff]
    %v655 = vld [vmem:[%s1 + $0xab8] sm:$0xff]
    %v656 = vld [vmem:[%s1 + $0xac0] sm:$0xff]
    %v657 = vld [vmem:[%s1 + $0xac8] sm:$0xff]
    %v658 = vld [vmem:[%s1 + $0xad0] sm:$0xff]
    %v659 = vld [vmem:[%s1 + $0xad8] sm:$0xff]
    %v660 = vld [vmem:[%s1 + $0xae0] sm:$0xff]
    %v661 = vld [vmem:[%s1 + $0xae8] sm:$0xff]
    %v662 = vld [vmem:[%s1 + $0xaf0] sm:$0xff]
    %v663 = vld [vmem:[%s1 + $0xaf8] sm:$0xff]
    %v664 = vld [vmem:[%s1 + $0xb00] sm:$0xff]
    %v665 = vld [vmem:[%s1 + $0xb08] sm:$0xff]
    %v666 = vld [vmem:[%s1 + $0xb10] sm:$0xff]
    %v667 = vld [vmem:[%s1 + $0xb18] sm:$0xff]
    %v668 = vld [vmem:[%s1 + $0xb20] sm:$0xff]
    %v669 = vld [vmem:[%s1 + $0xb28] sm:$0xff]
    %v670 = vld [vmem:[%s1 + $0xb30] sm:$0xff]
    %v671 = vld [vmem:[%s1 + $0xb38] sm:$0xff]
    %v672 = vld [vmem:[%s1 + $0xb40] sm:$0xff]
    %v673 = vld [vmem:[%s1 + $0xb48] sm:$0xff]
    %v674 = vld [vmem:[%s1 + $0xb50] sm:$0xff]
    %v675 = vld [vmem:[%s1 + $0xb58] sm:$0xff]
    %v676 = vld [vmem:[%s1 + $0xb60] sm:$0xff]
    %v677 = vld [vmem:[%s1 + $0xb68] sm:$0xff]
    %v678 = vld [vmem:[%s1 + $0xb70] sm:$0xff]
    %v679 = vld [vmem:[%s1 + $0xb78] sm:$0xff]
    %v680 = vld [vmem:[%s1 + $0xb80] sm:$0xff]
    %v681 = vld [vmem:[%s1 + $0xb88] sm:$0xff]
    %v682 = vld [vmem:[%s1 + $0xb90] sm:$0xff]
    %v683 = vld [vmem:[%s1 + $0xb98] sm:$0xff]
    %v684 = vld [vmem:[%s1 + $0xba0] sm:$0xff]
    %v685 = vld [vmem:[%s1 + $0xba8] sm:$0xff]
    %v686 = vld [vmem:[%s1 + $0xbb0] sm:$0xff]
    %v687 = vld [vmem:[%s1 + $0xbb8] sm:$0xff]
    %v688 = vld [vmem:[%s1 + $0xbc0] sm:$0xff]
    %v689 = vld [vmem:[%s1 + $0xbc8] sm:$0xff]
    %v690 = vld [vmem:[%s1 + $0xbd0] sm:$0xff]
    %v691 = vld [vmem:[%s1 + $0xbd8] sm:$0xff]
    %v692 = vld [vmem:[%s1 + $0xbe0] sm:$0xff]
    %v693 = vld [vmem:[%s1 + $0xbe8] sm:$0xff]
    %v694 = vld [vmem:[%s1 + $0xbf0] sm:$0xff]
    %v695 = vld [vmem:[%s1 + $0xbf8] sm:$0xff]
    %v696 = vld [vmem:[%s1 + $0xc00] sm:$0xff]
    %v697 = vld [vmem:[%s1 + $0xc08] sm:$0xff]
    %v698 = vld [vmem:[%s1 + $0xc10] sm:$0xff]
    %v699 = vld [vmem:[%s1 + $0xc18] sm:$0xff]
    %v700 = vld [vmem:[%s1 + $0xc20] sm:$0xff]
    %v701 = vld [vmem:[%s1 + $0xc28] sm:$0xff]
    %v702 = vld [vmem:[%s1 + $0xc30] sm:$0xff]
    %v703 = vld [vmem:[%s1 + $0xc38] sm:$0xff]
    %v704 = vld [vmem:[%s1 + $0xc40] sm:$0xff]
    %v705 = vld [vmem:[%s1 + $0xc48] sm:$0xff]
    %v706 = vld [vmem:[%s1 + $0xc50] sm:$0xff]
    %v707 = vld [vmem:[%s1 + $0xc58] sm:$0xff]
    %v708 = vld [vmem:[%s1 + $0xc60] sm:$0xff]
    %v709 = vld [vmem:[%s1 + $0xc68] sm:$0xff]
    %v710 = vld [vmem:[%s1 + $0xc70] sm:$0xff]
    %v711 = vld [vmem:[%s1 + $0xc78] sm:$0xff]
    %v712 = vld [vmem:[%s1 + $0xc80] sm:$0xff]
    %v713 = vld [vmem:[%s1 + $0xc88] sm:$0xff]
    %v714 = vld [vmem:[%s1 + $0xc90] sm:$0xff]
    %v715 = vld [vmem:[%s1 + $0xc98] sm:$0xff]
    %v716 = vld [vmem:[%s1 + $0xca0] sm:$0xff]
    %v717 = vld [vmem:[%s1 + $0xca8] sm:$0xff]
    %v718 = vld [vmem:[%s1 + $0xcb0] sm:$0xff]
    %v719 = vld [vmem:[%s1 + $0xcb8] sm:$0xff]
    %v720 = vld [vmem:[%s1 + $0xcc0] sm:$0xff]
    %v721 = vld [vmem:[%s1 + $0xcc8] sm:$0xff]
    %v722 = vld [vmem:[%s1 + $0xcd0] sm:$0xff]
    %v723 = vld [vmem:[%s1 + $0xcd8] sm:$0xff]
    %v724 = vld [vmem:[%s1 + $0xce0] sm:$0xff]
    %v725 = vld [vmem:[%s1 + $0xce8] sm:$0xff]
    %v726 = vld [vmem:[%s1 + $0xcf0] sm:$0xff]
    %v727 = vld [vmem:[%s1 + $0xcf8] sm:$0xff]
    %v728 = vld [vmem:[%s1 + $0xd00] sm:$0xff]
    %v729 = vld [vmem:[%s1 + $0xd08] sm:$0xff]
    %v730 = vld [vmem:[%s1 + $0xd10] sm:$0xff]
    %v731 = vld [vmem:[%s1 + $0xd18] sm:$0xff]
    %v732 = vld [vmem:[%s1 + $0xd20] sm:$0xff]
    %v733 = vld [vmem:[%s1 + $0xd28] sm:$0xff]
    %v734 = vld [vmem:[%s1 + $0xd30] sm:$0xff]
    %v735 = vld [vmem:[%s1 + $0xd38] sm:$0xff]
    %v736 = vld [vmem:[%s1 + $0xd40] sm:$0xff]
    %v737 = vld [vmem:[%s1 + $0xd48] sm:$0xff]
    %v738 = vld [vmem:[%s1 + $0xd50] sm:$0xff]
    %v739 = vld [vmem:[%s1 + $0xd58] sm:$0xff]
    %v740 = vld [vmem:[%s1 + $0xd60] sm:$0xff]
    %v741 = vld [vmem:[%s1 + $0xd68] sm:$0xff]
    %v742 = vld [vmem:[%s1 + $0xd70] sm:$0xff]
    %v743 = vld [vmem:[%s1 + $0xd78] sm:$0xff]
    %v744 = vld [vmem:[%s1 + $0xd80] sm:$0xff]
    %v745 = vld [vmem:[%s1 + $0xd88] sm:$0xff]
    %v746 = vld [vmem:[%s1 + $0xd90] sm:$0xff]
    %v747 = vld [vmem:[%s1 + $0xd98] sm:$0xff]
    %v748 = vld [vmem:[%s1 + $0xda0] sm:$0xff]
    %v749 = vld [vmem:[%s1 + $0xda8] sm:$0xff]
    %v750 = vld [vmem:[%s1 + $0xdb0] sm:$0xff]
    %v751 = vld [vmem:[%s1 + $0xdb8] sm:$0xff]
    %v752 = vld [vmem:[%s1 + $0xdc0] sm:$0xff]
    %v753 = vld [vmem:[%s1 + $0xdc8] sm:$0xff]
    %v754 = vld [vmem:[%s1 + $0xdd0] sm:$0xff]
    %v755 = vld [vmem:[%s1 + $0xdd8] sm:$0xff]
    %v756 = vld [vmem:[%s1 + $0xde0] sm:$0xff]
    %v757 = vld [vmem:[%s1 + $0xde8] sm:$0xff]
    %v758 = vld [vmem:[%s1 + $0xdf0] sm:$0xff]
    %v759 = vld [vmem:[%s1 + $0xdf8] sm:$0xff]
    %v760 = vld [vmem:[%s1 + $0xe00] sm:$0xff]
    %v761 = vld [vmem:[%s1 + $0xe08] sm:$0xff]
    %v762 = vld [vmem:[%s1 + $0xe10] sm:$0xff]
    %v763 = vld [vmem:[%s1 + $0xe18] sm:$0xff]
    %v764 = vld [vmem:[%s1 + $0xe20] sm:$0xff]
    %v765 = vld [vmem:[%s1 + $0xe28] sm:$0xff]
    %v766 = vld [vmem:[%s1 + $0xe30] sm:$0xff]
    %v767 = vld [vmem:[%s1 + $0xe38] sm:$0xff]
    %v768 = vld [vmem:[%s1 + $0xe40] sm:$0xff]
    %v769 = vld [vmem:[%s1 + $0xe48] sm:$0xff]
    %v770 = vld [vmem:[%s1 + $0xe50] sm:$0xff]
    %v771 = vld [vmem:[%s1 + $0xe58] sm:$0xff]
    %v772 = vld [vmem:[%s1 + $0xe60] sm:$0xff]
    %v773 = vld [vmem:[%s1 + $0xe68] sm:$0xff]
    %v774 = vld [vmem:[%s1 + $0xe70] sm:$0xff]
    %v775 = vld [vmem:[%s1 + $0xe78] sm:$0xff]
    %v776 = vld [vmem:[%s1 + $0xe80] sm:$0xff]
    %v777 = vld [vmem:[%s1 + $0xe88] sm:$0xff]
    %v778 = vld [vmem:[%s1 + $0xe90] sm:$0xff]
    %v779 = vld [vmem:[%s1 + $0xe98] sm:$0xff]
    %v780 = vld [vmem:[%s1 + $0xea0] sm:$0xff]
    %v781 = vld [vmem:[%s1 + $0xea8] sm:$0xff]
    %v782 = vld [vmem:[%s1 + $0xeb0] sm:$0xff]
    %v783 = vld [vmem:[%s1 + $0xeb8] sm:$0xff]
    %v784 = vld [vmem:[%s1 + $0xec0] sm:$0xff]
    %v785 = vld [vmem:[%s1 + $0xec8] sm:$0xff]
    %v786 = vld [vmem:[%s1 + $0xed0] sm:$0xff]
    %v787 = vld [vmem:[%s1 + $0xed8] sm:$0xff]
    %v788 = vld [vmem:[%s1 + $0xee0] sm:$0xff]
    %v789 = vld [vmem:[%s1 + $0xee8] sm:$0xff]
    %v790 = vld [vmem:[%s1 + $0xef0] sm:$0xff]
    %v791 = vld [vmem:[%s1 + $0xef8] sm:$0xff]
    %v792 = vld [vmem:[%s1 + $0xf00] sm:$0xff]
    %v793 = vld [vmem:[%s1 + $0xf08] sm:$0xff]
    %v794 = vld [vmem:[%s1 + $0xf10] sm:$0xff]
    %v795 = vld [vmem:[%s1 + $0xf18] sm:$0xff]
    %v796 = vld [vmem:[%s1 + $0xf20] sm:$0xff]
    %v797 = vld [vmem:[%s1 + $0xf28] sm:$0xff]
    %v798 = vld [vmem:[%s1 + $0xf30] sm:$0xff]
    %v799 = vld [vmem:[%s1 + $0xf38] sm:$0xff]
    %v800 = vld [vmem:[%s1 + $0xf40] sm:$0xff]
    %v801 = vld [vmem:[%s1 + $0xf48] sm:$0xff]
    %v802 = vld [vmem:[%s1 + $0xf50] sm:$0xff]
    %v803 = vld [vmem:[%s1 + $0xf58] sm:$0xff]
    %v804 = vld [vmem:[%s1 + $0xf60] sm:$0xff]
    %v805 = vld [vmem:[%s1 + $0xf68] sm:$0xff]
    %v806 = vld [vmem:[%s1 + $0xf70] sm:$0xff]
    %v807 = vld [vmem:[%s1 + $0xf78] sm:$0xff]
    %v808 = vld [vmem:[%s1 + $0xf80] sm:$0xff]
    %v809 = vld [vmem:[%s1 + $0xf88] sm:$0xff]
    %v810 = vld [vmem:[%s1 + $0xf90] sm:$0xff]
    %v811 = vld [vmem:[%s1 + $0xf98] sm:$0xff]
    %v812 = vld [vmem:[%s1 + $0xfa0] sm:$0xff]
    %v813 = vld [vmem:[%s1 + $0xfa8] sm:$0xff]
    %v814 = vld [vmem:[%s1 + $0xfb0] sm:$0xff]
    %v815 = vld [vmem:[%s1 + $0xfb8] sm:$0xff]
    %v816 = vld [vmem:[%s1 + $0xfc0] sm:$0xff]
    %v817 = vld [vmem:[%s1 + $0xfc8] sm:$0xff]
    %v818 = vld [vmem:[%s1 + $0xfd0] sm:$0xff]
    %v819 = vld [vmem:[%s1 + $0xfd8] sm:$0xff]
    %v820 = vld [vmem:[%s1 + $0xfe0] sm:$0xff]
    %v821 = vld [vmem:[%s1 + $0xfe8] sm:$0xff]
    %v822 = vld [vmem:[%s1 + $0xff0] sm:$0xff]
    %v823 = vld [vmem:[%s1 + $0xff8] sm:$0xff]
    %v824 = vld [vmem:[%s1 + $0x1000] sm:$0xff]
    %v825 = vld [vmem:[%s1 + $0x1008] sm:$0xff]
    %v826 = vld [vmem:[%s1 + $0x1010] sm:$0xff]
    %v827 = vld [vmem:[%s1 + $0x1018] sm:$0xff]
    %v828 = vld [vmem:[%s1 + $0x1020] sm:$0xff]
    %v829 = vld [vmem:[%s1 + $0x1028] sm:$0xff]
    %v830 = vld [vmem:[%s1 + $0x1030] sm:$0xff]
    %v831 = vld [vmem:[%s1 + $0x1038] sm:$0xff]
    %v832 = vld [vmem:[%s1 + $0x1040] sm:$0xff]
    %v833 = vld [vmem:[%s1 + $0x1048] sm:$0xff]
    %v834 = vld [vmem:[%s1 + $0x1050] sm:$0xff]
    %v835 = vld [vmem:[%s1 + $0x1058] sm:$0xff]
    %v836 = vld [vmem:[%s1 + $0x1060] sm:$0xff]
    %v837 = vld [vmem:[%s1 + $0x1068] sm:$0xff]
    %v838 = vld [vmem:[%s1 + $0x1070] sm:$0xff]
    %v839 = vld [vmem:[%s1 + $0x1078] sm:$0xff]
    %v840 = vld [vmem:[%s1 + $0x1080] sm:$0xff]
    %v841 = vld [vmem:[%s1 + $0x1088] sm:$0xff]
    %v842 = vld [vmem:[%s1 + $0x1090] sm:$0xff]
    %v843 = vld [vmem:[%s1 + $0x1098] sm:$0xff]
    %v844 = vld [vmem:[%s1 + $0x10a0] sm:$0xff]
    %v845 = vld [vmem:[%s1 + $0x10a8] sm:$0xff]
    %v846 = vld [vmem:[%s1 + $0x10b0] sm:$0xff]
    %v847 = vld [vmem:[%s1 + $0x10b8] sm:$0xff]
    %v848 = vld [vmem:[%s1 + $0x10c0] sm:$0xff]
    %v849 = vld [vmem:[%s1 + $0x10c8] sm:$0xff]
    %v850 = vld [vmem:[%s1 + $0x10d0] sm:$0xff]
    %v851 = vld [vmem:[%s1 + $0x10d8] sm:$0xff]
    %v852 = vld [vmem:[%s1 + $0x10e0] sm:$0xff]
    %v853 = vld [vmem:[%s1 + $0x10e8] sm:$0xff]
    %v854 = vld [vmem:[%s1 + $0x10f0] sm:$0xff]
    %v855 = vld [vmem:[%s1 + $0x10f8] sm:$0xff]
    %v856 = vld [vmem:[%s1 + $0x1100] sm:$0xff]
    %v857 = vld [vmem:[%s1 + $0x1108] sm:$0xff]
    %v858 = vld [vmem:[%s1 + $0x1110] sm:$0xff]
    %v859 = vld [vmem:[%s1 + $0x1118] sm:$0xff]
    %v860 = vld [vmem:[%s1 + $0x1120] sm:$0xff]
    %v861 = vld [vmem:[%s1 + $0x1128] sm:$0xff]
    %v862 = vld [vmem:[%s1 + $0x1130] sm:$0xff]
    %v863 = vld [vmem:[%s1 + $0x1138] sm:$0xff]
    %v864 = vld [vmem:[%s1 + $0x1140] sm:$0xff]
    %v865 = vld [vmem:[%s1 + $0x1148] sm:$0xff]
    %v866 = vld [vmem:[%s1 + $0x1150] sm:$0xff]
    %v867 = vld [vmem:[%s1 + $0x1158] sm:$0xff]
    %v868 = vld [vmem:[%s1 + $0x1160] sm:$0xff]
    %v869 = vld [vmem:[%s1 + $0x1168] sm:$0xff]
    %v870 = vld [vmem:[%s1 + $0x1170] sm:$0xff]
    %v871 = vld [vmem:[%s1 + $0x1178] sm:$0xff]
    %v872 = vld [vmem:[%s1 + $0x1180] sm:$0xff]
    %v873 = vld [vmem:[%s1 + $0x1188] sm:$0xff]
    %v874 = vld [vmem:[%s1 + $0x1190] sm:$0xff]
    %v875 = vld [vmem:[%s1 + $0x1198] sm:$0xff]
    %v876 = vld [vmem:[%s1 + $0x11a0] sm:$0xff]
    %v877 = vld [vmem:[%s1 + $0x11a8] sm:$0xff]
    %v878 = vld [vmem:[%s1 + $0x11b0] sm:$0xff]
    %v879 = vld [vmem:[%s1 + $0x11b8] sm:$0xff]
    %v880 = vld [vmem:[%s1 + $0x11c0] sm:$0xff]
    %v881 = vld [vmem:[%s1 + $0x11c8] sm:$0xff]
    %v882 = vld [vmem:[%s1 + $0x11d0] sm:$0xff]
    %v883 = vld [vmem:[%s1 + $0x11d8] sm:$0xff]
    %v884 = vld [vmem:[%s1 + $0x11e0] sm:$0xff]
    %v885 = vld [vmem:[%s1 + $0x11e8] sm:$0xff]
    %v886 = vld [vmem:[%s1 + $0x11f0] sm:$0xff]
    %v887 = vld [vmem:[%s1 + $0x11f8] sm:$0xff]
    %v888 = vld [vmem:[%s1 + $0x1200] sm:$0xff]
    %v889 = vld [vmem:[%s1 + $0x1208] sm:$0xff]
    %v890 = vld [vmem:[%s1 + $0x1210] sm:$0xff]
    %v891 = vld [vmem:[%s1 + $0x1218] sm:$0xff]
    %v892 = vld [vmem:[%s1 + $0x1220] sm:$0xff]
    %v893 = vld [vmem:[%s1 + $0x1228] sm:$0xff]
    %v894 = vld [vmem:[%s1 + $0x1230] sm:$0xff]
    %v895 = vld [vmem:[%s1 + $0x1238] sm:$0xff]
    %v896 = vld [vmem:[%s1 + $0x1240] sm:$0xff]
    %v897 = vld [vmem:[%s1 + $0x1248] sm:$0xff]
    %v898 = vld [vmem:[%s1 + $0x1250] sm:$0xff]
    %v899 = vld [vmem:[%s1 + $0x1258] sm:$0xff]
    %v900 = vld [vmem:[%s1 + $0x1260] sm:$0xff]
    %v901 = vld [vmem:[%s1 + $0x1268] sm:$0xff]
    %v902 = vld [vmem:[%s1 + $0x1270] sm:$0xff]
    %v903 = vld [vmem:[%s1 + $0x1278] sm:$0xff]
    %v904 = vld [vmem:[%s1 + $0x1280] sm:$0xff]
    %v905 = vld [vmem:[%s1 + $0x1288] sm:$0xff]
    %v906 = vld [vmem:[%s1 + $0x1290] sm:$0xff]
    %v907 = vld [vmem:[%s1 + $0x1298] sm:$0xff]
    %v908 = vld [vmem:[%s1 + $0x12a0] sm:$0xff]
    %v909 = vld [vmem:[%s1 + $0x12a8] sm:$0xff]
    %v910 = vld [vmem:[%s1 + $0x12b0] sm:$0xff]
    %v911 = vld [vmem:[%s1 + $0x12b8] sm:$0xff]
    %v912 = vld [vmem:[%s1 + $0x12c0] sm:$0xff]
    %v913 = vld [vmem:[%s1 + $0x12c8] sm:$0xff]
    %v914 = vld [vmem:[%s1 + $0x12d0] sm:$0xff]
    %v915 = vld [vmem:[%s1 + $0x12d8] sm:$0xff]
    %v916 = vld [vmem:[%s1 + $0x12e0] sm:$0xff]
    %v917 = vld [vmem:[%s1 + $0x12e8] sm:$0xff]
    %v918 = vld [vmem:[%s1 + $0x12f0] sm:$0xff]
    %v919 = vld [vmem:[%s1 + $0x12f8] sm:$0xff]
    %v920 = vld [vmem:[%s1 + $0x1300] sm:$0xff]
    %v921 = vld [vmem:[%s1 + $0x1308] sm:$0xff]
    %v922 = vld [vmem:[%s1 + $0x1310] sm:$0xff]
    %v923 = vld [vmem:[%s1 + $0x1318] sm:$0xff]
    %v924 = vld [vmem:[%s1 + $0x1320] sm:$0xff]
    %v925 = vld [vmem:[%s1 + $0x1328] sm:$0xff]
    %v926 = vld [vmem:[%s1 + $0x1330] sm:$0xff]
    %v927 = vld [vmem:[%s1 + $0x1338] sm:$0xff]
    %v928 = vld [vmem:[%s1 + $0x1340] sm:$0xff]
    %v929 = vld [vmem:[%s1 + $0x1348] sm:$0xff]
    %v930 = vld [vmem:[%s1 + $0x1350] sm:$0xff]
    %v931 = vld [vmem:[%s1 + $0x1358] sm:$0xff]
    %v932 = vld [vmem:[%s1 + $0x1360] sm:$0xff]
    %v933 = vld [vmem:[%s1 + $0x1368] sm:$0xff]
    %v934 = vld [vmem:[%s1 + $0x1370] sm:$0xff]
    %v935 = vld [vmem:[%s1 + $0x1378] sm:$0xff]
    %v936 = vld [vmem:[%s1 + $0x1380] sm:$0xff]
    %v937 = vld [vmem:[%s1 + $0x1388] sm:$0xff]
    %v938 = vld [vmem:[%s1 + $0x1390] sm:$0xff]
    %v939 = vld [vmem:[%s1 + $0x1398] sm:$0xff]
    %v940 = vld [vmem:[%s1 + $0x13a0] sm:$0xff]
    %v941 = vld [vmem:[%s1 + $0x13a8] sm:$0xff]
    %v942 = vld [vmem:[%s1 + $0x13b0] sm:$0xff]
    %v943 = vld [vmem:[%s1 + $0x13b8] sm:$0xff]
    %v944 = vld [vmem:[%s1 + $0x13c0] sm:$0xff]
    %v945 = vld [vmem:[%s1 + $0x13c8] sm:$0xff]
    %v946 = vld [vmem:[%s1 + $0x13d0] sm:$0xff]
    %v947 = vld [vmem:[%s1 + $0x13d8] sm:$0xff]
    %v948 = vld [vmem:[%s1 + $0x13e0] sm:$0xff]
    %v949 = vld [vmem:[%s1 + $0x13e8] sm:$0xff]
    %v950 = vld [vmem:[%s1 + $0x13f0] sm:$0xff]
    %v951 = vld [vmem:[%s1 + $0x13f8] sm:$0xff]
    %v952 = vld [vmem:[%s1 + $0x1400] sm:$0xff]
    %v953 = vld [vmem:[%s1 + $0x1408] sm:$0xff]
    %v954 = vld [vmem:[%s1 + $0x1410] sm:$0xff]
    %v955 = vld [vmem:[%s1 + $0x1418] sm:$0xff]
    %v956 = vld [vmem:[%s1 + $0x1420] sm:$0xff]
    %v957 = vld [vmem:[%s1 + $0x1428] sm:$0xff]
    %v958 = vld [vmem:[%s1 + $0x1430] sm:$0xff]
    %v959 = vld [vmem:[%s1 + $0x1438] sm:$0xff]
    %v960 = vld [vmem:[%s1 + $0x1440] sm:$0xff]
    %v961 = vld [vmem:[%s1 + $0x1448] sm:$0xff]
    %v962 = vld [vmem:[%s1 + $0x1450] sm:$0xff]
    %v963 = vld [vmem:[%s1 + $0x1458] sm:$0xff]
    %v964 = vld [vmem:[%s1 + $0x1460] sm:$0xff]
    %v965 = vld [vmem:[%s1 + $0x1468] sm:$0xff]
    %v966 = vld [vmem:[%s1 + $0x1470] sm:$0xff]
    %v967 = vld [vmem:[%s1 + $0x1478] sm:$0xff]
    %v968 = vld [vmem:[%s1 + $0x1480] sm:$0xff]
    %v969 = vld [vmem:[%s1 + $0x1488] sm:$0xff]
    %v970 = vld [vmem:[%s1 + $0x1490] sm:$0xff]
    %v971 = vld [vmem:[%s1 + $0x1498] sm:$0xff]
    %v972 = vld [vmem:[%s1 + $0x14a0] sm:$0xff]
    %v973 = vld [vmem:[%s1 + $0x14a8] sm:$0xff]
    %v974 = vld [vmem:[%s1 + $0x14b0] sm:$0xff]
    %v975 = vld [vmem:[%s1 + $0x14b8] sm:$0xff]
    %v976 = vld [vmem:[%s1 + $0x14c0] sm:$0xff]
    %v977 = vld [vmem:[%s1 + $0x14c8] sm:$0xff]
    %v978 = vld [vmem:[%s1 + $0x14d0] sm:$0xff]
    %v979 = vld [vmem:[%s1 + $0x14d8] sm:$0xff]
    %v980 = vld [vmem:[%s1 + $0x14e0] sm:$0xff]
    %v981 = vld [vmem:[%s1 + $0x14e8] sm:$0xff]
    %v982 = vld [vmem:[%s1 + $0x14f0] sm:$0xff]
    %v983 = vld [vmem:[%s1 + $0x14f8] sm:$0xff]
    %v984 = vld [vmem:[%s1 + $0x1500] sm:$0xff]
    %v985 = vld [vmem:[%s1 + $0x1508] sm:$0xff]
    %v986 = vld [vmem:[%s1 + $0x1510] sm:$0xff]
    %v987 = vld [vmem:[%s1 + $0x1518] sm:$0xff]
    %v988 = vld [vmem:[%s1 + $0x1520] sm:$0xff]
    %v989 = vld [vmem:[%s1 + $0x1528] sm:$0xff]
    %v990 = vld [vmem:[%s1 + $0x1530] sm:$0xff]
    %v991 = vld [vmem:[%s1 + $0x1538] sm:$0xff]
    %v992 = vld [vmem:[%s1 + $0x1540] sm:$0xff]
    %v993 = vld [vmem:[%s1 + $0x1548] sm:$0xff]
    %v994 = vld [vmem:[%s1 + $0x1550] sm:$0xff]
    %v995 = vld [vmem:[%s1 + $0x1558] sm:$0xff]
    %v996 = vld [vmem:[%s1 + $0x1560] sm:$0xff]
    %v997 = vld [vmem:[%s1 + $0x1568] sm:$0xff]
    %v998 = vld [vmem:[%s1 + $0x1570] sm:$0xff]
    %v999 = vld [vmem:[%s1 + $0x1578] sm:$0xff]
    %v1000 = vld [vmem:[%s1 + $0x1580] sm:$0xff]
    %v1001 = vld [vmem:[%s1 + $0x1588] sm:$0xff]
    %v1002 = vld [vmem:[%s1 + $0x1590] sm:$0xff]
    %v1003 = vld [vmem:[%s1 + $0x1598] sm:$0xff]
    %v1004 = vld [vmem:[%s1 + $0x15a0] sm:$0xff]
    %v1005 = vld [vmem:[%s1 + $0x15a8] sm:$0xff]
    %v1006 = vld [vmem:[%s1 + $0x15b0] sm:$0xff]
    %v1007 = vld [vmem:[%s1 + $0x15b8] sm:$0xff]
    %v1008 = vld [vmem:[%s1 + $0x15c0] sm:$0xff]
    %v1009 = vld [vmem:[%s1 + $0x15c8] sm:$0xff]
    %v1010 = vld [vmem:[%s1 + $0x15d0] sm:$0xff]
    %v1011 = vld [vmem:[%s1 + $0x15d8] sm:$0xff]
    %v1012 = vld [vmem:[%s1 + $0x15e0] sm:$0xff]
    %v1013 = vld [vmem:[%s1 + $0x15e8] sm:$0xff]
    %v1014 = vld [vmem:[%s1 + $0x15f0] sm:$0xff]
    %v1015 = vld [vmem:[%s1 + $0x15f8] sm:$0xff]
    %v1016 = vld [vmem:[%s1 + $0x1600] sm:$0xff]
    %v1017 = vld [vmem:[%s1 + $0x1608] sm:$0xff]
    %v1018 = vld [vmem:[%s1 + $0x1610] sm:$0xff]
    %v1019 = vld [vmem:[%s1 + $0x1618] sm:$0xff]
    %v1020 = vld [vmem:[%s1 + $0x1620] sm:$0xff]
    %v1021 = vld [vmem:[%s1 + $0x1628] sm:$0xff]
    %v1022 = vld [vmem:[%s1 + $0x1630] sm:$0xff]
    %v1023 = vld [vmem:[%s1 + $0x1638] sm:$0xff]
    %v1024 = vld [vmem:[%s1 + $0x1640] sm:$0xff]
    %v1025 = vld [vmem:[%s1 + $0x1648] sm:$0xff]
    %v1026 = vld [vmem:[%s1 + $0x1650] sm:$0xff]
    %v1027 = vld [vmem:[%s1 + $0x1658] sm:$0xff]
    %v1028 = vld [vmem:[%s1 + $0x1660] sm:$0xff]
    %v1029 = vld [vmem:[%s1 + $0x1668] sm:$0xff]
    %v1030 = vld [vmem:[%s1 + $0x1670] sm:$0xff]
    %v1031 = vld [vmem:[%s1 + $0x1678] sm:$0xff]
    %v1032 = vld [vmem:[%s1 + $0x1680] sm:$0xff]
    %v1033 = vld [vmem:[%s1 + $0x1688] sm:$0xff]
    %v1034 = vld [vmem:[%s1 + $0x1690] sm:$0xff]
    %v1035 = vld [vmem:[%s1 + $0x1698] sm:$0xff]
    %v1036 = vld [vmem:[%s1 + $0x16a0] sm:$0xff]
    %v1037 = vld [vmem:[%s1 + $0x16a8] sm:$0xff]
    %v1038 = vld [vmem:[%s1 + $0x16b0] sm:$0xff]
    %v1039 = vld [vmem:[%s1 + $0x16b8] sm:$0xff]
    %v1040 = vld [vmem:[%s1 + $0x16c0] sm:$0xff]
    %v1041 = vld [vmem:[%s1 + $0x16c8] sm:$0xff]
    %v1042 = vld [vmem:[%s1 + $0x16d0] sm:$0xff]
    %v1043 = vld [vmem:[%s1 + $0x16d8] sm:$0xff]
    %v1044 = vld [vmem:[%s1 + $0x16e0] sm:$0xff]
    %v1045 = vld [vmem:[%s1 + $0x16e8] sm:$0xff]
    %v1046 = vld [vmem:[%s1 + $0x16f0] sm:$0xff]
    %v1047 = vld [vmem:[%s1 + $0x16f8] sm:$0xff]
    %v1048 = vld [vmem:[%s1 + $0x1700] sm:$0xff]
    %v1049 = vld [vmem:[%s1 + $0x1708] sm:$0xff]
    %v1050 = vld [vmem:[%s1 + $0x1710] sm:$0xff]
    %v1051 = vld [vmem:[%s1 + $0x1718] sm:$0xff]
    %v1052 = vld [vmem:[%s1 + $0x1720] sm:$0xff]
    %v1053 = vld [vmem:[%s1 + $0x1728] sm:$0xff]
    %v1054 = vld [vmem:[%s1 + $0x1730] sm:$0xff]
    %v1055 = vld [vmem:[%s1 + $0x1738] sm:$0xff]
    %v1056 = vld [vmem:[%s1 + $0x1740] sm:$0xff]
    %v1057 = vld [vmem:[%s1 + $0x1748] sm:$0xff]
    %v1058 = vld [vmem:[%s1 + $0x1750] sm:$0xff]
    %v1059 = vld [vmem:[%s1 + $0x1758] sm:$0xff]
    %v1060 = vld [vmem:[%s1 + $0x1760] sm:$0xff]
    %v1061 = vld [vmem:[%s1 + $0x1768] sm:$0xff]
    %v1062 = vld [vmem:[%s1 + $0x1770] sm:$0xff]
    %v1063 = vld [vmem:[%s1 + $0x1778] sm:$0xff]
    %v1064 = vld [vmem:[%s1 + $0x1780] sm:$0xff]
    %v1065 = vld [vmem:[%s1 + $0x1788] sm:$0xff]
    %v1066 = vld [vmem:[%s1 + $0x1790] sm:$0xff]
    %v1067 = vld [vmem:[%s1 + $0x1798] sm:$0xff]
    %v1068 = vld [vmem:[%s1 + $0x17a0] sm:$0xff]
    %v1069 = vld [vmem:[%s1 + $0x17a8] sm:$0xff]
    %v1070 = vld [vmem:[%s1 + $0x17b0] sm:$0xff]
    %v1071 = vld [vmem:[%s1 + $0x17b8] sm:$0xff]
    %v1072 = vld [vmem:[%s1 + $0x17c0] sm:$0xff]
    %v1073 = vld [vmem:[%s1 + $0x17c8] sm:$0xff]
    %v1074 = vld [vmem:[%s1 + $0x17d0] sm:$0xff]
    %v1075 = vld [vmem:[%s1 + $0x17d8] sm:$0xff]
    %v1076 = vld [vmem:[%s1 + $0x17e0] sm:$0xff]
    %v1077 = vld [vmem:[%s1 + $0x17e8] sm:$0xff]
    %v1078 = vld [vmem:[%s1 + $0x17f0] sm:$0xff]
    %v1079 = vld [vmem:[%s1 + $0x17f8] sm:$0xff]
    %v1080 = vld [vmem:[%s2] sm:$0xf]
    %v1082 = vperm.slane %v1080, 0
    %v1083 = vperm.slane %v1080, 1
    %v1084 = vperm.slane %v1080, 2
    %v1085 = vperm.slane %v1080, 3
    %vm1114 = vcmask 1041409
    %v1115 = vsel %vm1114, %v300, %v288
    %v1116 = vsel %vm1114, %v301, %v289
    %v1117 = vsel %vm1114, %v302, %v290
    %v1118 = vsel %vm1114, %v303, %v291
    %v1119 = vsel %vm1114, %v304, %v292
    %v1120 = vsel %vm1114, %v305, %v293
    %v1121 = vsel %vm1114, %v306, %v294
    %v1122 = vsel %vm1114, %v307, %v295
    %v1123 = vsel %vm1114, %v308, %v296
    %v1124 = vsel %vm1114, %v309, %v297
    %v1125 = vsel %vm1114, %v310, %v298
    %v1126 = vsel %vm1114, %v311, %v299
    %1139 = vmatpush.msra.mxu0 %v372
    %1140 = vmatpush.msra.mxu0 %v368
    %1141 = vmatpush.msra.mxu0 %v364
    %1142 = vmatpush.msra.mxu0 %v360
    %1143 = vmatpush.msra.mxu0 %v356
    %1144 = vmatpush.msra.mxu0 %v352
    %1145 = vmatpush.msra.mxu0 %v348
    %1146 = vmatpush.msra.mxu0 %v344
    %1147 = vmatpush.msra.mxu0 %v340
    %1148 = vmatpush.msra.mxu0 %v336
    %1149 = vmatpush.msra.mxu0 %v332
    %1150 = vmatpush.msra.mxu0 %v328
    %1151 = vmatpush.msra.mxu0 %v324
    %1152 = vmatpush.msra.mxu0 %v320
    %1153 = vmatpush.msra.mxu0 %v316
    %1154 = vmatpush.msra.mxu0 %v312
    %1155 = vmatmul.f32.gmra.mxu0 %v1115
    %v1156 = vpop.f32.mrf.mxu0
    %v1157 = vadd.f32 %v1082, %v1156
    %1158 = vdwg.mxu0
    %1159 = vmatpush.msra.mxu0 %v436
    %1160 = vmatpush.msra.mxu0 %v432
    %1161 = vmatpush.msra.mxu0 %v428
    %1162 = vmatpush.msra.mxu0 %v424
    %1163 = vmatpush.msra.mxu0 %v420
    %1164 = vmatpush.msra.mxu0 %v416
    %1165 = vmatpush.msra.mxu0 %v412
    %1166 = vmatpush.msra.mxu0 %v408
    %1167 = vmatpush.msra.mxu0 %v404
    %1168 = vmatpush.msra.mxu0 %v400
    %1169 = vmatpush.msra.mxu0 %v396
    %1170 = vmatpush.msra.mxu0 %v392
    %1171 = vmatpush.msra.mxu0 %v388
    %1172 = vmatpush.msra.mxu0 %v384
    %1173 = vmatpush.msra.mxu0 %v380
    %1174 = vmatpush.msra.mxu0 %v376
    %1175 = vmatmul.f32.gmra.mxu0 %v1116
    %v1176 = vpop.f32.mrf.mxu0
    %v1177 = vadd.f32 %v1157, %v1176
    %1178 = vdwg.mxu0
    %1179 = vmatpush.msra.mxu0 %v500
    %1180 = vmatpush.msra.mxu0 %v496
    %1181 = vmatpush.msra.mxu0 %v492
    %1182 = vmatpush.msra.mxu0 %v488
    %1183 = vmatpush.msra.mxu0 %v484
    %1184 = vmatpush.msra.mxu0 %v480
    %1185 = vmatpush.msra.mxu0 %v476
    %1186 = vmatpush.msra.mxu0 %v472
    %1187 = vmatpush.msra.mxu0 %v468
    %1188 = vmatpush.msra.mxu0 %v464
    %1189 = vmatpush.msra.mxu0 %v460
    %1190 = vmatpush.msra.mxu0 %v456
    %1191 = vmatpush.msra.mxu0 %v452
    %1192 = vmatpush.msra.mxu0 %v448
    %1193 = vmatpush.msra.mxu0 %v444
    %1194 = vmatpush.msra.mxu0 %v440
    %1195 = vmatmul.f32.gmra.mxu0 %v1117
    %v1196 = vpop.f32.mrf.mxu0
    %v1197 = vadd.f32 %v1177, %v1196
    %1198 = vdwg.mxu0
    %1199 = vmatpush.msra.mxu0 %v564
    %1200 = vmatpush.msra.mxu0 %v560
    %1201 = vmatpush.msra.mxu0 %v556
    %1202 = vmatpush.msra.mxu0 %v552
    %1203 = vmatpush.msra.mxu0 %v548
    %1204 = vmatpush.msra.mxu0 %v544
    %1205 = vmatpush.msra.mxu0 %v540
    %1206 = vmatpush.msra.mxu0 %v536
    %1207 = vmatpush.msra.mxu0 %v532
    %1208 = vmatpush.msra.mxu0 %v528
    %1209 = vmatpush.msra.mxu0 %v524
    %1210 = vmatpush.msra.mxu0 %v520
    %1211 = vmatpush.msra.mxu0 %v516
    %1212 = vmatpush.msra.mxu0 %v512
    %1213 = vmatpush.msra.mxu0 %v508
    %1214 = vmatpush.msra.mxu0 %v504
    %1215 = vmatmul.f32.gmra.mxu0 %v1118
    %v1216 = vpop.f32.mrf.mxu0
    %v1217 = vadd.f32 %v1197, %v1216
    %1218 = vdwg.mxu0
    %1219 = vmatpush.msra.mxu0 %v628
    %1220 = vmatpush.msra.mxu0 %v624
    %1221 = vmatpush.msra.mxu0 %v620
    %1222 = vmatpush.msra.mxu0 %v616
    %1223 = vmatpush.msra.mxu0 %v612
    %1224 = vmatpush.msra.mxu0 %v608
    %1225 = vmatpush.msra.mxu0 %v604
    %1226 = vmatpush.msra.mxu0 %v600
    %1227 = vmatpush.msra.mxu0 %v596
    %1228 = vmatpush.msra.mxu0 %v592
    %1229 = vmatpush.msra.mxu0 %v588
    %1230 = vmatpush.msra.mxu0 %v584
    %1231 = vmatpush.msra.mxu0 %v580
    %1232 = vmatpush.msra.mxu0 %v576
    %1233 = vmatpush.msra.mxu0 %v572
    %1234 = vmatpush.msra.mxu0 %v568
    %1235 = vmatmul.f32.gmra.mxu0 %v1119
    %v1236 = vpop.f32.mrf.mxu0
    %v1237 = vadd.f32 %v1217, %v1236
    %1238 = vdwg.mxu0
    %1239 = vmatpush.msra.mxu0 %v692
    %1240 = vmatpush.msra.mxu0 %v688
    %1241 = vmatpush.msra.mxu0 %v684
    %1242 = vmatpush.msra.mxu0 %v680
    %1243 = vmatpush.msra.mxu0 %v676
    %1244 = vmatpush.msra.mxu0 %v672
    %1245 = vmatpush.msra.mxu0 %v668
    %1246 = vmatpush.msra.mxu0 %v664
    %1247 = vmatpush.msra.mxu0 %v660
    %1248 = vmatpush.msra.mxu0 %v656
    %1249 = vmatpush.msra.mxu0 %v652
    %1250 = vmatpush.msra.mxu0 %v648
    %1251 = vmatpush.msra.mxu0 %v644
    %1252 = vmatpush.msra.mxu0 %v640
    %1253 = vmatpush.msra.mxu0 %v636
    %1254 = vmatpush.msra.mxu0 %v632
    %1255 = vmatmul.f32.gmra.mxu0 %v1120
    %v1256 = vpop.f32.mrf.mxu0
    %v1257 = vadd.f32 %v1237, %v1256
    %1258 = vdwg.mxu0
    %1259 = vmatpush.msra.mxu0 %v756
    %1260 = vmatpush.msra.mxu0 %v752
    %1261 = vmatpush.msra.mxu0 %v748
    %1262 = vmatpush.msra.mxu0 %v744
    %1263 = vmatpush.msra.mxu0 %v740
    %1264 = vmatpush.msra.mxu0 %v736
    %1265 = vmatpush.msra.mxu0 %v732
    %1266 = vmatpush.msra.mxu0 %v728
    %1267 = vmatpush.msra.mxu0 %v724
    %1268 = vmatpush.msra.mxu0 %v720
    %1269 = vmatpush.msra.mxu0 %v716
    %1270 = vmatpush.msra.mxu0 %v712
    %1271 = vmatpush.msra.mxu0 %v708
    %1272 = vmatpush.msra.mxu0 %v704
    %1273 = vmatpush.msra.mxu0 %v700
    %1274 = vmatpush.msra.mxu0 %v696
    %1275 = vmatmul.f32.gmra.mxu0 %v1121
    %v1276 = vpop.f32.mrf.mxu0
    %v1277 = vadd.f32 %v1257, %v1276
    %1278 = vdwg.mxu0
    %1279 = vmatpush.msra.mxu0 %v820
    %1280 = vmatpush.msra.mxu0 %v816
    %1281 = vmatpush.msra.mxu0 %v812
    %1282 = vmatpush.msra.mxu0 %v808
    %1283 = vmatpush.msra.mxu0 %v804
    %1284 = vmatpush.msra.mxu0 %v800
    %1285 = vmatpush.msra.mxu0 %v796
    %1286 = vmatpush.msra.mxu0 %v792
    %1287 = vmatpush.msra.mxu0 %v788
    %1288 = vmatpush.msra.mxu0 %v784
    %1289 = vmatpush.msra.mxu0 %v780
    %1290 = vmatpush.msra.mxu0 %v776
    %1291 = vmatpush.msra.mxu0 %v772
    %1292 = vmatpush.msra.mxu0 %v768
    %1293 = vmatpush.msra.mxu0 %v764
    %1294 = vmatpush.msra.mxu0 %v760
    %1295 = vmatmul.f32.gmra.mxu0 %v1122
    %v1296 = vpop.f32.mrf.mxu0
    %v1297 = vadd.f32 %v1277, %v1296
    %1298 = vdwg.mxu0
    %1299 = vmatpush.msra.mxu0 %v884
    %1300 = vmatpush.msra.mxu0 %v880
    %1301 = vmatpush.msra.mxu0 %v876
    %1302 = vmatpush.msra.mxu0 %v872
    %1303 = vmatpush.msra.mxu0 %v868
    %1304 = vmatpush.msra.mxu0 %v864
    %1305 = vmatpush.msra.mxu0 %v860
    %1306 = vmatpush.msra.mxu0 %v856
    %1307 = vmatpush.msra.mxu0 %v852
    %1308 = vmatpush.msra.mxu0 %v848
    %1309 = vmatpush.msra.mxu0 %v844
    %1310 = vmatpush.msra.mxu0 %v840
    %1311 = vmatpush.msra.mxu0 %v836
    %1312 = vmatpush.msra.mxu0 %v832
    %1313 = vmatpush.msra.mxu0 %v828
    %1314 = vmatpush.msra.mxu0 %v824
    %1315 = vmatmul.f32.gmra.mxu0 %v1123
    %v1316 = vpop.f32.mrf.mxu0
    %v1317 = vadd.f32 %v1297, %v1316
    %1318 = vdwg.mxu0
    %1319 = vmatpush.msra.mxu0 %v948
    %1320 = vmatpush.msra.mxu0 %v944
    %1321 = vmatpush.msra.mxu0 %v940
    %1322 = vmatpush.msra.mxu0 %v936
    %1323 = vmatpush.msra.mxu0 %v932
    %1324 = vmatpush.msra.mxu0 %v928
    %1325 = vmatpush.msra.mxu0 %v924
    %1326 = vmatpush.msra.mxu0 %v920
    %1327 = vmatpush.msra.mxu0 %v916
    %1328 = vmatpush.msra.mxu0 %v912
    %1329 = vmatpush.msra.mxu0 %v908
    %1330 = vmatpush.msra.mxu0 %v904
    %1331 = vmatpush.msra.mxu0 %v900
    %1332 = vmatpush.msra.mxu0 %v896
    %1333 = vmatpush.msra.mxu0 %v892
    %1334 = vmatpush.msra.mxu0 %v888
    %1335 = vmatmul.f32.gmra.mxu0 %v1124
    %v1336 = vpop.f32.mrf.mxu0
    %v1337 = vadd.f32 %v1317, %v1336
    %1338 = vdwg.mxu0
    %1339 = vmatpush.msra.mxu0 %v1012
    %1340 = vmatpush.msra.mxu0 %v1008
    %1341 = vmatpush.msra.mxu0 %v1004
    %1342 = vmatpush.msra.mxu0 %v1000
    %1343 = vmatpush.msra.mxu0 %v996
    %1344 = vmatpush.msra.mxu0 %v992
    %1345 = vmatpush.msra.mxu0 %v988
    %1346 = vmatpush.msra.mxu0 %v984
    %1347 = vmatpush.msra.mxu0 %v980
    %1348 = vmatpush.msra.mxu0 %v976
    %1349 = vmatpush.msra.mxu0 %v972
    %1350 = vmatpush.msra.mxu0 %v968
    %1351 = vmatpush.msra.mxu0 %v964
    %1352 = vmatpush.msra.mxu0 %v960
    %1353 = vmatpush.msra.mxu0 %v956
    %1354 = vmatpush.msra.mxu0 %v952
    %1355 = vmatmul.f32.gmra.mxu0 %v1125
    %v1356 = vpop.f32.mrf.mxu0
    %v1357 = vadd.f32 %v1337, %v1356
    %1358 = vdwg.mxu0
    %1359 = vmatpush.msra.mxu0 %v1076
    %1360 = vmatpush.msra.mxu0 %v1072
    %1361 = vmatpush.msra.mxu0 %v1068
    %1362 = vmatpush.msra.mxu0 %v1064
    %1363 = vmatpush.msra.mxu0 %v1060
    %1364 = vmatpush.msra.mxu0 %v1056
    %1365 = vmatpush.msra.mxu0 %v1052
    %1366 = vmatpush.msra.mxu0 %v1048
    %1367 = vmatpush.msra.mxu0 %v1044
    %1368 = vmatpush.msra.mxu0 %v1040
    %1369 = vmatpush.msra.mxu0 %v1036
    %1370 = vmatpush.msra.mxu0 %v1032
    %1371 = vmatpush.msra.mxu0 %v1028
    %1372 = vmatpush.msra.mxu0 %v1024
    %1373 = vmatpush.msra.mxu0 %v1020
    %1374 = vmatpush.msra.mxu0 %v1016
    %1375 = vmatmul.f32.gmra.mxu0 %v1126
    %v1376 = vpop.f32.mrf.mxu0
    %v1377 = vadd.f32 %v1357, %v1376
    %1378 = vdwg.mxu0
    %1379 = vmatpush.msra.mxu0 %v373
    %1380 = vmatpush.msra.mxu0 %v369
    %1381 = vmatpush.msra.mxu0 %v365
    %1382 = vmatpush.msra.mxu0 %v361
    %1383 = vmatpush.msra.mxu0 %v357
    %1384 = vmatpush.msra.mxu0 %v353
    %1385 = vmatpush.msra.mxu0 %v349
    %1386 = vmatpush.msra.mxu0 %v345
    %1387 = vmatpush.msra.mxu0 %v341
    %1388 = vmatpush.msra.mxu0 %v337
    %1389 = vmatpush.msra.mxu0 %v333
    %1390 = vmatpush.msra.mxu0 %v329
    %1391 = vmatpush.msra.mxu0 %v325
    %1392 = vmatpush.msra.mxu0 %v321
    %1393 = vmatpush.msra.mxu0 %v317
    %1394 = vmatpush.msra.mxu0 %v313
    %1395 = vmatmul.f32.gmra.mxu0 %v1115
    %v1396 = vpop.f32.mrf.mxu0
    %v1397 = vadd.f32 %v1083, %v1396
    %1398 = vdwg.mxu0
    %1399 = vmatpush.msra.mxu0 %v437
    %1400 = vmatpush.msra.mxu0 %v433
    %1401 = vmatpush.msra.mxu0 %v429
    %1402 = vmatpush.msra.mxu0 %v425
    %1403 = vmatpush.msra.mxu0 %v421
    %1404 = vmatpush.msra.mxu0 %v417
    %1405 = vmatpush.msra.mxu0 %v413
    %1406 = vmatpush.msra.mxu0 %v409
    %1407 = vmatpush.msra.mxu0 %v405
    %1408 = vmatpush.msra.mxu0 %v401
    %1409 = vmatpush.msra.mxu0 %v397
    %1410 = vmatpush.msra.mxu0 %v393
    %1411 = vmatpush.msra.mxu0 %v389
    %1412 = vmatpush.msra.mxu0 %v385
    %1413 = vmatpush.msra.mxu0 %v381
    %1414 = vmatpush.msra.mxu0 %v377
    %1415 = vmatmul.f32.gmra.mxu0 %v1116
    %v1416 = vpop.f32.mrf.mxu0
    %v1417 = vadd.f32 %v1397, %v1416
    %1418 = vdwg.mxu0
    %1419 = vmatpush.msra.mxu0 %v501
    %1420 = vmatpush.msra.mxu0 %v497
    %1421 = vmatpush.msra.mxu0 %v493
    %1422 = vmatpush.msra.mxu0 %v489
    %1423 = vmatpush.msra.mxu0 %v485
    %1424 = vmatpush.msra.mxu0 %v481
    %1425 = vmatpush.msra.mxu0 %v477
    %1426 = vmatpush.msra.mxu0 %v473
    %1427 = vmatpush.msra.mxu0 %v469
    %1428 = vmatpush.msra.mxu0 %v465
    %1429 = vmatpush.msra.mxu0 %v461
    %1430 = vmatpush.msra.mxu0 %v457
    %1431 = vmatpush.msra.mxu0 %v453
    %1432 = vmatpush.msra.mxu0 %v449
    %1433 = vmatpush.msra.mxu0 %v445
    %1434 = vmatpush.msra.mxu0 %v441
    %1435 = vmatmul.f32.gmra.mxu0 %v1117
    %v1436 = vpop.f32.mrf.mxu0
    %v1437 = vadd.f32 %v1417, %v1436
    %1438 = vdwg.mxu0
    %1439 = vmatpush.msra.mxu0 %v565
    %1440 = vmatpush.msra.mxu0 %v561
    %1441 = vmatpush.msra.mxu0 %v557
    %1442 = vmatpush.msra.mxu0 %v553
    %1443 = vmatpush.msra.mxu0 %v549
    %1444 = vmatpush.msra.mxu0 %v545
    %1445 = vmatpush.msra.mxu0 %v541
    %1446 = vmatpush.msra.mxu0 %v537
    %1447 = vmatpush.msra.mxu0 %v533
    %1448 = vmatpush.msra.mxu0 %v529
    %1449 = vmatpush.msra.mxu0 %v525
    %1450 = vmatpush.msra.mxu0 %v521
    %1451 = vmatpush.msra.mxu0 %v517
    %1452 = vmatpush.msra.mxu0 %v513
    %1453 = vmatpush.msra.mxu0 %v509
    %1454 = vmatpush.msra.mxu0 %v505
    %1455 = vmatmul.f32.gmra.mxu0 %v1118
    %v1456 = vpop.f32.mrf.mxu0
    %v1457 = vadd.f32 %v1437, %v1456
    %1458 = vdwg.mxu0
    %1459 = vmatpush.msra.mxu0 %v629
    %1460 = vmatpush.msra.mxu0 %v625
    %1461 = vmatpush.msra.mxu0 %v621
    %1462 = vmatpush.msra.mxu0 %v617
    %1463 = vmatpush.msra.mxu0 %v613
    %1464 = vmatpush.msra.mxu0 %v609
    %1465 = vmatpush.msra.mxu0 %v605
    %1466 = vmatpush.msra.mxu0 %v601
    %1467 = vmatpush.msra.mxu0 %v597
    %1468 = vmatpush.msra.mxu0 %v593
    %1469 = vmatpush.msra.mxu0 %v589
    %1470 = vmatpush.msra.mxu0 %v585
    %1471 = vmatpush.msra.mxu0 %v581
    %1472 = vmatpush.msra.mxu0 %v577
    %1473 = vmatpush.msra.mxu0 %v573
    %1474 = vmatpush.msra.mxu0 %v569
    %1475 = vmatmul.f32.gmra.mxu0 %v1119
    %v1476 = vpop.f32.mrf.mxu0
    %v1477 = vadd.f32 %v1457, %v1476
    %1478 = vdwg.mxu0
    %1479 = vmatpush.msra.mxu0 %v693
    %1480 = vmatpush.msra.mxu0 %v689
    %1481 = vmatpush.msra.mxu0 %v685
    %1482 = vmatpush.msra.mxu0 %v681
    %1483 = vmatpush.msra.mxu0 %v677
    %1484 = vmatpush.msra.mxu0 %v673
    %1485 = vmatpush.msra.mxu0 %v669
    %1486 = vmatpush.msra.mxu0 %v665
    %1487 = vmatpush.msra.mxu0 %v661
    %1488 = vmatpush.msra.mxu0 %v657
    %1489 = vmatpush.msra.mxu0 %v653
    %1490 = vmatpush.msra.mxu0 %v649
    %1491 = vmatpush.msra.mxu0 %v645
    %1492 = vmatpush.msra.mxu0 %v641
    %1493 = vmatpush.msra.mxu0 %v637
    %1494 = vmatpush.msra.mxu0 %v633
    %1495 = vmatmul.f32.gmra.mxu0 %v1120
    %v1496 = vpop.f32.mrf.mxu0
    %v1497 = vadd.f32 %v1477, %v1496
    %1498 = vdwg.mxu0
    %1499 = vmatpush.msra.mxu0 %v757
    %1500 = vmatpush.msra.mxu0 %v753
    %1501 = vmatpush.msra.mxu0 %v749
    %1502 = vmatpush.msra.mxu0 %v745
    %1503 = vmatpush.msra.mxu0 %v741
    %1504 = vmatpush.msra.mxu0 %v737
    %1505 = vmatpush.msra.mxu0 %v733
    %1506 = vmatpush.msra.mxu0 %v729
    %1507 = vmatpush.msra.mxu0 %v725
    %1508 = vmatpush.msra.mxu0 %v721
    %1509 = vmatpush.msra.mxu0 %v717
    %1510 = vmatpush.msra.mxu0 %v713
    %1511 = vmatpush.msra.mxu0 %v709
    %1512 = vmatpush.msra.mxu0 %v705
    %1513 = vmatpush.msra.mxu0 %v701
    %1514 = vmatpush.msra.mxu0 %v697
    %1515 = vmatmul.f32.gmra.mxu0 %v1121
    %v1516 = vpop.f32.mrf.mxu0
    %v1517 = vadd.f32 %v1497, %v1516
    %1518 = vdwg.mxu0
    %1519 = vmatpush.msra.mxu0 %v821
    %1520 = vmatpush.msra.mxu0 %v817
    %1521 = vmatpush.msra.mxu0 %v813
    %1522 = vmatpush.msra.mxu0 %v809
    %1523 = vmatpush.msra.mxu0 %v805
    %1524 = vmatpush.msra.mxu0 %v801
    %1525 = vmatpush.msra.mxu0 %v797
    %1526 = vmatpush.msra.mxu0 %v793
    %1527 = vmatpush.msra.mxu0 %v789
    %1528 = vmatpush.msra.mxu0 %v785
    %1529 = vmatpush.msra.mxu0 %v781
    %1530 = vmatpush.msra.mxu0 %v777
    %1531 = vmatpush.msra.mxu0 %v773
    %1532 = vmatpush.msra.mxu0 %v769
    %1533 = vmatpush.msra.mxu0 %v765
    %1534 = vmatpush.msra.mxu0 %v761
    %1535 = vmatmul.f32.gmra.mxu0 %v1122
    %v1536 = vpop.f32.mrf.mxu0
    %v1537 = vadd.f32 %v1517, %v1536
    %1538 = vdwg.mxu0
    %1539 = vmatpush.msra.mxu0 %v885
    %1540 = vmatpush.msra.mxu0 %v881
    %1541 = vmatpush.msra.mxu0 %v877
    %1542 = vmatpush.msra.mxu0 %v873
    %1543 = vmatpush.msra.mxu0 %v869
    %1544 = vmatpush.msra.mxu0 %v865
    %1545 = vmatpush.msra.mxu0 %v861
    %1546 = vmatpush.msra.mxu0 %v857
    %1547 = vmatpush.msra.mxu0 %v853
    %1548 = vmatpush.msra.mxu0 %v849
    %1549 = vmatpush.msra.mxu0 %v845
    %1550 = vmatpush.msra.mxu0 %v841
    %1551 = vmatpush.msra.mxu0 %v837
    %1552 = vmatpush.msra.mxu0 %v833
    %1553 = vmatpush.msra.mxu0 %v829
    %1554 = vmatpush.msra.mxu0 %v825
    %1555 = vmatmul.f32.gmra.mxu0 %v1123
    %v1556 = vpop.f32.mrf.mxu0
    %v1557 = vadd.f32 %v1537, %v1556
    %1558 = vdwg.mxu0
    %1559 = vmatpush.msra.mxu0 %v949
    %1560 = vmatpush.msra.mxu0 %v945
    %1561 = vmatpush.msra.mxu0 %v941
    %1562 = vmatpush.msra.mxu0 %v937
    %1563 = vmatpush.msra.mxu0 %v933
    %1564 = vmatpush.msra.mxu0 %v929
    %1565 = vmatpush.msra.mxu0 %v925
    %1566 = vmatpush.msra.mxu0 %v921
    %1567 = vmatpush.msra.mxu0 %v917
    %1568 = vmatpush.msra.mxu0 %v913
    %1569 = vmatpush.msra.mxu0 %v909
    %1570 = vmatpush.msra.mxu0 %v905
    %1571 = vmatpush.msra.mxu0 %v901
    %1572 = vmatpush.msra.mxu0 %v897
    %1573 = vmatpush.msra.mxu0 %v893
    %1574 = vmatpush.msra.mxu0 %v889
    %1575 = vmatmul.f32.gmra.mxu0 %v1124
    %v1576 = vpop.f32.mrf.mxu0
    %v1577 = vadd.f32 %v1557, %v1576
    %1578 = vdwg.mxu0
    %1579 = vmatpush.msra.mxu0 %v1013
    %1580 = vmatpush.msra.mxu0 %v1009
    %1581 = vmatpush.msra.mxu0 %v1005
    %1582 = vmatpush.msra.mxu0 %v1001
    %1583 = vmatpush.msra.mxu0 %v997
    %1584 = vmatpush.msra.mxu0 %v993
    %1585 = vmatpush.msra.mxu0 %v989
    %1586 = vmatpush.msra.mxu0 %v985
    %1587 = vmatpush.msra.mxu0 %v981
    %1588 = vmatpush.msra.mxu0 %v977
    %1589 = vmatpush.msra.mxu0 %v973
    %1590 = vmatpush.msra.mxu0 %v969
    %1591 = vmatpush.msra.mxu0 %v965
    %1592 = vmatpush.msra.mxu0 %v961
    %1593 = vmatpush.msra.mxu0 %v957
    %1594 = vmatpush.msra.mxu0 %v953
    %1595 = vmatmul.f32.gmra.mxu0 %v1125
    %v1596 = vpop.f32.mrf.mxu0
    %v1597 = vadd.f32 %v1577, %v1596
    %1598 = vdwg.mxu0
    %1599 = vmatpush.msra.mxu0 %v1077
    %1600 = vmatpush.msra.mxu0 %v1073
    %1601 = vmatpush.msra.mxu0 %v1069
    %1602 = vmatpush.msra.mxu0 %v1065
    %1603 = vmatpush.msra.mxu0 %v1061
    %1604 = vmatpush.msra.mxu0 %v1057
    %1605 = vmatpush.msra.mxu0 %v1053
    %1606 = vmatpush.msra.mxu0 %v1049
    %1607 = vmatpush.msra.mxu0 %v1045
    %1608 = vmatpush.msra.mxu0 %v1041
    %1609 = vmatpush.msra.mxu0 %v1037
    %1610 = vmatpush.msra.mxu0 %v1033
    %1611 = vmatpush.msra.mxu0 %v1029
    %1612 = vmatpush.msra.mxu0 %v1025
    %1613 = vmatpush.msra.mxu0 %v1021
    %1614 = vmatpush.msra.mxu0 %v1017
    %1615 = vmatmul.f32.gmra.mxu0 %v1126
    %v1616 = vpop.f32.mrf.mxu0
    %v1617 = vadd.f32 %v1597, %v1616
    %1618 = vdwg.mxu0
    %1619 = vmatpush.msra.mxu0 %v374
    %1620 = vmatpush.msra.mxu0 %v370
    %1621 = vmatpush.msra.mxu0 %v366
    %1622 = vmatpush.msra.mxu0 %v362
    %1623 = vmatpush.msra.mxu0 %v358
    %1624 = vmatpush.msra.mxu0 %v354
    %1625 = vmatpush.msra.mxu0 %v350
    %1626 = vmatpush.msra.mxu0 %v346
    %1627 = vmatpush.msra.mxu0 %v342
    %1628 = vmatpush.msra.mxu0 %v338
    %1629 = vmatpush.msra.mxu0 %v334
    %1630 = vmatpush.msra.mxu0 %v330
    %1631 = vmatpush.msra.mxu0 %v326
    %1632 = vmatpush.msra.mxu0 %v322
    %1633 = vmatpush.msra.mxu0 %v318
    %1634 = vmatpush.msra.mxu0 %v314
    %1635 = vmatmul.f32.gmra.mxu0 %v1115
    %v1636 = vpop.f32.mrf.mxu0
    %v1637 = vadd.f32 %v1084, %v1636
    %1638 = vdwg.mxu0
    %1639 = vmatpush.msra.mxu0 %v438
    %1640 = vmatpush.msra.mxu0 %v434
    %1641 = vmatpush.msra.mxu0 %v430
    %1642 = vmatpush.msra.mxu0 %v426
    %1643 = vmatpush.msra.mxu0 %v422
    %1644 = vmatpush.msra.mxu0 %v418
    %1645 = vmatpush.msra.mxu0 %v414
    %1646 = vmatpush.msra.mxu0 %v410
    %1647 = vmatpush.msra.mxu0 %v406
    %1648 = vmatpush.msra.mxu0 %v402
    %1649 = vmatpush.msra.mxu0 %v398
    %1650 = vmatpush.msra.mxu0 %v394
    %1651 = vmatpush.msra.mxu0 %v390
    %1652 = vmatpush.msra.mxu0 %v386
    %1653 = vmatpush.msra.mxu0 %v382
    %1654 = vmatpush.msra.mxu0 %v378
    %1655 = vmatmul.f32.gmra.mxu0 %v1116
    %v1656 = vpop.f32.mrf.mxu0
    %v1657 = vadd.f32 %v1637, %v1656
    %1658 = vdwg.mxu0
    %1659 = vmatpush.msra.mxu0 %v502
    %1660 = vmatpush.msra.mxu0 %v498
    %1661 = vmatpush.msra.mxu0 %v494
    %1662 = vmatpush.msra.mxu0 %v490
    %1663 = vmatpush.msra.mxu0 %v486
    %1664 = vmatpush.msra.mxu0 %v482
    %1665 = vmatpush.msra.mxu0 %v478
    %1666 = vmatpush.msra.mxu0 %v474
    %1667 = vmatpush.msra.mxu0 %v470
    %1668 = vmatpush.msra.mxu0 %v466
    %1669 = vmatpush.msra.mxu0 %v462
    %1670 = vmatpush.msra.mxu0 %v458
    %1671 = vmatpush.msra.mxu0 %v454
    %1672 = vmatpush.msra.mxu0 %v450
    %1673 = vmatpush.msra.mxu0 %v446
    %1674 = vmatpush.msra.mxu0 %v442
    %1675 = vmatmul.f32.gmra.mxu0 %v1117
    %v1676 = vpop.f32.mrf.mxu0
    %v1677 = vadd.f32 %v1657, %v1676
    %1678 = vdwg.mxu0
    %1679 = vmatpush.msra.mxu0 %v566
    %1680 = vmatpush.msra.mxu0 %v562
    %1681 = vmatpush.msra.mxu0 %v558
    %1682 = vmatpush.msra.mxu0 %v554
    %1683 = vmatpush.msra.mxu0 %v550
    %1684 = vmatpush.msra.mxu0 %v546
    %1685 = vmatpush.msra.mxu0 %v542
    %1686 = vmatpush.msra.mxu0 %v538
    %1687 = vmatpush.msra.mxu0 %v534
    %1688 = vmatpush.msra.mxu0 %v530
    %1689 = vmatpush.msra.mxu0 %v526
    %1690 = vmatpush.msra.mxu0 %v522
    %1691 = vmatpush.msra.mxu0 %v518
    %1692 = vmatpush.msra.mxu0 %v514
    %1693 = vmatpush.msra.mxu0 %v510
    %1694 = vmatpush.msra.mxu0 %v506
    %1695 = vmatmul.f32.gmra.mxu0 %v1118
    %v1696 = vpop.f32.mrf.mxu0
    %v1697 = vadd.f32 %v1677, %v1696
    %1698 = vdwg.mxu0
    %1699 = vmatpush.msra.mxu0 %v630
    %1700 = vmatpush.msra.mxu0 %v626
    %1701 = vmatpush.msra.mxu0 %v622
    %1702 = vmatpush.msra.mxu0 %v618
    %1703 = vmatpush.msra.mxu0 %v614
    %1704 = vmatpush.msra.mxu0 %v610
    %1705 = vmatpush.msra.mxu0 %v606
    %1706 = vmatpush.msra.mxu0 %v602
    %1707 = vmatpush.msra.mxu0 %v598
    %1708 = vmatpush.msra.mxu0 %v594
    %1709 = vmatpush.msra.mxu0 %v590
    %1710 = vmatpush.msra.mxu0 %v586
    %1711 = vmatpush.msra.mxu0 %v582
    %1712 = vmatpush.msra.mxu0 %v578
    %1713 = vmatpush.msra.mxu0 %v574
    %1714 = vmatpush.msra.mxu0 %v570
    %1715 = vmatmul.f32.gmra.mxu0 %v1119
    %v1716 = vpop.f32.mrf.mxu0
    %v1717 = vadd.f32 %v1697, %v1716
    %1718 = vdwg.mxu0
    %1719 = vmatpush.msra.mxu0 %v694
    %1720 = vmatpush.msra.mxu0 %v690
    %1721 = vmatpush.msra.mxu0 %v686
    %1722 = vmatpush.msra.mxu0 %v682
    %1723 = vmatpush.msra.mxu0 %v678
    %1724 = vmatpush.msra.mxu0 %v674
    %1725 = vmatpush.msra.mxu0 %v670
    %1726 = vmatpush.msra.mxu0 %v666
    %1727 = vmatpush.msra.mxu0 %v662
    %1728 = vmatpush.msra.mxu0 %v658
    %1729 = vmatpush.msra.mxu0 %v654
    %1730 = vmatpush.msra.mxu0 %v650
    %1731 = vmatpush.msra.mxu0 %v646
    %1732 = vmatpush.msra.mxu0 %v642
    %1733 = vmatpush.msra.mxu0 %v638
    %1734 = vmatpush.msra.mxu0 %v634
    %1735 = vmatmul.f32.gmra.mxu0 %v1120
    %v1736 = vpop.f32.mrf.mxu0
    %v1737 = vadd.f32 %v1717, %v1736
    %1738 = vdwg.mxu0
    %1739 = vmatpush.msra.mxu0 %v758
    %1740 = vmatpush.msra.mxu0 %v754
    %1741 = vmatpush.msra.mxu0 %v750
    %1742 = vmatpush.msra.mxu0 %v746
    %1743 = vmatpush.msra.mxu0 %v742
    %1744 = vmatpush.msra.mxu0 %v738
    %1745 = vmatpush.msra.mxu0 %v734
    %1746 = vmatpush.msra.mxu0 %v730
    %1747 = vmatpush.msra.mxu0 %v726
    %1748 = vmatpush.msra.mxu0 %v722
    %1749 = vmatpush.msra.mxu0 %v718
    %1750 = vmatpush.msra.mxu0 %v714
    %1751 = vmatpush.msra.mxu0 %v710
    %1752 = vmatpush.msra.mxu0 %v706
    %1753 = vmatpush.msra.mxu0 %v702
    %1754 = vmatpush.msra.mxu0 %v698
    %1755 = vmatmul.f32.gmra.mxu0 %v1121
    %v1756 = vpop.f32.mrf.mxu0
    %v1757 = vadd.f32 %v1737, %v1756
    %1758 = vdwg.mxu0
    %1759 = vmatpush.msra.mxu0 %v822
    %1760 = vmatpush.msra.mxu0 %v818
    %1761 = vmatpush.msra.mxu0 %v814
    %1762 = vmatpush.msra.mxu0 %v810
    %1763 = vmatpush.msra.mxu0 %v806
    %1764 = vmatpush.msra.mxu0 %v802
    %1765 = vmatpush.msra.mxu0 %v798
    %1766 = vmatpush.msra.mxu0 %v794
    %1767 = vmatpush.msra.mxu0 %v790
    %1768 = vmatpush.msra.mxu0 %v786
    %1769 = vmatpush.msra.mxu0 %v782
    %1770 = vmatpush.msra.mxu0 %v778
    %1771 = vmatpush.msra.mxu0 %v774
    %1772 = vmatpush.msra.mxu0 %v770
    %1773 = vmatpush.msra.mxu0 %v766
    %1774 = vmatpush.msra.mxu0 %v762
    %1775 = vmatmul.f32.gmra.mxu0 %v1122
    %v1776 = vpop.f32.mrf.mxu0
    %v1777 = vadd.f32 %v1757, %v1776
    %1778 = vdwg.mxu0
    %1779 = vmatpush.msra.mxu0 %v886
    %1780 = vmatpush.msra.mxu0 %v882
    %1781 = vmatpush.msra.mxu0 %v878
    %1782 = vmatpush.msra.mxu0 %v874
    %1783 = vmatpush.msra.mxu0 %v870
    %1784 = vmatpush.msra.mxu0 %v866
    %1785 = vmatpush.msra.mxu0 %v862
    %1786 = vmatpush.msra.mxu0 %v858
    %1787 = vmatpush.msra.mxu0 %v854
    %1788 = vmatpush.msra.mxu0 %v850
    %1789 = vmatpush.msra.mxu0 %v846
    %1790 = vmatpush.msra.mxu0 %v842
    %1791 = vmatpush.msra.mxu0 %v838
    %1792 = vmatpush.msra.mxu0 %v834
    %1793 = vmatpush.msra.mxu0 %v830
    %1794 = vmatpush.msra.mxu0 %v826
    %1795 = vmatmul.f32.gmra.mxu0 %v1123
    %v1796 = vpop.f32.mrf.mxu0
    %v1797 = vadd.f32 %v1777, %v1796
    %1798 = vdwg.mxu0
    %1799 = vmatpush.msra.mxu0 %v950
    %1800 = vmatpush.msra.mxu0 %v946
    %1801 = vmatpush.msra.mxu0 %v942
    %1802 = vmatpush.msra.mxu0 %v938
    %1803 = vmatpush.msra.mxu0 %v934
    %1804 = vmatpush.msra.mxu0 %v930
    %1805 = vmatpush.msra.mxu0 %v926
    %1806 = vmatpush.msra.mxu0 %v922
    %1807 = vmatpush.msra.mxu0 %v918
    %1808 = vmatpush.msra.mxu0 %v914
    %1809 = vmatpush.msra.mxu0 %v910
    %1810 = vmatpush.msra.mxu0 %v906
    %1811 = vmatpush.msra.mxu0 %v902
    %1812 = vmatpush.msra.mxu0 %v898
    %1813 = vmatpush.msra.mxu0 %v894
    %1814 = vmatpush.msra.mxu0 %v890
    %1815 = vmatmul.f32.gmra.mxu0 %v1124
    %v1816 = vpop.f32.mrf.mxu0
    %v1817 = vadd.f32 %v1797, %v1816
    %1818 = vdwg.mxu0
    %1819 = vmatpush.msra.mxu0 %v1014
    %1820 = vmatpush.msra.mxu0 %v1010
    %1821 = vmatpush.msra.mxu0 %v1006
    %1822 = vmatpush.msra.mxu0 %v1002
    %1823 = vmatpush.msra.mxu0 %v998
    %1824 = vmatpush.msra.mxu0 %v994
    %1825 = vmatpush.msra.mxu0 %v990
    %1826 = vmatpush.msra.mxu0 %v986
    %1827 = vmatpush.msra.mxu0 %v982
    %1828 = vmatpush.msra.mxu0 %v978
    %1829 = vmatpush.msra.mxu0 %v974
    %1830 = vmatpush.msra.mxu0 %v970
    %1831 = vmatpush.msra.mxu0 %v966
    %1832 = vmatpush.msra.mxu0 %v962
    %1833 = vmatpush.msra.mxu0 %v958
    %1834 = vmatpush.msra.mxu0 %v954
    %1835 = vmatmul.f32.gmra.mxu0 %v1125
    %v1836 = vpop.f32.mrf.mxu0
    %v1837 = vadd.f32 %v1817, %v1836
    %1838 = vdwg.mxu0
    %1839 = vmatpush.msra.mxu0 %v1078
    %1840 = vmatpush.msra.mxu0 %v1074
    %1841 = vmatpush.msra.mxu0 %v1070
    %1842 = vmatpush.msra.mxu0 %v1066
    %1843 = vmatpush.msra.mxu0 %v1062
    %1844 = vmatpush.msra.mxu0 %v1058
    %1845 = vmatpush.msra.mxu0 %v1054
    %1846 = vmatpush.msra.mxu0 %v1050
    %1847 = vmatpush.msra.mxu0 %v1046
    %1848 = vmatpush.msra.mxu0 %v1042
    %1849 = vmatpush.msra.mxu0 %v1038
    %1850 = vmatpush.msra.mxu0 %v1034
    %1851 = vmatpush.msra.mxu0 %v1030
    %1852 = vmatpush.msra.mxu0 %v1026
    %1853 = vmatpush.msra.mxu0 %v1022
    %1854 = vmatpush.msra.mxu0 %v1018
    %1855 = vmatmul.f32.gmra.mxu0 %v1126
    %v1856 = vpop.f32.mrf.mxu0
    %v1857 = vadd.f32 %v1837, %v1856
    %1858 = vdwg.mxu0
    %1859 = vmatpush.msra.mxu0 %v375
    %1860 = vmatpush.msra.mxu0 %v371
    %1861 = vmatpush.msra.mxu0 %v367
    %1862 = vmatpush.msra.mxu0 %v363
    %1863 = vmatpush.msra.mxu0 %v359
    %1864 = vmatpush.msra.mxu0 %v355
    %1865 = vmatpush.msra.mxu0 %v351
    %1866 = vmatpush.msra.mxu0 %v347
    %1867 = vmatpush.msra.mxu0 %v343
    %1868 = vmatpush.msra.mxu0 %v339
    %1869 = vmatpush.msra.mxu0 %v335
    %1870 = vmatpush.msra.mxu0 %v331
    %1871 = vmatpush.msra.mxu0 %v327
    %1872 = vmatpush.msra.mxu0 %v323
    %1873 = vmatpush.msra.mxu0 %v319
    %1874 = vmatpush.msra.mxu0 %v315
    %1875 = vmatmul.f32.gmra.mxu0 %v1115
    %v1876 = vpop.f32.mrf.mxu0
    %v1877 = vadd.f32 %v1085, %v1876
    %1878 = vdwg.mxu0
    %1879 = vmatpush.msra.mxu0 %v439
    %1880 = vmatpush.msra.mxu0 %v435
    %1881 = vmatpush.msra.mxu0 %v431
    %1882 = vmatpush.msra.mxu0 %v427
    %1883 = vmatpush.msra.mxu0 %v423
    %1884 = vmatpush.msra.mxu0 %v419
    %1885 = vmatpush.msra.mxu0 %v415
    %1886 = vmatpush.msra.mxu0 %v411
    %1887 = vmatpush.msra.mxu0 %v407
    %1888 = vmatpush.msra.mxu0 %v403
    %1889 = vmatpush.msra.mxu0 %v399
    %1890 = vmatpush.msra.mxu0 %v395
    %1891 = vmatpush.msra.mxu0 %v391
    %1892 = vmatpush.msra.mxu0 %v387
    %1893 = vmatpush.msra.mxu0 %v383
    %1894 = vmatpush.msra.mxu0 %v379
    %1895 = vmatmul.f32.gmra.mxu0 %v1116
    %v1896 = vpop.f32.mrf.mxu0
    %v1897 = vadd.f32 %v1877, %v1896
    %1898 = vdwg.mxu0
    %1899 = vmatpush.msra.mxu0 %v503
    %1900 = vmatpush.msra.mxu0 %v499
    %1901 = vmatpush.msra.mxu0 %v495
    %1902 = vmatpush.msra.mxu0 %v491
    %1903 = vmatpush.msra.mxu0 %v487
    %1904 = vmatpush.msra.mxu0 %v483
    %1905 = vmatpush.msra.mxu0 %v479
    %1906 = vmatpush.msra.mxu0 %v475
    %1907 = vmatpush.msra.mxu0 %v471
    %1908 = vmatpush.msra.mxu0 %v467
    %1909 = vmatpush.msra.mxu0 %v463
    %1910 = vmatpush.msra.mxu0 %v459
    %1911 = vmatpush.msra.mxu0 %v455
    %1912 = vmatpush.msra.mxu0 %v451
    %1913 = vmatpush.msra.mxu0 %v447
    %1914 = vmatpush.msra.mxu0 %v443
    %1915 = vmatmul.f32.gmra.mxu0 %v1117
    %v1916 = vpop.f32.mrf.mxu0
    %v1917 = vadd.f32 %v1897, %v1916
    %1918 = vdwg.mxu0
    %1919 = vmatpush.msra.mxu0 %v567
    %1920 = vmatpush.msra.mxu0 %v563
    %1921 = vmatpush.msra.mxu0 %v559
    %1922 = vmatpush.msra.mxu0 %v555
    %1923 = vmatpush.msra.mxu0 %v551
    %1924 = vmatpush.msra.mxu0 %v547
    %1925 = vmatpush.msra.mxu0 %v543
    %1926 = vmatpush.msra.mxu0 %v539
    %1927 = vmatpush.msra.mxu0 %v535
    %1928 = vmatpush.msra.mxu0 %v531
    %1929 = vmatpush.msra.mxu0 %v527
    %1930 = vmatpush.msra.mxu0 %v523
    %1931 = vmatpush.msra.mxu0 %v519
    %1932 = vmatpush.msra.mxu0 %v515
    %1933 = vmatpush.msra.mxu0 %v511
    %1934 = vmatpush.msra.mxu0 %v507
    %1935 = vmatmul.f32.gmra.mxu0 %v1118
    %v1936 = vpop.f32.mrf.mxu0
    %v1937 = vadd.f32 %v1917, %v1936
    %1938 = vdwg.mxu0
    %1939 = vmatpush.msra.mxu0 %v631
    %1940 = vmatpush.msra.mxu0 %v627
    %1941 = vmatpush.msra.mxu0 %v623
    %1942 = vmatpush.msra.mxu0 %v619
    %1943 = vmatpush.msra.mxu0 %v615
    %1944 = vmatpush.msra.mxu0 %v611
    %1945 = vmatpush.msra.mxu0 %v607
    %1946 = vmatpush.msra.mxu0 %v603
    %1947 = vmatpush.msra.mxu0 %v599
    %1948 = vmatpush.msra.mxu0 %v595
    %1949 = vmatpush.msra.mxu0 %v591
    %1950 = vmatpush.msra.mxu0 %v587
    %1951 = vmatpush.msra.mxu0 %v583
    %1952 = vmatpush.msra.mxu0 %v579
    %1953 = vmatpush.msra.mxu0 %v575
    %1954 = vmatpush.msra.mxu0 %v571
    %1955 = vmatmul.f32.gmra.mxu0 %v1119
    %v1956 = vpop.f32.mrf.mxu0
    %v1957 = vadd.f32 %v1937, %v1956
    %1958 = vdwg.mxu0
    %1959 = vmatpush.msra.mxu0 %v695
    %1960 = vmatpush.msra.mxu0 %v691
    %1961 = vmatpush.msra.mxu0 %v687
    %1962 = vmatpush.msra.mxu0 %v683
    %1963 = vmatpush.msra.mxu0 %v679
    %1964 = vmatpush.msra.mxu0 %v675
    %1965 = vmatpush.msra.mxu0 %v671
    %1966 = vmatpush.msra.mxu0 %v667
    %1967 = vmatpush.msra.mxu0 %v663
    %1968 = vmatpush.msra.mxu0 %v659
    %1969 = vmatpush.msra.mxu0 %v655
    %1970 = vmatpush.msra.mxu0 %v651
    %1971 = vmatpush.msra.mxu0 %v647
    %1972 = vmatpush.msra.mxu0 %v643
    %1973 = vmatpush.msra.mxu0 %v639
    %1974 = vmatpush.msra.mxu0 %v635
    %1975 = vmatmul.f32.gmra.mxu0 %v1120
    %v1976 = vpop.f32.mrf.mxu0
    %v1977 = vadd.f32 %v1957, %v1976
    %1978 = vdwg.mxu0
    %1979 = vmatpush.msra.mxu0 %v759
    %1980 = vmatpush.msra.mxu0 %v755
    %1981 = vmatpush.msra.mxu0 %v751
    %1982 = vmatpush.msra.mxu0 %v747
    %1983 = vmatpush.msra.mxu0 %v743
    %1984 = vmatpush.msra.mxu0 %v739
    %1985 = vmatpush.msra.mxu0 %v735
    %1986 = vmatpush.msra.mxu0 %v731
    %1987 = vmatpush.msra.mxu0 %v727
    %1988 = vmatpush.msra.mxu0 %v723
    %1989 = vmatpush.msra.mxu0 %v719
    %1990 = vmatpush.msra.mxu0 %v715
    %1991 = vmatpush.msra.mxu0 %v711
    %1992 = vmatpush.msra.mxu0 %v707
    %1993 = vmatpush.msra.mxu0 %v703
    %1994 = vmatpush.msra.mxu0 %v699
    %1995 = vmatmul.f32.gmra.mxu0 %v1121
    %v1996 = vpop.f32.mrf.mxu0
    %v1997 = vadd.f32 %v1977, %v1996
    %1998 = vdwg.mxu0
    %1999 = vmatpush.msra.mxu0 %v823
    %2000 = vmatpush.msra.mxu0 %v819
    %2001 = vmatpush.msra.mxu0 %v815
    %2002 = vmatpush.msra.mxu0 %v811
    %2003 = vmatpush.msra.mxu0 %v807
    %2004 = vmatpush.msra.mxu0 %v803
    %2005 = vmatpush.msra.mxu0 %v799
    %2006 = vmatpush.msra.mxu0 %v795
    %2007 = vmatpush.msra.mxu0 %v791
    %2008 = vmatpush.msra.mxu0 %v787
    %2009 = vmatpush.msra.mxu0 %v783
    %2010 = vmatpush.msra.mxu0 %v779
    %2011 = vmatpush.msra.mxu0 %v775
    %2012 = vmatpush.msra.mxu0 %v771
    %2013 = vmatpush.msra.mxu0 %v767
    %2014 = vmatpush.msra.mxu0 %v763
    %2015 = vmatmul.f32.gmra.mxu0 %v1122
    %v2016 = vpop.f32.mrf.mxu0
    %v2017 = vadd.f32 %v1997, %v2016
    %2018 = vdwg.mxu0
    %2019 = vmatpush.msra.mxu0 %v887
    %2020 = vmatpush.msra.mxu0 %v883
    %2021 = vmatpush.msra.mxu0 %v879
    %2022 = vmatpush.msra.mxu0 %v875
    %2023 = vmatpush.msra.mxu0 %v871
    %2024 = vmatpush.msra.mxu0 %v867
    %2025 = vmatpush.msra.mxu0 %v863
    %2026 = vmatpush.msra.mxu0 %v859
    %2027 = vmatpush.msra.mxu0 %v855
    %2028 = vmatpush.msra.mxu0 %v851
    %2029 = vmatpush.msra.mxu0 %v847
    %2030 = vmatpush.msra.mxu0 %v843
    %2031 = vmatpush.msra.mxu0 %v839
    %2032 = vmatpush.msra.mxu0 %v835
    %2033 = vmatpush.msra.mxu0 %v831
    %2034 = vmatpush.msra.mxu0 %v827
    %2035 = vmatmul.f32.gmra.mxu0 %v1123
    %v2036 = vpop.f32.mrf.mxu0
    %v2037 = vadd.f32 %v2017, %v2036
    %2038 = vdwg.mxu0
    %2039 = vmatpush.msra.mxu0 %v951
    %2040 = vmatpush.msra.mxu0 %v947
    %2041 = vmatpush.msra.mxu0 %v943
    %2042 = vmatpush.msra.mxu0 %v939
    %2043 = vmatpush.msra.mxu0 %v935
    %2044 = vmatpush.msra.mxu0 %v931
    %2045 = vmatpush.msra.mxu0 %v927
    %2046 = vmatpush.msra.mxu0 %v923
    %2047 = vmatpush.msra.mxu0 %v919
    %2048 = vmatpush.msra.mxu0 %v915
    %2049 = vmatpush.msra.mxu0 %v911
    %2050 = vmatpush.msra.mxu0 %v907
    %2051 = vmatpush.msra.mxu0 %v903
    %2052 = vmatpush.msra.mxu0 %v899
    %2053 = vmatpush.msra.mxu0 %v895
    %2054 = vmatpush.msra.mxu0 %v891
    %2055 = vmatmul.f32.gmra.mxu0 %v1124
    %v2056 = vpop.f32.mrf.mxu0
    %v2057 = vadd.f32 %v2037, %v2056
    %2058 = vdwg.mxu0
    %2059 = vmatpush.msra.mxu0 %v1015
    %2060 = vmatpush.msra.mxu0 %v1011
    %2061 = vmatpush.msra.mxu0 %v1007
    %2062 = vmatpush.msra.mxu0 %v1003
    %2063 = vmatpush.msra.mxu0 %v999
    %2064 = vmatpush.msra.mxu0 %v995
    %2065 = vmatpush.msra.mxu0 %v991
    %2066 = vmatpush.msra.mxu0 %v987
    %2067 = vmatpush.msra.mxu0 %v983
    %2068 = vmatpush.msra.mxu0 %v979
    %2069 = vmatpush.msra.mxu0 %v975
    %2070 = vmatpush.msra.mxu0 %v971
    %2071 = vmatpush.msra.mxu0 %v967
    %2072 = vmatpush.msra.mxu0 %v963
    %2073 = vmatpush.msra.mxu0 %v959
    %2074 = vmatpush.msra.mxu0 %v955
    %2075 = vmatmul.f32.gmra.mxu0 %v1125
    %v2076 = vpop.f32.mrf.mxu0
    %v2077 = vadd.f32 %v2057, %v2076
    %2078 = vdwg.mxu0
    %2079 = vmatpush.msra.mxu0 %v1079
    %2080 = vmatpush.msra.mxu0 %v1075
    %2081 = vmatpush.msra.mxu0 %v1071
    %2082 = vmatpush.msra.mxu0 %v1067
    %2083 = vmatpush.msra.mxu0 %v1063
    %2084 = vmatpush.msra.mxu0 %v1059
    %2085 = vmatpush.msra.mxu0 %v1055
    %2086 = vmatpush.msra.mxu0 %v1051
    %2087 = vmatpush.msra.mxu0 %v1047
    %2088 = vmatpush.msra.mxu0 %v1043
    %2089 = vmatpush.msra.mxu0 %v1039
    %2090 = vmatpush.msra.mxu0 %v1035
    %2091 = vmatpush.msra.mxu0 %v1031
    %2092 = vmatpush.msra.mxu0 %v1027
    %2093 = vmatpush.msra.mxu0 %v1023
    %2094 = vmatpush.msra.mxu0 %v1019
    %2095 = vmatmul.f32.gmra.mxu0 %v1126
    %v2096 = vpop.f32.mrf.mxu0
    %v2097 = vadd.f32 %v2077, %v2096
    %2098 = vdwg.mxu0
    %v2099 = vmax.f32 %v1377, 0.0
    %v2100 = vmax.f32 %v1617, 0.0
    %v2101 = vmax.f32 %v1857, 0.0
    %v2102 = vmax.f32 %v2097, 0.0
    %v2103 = vld [vmem:[%s3] sm:$0xff]
    %v2104 = vld [vmem:[%s3 + $0x8] sm:$0xff]
    %v2105 = vld [vmem:[%s3 + $0x10] sm:$0xff]
    %v2106 = vld [vmem:[%s3 + $0x18] sm:$0xff]
    %v2107 = vld [vmem:[%s3 + $0x20] sm:$0xff]
    %v2108 = vld [vmem:[%s3 + $0x28] sm:$0xff]
    %v2109 = vld [vmem:[%s3 + $0x30] sm:$0xff]
    %v2110 = vld [vmem:[%s3 + $0x38] sm:$0xff]
    %v2111 = vld [vmem:[%s3 + $0x40] sm:$0xff]
    %v2112 = vld [vmem:[%s3 + $0x48] sm:$0xff]
    %v2113 = vld [vmem:[%s3 + $0x50] sm:$0xff]
    %v2114 = vld [vmem:[%s3 + $0x58] sm:$0xff]
    %v2115 = vld [vmem:[%s3 + $0x60] sm:$0xff]
    %v2116 = vld [vmem:[%s3 + $0x68] sm:$0xff]
    %v2117 = vld [vmem:[%s3 + $0x70] sm:$0xff]
    %v2118 = vld [vmem:[%s3 + $0x78] sm:$0xff]
    %v2119 = vld [vmem:[%s3 + $0x80] sm:$0xff]
    %v2120 = vld [vmem:[%s3 + $0x88] sm:$0xff]
    %v2121 = vld [vmem:[%s3 + $0x90] sm:$0xff]
    %v2122 = vld [vmem:[%s3 + $0x98] sm:$0xff]
    %v2123 = vld [vmem:[%s3 + $0xa0] sm:$0xff]
    %v2124 = vld [vmem:[%s3 + $0xa8] sm:$0xff]
    %v2125 = vld [vmem:[%s3 + $0xb0] sm:$0xff]
    %v2126 = vld [vmem:[%s3 + $0xb8] sm:$0xff]
    %v2127 = vld [vmem:[%s3 + $0xc0] sm:$0xff]
    %v2128 = vld [vmem:[%s3 + $0xc8] sm:$0xff]
    %v2129 = vld [vmem:[%s3 + $0xd0] sm:$0xff]
    %v2130 = vld [vmem:[%s3 + $0xd8] sm:$0xff]
    %v2131 = vld [vmem:[%s3 + $0xe0] sm:$0xff]
    %v2132 = vld [vmem:[%s3 + $0xe8] sm:$0xff]
    %v2133 = vld [vmem:[%s3 + $0xf0] sm:$0xff]
    %v2134 = vld [vmem:[%s3 + $0xf8] sm:$0xff]
    %v2135 = vld [vmem:[%s3 + $0x100] sm:$0xff]
    %v2136 = vld [vmem:[%s3 + $0x108] sm:$0xff]
    %v2137 = vld [vmem:[%s3 + $0x110] sm:$0xff]
    %v2138 = vld [vmem:[%s3 + $0x118] sm:$0xff]
    %v2139 = vld [vmem:[%s3 + $0x120] sm:$0xff]
    %v2140 = vld [vmem:[%s3 + $0x128] sm:$0xff]
    %v2141 = vld [vmem:[%s3 + $0x130] sm:$0xff]
    %v2142 = vld [vmem:[%s3 + $0x138] sm:$0xff]
    %v2143 = vld [vmem:[%s3 + $0x140] sm:$0xff]
    %v2144 = vld [vmem:[%s3 + $0x148] sm:$0xff]
    %v2145 = vld [vmem:[%s3 + $0x150] sm:$0xff]
    %v2146 = vld [vmem:[%s3 + $0x158] sm:$0xff]
    %v2147 = vld [vmem:[%s3 + $0x160] sm:$0xff]
    %v2148 = vld [vmem:[%s3 + $0x168] sm:$0xff]
    %v2149 = vld [vmem:[%s3 + $0x170] sm:$0xff]
    %v2150 = vld [vmem:[%s3 + $0x178] sm:$0xff]
    %v2151 = vld [vmem:[%s3 + $0x180] sm:$0xff]
    %v2152 = vld [vmem:[%s3 + $0x188] sm:$0xff]
    %v2153 = vld [vmem:[%s3 + $0x190] sm:$0xff]
    %v2154 = vld [vmem:[%s3 + $0x198] sm:$0xff]
    %v2155 = vld [vmem:[%s3 + $0x1a0] sm:$0xff]
    %v2156 = vld [vmem:[%s3 + $0x1a8] sm:$0xff]
    %v2157 = vld [vmem:[%s3 + $0x1b0] sm:$0xff]
    %v2158 = vld [vmem:[%s3 + $0x1b8] sm:$0xff]
    %v2159 = vld [vmem:[%s3 + $0x1c0] sm:$0xff]
    %v2160 = vld [vmem:[%s3 + $0x1c8] sm:$0xff]
    %v2161 = vld [vmem:[%s3 + $0x1d0] sm:$0xff]
    %v2162 = vld [vmem:[%s3 + $0x1d8] sm:$0xff]
    %v2163 = vld [vmem:[%s4] sm:$0x1]
    %v2165 = vperm.slane %v2163, 0
    %vm2167 = vcmask 785408
    %v2169 = vsel %vm2167, %v2102, 0
    %2171 = vmatpush.msra.mxu0 %v2118
    %2172 = vmatpush.msra.mxu0 %v2117
    %2173 = vmatpush.msra.mxu0 %v2116
    %2174 = vmatpush.msra.mxu0 %v2115
    %2175 = vmatpush.msra.mxu0 %v2114
    %2176 = vmatpush.msra.mxu0 %v2113
    %2177 = vmatpush.msra.mxu0 %v2112
    %2178 = vmatpush.msra.mxu0 %v2111
    %2179 = vmatpush.msra.mxu0 %v2110
    %2180 = vmatpush.msra.mxu0 %v2109
    %2181 = vmatpush.msra.mxu0 %v2108
    %2182 = vmatpush.msra.mxu0 %v2107
    %2183 = vmatpush.msra.mxu0 %v2106
    %2184 = vmatpush.msra.mxu0 %v2105
    %2185 = vmatpush.msra.mxu0 %v2104
    %2186 = vmatpush.msra.mxu0 %v2103
    %2187 = vmatmul.f32.gmra.mxu0 %v2099
    %v2188 = vpop.f32.mrf.mxu0
    %v2189 = vadd.f32 %v2165, %v2188
    %2190 = vdwg.mxu0
    %2191 = vmatpush.msra.mxu0 %v2134
    %2192 = vmatpush.msra.mxu0 %v2133
    %2193 = vmatpush.msra.mxu0 %v2132
    %2194 = vmatpush.msra.mxu0 %v2131
    %2195 = vmatpush.msra.mxu0 %v2130
    %2196 = vmatpush.msra.mxu0 %v2129
    %2197 = vmatpush.msra.mxu0 %v2128
    %2198 = vmatpush.msra.mxu0 %v2127
    %2199 = vmatpush.msra.mxu0 %v2126
    %2200 = vmatpush.msra.mxu0 %v2125
    %2201 = vmatpush.msra.mxu0 %v2124
    %2202 = vmatpush.msra.mxu0 %v2123
    %2203 = vmatpush.msra.mxu0 %v2122
    %2204 = vmatpush.msra.mxu0 %v2121
    %2205 = vmatpush.msra.mxu0 %v2120
    %2206 = vmatpush.msra.mxu0 %v2119
    %2207 = vmatmul.f32.gmra.mxu0 %v2100
    %v2208 = vpop.f32.mrf.mxu0
    %v2209 = vadd.f32 %v2189, %v2208
    %2210 = vdwg.mxu0
    %2211 = vmatpush.msra.mxu0 %v2150
    %2212 = vmatpush.msra.mxu0 %v2149
    %2213 = vmatpush.msra.mxu0 %v2148
    %2214 = vmatpush.msra.mxu0 %v2147
    %2215 = vmatpush.msra.mxu0 %v2146
    %2216 = vmatpush.msra.mxu0 %v2145
    %2217 = vmatpush.msra.mxu0 %v2144
    %2218 = vmatpush.msra.mxu0 %v2143
    %2219 = vmatpush.msra.mxu0 %v2142
    %2220 = vmatpush.msra.mxu0 %v2141
    %2221 = vmatpush.msra.mxu0 %v2140
    %2222 = vmatpush.msra.mxu0 %v2139
    %2223 = vmatpush.msra.mxu0 %v2138
    %2224 = vmatpush.msra.mxu0 %v2137
    %2225 = vmatpush.msra.mxu0 %v2136
    %2226 = vmatpush.msra.mxu0 %v2135
    %2227 = vmatmul.f32.gmra.mxu0 %v2101
    %v2228 = vpop.f32.mrf.mxu0
    %v2229 = vadd.f32 %v2209, %v2228
    %2230 = vdwg.mxu0
    %2231 = vmatpush.msra.mxu0 0.0
    %2232 = vmatpush.msra.mxu0 0.0
    %2233 = vmatpush.msra.mxu0 0.0
    %2234 = vmatpush.msra.mxu0 0.0
    %2235 = vmatpush.msra.mxu0 %v2162
    %2236 = vmatpush.msra.mxu0 %v2161
    %2237 = vmatpush.msra.mxu0 %v2160
    %2238 = vmatpush.msra.mxu0 %v2159
    %2239 = vmatpush.msra.mxu0 %v2158
    %2240 = vmatpush.msra.mxu0 %v2157
    %2241 = vmatpush.msra.mxu0 %v2156
    %2242 = vmatpush.msra.mxu0 %v2155
    %2243 = vmatpush.msra.mxu0 %v2154
    %2244 = vmatpush.msra.mxu0 %v2153
    %2245 = vmatpush.msra.mxu0 %v2152
    %2246 = vmatpush.msra.mxu0 %v2151
    %2247 = vmatmul.f32.gmra.mxu0 %v2169
    %v2248 = vpop.f32.mrf.mxu0
    %v2249 = vadd.f32 %v2229, %v2248
    %2250 = vdwg.mxu0
    %vm2251 = vcmask 33792
    %2252 = vst.msk [vmem:[#allocation2] sm:$0x3] %vm2251, %v2249
    %s2253 = scalar_lea.vmem %s1, 6144
    %v2254 = vld [vmem:[%s2253] sm:$0xff]
    %v2255 = vld [vmem:[%s2253 + $0x8] sm:$0xff]
    %v2256 = vld [vmem:[%s2253 + $0x10] sm:$0xff]
    %v2257 = vld [vmem:[%s2253 + $0x18] sm:$0xff]
    %v2258 = vld [vmem:[%s2253 + $0x20] sm:$0xff]
    %v2259 = vld [vmem:[%s2253 + $0x28] sm:$0xff]
    %v2260 = vld [vmem:[%s2253 + $0x30] sm:$0xff]
    %v2261 = vld [vmem:[%s2253 + $0x38] sm:$0xff]
    %v2262 = vld [vmem:[%s2253 + $0x40] sm:$0xff]
    %v2263 = vld [vmem:[%s2253 + $0x48] sm:$0xff]
    %v2264 = vld [vmem:[%s2253 + $0x50] sm:$0xff]
    %v2265 = vld [vmem:[%s2253 + $0x58] sm:$0xff]
    %v2266 = vld [vmem:[%s2253 + $0x60] sm:$0xff]
    %v2267 = vld [vmem:[%s2253 + $0x68] sm:$0xff]
    %v2268 = vld [vmem:[%s2253 + $0x70] sm:$0xff]
    %v2269 = vld [vmem:[%s2253 + $0x78] sm:$0xff]
    %v2270 = vld [vmem:[%s2253 + $0x80] sm:$0xff]
    %v2271 = vld [vmem:[%s2253 + $0x88] sm:$0xff]
    %v2272 = vld [vmem:[%s2253 + $0x90] sm:$0xff]
    %v2273 = vld [vmem:[%s2253 + $0x98] sm:$0xff]
    %v2274 = vld [vmem:[%s2253 + $0xa0] sm:$0xff]
    %v2275 = vld [vmem:[%s2253 + $0xa8] sm:$0xff]
    %v2276 = vld [vmem:[%s2253 + $0xb0] sm:$0xff]
    %v2277 = vld [vmem:[%s2253 + $0xb8] sm:$0xff]
    %v2278 = vld [vmem:[%s2253 + $0xc0] sm:$0xff]
    %v2279 = vld [vmem:[%s2253 + $0xc8] sm:$0xff]
    %v2280 = vld [vmem:[%s2253 + $0xd0] sm:$0xff]
    %v2281 = vld [vmem:[%s2253 + $0xd8] sm:$0xff]
    %v2282 = vld [vmem:[%s2253 + $0xe0] sm:$0xff]
    %v2283 = vld [vmem:[%s2253 + $0xe8] sm:$0xff]
    %v2284 = vld [vmem:[%s2253 + $0xf0] sm:$0xff]
    %v2285 = vld [vmem:[%s2253 + $0xf8] sm:$0xff]
    %v2286 = vld [vmem:[%s2253 + $0x100] sm:$0xff]
    %v2287 = vld [vmem:[%s2253 + $0x108] sm:$0xff]
    %v2288 = vld [vmem:[%s2253 + $0x110] sm:$0xff]
    %v2289 = vld [vmem:[%s2253 + $0x118] sm:$0xff]
    %v2290 = vld [vmem:[%s2253 + $0x120] sm:$0xff]
    %v2291 = vld [vmem:[%s2253 + $0x128] sm:$0xff]
    %v2292 = vld [vmem:[%s2253 + $0x130] sm:$0xff]
    %v2293 = vld [vmem:[%s2253 + $0x138] sm:$0xff]
    %v2294 = vld [vmem:[%s2253 + $0x140] sm:$0xff]
    %v2295 = vld [vmem:[%s2253 + $0x148] sm:$0xff]
    %v2296 = vld [vmem:[%s2253 + $0x150] sm:$0xff]
    %v2297 = vld [vmem:[%s2253 + $0x158] sm:$0xff]
    %v2298 = vld [vmem:[%s2253 + $0x160] sm:$0xff]
    %v2299 = vld [vmem:[%s2253 + $0x168] sm:$0xff]
    %v2300 = vld [vmem:[%s2253 + $0x170] sm:$0xff]
    %v2301 = vld [vmem:[%s2253 + $0x178] sm:$0xff]
    %v2302 = vld [vmem:[%s2253 + $0x180] sm:$0xff]
    %v2303 = vld [vmem:[%s2253 + $0x188] sm:$0xff]
    %v2304 = vld [vmem:[%s2253 + $0x190] sm:$0xff]
    %v2305 = vld [vmem:[%s2253 + $0x198] sm:$0xff]
    %v2306 = vld [vmem:[%s2253 + $0x1a0] sm:$0xff]
    %v2307 = vld [vmem:[%s2253 + $0x1a8] sm:$0xff]
    %v2308 = vld [vmem:[%s2253 + $0x1b0] sm:$0xff]
    %v2309 = vld [vmem:[%s2253 + $0x1b8] sm:$0xff]
    %v2310 = vld [vmem:[%s2253 + $0x1c0] sm:$0xff]
    %v2311 = vld [vmem:[%s2253 + $0x1c8] sm:$0xff]
    %v2312 = vld [vmem:[%s2253 + $0x1d0] sm:$0xff]
    %v2313 = vld [vmem:[%s2253 + $0x1d8] sm:$0xff]
    %v2314 = vld [vmem:[%s2253 + $0x1e0] sm:$0xff]
    %v2315 = vld [vmem:[%s2253 + $0x1e8] sm:$0xff]
    %v2316 = vld [vmem:[%s2253 + $0x1f0] sm:$0xff]
    %v2317 = vld [vmem:[%s2253 + $0x1f8] sm:$0xff]
    %v2318 = vld [vmem:[%s2253 + $0x200] sm:$0xff]
    %v2319 = vld [vmem:[%s2253 + $0x208] sm:$0xff]
    %v2320 = vld [vmem:[%s2253 + $0x210] sm:$0xff]
    %v2321 = vld [vmem:[%s2253 + $0x218] sm:$0xff]
    %v2322 = vld [vmem:[%s2253 + $0x220] sm:$0xff]
    %v2323 = vld [vmem:[%s2253 + $0x228] sm:$0xff]
    %v2324 = vld [vmem:[%s2253 + $0x230] sm:$0xff]
    %v2325 = vld [vmem:[%s2253 + $0x238] sm:$0xff]
    %v2326 = vld [vmem:[%s2253 + $0x240] sm:$0xff]
    %v2327 = vld [vmem:[%s2253 + $0x248] sm:$0xff]
    %v2328 = vld [vmem:[%s2253 + $0x250] sm:$0xff]
    %v2329 = vld [vmem:[%s2253 + $0x258] sm:$0xff]
    %v2330 = vld [vmem:[%s2253 + $0x260] sm:$0xff]
    %v2331 = vld [vmem:[%s2253 + $0x268] sm:$0xff]
    %v2332 = vld [vmem:[%s2253 + $0x270] sm:$0xff]
    %v2333 = vld [vmem:[%s2253 + $0x278] sm:$0xff]
    %v2334 = vld [vmem:[%s2253 + $0x280] sm:$0xff]
    %v2335 = vld [vmem:[%s2253 + $0x288] sm:$0xff]
    %v2336 = vld [vmem:[%s2253 + $0x290] sm:$0xff]
    %v2337 = vld [vmem:[%s2253 + $0x298] sm:$0xff]
    %v2338 = vld [vmem:[%s2253 + $0x2a0] sm:$0xff]
    %v2339 = vld [vmem:[%s2253 + $0x2a8] sm:$0xff]
    %v2340 = vld [vmem:[%s2253 + $0x2b0] sm:$0xff]
    %v2341 = vld [vmem:[%s2253 + $0x2b8] sm:$0xff]
    %v2342 = vld [vmem:[%s2253 + $0x2c0] sm:$0xff]
    %v2343 = vld [vmem:[%s2253 + $0x2c8] sm:$0xff]
    %v2344 = vld [vmem:[%s2253 + $0x2d0] sm:$0xff]
    %v2345 = vld [vmem:[%s2253 + $0x2d8] sm:$0xff]
    %v2346 = vld [vmem:[%s2253 + $0x2e0] sm:$0xff]
    %v2347 = vld [vmem:[%s2253 + $0x2e8] sm:$0xff]
    %v2348 = vld [vmem:[%s2253 + $0x2f0] sm:$0xff]
    %v2349 = vld [vmem:[%s2253 + $0x2f8] sm:$0xff]
    %v2350 = vld [vmem:[%s2253 + $0x300] sm:$0xff]
    %v2351 = vld [vmem:[%s2253 + $0x308] sm:$0xff]
    %v2352 = vld [vmem:[%s2253 + $0x310] sm:$0xff]
    %v2353 = vld [vmem:[%s2253 + $0x318] sm:$0xff]
    %v2354 = vld [vmem:[%s2253 + $0x320] sm:$0xff]
    %v2355 = vld [vmem:[%s2253 + $0x328] sm:$0xff]
    %v2356 = vld [vmem:[%s2253 + $0x330] sm:$0xff]
    %v2357 = vld [vmem:[%s2253 + $0x338] sm:$0xff]
    %v2358 = vld [vmem:[%s2253 + $0x340] sm:$0xff]
    %v2359 = vld [vmem:[%s2253 + $0x348] sm:$0xff]
    %v2360 = vld [vmem:[%s2253 + $0x350] sm:$0xff]
    %v2361 = vld [vmem:[%s2253 + $0x358] sm:$0xff]
    %v2362 = vld [vmem:[%s2253 + $0x360] sm:$0xff]
    %v2363 = vld [vmem:[%s2253 + $0x368] sm:$0xff]
    %v2364 = vld [vmem:[%s2253 + $0x370] sm:$0xff]
    %v2365 = vld [vmem:[%s2253 + $0x378] sm:$0xff]
    %v2366 = vld [vmem:[%s2253 + $0x380] sm:$0xff]
    %v2367 = vld [vmem:[%s2253 + $0x388] sm:$0xff]
    %v2368 = vld [vmem:[%s2253 + $0x390] sm:$0xff]
    %v2369 = vld [vmem:[%s2253 + $0x398] sm:$0xff]
    %v2370 = vld [vmem:[%s2253 + $0x3a0] sm:$0xff]
    %v2371 = vld [vmem:[%s2253 + $0x3a8] sm:$0xff]
    %v2372 = vld [vmem:[%s2253 + $0x3b0] sm:$0xff]
    %v2373 = vld [vmem:[%s2253 + $0x3b8] sm:$0xff]
    %v2374 = vld [vmem:[%s2253 + $0x3c0] sm:$0xff]
    %v2375 = vld [vmem:[%s2253 + $0x3c8] sm:$0xff]
    %v2376 = vld [vmem:[%s2253 + $0x3d0] sm:$0xff]
    %v2377 = vld [vmem:[%s2253 + $0x3d8] sm:$0xff]
    %v2378 = vld [vmem:[%s2253 + $0x3e0] sm:$0xff]
    %v2379 = vld [vmem:[%s2253 + $0x3e8] sm:$0xff]
    %v2380 = vld [vmem:[%s2253 + $0x3f0] sm:$0xff]
    %v2381 = vld [vmem:[%s2253 + $0x3f8] sm:$0xff]
    %v2382 = vld [vmem:[%s2253 + $0x400] sm:$0xff]
    %v2383 = vld [vmem:[%s2253 + $0x408] sm:$0xff]
    %v2384 = vld [vmem:[%s2253 + $0x410] sm:$0xff]
    %v2385 = vld [vmem:[%s2253 + $0x418] sm:$0xff]
    %v2386 = vld [vmem:[%s2253 + $0x420] sm:$0xff]
    %v2387 = vld [vmem:[%s2253 + $0x428] sm:$0xff]
    %v2388 = vld [vmem:[%s2253 + $0x430] sm:$0xff]
    %v2389 = vld [vmem:[%s2253 + $0x438] sm:$0xff]
    %v2390 = vld [vmem:[%s2253 + $0x440] sm:$0xff]
    %v2391 = vld [vmem:[%s2253 + $0x448] sm:$0xff]
    %v2392 = vld [vmem:[%s2253 + $0x450] sm:$0xff]
    %v2393 = vld [vmem:[%s2253 + $0x458] sm:$0xff]
    %v2394 = vld [vmem:[%s2253 + $0x460] sm:$0xff]
    %v2395 = vld [vmem:[%s2253 + $0x468] sm:$0xff]
    %v2396 = vld [vmem:[%s2253 + $0x470] sm:$0xff]
    %v2397 = vld [vmem:[%s2253 + $0x478] sm:$0xff]
    %v2398 = vld [vmem:[%s2253 + $0x480] sm:$0xff]
    %v2399 = vld [vmem:[%s2253 + $0x488] sm:$0xff]
    %v2400 = vld [vmem:[%s2253 + $0x490] sm:$0xff]
    %v2401 = vld [vmem:[%s2253 + $0x498] sm:$0xff]
    %v2402 = vld [vmem:[%s2253 + $0x4a0] sm:$0xff]
    %v2403 = vld [vmem:[%s2253 + $0x4a8] sm:$0xff]
    %v2404 = vld [vmem:[%s2253 + $0x4b0] sm:$0xff]
    %v2405 = vld [vmem:[%s2253 + $0x4b8] sm:$0xff]
    %v2406 = vld [vmem:[%s2253 + $0x4c0] sm:$0xff]
    %v2407 = vld [vmem:[%s2253 + $0x4c8] sm:$0xff]
    %v2408 = vld [vmem:[%s2253 + $0x4d0] sm:$0xff]
    %v2409 = vld [vmem:[%s2253 + $0x4d8] sm:$0xff]
    %v2410 = vld [vmem:[%s2253 + $0x4e0] sm:$0xff]
    %v2411 = vld [vmem:[%s2253 + $0x4e8] sm:$0xff]
    %v2412 = vld [vmem:[%s2253 + $0x4f0] sm:$0xff]
    %v2413 = vld [vmem:[%s2253 + $0x4f8] sm:$0xff]
    %v2414 = vld [vmem:[%s2253 + $0x500] sm:$0xff]
    %v2415 = vld [vmem:[%s2253 + $0x508] sm:$0xff]
    %v2416 = vld [vmem:[%s2253 + $0x510] sm:$0xff]
    %v2417 = vld [vmem:[%s2253 + $0x518] sm:$0xff]
    %v2418 = vld [vmem:[%s2253 + $0x520] sm:$0xff]
    %v2419 = vld [vmem:[%s2253 + $0x528] sm:$0xff]
    %v2420 = vld [vmem:[%s2253 + $0x530] sm:$0xff]
    %v2421 = vld [vmem:[%s2253 + $0x538] sm:$0xff]
    %v2422 = vld [vmem:[%s2253 + $0x540] sm:$0xff]
    %v2423 = vld [vmem:[%s2253 + $0x548] sm:$0xff]
    %v2424 = vld [vmem:[%s2253 + $0x550] sm:$0xff]
    %v2425 = vld [vmem:[%s2253 + $0x558] sm:$0xff]
    %v2426 = vld [vmem:[%s2253 + $0x560] sm:$0xff]
    %v2427 = vld [vmem:[%s2253 + $0x568] sm:$0xff]
    %v2428 = vld [vmem:[%s2253 + $0x570] sm:$0xff]
    %v2429 = vld [vmem:[%s2253 + $0x578] sm:$0xff]
    %v2430 = vld [vmem:[%s2253 + $0x580] sm:$0xff]
    %v2431 = vld [vmem:[%s2253 + $0x588] sm:$0xff]
    %v2432 = vld [vmem:[%s2253 + $0x590] sm:$0xff]
    %v2433 = vld [vmem:[%s2253 + $0x598] sm:$0xff]
    %v2434 = vld [vmem:[%s2253 + $0x5a0] sm:$0xff]
    %v2435 = vld [vmem:[%s2253 + $0x5a8] sm:$0xff]
    %v2436 = vld [vmem:[%s2253 + $0x5b0] sm:$0xff]
    %v2437 = vld [vmem:[%s2253 + $0x5b8] sm:$0xff]
    %v2438 = vld [vmem:[%s2253 + $0x5c0] sm:$0xff]
    %v2439 = vld [vmem:[%s2253 + $0x5c8] sm:$0xff]
    %v2440 = vld [vmem:[%s2253 + $0x5d0] sm:$0xff]
    %v2441 = vld [vmem:[%s2253 + $0x5d8] sm:$0xff]
    %v2442 = vld [vmem:[%s2253 + $0x5e0] sm:$0xff]
    %v2443 = vld [vmem:[%s2253 + $0x5e8] sm:$0xff]
    %v2444 = vld [vmem:[%s2253 + $0x5f0] sm:$0xff]
    %v2445 = vld [vmem:[%s2253 + $0x5f8] sm:$0xff]
    %v2446 = vld [vmem:[%s2253 + $0x600] sm:$0xff]
    %v2447 = vld [vmem:[%s2253 + $0x608] sm:$0xff]
    %v2448 = vld [vmem:[%s2253 + $0x610] sm:$0xff]
    %v2449 = vld [vmem:[%s2253 + $0x618] sm:$0xff]
    %v2450 = vld [vmem:[%s2253 + $0x620] sm:$0xff]
    %v2451 = vld [vmem:[%s2253 + $0x628] sm:$0xff]
    %v2452 = vld [vmem:[%s2253 + $0x630] sm:$0xff]
    %v2453 = vld [vmem:[%s2253 + $0x638] sm:$0xff]
    %v2454 = vld [vmem:[%s2253 + $0x640] sm:$0xff]
    %v2455 = vld [vmem:[%s2253 + $0x648] sm:$0xff]
    %v2456 = vld [vmem:[%s2253 + $0x650] sm:$0xff]
    %v2457 = vld [vmem:[%s2253 + $0x658] sm:$0xff]
    %v2458 = vld [vmem:[%s2253 + $0x660] sm:$0xff]
    %v2459 = vld [vmem:[%s2253 + $0x668] sm:$0xff]
    %v2460 = vld [vmem:[%s2253 + $0x670] sm:$0xff]
    %v2461 = vld [vmem:[%s2253 + $0x678] sm:$0xff]
    %v2462 = vld [vmem:[%s2253 + $0x680] sm:$0xff]
    %v2463 = vld [vmem:[%s2253 + $0x688] sm:$0xff]
    %v2464 = vld [vmem:[%s2253 + $0x690] sm:$0xff]
    %v2465 = vld [vmem:[%s2253 + $0x698] sm:$0xff]
    %v2466 = vld [vmem:[%s2253 + $0x6a0] sm:$0xff]
    %v2467 = vld [vmem:[%s2253 + $0x6a8] sm:$0xff]
    %v2468 = vld [vmem:[%s2253 + $0x6b0] sm:$0xff]
    %v2469 = vld [vmem:[%s2253 + $0x6b8] sm:$0xff]
    %v2470 = vld [vmem:[%s2253 + $0x6c0] sm:$0xff]
    %v2471 = vld [vmem:[%s2253 + $0x6c8] sm:$0xff]
    %v2472 = vld [vmem:[%s2253 + $0x6d0] sm:$0xff]
    %v2473 = vld [vmem:[%s2253 + $0x6d8] sm:$0xff]
    %v2474 = vld [vmem:[%s2253 + $0x6e0] sm:$0xff]
    %v2475 = vld [vmem:[%s2253 + $0x6e8] sm:$0xff]
    %v2476 = vld [vmem:[%s2253 + $0x6f0] sm:$0xff]
    %v2477 = vld [vmem:[%s2253 + $0x6f8] sm:$0xff]
    %v2478 = vld [vmem:[%s2253 + $0x700] sm:$0xff]
    %v2479 = vld [vmem:[%s2253 + $0x708] sm:$0xff]
    %v2480 = vld [vmem:[%s2253 + $0x710] sm:$0xff]
    %v2481 = vld [vmem:[%s2253 + $0x718] sm:$0xff]
    %v2482 = vld [vmem:[%s2253 + $0x720] sm:$0xff]
    %v2483 = vld [vmem:[%s2253 + $0x728] sm:$0xff]
    %v2484 = vld [vmem:[%s2253 + $0x730] sm:$0xff]
    %v2485 = vld [vmem:[%s2253 + $0x738] sm:$0xff]
    %v2486 = vld [vmem:[%s2253 + $0x740] sm:$0xff]
    %v2487 = vld [vmem:[%s2253 + $0x748] sm:$0xff]
    %v2488 = vld [vmem:[%s2253 + $0x750] sm:$0xff]
    %v2489 = vld [vmem:[%s2253 + $0x758] sm:$0xff]
    %v2490 = vld [vmem:[%s2253 + $0x760] sm:$0xff]
    %v2491 = vld [vmem:[%s2253 + $0x768] sm:$0xff]
    %v2492 = vld [vmem:[%s2253 + $0x770] sm:$0xff]
    %v2493 = vld [vmem:[%s2253 + $0x778] sm:$0xff]
    %v2494 = vld [vmem:[%s2253 + $0x780] sm:$0xff]
    %v2495 = vld [vmem:[%s2253 + $0x788] sm:$0xff]
    %v2496 = vld [vmem:[%s2253 + $0x790] sm:$0xff]
    %v2497 = vld [vmem:[%s2253 + $0x798] sm:$0xff]
    %v2498 = vld [vmem:[%s2253 + $0x7a0] sm:$0xff]
    %v2499 = vld [vmem:[%s2253 + $0x7a8] sm:$0xff]
    %v2500 = vld [vmem:[%s2253 + $0x7b0] sm:$0xff]
    %v2501 = vld [vmem:[%s2253 + $0x7b8] sm:$0xff]
    %v2502 = vld [vmem:[%s2253 + $0x7c0] sm:$0xff]
    %v2503 = vld [vmem:[%s2253 + $0x7c8] sm:$0xff]
    %v2504 = vld [vmem:[%s2253 + $0x7d0] sm:$0xff]
    %v2505 = vld [vmem:[%s2253 + $0x7d8] sm:$0xff]
    %v2506 = vld [vmem:[%s2253 + $0x7e0] sm:$0xff]
    %v2507 = vld [vmem:[%s2253 + $0x7e8] sm:$0xff]
    %v2508 = vld [vmem:[%s2253 + $0x7f0] sm:$0xff]
    %v2509 = vld [vmem:[%s2253 + $0x7f8] sm:$0xff]
    %v2510 = vld [vmem:[%s2253 + $0x800] sm:$0xff]
    %v2511 = vld [vmem:[%s2253 + $0x808] sm:$0xff]
    %v2512 = vld [vmem:[%s2253 + $0x810] sm:$0xff]
    %v2513 = vld [vmem:[%s2253 + $0x818] sm:$0xff]
    %v2514 = vld [vmem:[%s2253 + $0x820] sm:$0xff]
    %v2515 = vld [vmem:[%s2253 + $0x828] sm:$0xff]
    %v2516 = vld [vmem:[%s2253 + $0x830] sm:$0xff]
    %v2517 = vld [vmem:[%s2253 + $0x838] sm:$0xff]
    %v2518 = vld [vmem:[%s2253 + $0x840] sm:$0xff]
    %v2519 = vld [vmem:[%s2253 + $0x848] sm:$0xff]
    %v2520 = vld [vmem:[%s2253 + $0x850] sm:$0xff]
    %v2521 = vld [vmem:[%s2253 + $0x858] sm:$0xff]
    %v2522 = vld [vmem:[%s2253 + $0x860] sm:$0xff]
    %v2523 = vld [vmem:[%s2253 + $0x868] sm:$0xff]
    %v2524 = vld [vmem:[%s2253 + $0x870] sm:$0xff]
    %v2525 = vld [vmem:[%s2253 + $0x878] sm:$0xff]
    %v2526 = vld [vmem:[%s2253 + $0x880] sm:$0xff]
    %v2527 = vld [vmem:[%s2253 + $0x888] sm:$0xff]
    %v2528 = vld [vmem:[%s2253 + $0x890] sm:$0xff]
    %v2529 = vld [vmem:[%s2253 + $0x898] sm:$0xff]
    %v2530 = vld [vmem:[%s2253 + $0x8a0] sm:$0xff]
    %v2531 = vld [vmem:[%s2253 + $0x8a8] sm:$0xff]
    %v2532 = vld [vmem:[%s2253 + $0x8b0] sm:$0xff]
    %v2533 = vld [vmem:[%s2253 + $0x8b8] sm:$0xff]
    %v2534 = vld [vmem:[%s2253 + $0x8c0] sm:$0xff]
    %v2535 = vld [vmem:[%s2253 + $0x8c8] sm:$0xff]
    %v2536 = vld [vmem:[%s2253 + $0x8d0] sm:$0xff]
    %v2537 = vld [vmem:[%s2253 + $0x8d8] sm:$0xff]
    %v2538 = vld [vmem:[%s2253 + $0x8e0] sm:$0xff]
    %v2539 = vld [vmem:[%s2253 + $0x8e8] sm:$0xff]
    %v2540 = vld [vmem:[%s2253 + $0x8f0] sm:$0xff]
    %v2541 = vld [vmem:[%s2253 + $0x8f8] sm:$0xff]
    %v2542 = vld [vmem:[%s2253 + $0x900] sm:$0xff]
    %v2543 = vld [vmem:[%s2253 + $0x908] sm:$0xff]
    %v2544 = vld [vmem:[%s2253 + $0x910] sm:$0xff]
    %v2545 = vld [vmem:[%s2253 + $0x918] sm:$0xff]
    %v2546 = vld [vmem:[%s2253 + $0x920] sm:$0xff]
    %v2547 = vld [vmem:[%s2253 + $0x928] sm:$0xff]
    %v2548 = vld [vmem:[%s2253 + $0x930] sm:$0xff]
    %v2549 = vld [vmem:[%s2253 + $0x938] sm:$0xff]
    %v2550 = vld [vmem:[%s2253 + $0x940] sm:$0xff]
    %v2551 = vld [vmem:[%s2253 + $0x948] sm:$0xff]
    %v2552 = vld [vmem:[%s2253 + $0x950] sm:$0xff]
    %v2553 = vld [vmem:[%s2253 + $0x958] sm:$0xff]
    %v2554 = vld [vmem:[%s2253 + $0x960] sm:$0xff]
    %v2555 = vld [vmem:[%s2253 + $0x968] sm:$0xff]
    %v2556 = vld [vmem:[%s2253 + $0x970] sm:$0xff]
    %v2557 = vld [vmem:[%s2253 + $0x978] sm:$0xff]
    %v2558 = vld [vmem:[%s2253 + $0x980] sm:$0xff]
    %v2559 = vld [vmem:[%s2253 + $0x988] sm:$0xff]
    %v2560 = vld [vmem:[%s2253 + $0x990] sm:$0xff]
    %v2561 = vld [vmem:[%s2253 + $0x998] sm:$0xff]
    %v2562 = vld [vmem:[%s2253 + $0x9a0] sm:$0xff]
    %v2563 = vld [vmem:[%s2253 + $0x9a8] sm:$0xff]
    %v2564 = vld [vmem:[%s2253 + $0x9b0] sm:$0xff]
    %v2565 = vld [vmem:[%s2253 + $0x9b8] sm:$0xff]
    %v2566 = vld [vmem:[%s2253 + $0x9c0] sm:$0xff]
    %v2567 = vld [vmem:[%s2253 + $0x9c8] sm:$0xff]
    %v2568 = vld [vmem:[%s2253 + $0x9d0] sm:$0xff]
    %v2569 = vld [vmem:[%s2253 + $0x9d8] sm:$0xff]
    %v2570 = vld [vmem:[%s2253 + $0x9e0] sm:$0xff]
    %v2571 = vld [vmem:[%s2253 + $0x9e8] sm:$0xff]
    %v2572 = vld [vmem:[%s2253 + $0x9f0] sm:$0xff]
    %v2573 = vld [vmem:[%s2253 + $0x9f8] sm:$0xff]
    %v2574 = vld [vmem:[%s2253 + $0xa00] sm:$0xff]
    %v2575 = vld [vmem:[%s2253 + $0xa08] sm:$0xff]
    %v2576 = vld [vmem:[%s2253 + $0xa10] sm:$0xff]
    %v2577 = vld [vmem:[%s2253 + $0xa18] sm:$0xff]
    %v2578 = vld [vmem:[%s2253 + $0xa20] sm:$0xff]
    %v2579 = vld [vmem:[%s2253 + $0xa28] sm:$0xff]
    %v2580 = vld [vmem:[%s2253 + $0xa30] sm:$0xff]
    %v2581 = vld [vmem:[%s2253 + $0xa38] sm:$0xff]
    %v2582 = vld [vmem:[%s2253 + $0xa40] sm:$0xff]
    %v2583 = vld [vmem:[%s2253 + $0xa48] sm:$0xff]
    %v2584 = vld [vmem:[%s2253 + $0xa50] sm:$0xff]
    %v2585 = vld [vmem:[%s2253 + $0xa58] sm:$0xff]
    %v2586 = vld [vmem:[%s2253 + $0xa60] sm:$0xff]
    %v2587 = vld [vmem:[%s2253 + $0xa68] sm:$0xff]
    %v2588 = vld [vmem:[%s2253 + $0xa70] sm:$0xff]
    %v2589 = vld [vmem:[%s2253 + $0xa78] sm:$0xff]
    %v2590 = vld [vmem:[%s2253 + $0xa80] sm:$0xff]
    %v2591 = vld [vmem:[%s2253 + $0xa88] sm:$0xff]
    %v2592 = vld [vmem:[%s2253 + $0xa90] sm:$0xff]
    %v2593 = vld [vmem:[%s2253 + $0xa98] sm:$0xff]
    %v2594 = vld [vmem:[%s2253 + $0xaa0] sm:$0xff]
    %v2595 = vld [vmem:[%s2253 + $0xaa8] sm:$0xff]
    %v2596 = vld [vmem:[%s2253 + $0xab0] sm:$0xff]
    %v2597 = vld [vmem:[%s2253 + $0xab8] sm:$0xff]
    %v2598 = vld [vmem:[%s2253 + $0xac0] sm:$0xff]
    %v2599 = vld [vmem:[%s2253 + $0xac8] sm:$0xff]
    %v2600 = vld [vmem:[%s2253 + $0xad0] sm:$0xff]
    %v2601 = vld [vmem:[%s2253 + $0xad8] sm:$0xff]
    %v2602 = vld [vmem:[%s2253 + $0xae0] sm:$0xff]
    %v2603 = vld [vmem:[%s2253 + $0xae8] sm:$0xff]
    %v2604 = vld [vmem:[%s2253 + $0xaf0] sm:$0xff]
    %v2605 = vld [vmem:[%s2253 + $0xaf8] sm:$0xff]
    %v2606 = vld [vmem:[%s2253 + $0xb00] sm:$0xff]
    %v2607 = vld [vmem:[%s2253 + $0xb08] sm:$0xff]
    %v2608 = vld [vmem:[%s2253 + $0xb10] sm:$0xff]
    %v2609 = vld [vmem:[%s2253 + $0xb18] sm:$0xff]
    %v2610 = vld [vmem:[%s2253 + $0xb20] sm:$0xff]
    %v2611 = vld [vmem:[%s2253 + $0xb28] sm:$0xff]
    %v2612 = vld [vmem:[%s2253 + $0xb30] sm:$0xff]
    %v2613 = vld [vmem:[%s2253 + $0xb38] sm:$0xff]
    %v2614 = vld [vmem:[%s2253 + $0xb40] sm:$0xff]
    %v2615 = vld [vmem:[%s2253 + $0xb48] sm:$0xff]
    %v2616 = vld [vmem:[%s2253 + $0xb50] sm:$0xff]
    %v2617 = vld [vmem:[%s2253 + $0xb58] sm:$0xff]
    %v2618 = vld [vmem:[%s2253 + $0xb60] sm:$0xff]
    %v2619 = vld [vmem:[%s2253 + $0xb68] sm:$0xff]
    %v2620 = vld [vmem:[%s2253 + $0xb70] sm:$0xff]
    %v2621 = vld [vmem:[%s2253 + $0xb78] sm:$0xff]
    %v2622 = vld [vmem:[%s2253 + $0xb80] sm:$0xff]
    %v2623 = vld [vmem:[%s2253 + $0xb88] sm:$0xff]
    %v2624 = vld [vmem:[%s2253 + $0xb90] sm:$0xff]
    %v2625 = vld [vmem:[%s2253 + $0xb98] sm:$0xff]
    %v2626 = vld [vmem:[%s2253 + $0xba0] sm:$0xff]
    %v2627 = vld [vmem:[%s2253 + $0xba8] sm:$0xff]
    %v2628 = vld [vmem:[%s2253 + $0xbb0] sm:$0xff]
    %v2629 = vld [vmem:[%s2253 + $0xbb8] sm:$0xff]
    %v2630 = vld [vmem:[%s2253 + $0xbc0] sm:$0xff]
    %v2631 = vld [vmem:[%s2253 + $0xbc8] sm:$0xff]
    %v2632 = vld [vmem:[%s2253 + $0xbd0] sm:$0xff]
    %v2633 = vld [vmem:[%s2253 + $0xbd8] sm:$0xff]
    %v2634 = vld [vmem:[%s2253 + $0xbe0] sm:$0xff]
    %v2635 = vld [vmem:[%s2253 + $0xbe8] sm:$0xff]
    %v2636 = vld [vmem:[%s2253 + $0xbf0] sm:$0xff]
    %v2637 = vld [vmem:[%s2253 + $0xbf8] sm:$0xff]
    %v2638 = vld [vmem:[%s2253 + $0xc00] sm:$0xff]
    %v2639 = vld [vmem:[%s2253 + $0xc08] sm:$0xff]
    %v2640 = vld [vmem:[%s2253 + $0xc10] sm:$0xff]
    %v2641 = vld [vmem:[%s2253 + $0xc18] sm:$0xff]
    %v2642 = vld [vmem:[%s2253 + $0xc20] sm:$0xff]
    %v2643 = vld [vmem:[%s2253 + $0xc28] sm:$0xff]
    %v2644 = vld [vmem:[%s2253 + $0xc30] sm:$0xff]
    %v2645 = vld [vmem:[%s2253 + $0xc38] sm:$0xff]
    %v2646 = vld [vmem:[%s2253 + $0xc40] sm:$0xff]
    %v2647 = vld [vmem:[%s2253 + $0xc48] sm:$0xff]
    %v2648 = vld [vmem:[%s2253 + $0xc50] sm:$0xff]
    %v2649 = vld [vmem:[%s2253 + $0xc58] sm:$0xff]
    %v2650 = vld [vmem:[%s2253 + $0xc60] sm:$0xff]
    %v2651 = vld [vmem:[%s2253 + $0xc68] sm:$0xff]
    %v2652 = vld [vmem:[%s2253 + $0xc70] sm:$0xff]
    %v2653 = vld [vmem:[%s2253 + $0xc78] sm:$0xff]
    %v2654 = vld [vmem:[%s2253 + $0xc80] sm:$0xff]
    %v2655 = vld [vmem:[%s2253 + $0xc88] sm:$0xff]
    %v2656 = vld [vmem:[%s2253 + $0xc90] sm:$0xff]
    %v2657 = vld [vmem:[%s2253 + $0xc98] sm:$0xff]
    %v2658 = vld [vmem:[%s2253 + $0xca0] sm:$0xff]
    %v2659 = vld [vmem:[%s2253 + $0xca8] sm:$0xff]
    %v2660 = vld [vmem:[%s2253 + $0xcb0] sm:$0xff]
    %v2661 = vld [vmem:[%s2253 + $0xcb8] sm:$0xff]
    %v2662 = vld [vmem:[%s2253 + $0xcc0] sm:$0xff]
    %v2663 = vld [vmem:[%s2253 + $0xcc8] sm:$0xff]
    %v2664 = vld [vmem:[%s2253 + $0xcd0] sm:$0xff]
    %v2665 = vld [vmem:[%s2253 + $0xcd8] sm:$0xff]
    %v2666 = vld [vmem:[%s2253 + $0xce0] sm:$0xff]
    %v2667 = vld [vmem:[%s2253 + $0xce8] sm:$0xff]
    %v2668 = vld [vmem:[%s2253 + $0xcf0] sm:$0xff]
    %v2669 = vld [vmem:[%s2253 + $0xcf8] sm:$0xff]
    %v2670 = vld [vmem:[%s2253 + $0xd00] sm:$0xff]
    %v2671 = vld [vmem:[%s2253 + $0xd08] sm:$0xff]
    %v2672 = vld [vmem:[%s2253 + $0xd10] sm:$0xff]
    %v2673 = vld [vmem:[%s2253 + $0xd18] sm:$0xff]
    %v2674 = vld [vmem:[%s2253 + $0xd20] sm:$0xff]
    %v2675 = vld [vmem:[%s2253 + $0xd28] sm:$0xff]
    %v2676 = vld [vmem:[%s2253 + $0xd30] sm:$0xff]
    %v2677 = vld [vmem:[%s2253 + $0xd38] sm:$0xff]
    %v2678 = vld [vmem:[%s2253 + $0xd40] sm:$0xff]
    %v2679 = vld [vmem:[%s2253 + $0xd48] sm:$0xff]
    %v2680 = vld [vmem:[%s2253 + $0xd50] sm:$0xff]
    %v2681 = vld [vmem:[%s2253 + $0xd58] sm:$0xff]
    %v2682 = vld [vmem:[%s2253 + $0xd60] sm:$0xff]
    %v2683 = vld [vmem:[%s2253 + $0xd68] sm:$0xff]
    %v2684 = vld [vmem:[%s2253 + $0xd70] sm:$0xff]
    %v2685 = vld [vmem:[%s2253 + $0xd78] sm:$0xff]
    %v2686 = vld [vmem:[%s2253 + $0xd80] sm:$0xff]
    %v2687 = vld [vmem:[%s2253 + $0xd88] sm:$0xff]
    %v2688 = vld [vmem:[%s2253 + $0xd90] sm:$0xff]
    %v2689 = vld [vmem:[%s2253 + $0xd98] sm:$0xff]
    %v2690 = vld [vmem:[%s2253 + $0xda0] sm:$0xff]
    %v2691 = vld [vmem:[%s2253 + $0xda8] sm:$0xff]
    %v2692 = vld [vmem:[%s2253 + $0xdb0] sm:$0xff]
    %v2693 = vld [vmem:[%s2253 + $0xdb8] sm:$0xff]
    %v2694 = vld [vmem:[%s2253 + $0xdc0] sm:$0xff]
    %v2695 = vld [vmem:[%s2253 + $0xdc8] sm:$0xff]
    %v2696 = vld [vmem:[%s2253 + $0xdd0] sm:$0xff]
    %v2697 = vld [vmem:[%s2253 + $0xdd8] sm:$0xff]
    %v2698 = vld [vmem:[%s2253 + $0xde0] sm:$0xff]
    %v2699 = vld [vmem:[%s2253 + $0xde8] sm:$0xff]
    %v2700 = vld [vmem:[%s2253 + $0xdf0] sm:$0xff]
    %v2701 = vld [vmem:[%s2253 + $0xdf8] sm:$0xff]
    %v2702 = vld [vmem:[%s2253 + $0xe00] sm:$0xff]
    %v2703 = vld [vmem:[%s2253 + $0xe08] sm:$0xff]
    %v2704 = vld [vmem:[%s2253 + $0xe10] sm:$0xff]
    %v2705 = vld [vmem:[%s2253 + $0xe18] sm:$0xff]
    %v2706 = vld [vmem:[%s2253 + $0xe20] sm:$0xff]
    %v2707 = vld [vmem:[%s2253 + $0xe28] sm:$0xff]
    %v2708 = vld [vmem:[%s2253 + $0xe30] sm:$0xff]
    %v2709 = vld [vmem:[%s2253 + $0xe38] sm:$0xff]
    %v2710 = vld [vmem:[%s2253 + $0xe40] sm:$0xff]
    %v2711 = vld [vmem:[%s2253 + $0xe48] sm:$0xff]
    %v2712 = vld [vmem:[%s2253 + $0xe50] sm:$0xff]
    %v2713 = vld [vmem:[%s2253 + $0xe58] sm:$0xff]
    %v2714 = vld [vmem:[%s2253 + $0xe60] sm:$0xff]
    %v2715 = vld [vmem:[%s2253 + $0xe68] sm:$0xff]
    %v2716 = vld [vmem:[%s2253 + $0xe70] sm:$0xff]
    %v2717 = vld [vmem:[%s2253 + $0xe78] sm:$0xff]
    %v2718 = vld [vmem:[%s2253 + $0xe80] sm:$0xff]
    %v2719 = vld [vmem:[%s2253 + $0xe88] sm:$0xff]
    %v2720 = vld [vmem:[%s2253 + $0xe90] sm:$0xff]
    %v2721 = vld [vmem:[%s2253 + $0xe98] sm:$0xff]
    %v2722 = vld [vmem:[%s2253 + $0xea0] sm:$0xff]
    %v2723 = vld [vmem:[%s2253 + $0xea8] sm:$0xff]
    %v2724 = vld [vmem:[%s2253 + $0xeb0] sm:$0xff]
    %v2725 = vld [vmem:[%s2253 + $0xeb8] sm:$0xff]
    %v2726 = vld [vmem:[%s2253 + $0xec0] sm:$0xff]
    %v2727 = vld [vmem:[%s2253 + $0xec8] sm:$0xff]
    %v2728 = vld [vmem:[%s2253 + $0xed0] sm:$0xff]
    %v2729 = vld [vmem:[%s2253 + $0xed8] sm:$0xff]
    %v2730 = vld [vmem:[%s2253 + $0xee0] sm:$0xff]
    %v2731 = vld [vmem:[%s2253 + $0xee8] sm:$0xff]
    %v2732 = vld [vmem:[%s2253 + $0xef0] sm:$0xff]
    %v2733 = vld [vmem:[%s2253 + $0xef8] sm:$0xff]
    %v2734 = vld [vmem:[%s2253 + $0xf00] sm:$0xff]
    %v2735 = vld [vmem:[%s2253 + $0xf08] sm:$0xff]
    %v2736 = vld [vmem:[%s2253 + $0xf10] sm:$0xff]
    %v2737 = vld [vmem:[%s2253 + $0xf18] sm:$0xff]
    %v2738 = vld [vmem:[%s2253 + $0xf20] sm:$0xff]
    %v2739 = vld [vmem:[%s2253 + $0xf28] sm:$0xff]
    %v2740 = vld [vmem:[%s2253 + $0xf30] sm:$0xff]
    %v2741 = vld [vmem:[%s2253 + $0xf38] sm:$0xff]
    %v2742 = vld [vmem:[%s2253 + $0xf40] sm:$0xff]
    %v2743 = vld [vmem:[%s2253 + $0xf48] sm:$0xff]
    %v2744 = vld [vmem:[%s2253 + $0xf50] sm:$0xff]
    %v2745 = vld [vmem:[%s2253 + $0xf58] sm:$0xff]
    %v2746 = vld [vmem:[%s2253 + $0xf60] sm:$0xff]
    %v2747 = vld [vmem:[%s2253 + $0xf68] sm:$0xff]
    %v2748 = vld [vmem:[%s2253 + $0xf70] sm:$0xff]
    %v2749 = vld [vmem:[%s2253 + $0xf78] sm:$0xff]
    %v2750 = vld [vmem:[%s2253 + $0xf80] sm:$0xff]
    %v2751 = vld [vmem:[%s2253 + $0xf88] sm:$0xff]
    %v2752 = vld [vmem:[%s2253 + $0xf90] sm:$0xff]
    %v2753 = vld [vmem:[%s2253 + $0xf98] sm:$0xff]
    %v2754 = vld [vmem:[%s2253 + $0xfa0] sm:$0xff]
    %v2755 = vld [vmem:[%s2253 + $0xfa8] sm:$0xff]
    %v2756 = vld [vmem:[%s2253 + $0xfb0] sm:$0xff]
    %v2757 = vld [vmem:[%s2253 + $0xfb8] sm:$0xff]
    %v2758 = vld [vmem:[%s2253 + $0xfc0] sm:$0xff]
    %v2759 = vld [vmem:[%s2253 + $0xfc8] sm:$0xff]
    %v2760 = vld [vmem:[%s2253 + $0xfd0] sm:$0xff]
    %v2761 = vld [vmem:[%s2253 + $0xfd8] sm:$0xff]
    %v2762 = vld [vmem:[%s2253 + $0xfe0] sm:$0xff]
    %v2763 = vld [vmem:[%s2253 + $0xfe8] sm:$0xff]
    %v2764 = vld [vmem:[%s2253 + $0xff0] sm:$0xff]
    %v2765 = vld [vmem:[%s2253 + $0xff8] sm:$0xff]
    %v2766 = vld [vmem:[%s2253 + $0x1000] sm:$0xff]
    %v2767 = vld [vmem:[%s2253 + $0x1008] sm:$0xff]
    %v2768 = vld [vmem:[%s2253 + $0x1010] sm:$0xff]
    %v2769 = vld [vmem:[%s2253 + $0x1018] sm:$0xff]
    %v2770 = vld [vmem:[%s2253 + $0x1020] sm:$0xff]
    %v2771 = vld [vmem:[%s2253 + $0x1028] sm:$0xff]
    %v2772 = vld [vmem:[%s2253 + $0x1030] sm:$0xff]
    %v2773 = vld [vmem:[%s2253 + $0x1038] sm:$0xff]
    %v2774 = vld [vmem:[%s2253 + $0x1040] sm:$0xff]
    %v2775 = vld [vmem:[%s2253 + $0x1048] sm:$0xff]
    %v2776 = vld [vmem:[%s2253 + $0x1050] sm:$0xff]
    %v2777 = vld [vmem:[%s2253 + $0x1058] sm:$0xff]
    %v2778 = vld [vmem:[%s2253 + $0x1060] sm:$0xff]
    %v2779 = vld [vmem:[%s2253 + $0x1068] sm:$0xff]
    %v2780 = vld [vmem:[%s2253 + $0x1070] sm:$0xff]
    %v2781 = vld [vmem:[%s2253 + $0x1078] sm:$0xff]
    %v2782 = vld [vmem:[%s2253 + $0x1080] sm:$0xff]
    %v2783 = vld [vmem:[%s2253 + $0x1088] sm:$0xff]
    %v2784 = vld [vmem:[%s2253 + $0x1090] sm:$0xff]
    %v2785 = vld [vmem:[%s2253 + $0x1098] sm:$0xff]
    %v2786 = vld [vmem:[%s2253 + $0x10a0] sm:$0xff]
    %v2787 = vld [vmem:[%s2253 + $0x10a8] sm:$0xff]
    %v2788 = vld [vmem:[%s2253 + $0x10b0] sm:$0xff]
    %v2789 = vld [vmem:[%s2253 + $0x10b8] sm:$0xff]
    %v2790 = vld [vmem:[%s2253 + $0x10c0] sm:$0xff]
    %v2791 = vld [vmem:[%s2253 + $0x10c8] sm:$0xff]
    %v2792 = vld [vmem:[%s2253 + $0x10d0] sm:$0xff]
    %v2793 = vld [vmem:[%s2253 + $0x10d8] sm:$0xff]
    %v2794 = vld [vmem:[%s2253 + $0x10e0] sm:$0xff]
    %v2795 = vld [vmem:[%s2253 + $0x10e8] sm:$0xff]
    %v2796 = vld [vmem:[%s2253 + $0x10f0] sm:$0xff]
    %v2797 = vld [vmem:[%s2253 + $0x10f8] sm:$0xff]
    %v2798 = vld [vmem:[%s2253 + $0x1100] sm:$0xff]
    %v2799 = vld [vmem:[%s2253 + $0x1108] sm:$0xff]
    %v2800 = vld [vmem:[%s2253 + $0x1110] sm:$0xff]
    %v2801 = vld [vmem:[%s2253 + $0x1118] sm:$0xff]
    %v2802 = vld [vmem:[%s2253 + $0x1120] sm:$0xff]
    %v2803 = vld [vmem:[%s2253 + $0x1128] sm:$0xff]
    %v2804 = vld [vmem:[%s2253 + $0x1130] sm:$0xff]
    %v2805 = vld [vmem:[%s2253 + $0x1138] sm:$0xff]
    %v2806 = vld [vmem:[%s2253 + $0x1140] sm:$0xff]
    %v2807 = vld [vmem:[%s2253 + $0x1148] sm:$0xff]
    %v2808 = vld [vmem:[%s2253 + $0x1150] sm:$0xff]
    %v2809 = vld [vmem:[%s2253 + $0x1158] sm:$0xff]
    %v2810 = vld [vmem:[%s2253 + $0x1160] sm:$0xff]
    %v2811 = vld [vmem:[%s2253 + $0x1168] sm:$0xff]
    %v2812 = vld [vmem:[%s2253 + $0x1170] sm:$0xff]
    %v2813 = vld [vmem:[%s2253 + $0x1178] sm:$0xff]
    %v2814 = vld [vmem:[%s2253 + $0x1180] sm:$0xff]
    %v2815 = vld [vmem:[%s2253 + $0x1188] sm:$0xff]
    %v2816 = vld [vmem:[%s2253 + $0x1190] sm:$0xff]
    %v2817 = vld [vmem:[%s2253 + $0x1198] sm:$0xff]
    %v2818 = vld [vmem:[%s2253 + $0x11a0] sm:$0xff]
    %v2819 = vld [vmem:[%s2253 + $0x11a8] sm:$0xff]
    %v2820 = vld [vmem:[%s2253 + $0x11b0] sm:$0xff]
    %v2821 = vld [vmem:[%s2253 + $0x11b8] sm:$0xff]
    %v2822 = vld [vmem:[%s2253 + $0x11c0] sm:$0xff]
    %v2823 = vld [vmem:[%s2253 + $0x11c8] sm:$0xff]
    %v2824 = vld [vmem:[%s2253 + $0x11d0] sm:$0xff]
    %v2825 = vld [vmem:[%s2253 + $0x11d8] sm:$0xff]
    %v2826 = vld [vmem:[%s2253 + $0x11e0] sm:$0xff]
    %v2827 = vld [vmem:[%s2253 + $0x11e8] sm:$0xff]
    %v2828 = vld [vmem:[%s2253 + $0x11f0] sm:$0xff]
    %v2829 = vld [vmem:[%s2253 + $0x11f8] sm:$0xff]
    %v2830 = vld [vmem:[%s2253 + $0x1200] sm:$0xff]
    %v2831 = vld [vmem:[%s2253 + $0x1208] sm:$0xff]
    %v2832 = vld [vmem:[%s2253 + $0x1210] sm:$0xff]
    %v2833 = vld [vmem:[%s2253 + $0x1218] sm:$0xff]
    %v2834 = vld [vmem:[%s2253 + $0x1220] sm:$0xff]
    %v2835 = vld [vmem:[%s2253 + $0x1228] sm:$0xff]
    %v2836 = vld [vmem:[%s2253 + $0x1230] sm:$0xff]
    %v2837 = vld [vmem:[%s2253 + $0x1238] sm:$0xff]
    %v2838 = vld [vmem:[%s2253 + $0x1240] sm:$0xff]
    %v2839 = vld [vmem:[%s2253 + $0x1248] sm:$0xff]
    %v2840 = vld [vmem:[%s2253 + $0x1250] sm:$0xff]
    %v2841 = vld [vmem:[%s2253 + $0x1258] sm:$0xff]
    %v2842 = vld [vmem:[%s2253 + $0x1260] sm:$0xff]
    %v2843 = vld [vmem:[%s2253 + $0x1268] sm:$0xff]
    %v2844 = vld [vmem:[%s2253 + $0x1270] sm:$0xff]
    %v2845 = vld [vmem:[%s2253 + $0x1278] sm:$0xff]
    %v2846 = vld [vmem:[%s2253 + $0x1280] sm:$0xff]
    %v2847 = vld [vmem:[%s2253 + $0x1288] sm:$0xff]
    %v2848 = vld [vmem:[%s2253 + $0x1290] sm:$0xff]
    %v2849 = vld [vmem:[%s2253 + $0x1298] sm:$0xff]
    %v2850 = vld [vmem:[%s2253 + $0x12a0] sm:$0xff]
    %v2851 = vld [vmem:[%s2253 + $0x12a8] sm:$0xff]
    %v2852 = vld [vmem:[%s2253 + $0x12b0] sm:$0xff]
    %v2853 = vld [vmem:[%s2253 + $0x12b8] sm:$0xff]
    %v2854 = vld [vmem:[%s2253 + $0x12c0] sm:$0xff]
    %v2855 = vld [vmem:[%s2253 + $0x12c8] sm:$0xff]
    %v2856 = vld [vmem:[%s2253 + $0x12d0] sm:$0xff]
    %v2857 = vld [vmem:[%s2253 + $0x12d8] sm:$0xff]
    %v2858 = vld [vmem:[%s2253 + $0x12e0] sm:$0xff]
    %v2859 = vld [vmem:[%s2253 + $0x12e8] sm:$0xff]
    %v2860 = vld [vmem:[%s2253 + $0x12f0] sm:$0xff]
    %v2861 = vld [vmem:[%s2253 + $0x12f8] sm:$0xff]
    %v2862 = vld [vmem:[%s2253 + $0x1300] sm:$0xff]
    %v2863 = vld [vmem:[%s2253 + $0x1308] sm:$0xff]
    %v2864 = vld [vmem:[%s2253 + $0x1310] sm:$0xff]
    %v2865 = vld [vmem:[%s2253 + $0x1318] sm:$0xff]
    %v2866 = vld [vmem:[%s2253 + $0x1320] sm:$0xff]
    %v2867 = vld [vmem:[%s2253 + $0x1328] sm:$0xff]
    %v2868 = vld [vmem:[%s2253 + $0x1330] sm:$0xff]
    %v2869 = vld [vmem:[%s2253 + $0x1338] sm:$0xff]
    %v2870 = vld [vmem:[%s2253 + $0x1340] sm:$0xff]
    %v2871 = vld [vmem:[%s2253 + $0x1348] sm:$0xff]
    %v2872 = vld [vmem:[%s2253 + $0x1350] sm:$0xff]
    %v2873 = vld [vmem:[%s2253 + $0x1358] sm:$0xff]
    %v2874 = vld [vmem:[%s2253 + $0x1360] sm:$0xff]
    %v2875 = vld [vmem:[%s2253 + $0x1368] sm:$0xff]
    %v2876 = vld [vmem:[%s2253 + $0x1370] sm:$0xff]
    %v2877 = vld [vmem:[%s2253 + $0x1378] sm:$0xff]
    %v2878 = vld [vmem:[%s2253 + $0x1380] sm:$0xff]
    %v2879 = vld [vmem:[%s2253 + $0x1388] sm:$0xff]
    %v2880 = vld [vmem:[%s2253 + $0x1390] sm:$0xff]
    %v2881 = vld [vmem:[%s2253 + $0x1398] sm:$0xff]
    %v2882 = vld [vmem:[%s2253 + $0x13a0] sm:$0xff]
    %v2883 = vld [vmem:[%s2253 + $0x13a8] sm:$0xff]
    %v2884 = vld [vmem:[%s2253 + $0x13b0] sm:$0xff]
    %v2885 = vld [vmem:[%s2253 + $0x13b8] sm:$0xff]
    %v2886 = vld [vmem:[%s2253 + $0x13c0] sm:$0xff]
    %v2887 = vld [vmem:[%s2253 + $0x13c8] sm:$0xff]
    %v2888 = vld [vmem:[%s2253 + $0x13d0] sm:$0xff]
    %v2889 = vld [vmem:[%s2253 + $0x13d8] sm:$0xff]
    %v2890 = vld [vmem:[%s2253 + $0x13e0] sm:$0xff]
    %v2891 = vld [vmem:[%s2253 + $0x13e8] sm:$0xff]
    %v2892 = vld [vmem:[%s2253 + $0x13f0] sm:$0xff]
    %v2893 = vld [vmem:[%s2253 + $0x13f8] sm:$0xff]
    %v2894 = vld [vmem:[%s2253 + $0x1400] sm:$0xff]
    %v2895 = vld [vmem:[%s2253 + $0x1408] sm:$0xff]
    %v2896 = vld [vmem:[%s2253 + $0x1410] sm:$0xff]
    %v2897 = vld [vmem:[%s2253 + $0x1418] sm:$0xff]
    %v2898 = vld [vmem:[%s2253 + $0x1420] sm:$0xff]
    %v2899 = vld [vmem:[%s2253 + $0x1428] sm:$0xff]
    %v2900 = vld [vmem:[%s2253 + $0x1430] sm:$0xff]
    %v2901 = vld [vmem:[%s2253 + $0x1438] sm:$0xff]
    %v2902 = vld [vmem:[%s2253 + $0x1440] sm:$0xff]
    %v2903 = vld [vmem:[%s2253 + $0x1448] sm:$0xff]
    %v2904 = vld [vmem:[%s2253 + $0x1450] sm:$0xff]
    %v2905 = vld [vmem:[%s2253 + $0x1458] sm:$0xff]
    %v2906 = vld [vmem:[%s2253 + $0x1460] sm:$0xff]
    %v2907 = vld [vmem:[%s2253 + $0x1468] sm:$0xff]
    %v2908 = vld [vmem:[%s2253 + $0x1470] sm:$0xff]
    %v2909 = vld [vmem:[%s2253 + $0x1478] sm:$0xff]
    %v2910 = vld [vmem:[%s2253 + $0x1480] sm:$0xff]
    %v2911 = vld [vmem:[%s2253 + $0x1488] sm:$0xff]
    %v2912 = vld [vmem:[%s2253 + $0x1490] sm:$0xff]
    %v2913 = vld [vmem:[%s2253 + $0x1498] sm:$0xff]
    %v2914 = vld [vmem:[%s2253 + $0x14a0] sm:$0xff]
    %v2915 = vld [vmem:[%s2253 + $0x14a8] sm:$0xff]
    %v2916 = vld [vmem:[%s2253 + $0x14b0] sm:$0xff]
    %v2917 = vld [vmem:[%s2253 + $0x14b8] sm:$0xff]
    %v2918 = vld [vmem:[%s2253 + $0x14c0] sm:$0xff]
    %v2919 = vld [vmem:[%s2253 + $0x14c8] sm:$0xff]
    %v2920 = vld [vmem:[%s2253 + $0x14d0] sm:$0xff]
    %v2921 = vld [vmem:[%s2253 + $0x14d8] sm:$0xff]
    %v2922 = vld [vmem:[%s2253 + $0x14e0] sm:$0xff]
    %v2923 = vld [vmem:[%s2253 + $0x14e8] sm:$0xff]
    %v2924 = vld [vmem:[%s2253 + $0x14f0] sm:$0xff]
    %v2925 = vld [vmem:[%s2253 + $0x14f8] sm:$0xff]
    %v2926 = vld [vmem:[%s2253 + $0x1500] sm:$0xff]
    %v2927 = vld [vmem:[%s2253 + $0x1508] sm:$0xff]
    %v2928 = vld [vmem:[%s2253 + $0x1510] sm:$0xff]
    %v2929 = vld [vmem:[%s2253 + $0x1518] sm:$0xff]
    %v2930 = vld [vmem:[%s2253 + $0x1520] sm:$0xff]
    %v2931 = vld [vmem:[%s2253 + $0x1528] sm:$0xff]
    %v2932 = vld [vmem:[%s2253 + $0x1530] sm:$0xff]
    %v2933 = vld [vmem:[%s2253 + $0x1538] sm:$0xff]
    %v2934 = vld [vmem:[%s2253 + $0x1540] sm:$0xff]
    %v2935 = vld [vmem:[%s2253 + $0x1548] sm:$0xff]
    %v2936 = vld [vmem:[%s2253 + $0x1550] sm:$0xff]
    %v2937 = vld [vmem:[%s2253 + $0x1558] sm:$0xff]
    %v2938 = vld [vmem:[%s2253 + $0x1560] sm:$0xff]
    %v2939 = vld [vmem:[%s2253 + $0x1568] sm:$0xff]
    %v2940 = vld [vmem:[%s2253 + $0x1570] sm:$0xff]
    %v2941 = vld [vmem:[%s2253 + $0x1578] sm:$0xff]
    %v2942 = vld [vmem:[%s2253 + $0x1580] sm:$0xff]
    %v2943 = vld [vmem:[%s2253 + $0x1588] sm:$0xff]
    %v2944 = vld [vmem:[%s2253 + $0x1590] sm:$0xff]
    %v2945 = vld [vmem:[%s2253 + $0x1598] sm:$0xff]
    %v2946 = vld [vmem:[%s2253 + $0x15a0] sm:$0xff]
    %v2947 = vld [vmem:[%s2253 + $0x15a8] sm:$0xff]
    %v2948 = vld [vmem:[%s2253 + $0x15b0] sm:$0xff]
    %v2949 = vld [vmem:[%s2253 + $0x15b8] sm:$0xff]
    %v2950 = vld [vmem:[%s2253 + $0x15c0] sm:$0xff]
    %v2951 = vld [vmem:[%s2253 + $0x15c8] sm:$0xff]
    %v2952 = vld [vmem:[%s2253 + $0x15d0] sm:$0xff]
    %v2953 = vld [vmem:[%s2253 + $0x15d8] sm:$0xff]
    %v2954 = vld [vmem:[%s2253 + $0x15e0] sm:$0xff]
    %v2955 = vld [vmem:[%s2253 + $0x15e8] sm:$0xff]
    %v2956 = vld [vmem:[%s2253 + $0x15f0] sm:$0xff]
    %v2957 = vld [vmem:[%s2253 + $0x15f8] sm:$0xff]
    %v2958 = vld [vmem:[%s2253 + $0x1600] sm:$0xff]
    %v2959 = vld [vmem:[%s2253 + $0x1608] sm:$0xff]
    %v2960 = vld [vmem:[%s2253 + $0x1610] sm:$0xff]
    %v2961 = vld [vmem:[%s2253 + $0x1618] sm:$0xff]
    %v2962 = vld [vmem:[%s2253 + $0x1620] sm:$0xff]
    %v2963 = vld [vmem:[%s2253 + $0x1628] sm:$0xff]
    %v2964 = vld [vmem:[%s2253 + $0x1630] sm:$0xff]
    %v2965 = vld [vmem:[%s2253 + $0x1638] sm:$0xff]
    %v2966 = vld [vmem:[%s2253 + $0x1640] sm:$0xff]
    %v2967 = vld [vmem:[%s2253 + $0x1648] sm:$0xff]
    %v2968 = vld [vmem:[%s2253 + $0x1650] sm:$0xff]
    %v2969 = vld [vmem:[%s2253 + $0x1658] sm:$0xff]
    %v2970 = vld [vmem:[%s2253 + $0x1660] sm:$0xff]
    %v2971 = vld [vmem:[%s2253 + $0x1668] sm:$0xff]
    %v2972 = vld [vmem:[%s2253 + $0x1670] sm:$0xff]
    %v2973 = vld [vmem:[%s2253 + $0x1678] sm:$0xff]
    %v2974 = vld [vmem:[%s2253 + $0x1680] sm:$0xff]
    %v2975 = vld [vmem:[%s2253 + $0x1688] sm:$0xff]
    %v2976 = vld [vmem:[%s2253 + $0x1690] sm:$0xff]
    %v2977 = vld [vmem:[%s2253 + $0x1698] sm:$0xff]
    %v2978 = vld [vmem:[%s2253 + $0x16a0] sm:$0xff]
    %v2979 = vld [vmem:[%s2253 + $0x16a8] sm:$0xff]
    %v2980 = vld [vmem:[%s2253 + $0x16b0] sm:$0xff]
    %v2981 = vld [vmem:[%s2253 + $0x16b8] sm:$0xff]
    %v2982 = vld [vmem:[%s2253 + $0x16c0] sm:$0xff]
    %v2983 = vld [vmem:[%s2253 + $0x16c8] sm:$0xff]
    %v2984 = vld [vmem:[%s2253 + $0x16d0] sm:$0xff]
    %v2985 = vld [vmem:[%s2253 + $0x16d8] sm:$0xff]
    %v2986 = vld [vmem:[%s2253 + $0x16e0] sm:$0xff]
    %v2987 = vld [vmem:[%s2253 + $0x16e8] sm:$0xff]
    %v2988 = vld [vmem:[%s2253 + $0x16f0] sm:$0xff]
    %v2989 = vld [vmem:[%s2253 + $0x16f8] sm:$0xff]
    %v2990 = vld [vmem:[%s2253 + $0x1700] sm:$0xff]
    %v2991 = vld [vmem:[%s2253 + $0x1708] sm:$0xff]
    %v2992 = vld [vmem:[%s2253 + $0x1710] sm:$0xff]
    %v2993 = vld [vmem:[%s2253 + $0x1718] sm:$0xff]
    %v2994 = vld [vmem:[%s2253 + $0x1720] sm:$0xff]
    %v2995 = vld [vmem:[%s2253 + $0x1728] sm:$0xff]
    %v2996 = vld [vmem:[%s2253 + $0x1730] sm:$0xff]
    %v2997 = vld [vmem:[%s2253 + $0x1738] sm:$0xff]
    %v2998 = vld [vmem:[%s2253 + $0x1740] sm:$0xff]
    %v2999 = vld [vmem:[%s2253 + $0x1748] sm:$0xff]
    %v3000 = vld [vmem:[%s2253 + $0x1750] sm:$0xff]
    %v3001 = vld [vmem:[%s2253 + $0x1758] sm:$0xff]
    %v3002 = vld [vmem:[%s2253 + $0x1760] sm:$0xff]
    %v3003 = vld [vmem:[%s2253 + $0x1768] sm:$0xff]
    %v3004 = vld [vmem:[%s2253 + $0x1770] sm:$0xff]
    %v3005 = vld [vmem:[%s2253 + $0x1778] sm:$0xff]
    %v3006 = vld [vmem:[%s2253 + $0x1780] sm:$0xff]
    %v3007 = vld [vmem:[%s2253 + $0x1788] sm:$0xff]
    %v3008 = vld [vmem:[%s2253 + $0x1790] sm:$0xff]
    %v3009 = vld [vmem:[%s2253 + $0x1798] sm:$0xff]
    %v3010 = vld [vmem:[%s2253 + $0x17a0] sm:$0xff]
    %v3011 = vld [vmem:[%s2253 + $0x17a8] sm:$0xff]
    %v3012 = vld [vmem:[%s2253 + $0x17b0] sm:$0xff]
    %v3013 = vld [vmem:[%s2253 + $0x17b8] sm:$0xff]
    %v3014 = vld [vmem:[%s2253 + $0x17c0] sm:$0xff]
    %v3015 = vld [vmem:[%s2253 + $0x17c8] sm:$0xff]
    %v3016 = vld [vmem:[%s2253 + $0x17d0] sm:$0xff]
    %v3017 = vld [vmem:[%s2253 + $0x17d8] sm:$0xff]
    %v3018 = vld [vmem:[%s2253 + $0x17e0] sm:$0xff]
    %v3019 = vld [vmem:[%s2253 + $0x17e8] sm:$0xff]
    %v3020 = vld [vmem:[%s2253 + $0x17f0] sm:$0xff]
    %v3021 = vld [vmem:[%s2253 + $0x17f8] sm:$0xff]
    %s3022 = scalar_lea.vmem %s2, 4
    %v3023 = vld [vmem:[%s3022] sm:$0xf]
    %v3025 = vperm.slane %v3023, 0
    %v3026 = vperm.slane %v3023, 1
    %v3027 = vperm.slane %v3023, 2
    %v3028 = vperm.slane %v3023, 3
    %3033 = vmatpush.msra.mxu0 %v2314
    %3034 = vmatpush.msra.mxu0 %v2310
    %3035 = vmatpush.msra.mxu0 %v2306
    %3036 = vmatpush.msra.mxu0 %v2302
    %3037 = vmatpush.msra.mxu0 %v2298
    %3038 = vmatpush.msra.mxu0 %v2294
    %3039 = vmatpush.msra.mxu0 %v2290
    %3040 = vmatpush.msra.mxu0 %v2286
    %3041 = vmatpush.msra.mxu0 %v2282
    %3042 = vmatpush.msra.mxu0 %v2278
    %3043 = vmatpush.msra.mxu0 %v2274
    %3044 = vmatpush.msra.mxu0 %v2270
    %3045 = vmatpush.msra.mxu0 %v2266
    %3046 = vmatpush.msra.mxu0 %v2262
    %3047 = vmatpush.msra.mxu0 %v2258
    %3048 = vmatpush.msra.mxu0 %v2254
    %3049 = vmatmul.f32.gmra.mxu0 %v1115
    %v3050 = vpop.f32.mrf.mxu0
    %v3051 = vadd.f32 %v3025, %v3050
    %3052 = vdwg.mxu0
    %3053 = vmatpush.msra.mxu0 %v2378
    %3054 = vmatpush.msra.mxu0 %v2374
    %3055 = vmatpush.msra.mxu0 %v2370
    %3056 = vmatpush.msra.mxu0 %v2366
    %3057 = vmatpush.msra.mxu0 %v2362
    %3058 = vmatpush.msra.mxu0 %v2358
    %3059 = vmatpush.msra.mxu0 %v2354
    %3060 = vmatpush.msra.mxu0 %v2350
    %3061 = vmatpush.msra.mxu0 %v2346
    %3062 = vmatpush.msra.mxu0 %v2342
    %3063 = vmatpush.msra.mxu0 %v2338
    %3064 = vmatpush.msra.mxu0 %v2334
    %3065 = vmatpush.msra.mxu0 %v2330
    %3066 = vmatpush.msra.mxu0 %v2326
    %3067 = vmatpush.msra.mxu0 %v2322
    %3068 = vmatpush.msra.mxu0 %v2318
    %3069 = vmatmul.f32.gmra.mxu0 %v1116
    %v3070 = vpop.f32.mrf.mxu0
    %v3071 = vadd.f32 %v3051, %v3070
    %3072 = vdwg.mxu0
    %3073 = vmatpush.msra.mxu0 %v2442
    %3074 = vmatpush.msra.mxu0 %v2438
    %3075 = vmatpush.msra.mxu0 %v2434
    %3076 = vmatpush.msra.mxu0 %v2430
    %3077 = vmatpush.msra.mxu0 %v2426
    %3078 = vmatpush.msra.mxu0 %v2422
    %3079 = vmatpush.msra.mxu0 %v2418
    %3080 = vmatpush.msra.mxu0 %v2414
    %3081 = vmatpush.msra.mxu0 %v2410
    %3082 = vmatpush.msra.mxu0 %v2406
    %3083 = vmatpush.msra.mxu0 %v2402
    %3084 = vmatpush.msra.mxu0 %v2398
    %3085 = vmatpush.msra.mxu0 %v2394
    %3086 = vmatpush.msra.mxu0 %v2390
    %3087 = vmatpush.msra.mxu0 %v2386
    %3088 = vmatpush.msra.mxu0 %v2382
    %3089 = vmatmul.f32.gmra.mxu0 %v1117
    %v3090 = vpop.f32.mrf.mxu0
    %v3091 = vadd.f32 %v3071, %v3090
    %3092 = vdwg.mxu0
    %3093 = vmatpush.msra.mxu0 %v2506
    %3094 = vmatpush.msra.mxu0 %v2502
    %3095 = vmatpush.msra.mxu0 %v2498
    %3096 = vmatpush.msra.mxu0 %v2494
    %3097 = vmatpush.msra.mxu0 %v2490
    %3098 = vmatpush.msra.mxu0 %v2486
    %3099 = vmatpush.msra.mxu0 %v2482
    %3100 = vmatpush.msra.mxu0 %v2478
    %3101 = vmatpush.msra.mxu0 %v2474
    %3102 = vmatpush.msra.mxu0 %v2470
    %3103 = vmatpush.msra.mxu0 %v2466
    %3104 = vmatpush.msra.mxu0 %v2462
    %3105 = vmatpush.msra.mxu0 %v2458
    %3106 = vmatpush.msra.mxu0 %v2454
    %3107 = vmatpush.msra.mxu0 %v2450
    %3108 = vmatpush.msra.mxu0 %v2446
    %3109 = vmatmul.f32.gmra.mxu0 %v1118
    %v3110 = vpop.f32.mrf.mxu0
    %v3111 = vadd.f32 %v3091, %v3110
    %3112 = vdwg.mxu0
    %3113 = vmatpush.msra.mxu0 %v2570
    %3114 = vmatpush.msra.mxu0 %v2566
    %3115 = vmatpush.msra.mxu0 %v2562
    %3116 = vmatpush.msra.mxu0 %v2558
    %3117 = vmatpush.msra.mxu0 %v2554
    %3118 = vmatpush.msra.mxu0 %v2550
    %3119 = vmatpush.msra.mxu0 %v2546
    %3120 = vmatpush.msra.mxu0 %v2542
    %3121 = vmatpush.msra.mxu0 %v2538
    %3122 = vmatpush.msra.mxu0 %v2534
    %3123 = vmatpush.msra.mxu0 %v2530
    %3124 = vmatpush.msra.mxu0 %v2526
    %3125 = vmatpush.msra.mxu0 %v2522
    %3126 = vmatpush.msra.mxu0 %v2518
    %3127 = vmatpush.msra.mxu0 %v2514
    %3128 = vmatpush.msra.mxu0 %v2510
    %3129 = vmatmul.f32.gmra.mxu0 %v1119
    %v3130 = vpop.f32.mrf.mxu0
    %v3131 = vadd.f32 %v3111, %v3130
    %3132 = vdwg.mxu0
    %3133 = vmatpush.msra.mxu0 %v2634
    %3134 = vmatpush.msra.mxu0 %v2630
    %3135 = vmatpush.msra.mxu0 %v2626
    %3136 = vmatpush.msra.mxu0 %v2622
    %3137 = vmatpush.msra.mxu0 %v2618
    %3138 = vmatpush.msra.mxu0 %v2614
    %3139 = vmatpush.msra.mxu0 %v2610
    %3140 = vmatpush.msra.mxu0 %v2606
    %3141 = vmatpush.msra.mxu0 %v2602
    %3142 = vmatpush.msra.mxu0 %v2598
    %3143 = vmatpush.msra.mxu0 %v2594
    %3144 = vmatpush.msra.mxu0 %v2590
    %3145 = vmatpush.msra.mxu0 %v2586
    %3146 = vmatpush.msra.mxu0 %v2582
    %3147 = vmatpush.msra.mxu0 %v2578
    %3148 = vmatpush.msra.mxu0 %v2574
    %3149 = vmatmul.f32.gmra.mxu0 %v1120
    %v3150 = vpop.f32.mrf.mxu0
    %v3151 = vadd.f32 %v3131, %v3150
    %3152 = vdwg.mxu0
    %3153 = vmatpush.msra.mxu0 %v2698
    %3154 = vmatpush.msra.mxu0 %v2694
    %3155 = vmatpush.msra.mxu0 %v2690
    %3156 = vmatpush.msra.mxu0 %v2686
    %3157 = vmatpush.msra.mxu0 %v2682
    %3158 = vmatpush.msra.mxu0 %v2678
    %3159 = vmatpush.msra.mxu0 %v2674
    %3160 = vmatpush.msra.mxu0 %v2670
    %3161 = vmatpush.msra.mxu0 %v2666
    %3162 = vmatpush.msra.mxu0 %v2662
    %3163 = vmatpush.msra.mxu0 %v2658
    %3164 = vmatpush.msra.mxu0 %v2654
    %3165 = vmatpush.msra.mxu0 %v2650
    %3166 = vmatpush.msra.mxu0 %v2646
    %3167 = vmatpush.msra.mxu0 %v2642
    %3168 = vmatpush.msra.mxu0 %v2638
    %3169 = vmatmul.f32.gmra.mxu0 %v1121
    %v3170 = vpop.f32.mrf.mxu0
    %v3171 = vadd.f32 %v3151, %v3170
    %3172 = vdwg.mxu0
    %3173 = vmatpush.msra.mxu0 %v2762
    %3174 = vmatpush.msra.mxu0 %v2758
    %3175 = vmatpush.msra.mxu0 %v2754
    %3176 = vmatpush.msra.mxu0 %v2750
    %3177 = vmatpush.msra.mxu0 %v2746
    %3178 = vmatpush.msra.mxu0 %v2742
    %3179 = vmatpush.msra.mxu0 %v2738
    %3180 = vmatpush.msra.mxu0 %v2734
    %3181 = vmatpush.msra.mxu0 %v2730
    %3182 = vmatpush.msra.mxu0 %v2726
    %3183 = vmatpush.msra.mxu0 %v2722
    %3184 = vmatpush.msra.mxu0 %v2718
    %3185 = vmatpush.msra.mxu0 %v2714
    %3186 = vmatpush.msra.mxu0 %v2710
    %3187 = vmatpush.msra.mxu0 %v2706
    %3188 = vmatpush.msra.mxu0 %v2702
    %3189 = vmatmul.f32.gmra.mxu0 %v1122
    %v3190 = vpop.f32.mrf.mxu0
    %v3191 = vadd.f32 %v3171, %v3190
    %3192 = vdwg.mxu0
    %3193 = vmatpush.msra.mxu0 %v2826
    %3194 = vmatpush.msra.mxu0 %v2822
    %3195 = vmatpush.msra.mxu0 %v2818
    %3196 = vmatpush.msra.mxu0 %v2814
    %3197 = vmatpush.msra.mxu0 %v2810
    %3198 = vmatpush.msra.mxu0 %v2806
    %3199 = vmatpush.msra.mxu0 %v2802
    %3200 = vmatpush.msra.mxu0 %v2798
    %3201 = vmatpush.msra.mxu0 %v2794
    %3202 = vmatpush.msra.mxu0 %v2790
    %3203 = vmatpush.msra.mxu0 %v2786
    %3204 = vmatpush.msra.mxu0 %v2782
    %3205 = vmatpush.msra.mxu0 %v2778
    %3206 = vmatpush.msra.mxu0 %v2774
    %3207 = vmatpush.msra.mxu0 %v2770
    %3208 = vmatpush.msra.mxu0 %v2766
    %3209 = vmatmul.f32.gmra.mxu0 %v1123
    %v3210 = vpop.f32.mrf.mxu0
    %v3211 = vadd.f32 %v3191, %v3210
    %3212 = vdwg.mxu0
    %3213 = vmatpush.msra.mxu0 %v2890
    %3214 = vmatpush.msra.mxu0 %v2886
    %3215 = vmatpush.msra.mxu0 %v2882
    %3216 = vmatpush.msra.mxu0 %v2878
    %3217 = vmatpush.msra.mxu0 %v2874
    %3218 = vmatpush.msra.mxu0 %v2870
    %3219 = vmatpush.msra.mxu0 %v2866
    %3220 = vmatpush.msra.mxu0 %v2862
    %3221 = vmatpush.msra.mxu0 %v2858
    %3222 = vmatpush.msra.mxu0 %v2854
    %3223 = vmatpush.msra.mxu0 %v2850
    %3224 = vmatpush.msra.mxu0 %v2846
    %3225 = vmatpush.msra.mxu0 %v2842
    %3226 = vmatpush.msra.mxu0 %v2838
    %3227 = vmatpush.msra.mxu0 %v2834
    %3228 = vmatpush.msra.mxu0 %v2830
    %3229 = vmatmul.f32.gmra.mxu0 %v1124
    %v3230 = vpop.f32.mrf.mxu0
    %v3231 = vadd.f32 %v3211, %v3230
    %3232 = vdwg.mxu0
    %3233 = vmatpush.msra.mxu0 %v2954
    %3234 = vmatpush.msra.mxu0 %v2950
    %3235 = vmatpush.msra.mxu0 %v2946
    %3236 = vmatpush.msra.mxu0 %v2942
    %3237 = vmatpush.msra.mxu0 %v2938
    %3238 = vmatpush.msra.mxu0 %v2934
    %3239 = vmatpush.msra.mxu0 %v2930
    %3240 = vmatpush.msra.mxu0 %v2926
    %3241 = vmatpush.msra.mxu0 %v2922
    %3242 = vmatpush.msra.mxu0 %v2918
    %3243 = vmatpush.msra.mxu0 %v2914
    %3244 = vmatpush.msra.mxu0 %v2910
    %3245 = vmatpush.msra.mxu0 %v2906
    %3246 = vmatpush.msra.mxu0 %v2902
    %3247 = vmatpush.msra.mxu0 %v2898
    %3248 = vmatpush.msra.mxu0 %v2894
    %3249 = vmatmul.f32.gmra.mxu0 %v1125
    %v3250 = vpop.f32.mrf.mxu0
    %v3251 = vadd.f32 %v3231, %v3250
    %3252 = vdwg.mxu0
    %3253 = vmatpush.msra.mxu0 %v3018
    %3254 = vmatpush.msra.mxu0 %v3014
    %3255 = vmatpush.msra.mxu0 %v3010
    %3256 = vmatpush.msra.mxu0 %v3006
    %3257 = vmatpush.msra.mxu0 %v3002
    %3258 = vmatpush.msra.mxu0 %v2998
    %3259 = vmatpush.msra.mxu0 %v2994
    %3260 = vmatpush.msra.mxu0 %v2990
    %3261 = vmatpush.msra.mxu0 %v2986
    %3262 = vmatpush.msra.mxu0 %v2982
    %3263 = vmatpush.msra.mxu0 %v2978
    %3264 = vmatpush.msra.mxu0 %v2974
    %3265 = vmatpush.msra.mxu0 %v2970
    %3266 = vmatpush.msra.mxu0 %v2966
    %3267 = vmatpush.msra.mxu0 %v2962
    %3268 = vmatpush.msra.mxu0 %v2958
    %3269 = vmatmul.f32.gmra.mxu0 %v1126
    %v3270 = vpop.f32.mrf.mxu0
    %v3271 = vadd.f32 %v3251, %v3270
    %3272 = vdwg.mxu0
    %3273 = vmatpush.msra.mxu0 %v2315
    %3274 = vmatpush.msra.mxu0 %v2311
    %3275 = vmatpush.msra.mxu0 %v2307
    %3276 = vmatpush.msra.mxu0 %v2303
    %3277 = vmatpush.msra.mxu0 %v2299
    %3278 = vmatpush.msra.mxu0 %v2295
    %3279 = vmatpush.msra.mxu0 %v2291
    %3280 = vmatpush.msra.mxu0 %v2287
    %3281 = vmatpush.msra.mxu0 %v2283
    %3282 = vmatpush.msra.mxu0 %v2279
    %3283 = vmatpush.msra.mxu0 %v2275
    %3284 = vmatpush.msra.mxu0 %v2271
    %3285 = vmatpush.msra.mxu0 %v2267
    %3286 = vmatpush.msra.mxu0 %v2263
    %3287 = vmatpush.msra.mxu0 %v2259
    %3288 = vmatpush.msra.mxu0 %v2255
    %3289 = vmatmul.f32.gmra.mxu0 %v1115
    %v3290 = vpop.f32.mrf.mxu0
    %v3291 = vadd.f32 %v3026, %v3290
    %3292 = vdwg.mxu0
    %3293 = vmatpush.msra.mxu0 %v2379
    %3294 = vmatpush.msra.mxu0 %v2375
    %3295 = vmatpush.msra.mxu0 %v2371
    %3296 = vmatpush.msra.mxu0 %v2367
    %3297 = vmatpush.msra.mxu0 %v2363
    %3298 = vmatpush.msra.mxu0 %v2359
    %3299 = vmatpush.msra.mxu0 %v2355
    %3300 = vmatpush.msra.mxu0 %v2351
    %3301 = vmatpush.msra.mxu0 %v2347
    %3302 = vmatpush.msra.mxu0 %v2343
    %3303 = vmatpush.msra.mxu0 %v2339
    %3304 = vmatpush.msra.mxu0 %v2335
    %3305 = vmatpush.msra.mxu0 %v2331
    %3306 = vmatpush.msra.mxu0 %v2327
    %3307 = vmatpush.msra.mxu0 %v2323
    %3308 = vmatpush.msra.mxu0 %v2319
    %3309 = vmatmul.f32.gmra.mxu0 %v1116
    %v3310 = vpop.f32.mrf.mxu0
    %v3311 = vadd.f32 %v3291, %v3310
    %3312 = vdwg.mxu0
    %3313 = vmatpush.msra.mxu0 %v2443
    %3314 = vmatpush.msra.mxu0 %v2439
    %3315 = vmatpush.msra.mxu0 %v2435
    %3316 = vmatpush.msra.mxu0 %v2431
    %3317 = vmatpush.msra.mxu0 %v2427
    %3318 = vmatpush.msra.mxu0 %v2423
    %3319 = vmatpush.msra.mxu0 %v2419
    %3320 = vmatpush.msra.mxu0 %v2415
    %3321 = vmatpush.msra.mxu0 %v2411
    %3322 = vmatpush.msra.mxu0 %v2407
    %3323 = vmatpush.msra.mxu0 %v2403
    %3324 = vmatpush.msra.mxu0 %v2399
    %3325 = vmatpush.msra.mxu0 %v2395
    %3326 = vmatpush.msra.mxu0 %v2391
    %3327 = vmatpush.msra.mxu0 %v2387
    %3328 = vmatpush.msra.mxu0 %v2383
    %3329 = vmatmul.f32.gmra.mxu0 %v1117
    %v3330 = vpop.f32.mrf.mxu0
    %v3331 = vadd.f32 %v3311, %v3330
    %3332 = vdwg.mxu0
    %3333 = vmatpush.msra.mxu0 %v2507
    %3334 = vmatpush.msra.mxu0 %v2503
    %3335 = vmatpush.msra.mxu0 %v2499
    %3336 = vmatpush.msra.mxu0 %v2495
    %3337 = vmatpush.msra.mxu0 %v2491
    %3338 = vmatpush.msra.mxu0 %v2487
    %3339 = vmatpush.msra.mxu0 %v2483
    %3340 = vmatpush.msra.mxu0 %v2479
    %3341 = vmatpush.msra.mxu0 %v2475
    %3342 = vmatpush.msra.mxu0 %v2471
    %3343 = vmatpush.msra.mxu0 %v2467
    %3344 = vmatpush.msra.mxu0 %v2463
    %3345 = vmatpush.msra.mxu0 %v2459
    %3346 = vmatpush.msra.mxu0 %v2455
    %3347 = vmatpush.msra.mxu0 %v2451
    %3348 = vmatpush.msra.mxu0 %v2447
    %3349 = vmatmul.f32.gmra.mxu0 %v1118
    %v3350 = vpop.f32.mrf.mxu0
    %v3351 = vadd.f32 %v3331, %v3350
    %3352 = vdwg.mxu0
    %3353 = vmatpush.msra.mxu0 %v2571
    %3354 = vmatpush.msra.mxu0 %v2567
    %3355 = vmatpush.msra.mxu0 %v2563
    %3356 = vmatpush.msra.mxu0 %v2559
    %3357 = vmatpush.msra.mxu0 %v2555
    %3358 = vmatpush.msra.mxu0 %v2551
    %3359 = vmatpush.msra.mxu0 %v2547
    %3360 = vmatpush.msra.mxu0 %v2543
    %3361 = vmatpush.msra.mxu0 %v2539
    %3362 = vmatpush.msra.mxu0 %v2535
    %3363 = vmatpush.msra.mxu0 %v2531
    %3364 = vmatpush.msra.mxu0 %v2527
    %3365 = vmatpush.msra.mxu0 %v2523
    %3366 = vmatpush.msra.mxu0 %v2519
    %3367 = vmatpush.msra.mxu0 %v2515
    %3368 = vmatpush.msra.mxu0 %v2511
    %3369 = vmatmul.f32.gmra.mxu0 %v1119
    %v3370 = vpop.f32.mrf.mxu0
    %v3371 = vadd.f32 %v3351, %v3370
    %3372 = vdwg.mxu0
    %3373 = vmatpush.msra.mxu0 %v2635
    %3374 = vmatpush.msra.mxu0 %v2631
    %3375 = vmatpush.msra.mxu0 %v2627
    %3376 = vmatpush.msra.mxu0 %v2623
    %3377 = vmatpush.msra.mxu0 %v2619
    %3378 = vmatpush.msra.mxu0 %v2615
    %3379 = vmatpush.msra.mxu0 %v2611
    %3380 = vmatpush.msra.mxu0 %v2607
    %3381 = vmatpush.msra.mxu0 %v2603
    %3382 = vmatpush.msra.mxu0 %v2599
    %3383 = vmatpush.msra.mxu0 %v2595
    %3384 = vmatpush.msra.mxu0 %v2591
    %3385 = vmatpush.msra.mxu0 %v2587
    %3386 = vmatpush.msra.mxu0 %v2583
    %3387 = vmatpush.msra.mxu0 %v2579
    %3388 = vmatpush.msra.mxu0 %v2575
    %3389 = vmatmul.f32.gmra.mxu0 %v1120
    %v3390 = vpop.f32.mrf.mxu0
    %v3391 = vadd.f32 %v3371, %v3390
    %3392 = vdwg.mxu0
    %3393 = vmatpush.msra.mxu0 %v2699
    %3394 = vmatpush.msra.mxu0 %v2695
    %3395 = vmatpush.msra.mxu0 %v2691
    %3396 = vmatpush.msra.mxu0 %v2687
    %3397 = vmatpush.msra.mxu0 %v2683
    %3398 = vmatpush.msra.mxu0 %v2679
    %3399 = vmatpush.msra.mxu0 %v2675
    %3400 = vmatpush.msra.mxu0 %v2671
    %3401 = vmatpush.msra.mxu0 %v2667
    %3402 = vmatpush.msra.mxu0 %v2663
    %3403 = vmatpush.msra.mxu0 %v2659
    %3404 = vmatpush.msra.mxu0 %v2655
    %3405 = vmatpush.msra.mxu0 %v2651
    %3406 = vmatpush.msra.mxu0 %v2647
    %3407 = vmatpush.msra.mxu0 %v2643
    %3408 = vmatpush.msra.mxu0 %v2639
    %3409 = vmatmul.f32.gmra.mxu0 %v1121
    %v3410 = vpop.f32.mrf.mxu0
    %v3411 = vadd.f32 %v3391, %v3410
    %3412 = vdwg.mxu0
    %3413 = vmatpush.msra.mxu0 %v2763
    %3414 = vmatpush.msra.mxu0 %v2759
    %3415 = vmatpush.msra.mxu0 %v2755
    %3416 = vmatpush.msra.mxu0 %v2751
    %3417 = vmatpush.msra.mxu0 %v2747
    %3418 = vmatpush.msra.mxu0 %v2743
    %3419 = vmatpush.msra.mxu0 %v2739
    %3420 = vmatpush.msra.mxu0 %v2735
    %3421 = vmatpush.msra.mxu0 %v2731
    %3422 = vmatpush.msra.mxu0 %v2727
    %3423 = vmatpush.msra.mxu0 %v2723
    %3424 = vmatpush.msra.mxu0 %v2719
    %3425 = vmatpush.msra.mxu0 %v2715
    %3426 = vmatpush.msra.mxu0 %v2711
    %3427 = vmatpush.msra.mxu0 %v2707
    %3428 = vmatpush.msra.mxu0 %v2703
    %3429 = vmatmul.f32.gmra.mxu0 %v1122
    %v3430 = vpop.f32.mrf.mxu0
    %v3431 = vadd.f32 %v3411, %v3430
    %3432 = vdwg.mxu0
    %3433 = vmatpush.msra.mxu0 %v2827
    %3434 = vmatpush.msra.mxu0 %v2823
    %3435 = vmatpush.msra.mxu0 %v2819
    %3436 = vmatpush.msra.mxu0 %v2815
    %3437 = vmatpush.msra.mxu0 %v2811
    %3438 = vmatpush.msra.mxu0 %v2807
    %3439 = vmatpush.msra.mxu0 %v2803
    %3440 = vmatpush.msra.mxu0 %v2799
    %3441 = vmatpush.msra.mxu0 %v2795
    %3442 = vmatpush.msra.mxu0 %v2791
    %3443 = vmatpush.msra.mxu0 %v2787
    %3444 = vmatpush.msra.mxu0 %v2783
    %3445 = vmatpush.msra.mxu0 %v2779
    %3446 = vmatpush.msra.mxu0 %v2775
    %3447 = vmatpush.msra.mxu0 %v2771
    %3448 = vmatpush.msra.mxu0 %v2767
    %3449 = vmatmul.f32.gmra.mxu0 %v1123
    %v3450 = vpop.f32.mrf.mxu0
    %v3451 = vadd.f32 %v3431, %v3450
    %3452 = vdwg.mxu0
    %3453 = vmatpush.msra.mxu0 %v2891
    %3454 = vmatpush.msra.mxu0 %v2887
    %3455 = vmatpush.msra.mxu0 %v2883
    %3456 = vmatpush.msra.mxu0 %v2879
    %3457 = vmatpush.msra.mxu0 %v2875
    %3458 = vmatpush.msra.mxu0 %v2871
    %3459 = vmatpush.msra.mxu0 %v2867
    %3460 = vmatpush.msra.mxu0 %v2863
    %3461 = vmatpush.msra.mxu0 %v2859
    %3462 = vmatpush.msra.mxu0 %v2855
    %3463 = vmatpush.msra.mxu0 %v2851
    %3464 = vmatpush.msra.mxu0 %v2847
    %3465 = vmatpush.msra.mxu0 %v2843
    %3466 = vmatpush.msra.mxu0 %v2839
    %3467 = vmatpush.msra.mxu0 %v2835
    %3468 = vmatpush.msra.mxu0 %v2831
    %3469 = vmatmul.f32.gmra.mxu0 %v1124
    %v3470 = vpop.f32.mrf.mxu0
    %v3471 = vadd.f32 %v3451, %v3470
    %3472 = vdwg.mxu0
    %3473 = vmatpush.msra.mxu0 %v2955
    %3474 = vmatpush.msra.mxu0 %v2951
    %3475 = vmatpush.msra.mxu0 %v2947
    %3476 = vmatpush.msra.mxu0 %v2943
    %3477 = vmatpush.msra.mxu0 %v2939
    %3478 = vmatpush.msra.mxu0 %v2935
    %3479 = vmatpush.msra.mxu0 %v2931
    %3480 = vmatpush.msra.mxu0 %v2927
    %3481 = vmatpush.msra.mxu0 %v2923
    %3482 = vmatpush.msra.mxu0 %v2919
    %3483 = vmatpush.msra.mxu0 %v2915
    %3484 = vmatpush.msra.mxu0 %v2911
    %3485 = vmatpush.msra.mxu0 %v2907
    %3486 = vmatpush.msra.mxu0 %v2903
    %3487 = vmatpush.msra.mxu0 %v2899
    %3488 = vmatpush.msra.mxu0 %v2895
    %3489 = vmatmul.f32.gmra.mxu0 %v1125
    %v3490 = vpop.f32.mrf.mxu0
    %v3491 = vadd.f32 %v3471, %v3490
    %3492 = vdwg.mxu0
    %3493 = vmatpush.msra.mxu0 %v3019
    %3494 = vmatpush.msra.mxu0 %v3015
    %3495 = vmatpush.msra.mxu0 %v3011
    %3496 = vmatpush.msra.mxu0 %v3007
    %3497 = vmatpush.msra.mxu0 %v3003
    %3498 = vmatpush.msra.mxu0 %v2999
    %3499 = vmatpush.msra.mxu0 %v2995
    %3500 = vmatpush.msra.mxu0 %v2991
    %3501 = vmatpush.msra.mxu0 %v2987
    %3502 = vmatpush.msra.mxu0 %v2983
    %3503 = vmatpush.msra.mxu0 %v2979
    %3504 = vmatpush.msra.mxu0 %v2975
    %3505 = vmatpush.msra.mxu0 %v2971
    %3506 = vmatpush.msra.mxu0 %v2967
    %3507 = vmatpush.msra.mxu0 %v2963
    %3508 = vmatpush.msra.mxu0 %v2959
    %3509 = vmatmul.f32.gmra.mxu0 %v1126
    %v3510 = vpop.f32.mrf.mxu0
    %v3511 = vadd.f32 %v3491, %v3510
    %3512 = vdwg.mxu0
    %3513 = vmatpush.msra.mxu0 %v2316
    %3514 = vmatpush.msra.mxu0 %v2312
    %3515 = vmatpush.msra.mxu0 %v2308
    %3516 = vmatpush.msra.mxu0 %v2304
    %3517 = vmatpush.msra.mxu0 %v2300
    %3518 = vmatpush.msra.mxu0 %v2296
    %3519 = vmatpush.msra.mxu0 %v2292
    %3520 = vmatpush.msra.mxu0 %v2288
    %3521 = vmatpush.msra.mxu0 %v2284
    %3522 = vmatpush.msra.mxu0 %v2280
    %3523 = vmatpush.msra.mxu0 %v2276
    %3524 = vmatpush.msra.mxu0 %v2272
    %3525 = vmatpush.msra.mxu0 %v2268
    %3526 = vmatpush.msra.mxu0 %v2264
    %3527 = vmatpush.msra.mxu0 %v2260
    %3528 = vmatpush.msra.mxu0 %v2256
    %3529 = vmatmul.f32.gmra.mxu0 %v1115
    %v3530 = vpop.f32.mrf.mxu0
    %v3531 = vadd.f32 %v3027, %v3530
    %3532 = vdwg.mxu0
    %3533 = vmatpush.msra.mxu0 %v2380
    %3534 = vmatpush.msra.mxu0 %v2376
    %3535 = vmatpush.msra.mxu0 %v2372
    %3536 = vmatpush.msra.mxu0 %v2368
    %3537 = vmatpush.msra.mxu0 %v2364
    %3538 = vmatpush.msra.mxu0 %v2360
    %3539 = vmatpush.msra.mxu0 %v2356
    %3540 = vmatpush.msra.mxu0 %v2352
    %3541 = vmatpush.msra.mxu0 %v2348
    %3542 = vmatpush.msra.mxu0 %v2344
    %3543 = vmatpush.msra.mxu0 %v2340
    %3544 = vmatpush.msra.mxu0 %v2336
    %3545 = vmatpush.msra.mxu0 %v2332
    %3546 = vmatpush.msra.mxu0 %v2328
    %3547 = vmatpush.msra.mxu0 %v2324
    %3548 = vmatpush.msra.mxu0 %v2320
    %3549 = vmatmul.f32.gmra.mxu0 %v1116
    %v3550 = vpop.f32.mrf.mxu0
    %v3551 = vadd.f32 %v3531, %v3550
    %3552 = vdwg.mxu0
    %3553 = vmatpush.msra.mxu0 %v2444
    %3554 = vmatpush.msra.mxu0 %v2440
    %3555 = vmatpush.msra.mxu0 %v2436
    %3556 = vmatpush.msra.mxu0 %v2432
    %3557 = vmatpush.msra.mxu0 %v2428
    %3558 = vmatpush.msra.mxu0 %v2424
    %3559 = vmatpush.msra.mxu0 %v2420
    %3560 = vmatpush.msra.mxu0 %v2416
    %3561 = vmatpush.msra.mxu0 %v2412
    %3562 = vmatpush.msra.mxu0 %v2408
    %3563 = vmatpush.msra.mxu0 %v2404
    %3564 = vmatpush.msra.mxu0 %v2400
    %3565 = vmatpush.msra.mxu0 %v2396
    %3566 = vmatpush.msra.mxu0 %v2392
    %3567 = vmatpush.msra.mxu0 %v2388
    %3568 = vmatpush.msra.mxu0 %v2384
    %3569 = vmatmul.f32.gmra.mxu0 %v1117
    %v3570 = vpop.f32.mrf.mxu0
    %v3571 = vadd.f32 %v3551, %v3570
    %3572 = vdwg.mxu0
    %3573 = vmatpush.msra.mxu0 %v2508
    %3574 = vmatpush.msra.mxu0 %v2504
    %3575 = vmatpush.msra.mxu0 %v2500
    %3576 = vmatpush.msra.mxu0 %v2496
    %3577 = vmatpush.msra.mxu0 %v2492
    %3578 = vmatpush.msra.mxu0 %v2488
    %3579 = vmatpush.msra.mxu0 %v2484
    %3580 = vmatpush.msra.mxu0 %v2480
    %3581 = vmatpush.msra.mxu0 %v2476
    %3582 = vmatpush.msra.mxu0 %v2472
    %3583 = vmatpush.msra.mxu0 %v2468
    %3584 = vmatpush.msra.mxu0 %v2464
    %3585 = vmatpush.msra.mxu0 %v2460
    %3586 = vmatpush.msra.mxu0 %v2456
    %3587 = vmatpush.msra.mxu0 %v2452
    %3588 = vmatpush.msra.mxu0 %v2448
    %3589 = vmatmul.f32.gmra.mxu0 %v1118
    %v3590 = vpop.f32.mrf.mxu0
    %v3591 = vadd.f32 %v3571, %v3590
    %3592 = vdwg.mxu0
    %3593 = vmatpush.msra.mxu0 %v2572
    %3594 = vmatpush.msra.mxu0 %v2568
    %3595 = vmatpush.msra.mxu0 %v2564
    %3596 = vmatpush.msra.mxu0 %v2560
    %3597 = vmatpush.msra.mxu0 %v2556
    %3598 = vmatpush.msra.mxu0 %v2552
    %3599 = vmatpush.msra.mxu0 %v2548
    %3600 = vmatpush.msra.mxu0 %v2544
    %3601 = vmatpush.msra.mxu0 %v2540
    %3602 = vmatpush.msra.mxu0 %v2536
    %3603 = vmatpush.msra.mxu0 %v2532
    %3604 = vmatpush.msra.mxu0 %v2528
    %3605 = vmatpush.msra.mxu0 %v2524
    %3606 = vmatpush.msra.mxu0 %v2520
    %3607 = vmatpush.msra.mxu0 %v2516
    %3608 = vmatpush.msra.mxu0 %v2512
    %3609 = vmatmul.f32.gmra.mxu0 %v1119
    %v3610 = vpop.f32.mrf.mxu0
    %v3611 = vadd.f32 %v3591, %v3610
    %3612 = vdwg.mxu0
    %3613 = vmatpush.msra.mxu0 %v2636
    %3614 = vmatpush.msra.mxu0 %v2632
    %3615 = vmatpush.msra.mxu0 %v2628
    %3616 = vmatpush.msra.mxu0 %v2624
    %3617 = vmatpush.msra.mxu0 %v2620
    %3618 = vmatpush.msra.mxu0 %v2616
    %3619 = vmatpush.msra.mxu0 %v2612
    %3620 = vmatpush.msra.mxu0 %v2608
    %3621 = vmatpush.msra.mxu0 %v2604
    %3622 = vmatpush.msra.mxu0 %v2600
    %3623 = vmatpush.msra.mxu0 %v2596
    %3624 = vmatpush.msra.mxu0 %v2592
    %3625 = vmatpush.msra.mxu0 %v2588
    %3626 = vmatpush.msra.mxu0 %v2584
    %3627 = vmatpush.msra.mxu0 %v2580
    %3628 = vmatpush.msra.mxu0 %v2576
    %3629 = vmatmul.f32.gmra.mxu0 %v1120
    %v3630 = vpop.f32.mrf.mxu0
    %v3631 = vadd.f32 %v3611, %v3630
    %3632 = vdwg.mxu0
    %3633 = vmatpush.msra.mxu0 %v2700
    %3634 = vmatpush.msra.mxu0 %v2696
    %3635 = vmatpush.msra.mxu0 %v2692
    %3636 = vmatpush.msra.mxu0 %v2688
    %3637 = vmatpush.msra.mxu0 %v2684
    %3638 = vmatpush.msra.mxu0 %v2680
    %3639 = vmatpush.msra.mxu0 %v2676
    %3640 = vmatpush.msra.mxu0 %v2672
    %3641 = vmatpush.msra.mxu0 %v2668
    %3642 = vmatpush.msra.mxu0 %v2664
    %3643 = vmatpush.msra.mxu0 %v2660
    %3644 = vmatpush.msra.mxu0 %v2656
    %3645 = vmatpush.msra.mxu0 %v2652
    %3646 = vmatpush.msra.mxu0 %v2648
    %3647 = vmatpush.msra.mxu0 %v2644
    %3648 = vmatpush.msra.mxu0 %v2640
    %3649 = vmatmul.f32.gmra.mxu0 %v1121
    %v3650 = vpop.f32.mrf.mxu0
    %v3651 = vadd.f32 %v3631, %v3650
    %3652 = vdwg.mxu0
    %3653 = vmatpush.msra.mxu0 %v2764
    %3654 = vmatpush.msra.mxu0 %v2760
    %3655 = vmatpush.msra.mxu0 %v2756
    %3656 = vmatpush.msra.mxu0 %v2752
    %3657 = vmatpush.msra.mxu0 %v2748
    %3658 = vmatpush.msra.mxu0 %v2744
    %3659 = vmatpush.msra.mxu0 %v2740
    %3660 = vmatpush.msra.mxu0 %v2736
    %3661 = vmatpush.msra.mxu0 %v2732
    %3662 = vmatpush.msra.mxu0 %v2728
    %3663 = vmatpush.msra.mxu0 %v2724
    %3664 = vmatpush.msra.mxu0 %v2720
    %3665 = vmatpush.msra.mxu0 %v2716
    %3666 = vmatpush.msra.mxu0 %v2712
    %3667 = vmatpush.msra.mxu0 %v2708
    %3668 = vmatpush.msra.mxu0 %v2704
    %3669 = vmatmul.f32.gmra.mxu0 %v1122
    %v3670 = vpop.f32.mrf.mxu0
    %v3671 = vadd.f32 %v3651, %v3670
    %3672 = vdwg.mxu0
    %3673 = vmatpush.msra.mxu0 %v2828
    %3674 = vmatpush.msra.mxu0 %v2824
    %3675 = vmatpush.msra.mxu0 %v2820
    %3676 = vmatpush.msra.mxu0 %v2816
    %3677 = vmatpush.msra.mxu0 %v2812
    %3678 = vmatpush.msra.mxu0 %v2808
    %3679 = vmatpush.msra.mxu0 %v2804
    %3680 = vmatpush.msra.mxu0 %v2800
    %3681 = vmatpush.msra.mxu0 %v2796
    %3682 = vmatpush.msra.mxu0 %v2792
    %3683 = vmatpush.msra.mxu0 %v2788
    %3684 = vmatpush.msra.mxu0 %v2784
    %3685 = vmatpush.msra.mxu0 %v2780
    %3686 = vmatpush.msra.mxu0 %v2776
    %3687 = vmatpush.msra.mxu0 %v2772
    %3688 = vmatpush.msra.mxu0 %v2768
    %3689 = vmatmul.f32.gmra.mxu0 %v1123
    %v3690 = vpop.f32.mrf.mxu0
    %v3691 = vadd.f32 %v3671, %v3690
    %3692 = vdwg.mxu0
    %3693 = vmatpush.msra.mxu0 %v2892
    %3694 = vmatpush.msra.mxu0 %v2888
    %3695 = vmatpush.msra.mxu0 %v2884
    %3696 = vmatpush.msra.mxu0 %v2880
    %3697 = vmatpush.msra.mxu0 %v2876
    %3698 = vmatpush.msra.mxu0 %v2872
    %3699 = vmatpush.msra.mxu0 %v2868
    %3700 = vmatpush.msra.mxu0 %v2864
    %3701 = vmatpush.msra.mxu0 %v2860
    %3702 = vmatpush.msra.mxu0 %v2856
    %3703 = vmatpush.msra.mxu0 %v2852
    %3704 = vmatpush.msra.mxu0 %v2848
    %3705 = vmatpush.msra.mxu0 %v2844
    %3706 = vmatpush.msra.mxu0 %v2840
    %3707 = vmatpush.msra.mxu0 %v2836
    %3708 = vmatpush.msra.mxu0 %v2832
    %3709 = vmatmul.f32.gmra.mxu0 %v1124
    %v3710 = vpop.f32.mrf.mxu0
    %v3711 = vadd.f32 %v3691, %v3710
    %3712 = vdwg.mxu0
    %3713 = vmatpush.msra.mxu0 %v2956
    %3714 = vmatpush.msra.mxu0 %v2952
    %3715 = vmatpush.msra.mxu0 %v2948
    %3716 = vmatpush.msra.mxu0 %v2944
    %3717 = vmatpush.msra.mxu0 %v2940
    %3718 = vmatpush.msra.mxu0 %v2936
    %3719 = vmatpush.msra.mxu0 %v2932
    %3720 = vmatpush.msra.mxu0 %v2928
    %3721 = vmatpush.msra.mxu0 %v2924
    %3722 = vmatpush.msra.mxu0 %v2920
    %3723 = vmatpush.msra.mxu0 %v2916
    %3724 = vmatpush.msra.mxu0 %v2912
    %3725 = vmatpush.msra.mxu0 %v2908
    %3726 = vmatpush.msra.mxu0 %v2904
    %3727 = vmatpush.msra.mxu0 %v2900
    %3728 = vmatpush.msra.mxu0 %v2896
    %3729 = vmatmul.f32.gmra.mxu0 %v1125
    %v3730 = vpop.f32.mrf.mxu0
    %v3731 = vadd.f32 %v3711, %v3730
    %3732 = vdwg.mxu0
    %3733 = vmatpush.msra.mxu0 %v3020
    %3734 = vmatpush.msra.mxu0 %v3016
    %3735 = vmatpush.msra.mxu0 %v3012
    %3736 = vmatpush.msra.mxu0 %v3008
    %3737 = vmatpush.msra.mxu0 %v3004
    %3738 = vmatpush.msra.mxu0 %v3000
    %3739 = vmatpush.msra.mxu0 %v2996
    %3740 = vmatpush.msra.mxu0 %v2992
    %3741 = vmatpush.msra.mxu0 %v2988
    %3742 = vmatpush.msra.mxu0 %v2984
    %3743 = vmatpush.msra.mxu0 %v2980
    %3744 = vmatpush.msra.mxu0 %v2976
    %3745 = vmatpush.msra.mxu0 %v2972
    %3746 = vmatpush.msra.mxu0 %v2968
    %3747 = vmatpush.msra.mxu0 %v2964
    %3748 = vmatpush.msra.mxu0 %v2960
    %3749 = vmatmul.f32.gmra.mxu0 %v1126
    %v3750 = vpop.f32.mrf.mxu0
    %v3751 = vadd.f32 %v3731, %v3750
    %3752 = vdwg.mxu0
    %3753 = vmatpush.msra.mxu0 %v2317
    %3754 = vmatpush.msra.mxu0 %v2313
    %3755 = vmatpush.msra.mxu0 %v2309
    %3756 = vmatpush.msra.mxu0 %v2305
    %3757 = vmatpush.msra.mxu0 %v2301
    %3758 = vmatpush.msra.mxu0 %v2297
    %3759 = vmatpush.msra.mxu0 %v2293
    %3760 = vmatpush.msra.mxu0 %v2289
    %3761 = vmatpush.msra.mxu0 %v2285
    %3762 = vmatpush.msra.mxu0 %v2281
    %3763 = vmatpush.msra.mxu0 %v2277
    %3764 = vmatpush.msra.mxu0 %v2273
    %3765 = vmatpush.msra.mxu0 %v2269
    %3766 = vmatpush.msra.mxu0 %v2265
    %3767 = vmatpush.msra.mxu0 %v2261
    %3768 = vmatpush.msra.mxu0 %v2257
    %3769 = vmatmul.f32.gmra.mxu0 %v1115
    %v3770 = vpop.f32.mrf.mxu0
    %v3771 = vadd.f32 %v3028, %v3770
    %3772 = vdwg.mxu0
    %3773 = vmatpush.msra.mxu0 %v2381
    %3774 = vmatpush.msra.mxu0 %v2377
    %3775 = vmatpush.msra.mxu0 %v2373
    %3776 = vmatpush.msra.mxu0 %v2369
    %3777 = vmatpush.msra.mxu0 %v2365
    %3778 = vmatpush.msra.mxu0 %v2361
    %3779 = vmatpush.msra.mxu0 %v2357
    %3780 = vmatpush.msra.mxu0 %v2353
    %3781 = vmatpush.msra.mxu0 %v2349
    %3782 = vmatpush.msra.mxu0 %v2345
    %3783 = vmatpush.msra.mxu0 %v2341
    %3784 = vmatpush.msra.mxu0 %v2337
    %3785 = vmatpush.msra.mxu0 %v2333
    %3786 = vmatpush.msra.mxu0 %v2329
    %3787 = vmatpush.msra.mxu0 %v2325
    %3788 = vmatpush.msra.mxu0 %v2321
    %3789 = vmatmul.f32.gmra.mxu0 %v1116
    %v3790 = vpop.f32.mrf.mxu0
    %v3791 = vadd.f32 %v3771, %v3790
    %3792 = vdwg.mxu0
    %3793 = vmatpush.msra.mxu0 %v2445
    %3794 = vmatpush.msra.mxu0 %v2441
    %3795 = vmatpush.msra.mxu0 %v2437
    %3796 = vmatpush.msra.mxu0 %v2433
    %3797 = vmatpush.msra.mxu0 %v2429
    %3798 = vmatpush.msra.mxu0 %v2425
    %3799 = vmatpush.msra.mxu0 %v2421
    %3800 = vmatpush.msra.mxu0 %v2417
    %3801 = vmatpush.msra.mxu0 %v2413
    %3802 = vmatpush.msra.mxu0 %v2409
    %3803 = vmatpush.msra.mxu0 %v2405
    %3804 = vmatpush.msra.mxu0 %v2401
    %3805 = vmatpush.msra.mxu0 %v2397
    %3806 = vmatpush.msra.mxu0 %v2393
    %3807 = vmatpush.msra.mxu0 %v2389
    %3808 = vmatpush.msra.mxu0 %v2385
    %3809 = vmatmul.f32.gmra.mxu0 %v1117
    %v3810 = vpop.f32.mrf.mxu0
    %v3811 = vadd.f32 %v3791, %v3810
    %3812 = vdwg.mxu0
    %3813 = vmatpush.msra.mxu0 %v2509
    %3814 = vmatpush.msra.mxu0 %v2505
    %3815 = vmatpush.msra.mxu0 %v2501
    %3816 = vmatpush.msra.mxu0 %v2497
    %3817 = vmatpush.msra.mxu0 %v2493
    %3818 = vmatpush.msra.mxu0 %v2489
    %3819 = vmatpush.msra.mxu0 %v2485
    %3820 = vmatpush.msra.mxu0 %v2481
    %3821 = vmatpush.msra.mxu0 %v2477
    %3822 = vmatpush.msra.mxu0 %v2473
    %3823 = vmatpush.msra.mxu0 %v2469
    %3824 = vmatpush.msra.mxu0 %v2465
    %3825 = vmatpush.msra.mxu0 %v2461
    %3826 = vmatpush.msra.mxu0 %v2457
    %3827 = vmatpush.msra.mxu0 %v2453
    %3828 = vmatpush.msra.mxu0 %v2449
    %3829 = vmatmul.f32.gmra.mxu0 %v1118
    %v3830 = vpop.f32.mrf.mxu0
    %v3831 = vadd.f32 %v3811, %v3830
    %3832 = vdwg.mxu0
    %3833 = vmatpush.msra.mxu0 %v2573
    %3834 = vmatpush.msra.mxu0 %v2569
    %3835 = vmatpush.msra.mxu0 %v2565
    %3836 = vmatpush.msra.mxu0 %v2561
    %3837 = vmatpush.msra.mxu0 %v2557
    %3838 = vmatpush.msra.mxu0 %v2553
    %3839 = vmatpush.msra.mxu0 %v2549
    %3840 = vmatpush.msra.mxu0 %v2545
    %3841 = vmatpush.msra.mxu0 %v2541
    %3842 = vmatpush.msra.mxu0 %v2537
    %3843 = vmatpush.msra.mxu0 %v2533
    %3844 = vmatpush.msra.mxu0 %v2529
    %3845 = vmatpush.msra.mxu0 %v2525
    %3846 = vmatpush.msra.mxu0 %v2521
    %3847 = vmatpush.msra.mxu0 %v2517
    %3848 = vmatpush.msra.mxu0 %v2513
    %3849 = vmatmul.f32.gmra.mxu0 %v1119
    %v3850 = vpop.f32.mrf.mxu0
    %v3851 = vadd.f32 %v3831, %v3850
    %3852 = vdwg.mxu0
    %3853 = vmatpush.msra.mxu0 %v2637
    %3854 = vmatpush.msra.mxu0 %v2633
    %3855 = vmatpush.msra.mxu0 %v2629
    %3856 = vmatpush.msra.mxu0 %v2625
    %3857 = vmatpush.msra.mxu0 %v2621
    %3858 = vmatpush.msra.mxu0 %v2617
    %3859 = vmatpush.msra.mxu0 %v2613
    %3860 = vmatpush.msra.mxu0 %v2609
    %3861 = vmatpush.msra.mxu0 %v2605
    %3862 = vmatpush.msra.mxu0 %v2601
    %3863 = vmatpush.msra.mxu0 %v2597
    %3864 = vmatpush.msra.mxu0 %v2593
    %3865 = vmatpush.msra.mxu0 %v2589
    %3866 = vmatpush.msra.mxu0 %v2585
    %3867 = vmatpush.msra.mxu0 %v2581
    %3868 = vmatpush.msra.mxu0 %v2577
    %3869 = vmatmul.f32.gmra.mxu0 %v1120
    %v3870 = vpop.f32.mrf.mxu0
    %v3871 = vadd.f32 %v3851, %v3870
    %3872 = vdwg.mxu0
    %3873 = vmatpush.msra.mxu0 %v2701
    %3874 = vmatpush.msra.mxu0 %v2697
    %3875 = vmatpush.msra.mxu0 %v2693
    %3876 = vmatpush.msra.mxu0 %v2689
    %3877 = vmatpush.msra.mxu0 %v2685
    %3878 = vmatpush.msra.mxu0 %v2681
    %3879 = vmatpush.msra.mxu0 %v2677
    %3880 = vmatpush.msra.mxu0 %v2673
    %3881 = vmatpush.msra.mxu0 %v2669
    %3882 = vmatpush.msra.mxu0 %v2665
    %3883 = vmatpush.msra.mxu0 %v2661
    %3884 = vmatpush.msra.mxu0 %v2657
    %3885 = vmatpush.msra.mxu0 %v2653
    %3886 = vmatpush.msra.mxu0 %v2649
    %3887 = vmatpush.msra.mxu0 %v2645
    %3888 = vmatpush.msra.mxu0 %v2641
    %3889 = vmatmul.f32.gmra.mxu0 %v1121
    %v3890 = vpop.f32.mrf.mxu0
    %v3891 = vadd.f32 %v3871, %v3890
    %3892 = vdwg.mxu0
    %3893 = vmatpush.msra.mxu0 %v2765
    %3894 = vmatpush.msra.mxu0 %v2761
    %3895 = vmatpush.msra.mxu0 %v2757
    %3896 = vmatpush.msra.mxu0 %v2753
    %3897 = vmatpush.msra.mxu0 %v2749
    %3898 = vmatpush.msra.mxu0 %v2745
    %3899 = vmatpush.msra.mxu0 %v2741
    %3900 = vmatpush.msra.mxu0 %v2737
    %3901 = vmatpush.msra.mxu0 %v2733
    %3902 = vmatpush.msra.mxu0 %v2729
    %3903 = vmatpush.msra.mxu0 %v2725
    %3904 = vmatpush.msra.mxu0 %v2721
    %3905 = vmatpush.msra.mxu0 %v2717
    %3906 = vmatpush.msra.mxu0 %v2713
    %3907 = vmatpush.msra.mxu0 %v2709
    %3908 = vmatpush.msra.mxu0 %v2705
    %3909 = vmatmul.f32.gmra.mxu0 %v1122
    %v3910 = vpop.f32.mrf.mxu0
    %v3911 = vadd.f32 %v3891, %v3910
    %3912 = vdwg.mxu0
    %3913 = vmatpush.msra.mxu0 %v2829
    %3914 = vmatpush.msra.mxu0 %v2825
    %3915 = vmatpush.msra.mxu0 %v2821
    %3916 = vmatpush.msra.mxu0 %v2817
    %3917 = vmatpush.msra.mxu0 %v2813
    %3918 = vmatpush.msra.mxu0 %v2809
    %3919 = vmatpush.msra.mxu0 %v2805
    %3920 = vmatpush.msra.mxu0 %v2801
    %3921 = vmatpush.msra.mxu0 %v2797
    %3922 = vmatpush.msra.mxu0 %v2793
    %3923 = vmatpush.msra.mxu0 %v2789
    %3924 = vmatpush.msra.mxu0 %v2785
    %3925 = vmatpush.msra.mxu0 %v2781
    %3926 = vmatpush.msra.mxu0 %v2777
    %3927 = vmatpush.msra.mxu0 %v2773
    %3928 = vmatpush.msra.mxu0 %v2769
    %3929 = vmatmul.f32.gmra.mxu0 %v1123
    %v3930 = vpop.f32.mrf.mxu0
    %v3931 = vadd.f32 %v3911, %v3930
    %3932 = vdwg.mxu0
    %3933 = vmatpush.msra.mxu0 %v2893
    %3934 = vmatpush.msra.mxu0 %v2889
    %3935 = vmatpush.msra.mxu0 %v2885
    %3936 = vmatpush.msra.mxu0 %v2881
    %3937 = vmatpush.msra.mxu0 %v2877
    %3938 = vmatpush.msra.mxu0 %v2873
    %3939 = vmatpush.msra.mxu0 %v2869
    %3940 = vmatpush.msra.mxu0 %v2865
    %3941 = vmatpush.msra.mxu0 %v2861
    %3942 = vmatpush.msra.mxu0 %v2857
    %3943 = vmatpush.msra.mxu0 %v2853
    %3944 = vmatpush.msra.mxu0 %v2849
    %3945 = vmatpush.msra.mxu0 %v2845
    %3946 = vmatpush.msra.mxu0 %v2841
    %3947 = vmatpush.msra.mxu0 %v2837
    %3948 = vmatpush.msra.mxu0 %v2833
    %3949 = vmatmul.f32.gmra.mxu0 %v1124
    %v3950 = vpop.f32.mrf.mxu0
    %v3951 = vadd.f32 %v3931, %v3950
    %3952 = vdwg.mxu0
    %3953 = vmatpush.msra.mxu0 %v2957
    %3954 = vmatpush.msra.mxu0 %v2953
    %3955 = vmatpush.msra.mxu0 %v2949
    %3956 = vmatpush.msra.mxu0 %v2945
    %3957 = vmatpush.msra.mxu0 %v2941
    %3958 = vmatpush.msra.mxu0 %v2937
    %3959 = vmatpush.msra.mxu0 %v2933
    %3960 = vmatpush.msra.mxu0 %v2929
    %3961 = vmatpush.msra.mxu0 %v2925
    %3962 = vmatpush.msra.mxu0 %v2921
    %3963 = vmatpush.msra.mxu0 %v2917
    %3964 = vmatpush.msra.mxu0 %v2913
    %3965 = vmatpush.msra.mxu0 %v2909
    %3966 = vmatpush.msra.mxu0 %v2905
    %3967 = vmatpush.msra.mxu0 %v2901
    %3968 = vmatpush.msra.mxu0 %v2897
    %3969 = vmatmul.f32.gmra.mxu0 %v1125
    %v3970 = vpop.f32.mrf.mxu0
    %v3971 = vadd.f32 %v3951, %v3970
    %3972 = vdwg.mxu0
    %3973 = vmatpush.msra.mxu0 %v3021
    %3974 = vmatpush.msra.mxu0 %v3017
    %3975 = vmatpush.msra.mxu0 %v3013
    %3976 = vmatpush.msra.mxu0 %v3009
    %3977 = vmatpush.msra.mxu0 %v3005
    %3978 = vmatpush.msra.mxu0 %v3001
    %3979 = vmatpush.msra.mxu0 %v2997
    %3980 = vmatpush.msra.mxu0 %v2993
    %3981 = vmatpush.msra.mxu0 %v2989
    %3982 = vmatpush.msra.mxu0 %v2985
    %3983 = vmatpush.msra.mxu0 %v2981
    %3984 = vmatpush.msra.mxu0 %v2977
    %3985 = vmatpush.msra.mxu0 %v2973
    %3986 = vmatpush.msra.mxu0 %v2969
    %3987 = vmatpush.msra.mxu0 %v2965
    %3988 = vmatpush.msra.mxu0 %v2961
    %3989 = vmatmul.f32.gmra.mxu0 %v1126
    %v3990 = vpop.f32.mrf.mxu0
    %v3991 = vadd.f32 %v3971, %v3990
    %3992 = vdwg.mxu0
    %v3993 = vmax.f32 %v3271, 0.0
    %v3994 = vmax.f32 %v3511, 0.0
    %v3995 = vmax.f32 %v3751, 0.0
    %v3996 = vmax.f32 %v3991, 0.0
    %s3997 = scalar_lea.vmem %s3, 480
    %v3998 = vld [vmem:[%s3997] sm:$0xff]
    %v3999 = vld [vmem:[%s3997 + $0x8] sm:$0xff]
    %v4000 = vld [vmem:[%s3997 + $0x10] sm:$0xff]
    %v4001 = vld [vmem:[%s3997 + $0x18] sm:$0xff]
    %v4002 = vld [vmem:[%s3997 + $0x20] sm:$0xff]
    %v4003 = vld [vmem:[%s3997 + $0x28] sm:$0xff]
    %v4004 = vld [vmem:[%s3997 + $0x30] sm:$0xff]
    %v4005 = vld [vmem:[%s3997 + $0x38] sm:$0xff]
    %v4006 = vld [vmem:[%s3997 + $0x40] sm:$0xff]
    %v4007 = vld [vmem:[%s3997 + $0x48] sm:$0xff]
    %v4008 = vld [vmem:[%s3997 + $0x50] sm:$0xff]
    %v4009 = vld [vmem:[%s3997 + $0x58] sm:$0xff]
    %v4010 = vld [vmem:[%s3997 + $0x60] sm:$0xff]
    %v4011 = vld [vmem:[%s3997 + $0x68] sm:$0xff]
    %v4012 = vld [vmem:[%s3997 + $0x70] sm:$0xff]
    %v4013 = vld [vmem:[%s3997 + $0x78] sm:$0xff]
    %v4014 = vld [vmem:[%s3997 + $0x80] sm:$0xff]
    %v4015 = vld [vmem:[%s3997 + $0x88] sm:$0xff]
    %v4016 = vld [vmem:[%s3997 + $0x90] sm:$0xff]
    %v4017 = vld [vmem:[%s3997 + $0x98] sm:$0xff]
    %v4018 = vld [vmem:[%s3997 + $0xa0] sm:$0xff]
    %v4019 = vld [vmem:[%s3997 + $0xa8] sm:$0xff]
    %v4020 = vld [vmem:[%s3997 + $0xb0] sm:$0xff]
    %v4021 = vld [vmem:[%s3997 + $0xb8] sm:$0xff]
    %v4022 = vld [vmem:[%s3997 + $0xc0] sm:$0xff]
    %v4023 = vld [vmem:[%s3997 + $0xc8] sm:$0xff]
    %v4024 = vld [vmem:[%s3997 + $0xd0] sm:$0xff]
    %v4025 = vld [vmem:[%s3997 + $0xd8] sm:$0xff]
    %v4026 = vld [vmem:[%s3997 + $0xe0] sm:$0xff]
    %v4027 = vld [vmem:[%s3997 + $0xe8] sm:$0xff]
    %v4028 = vld [vmem:[%s3997 + $0xf0] sm:$0xff]
    %v4029 = vld [vmem:[%s3997 + $0xf8] sm:$0xff]
    %v4030 = vld [vmem:[%s3997 + $0x100] sm:$0xff]
    %v4031 = vld [vmem:[%s3997 + $0x108] sm:$0xff]
    %v4032 = vld [vmem:[%s3997 + $0x110] sm:$0xff]
    %v4033 = vld [vmem:[%s3997 + $0x118] sm:$0xff]
    %v4034 = vld [vmem:[%s3997 + $0x120] sm:$0xff]
    %v4035 = vld [vmem:[%s3997 + $0x128] sm:$0xff]
    %v4036 = vld [vmem:[%s3997 + $0x130] sm:$0xff]
    %v4037 = vld [vmem:[%s3997 + $0x138] sm:$0xff]
    %v4038 = vld [vmem:[%s3997 + $0x140] sm:$0xff]
    %v4039 = vld [vmem:[%s3997 + $0x148] sm:$0xff]
    %v4040 = vld [vmem:[%s3997 + $0x150] sm:$0xff]
    %v4041 = vld [vmem:[%s3997 + $0x158] sm:$0xff]
    %v4042 = vld [vmem:[%s3997 + $0x160] sm:$0xff]
    %v4043 = vld [vmem:[%s3997 + $0x168] sm:$0xff]
    %v4044 = vld [vmem:[%s3997 + $0x170] sm:$0xff]
    %v4045 = vld [vmem:[%s3997 + $0x178] sm:$0xff]
    %v4046 = vld [vmem:[%s3997 + $0x180] sm:$0xff]
    %v4047 = vld [vmem:[%s3997 + $0x188] sm:$0xff]
    %v4048 = vld [vmem:[%s3997 + $0x190] sm:$0xff]
    %v4049 = vld [vmem:[%s3997 + $0x198] sm:$0xff]
    %v4050 = vld [vmem:[%s3997 + $0x1a0] sm:$0xff]
    %v4051 = vld [vmem:[%s3997 + $0x1a8] sm:$0xff]
    %v4052 = vld [vmem:[%s3997 + $0x1b0] sm:$0xff]
    %v4053 = vld [vmem:[%s3997 + $0x1b8] sm:$0xff]
    %v4054 = vld [vmem:[%s3997 + $0x1c0] sm:$0xff]
    %v4055 = vld [vmem:[%s3997 + $0x1c8] sm:$0xff]
    %v4056 = vld [vmem:[%s3997 + $0x1d0] sm:$0xff]
    %v4057 = vld [vmem:[%s3997 + $0x1d8] sm:$0xff]
    %s4058 = scalar_lea.vmem %s4, 1
    %v4059 = vld [vmem:[%s4058] sm:$0x1]
    %v4061 = vperm.slane %v4059, 0
    %v4064 = vsel %vm2167, %v3996, 0
    %4066 = vmatpush.msra.mxu0 %v4013
    %4067 = vmatpush.msra.mxu0 %v4012
    %4068 = vmatpush.msra.mxu0 %v4011
    %4069 = vmatpush.msra.mxu0 %v4010
    %4070 = vmatpush.msra.mxu0 %v4009
    %4071 = vmatpush.msra.mxu0 %v4008
    %4072 = vmatpush.msra.mxu0 %v4007
    %4073 = vmatpush.msra.mxu0 %v4006
    %4074 = vmatpush.msra.mxu0 %v4005
    %4075 = vmatpush.msra.mxu0 %v4004
    %4076 = vmatpush.msra.mxu0 %v4003
    %4077 = vmatpush.msra.mxu0 %v4002
    %4078 = vmatpush.msra.mxu0 %v4001
    %4079 = vmatpush.msra.mxu0 %v4000
    %4080 = vmatpush.msra.mxu0 %v3999
    %4081 = vmatpush.msra.mxu0 %v3998
    %4082 = vmatmul.f32.gmra.mxu0 %v3993
    %v4083 = vpop.f32.mrf.mxu0
    %v4084 = vadd.f32 %v4061, %v4083
    %4085 = vdwg.mxu0
    %4086 = vmatpush.msra.mxu0 %v4029
    %4087 = vmatpush.msra.mxu0 %v4028
    %4088 = vmatpush.msra.mxu0 %v4027
    %4089 = vmatpush.msra.mxu0 %v4026
    %4090 = vmatpush.msra.mxu0 %v4025
    %4091 = vmatpush.msra.mxu0 %v4024
    %4092 = vmatpush.msra.mxu0 %v4023
    %4093 = vmatpush.msra.mxu0 %v4022
    %4094 = vmatpush.msra.mxu0 %v4021
    %4095 = vmatpush.msra.mxu0 %v4020
    %4096 = vmatpush.msra.mxu0 %v4019
    %4097 = vmatpush.msra.mxu0 %v4018
    %4098 = vmatpush.msra.mxu0 %v4017
    %4099 = vmatpush.msra.mxu0 %v4016
    %4100 = vmatpush.msra.mxu0 %v4015
    %4101 = vmatpush.msra.mxu0 %v4014
    %4102 = vmatmul.f32.gmra.mxu0 %v3994
    %v4103 = vpop.f32.mrf.mxu0
    %v4104 = vadd.f32 %v4084, %v4103
    %4105 = vdwg.mxu0
    %4106 = vmatpush.msra.mxu0 %v4045
    %4107 = vmatpush.msra.mxu0 %v4044
    %4108 = vmatpush.msra.mxu0 %v4043
    %4109 = vmatpush.msra.mxu0 %v4042
    %4110 = vmatpush.msra.mxu0 %v4041
    %4111 = vmatpush.msra.mxu0 %v4040
    %4112 = vmatpush.msra.mxu0 %v4039
    %4113 = vmatpush.msra.mxu0 %v4038
    %4114 = vmatpush.msra.mxu0 %v4037
    %4115 = vmatpush.msra.mxu0 %v4036
    %4116 = vmatpush.msra.mxu0 %v4035
    %4117 = vmatpush.msra.mxu0 %v4034
    %4118 = vmatpush.msra.mxu0 %v4033
    %4119 = vmatpush.msra.mxu0 %v4032
    %4120 = vmatpush.msra.mxu0 %v4031
    %4121 = vmatpush.msra.mxu0 %v4030
    %4122 = vmatmul.f32.gmra.mxu0 %v3995
    %v4123 = vpop.f32.mrf.mxu0
    %v4124 = vadd.f32 %v4104, %v4123
    %4125 = vdwg.mxu0
    %4126 = vmatpush.msra.mxu0 0.0
    %4127 = vmatpush.msra.mxu0 0.0
    %4128 = vmatpush.msra.mxu0 0.0
    %4129 = vmatpush.msra.mxu0 0.0
    %4130 = vmatpush.msra.mxu0 %v4057
    %4131 = vmatpush.msra.mxu0 %v4056
    %4132 = vmatpush.msra.mxu0 %v4055
    %4133 = vmatpush.msra.mxu0 %v4054
    %4134 = vmatpush.msra.mxu0 %v4053
    %4135 = vmatpush.msra.mxu0 %v4052
    %4136 = vmatpush.msra.mxu0 %v4051
    %4137 = vmatpush.msra.mxu0 %v4050
    %4138 = vmatpush.msra.mxu0 %v4049
    %4139 = vmatpush.msra.mxu0 %v4048
    %4140 = vmatpush.msra.mxu0 %v4047
    %4141 = vmatpush.msra.mxu0 %v4046
    %4142 = vmatmul.f32.gmra.mxu0 %v4064
    %v4143 = vpop.f32.mrf.mxu0
    %v4144 = vadd.f32 %v4124, %v4143
    %4145 = vdwg.mxu0
    %4146 = vst.msk [vmem:[#allocation4] sm:$0x3] %vm2251, %v4144
    %s4147 = scalar_lea.vmem %s1, 12288
    %v4148 = vld [vmem:[%s4147] sm:$0xff]
    %v4149 = vld [vmem:[%s4147 + $0x8] sm:$0xff]
    %v4150 = vld [vmem:[%s4147 + $0x10] sm:$0xff]
    %v4151 = vld [vmem:[%s4147 + $0x18] sm:$0xff]
    %v4152 = vld [vmem:[%s4147 + $0x20] sm:$0xff]
    %v4153 = vld [vmem:[%s4147 + $0x28] sm:$0xff]
    %v4154 = vld [vmem:[%s4147 + $0x30] sm:$0xff]
    %v4155 = vld [vmem:[%s4147 + $0x38] sm:$0xff]
    %v4156 = vld [vmem:[%s4147 + $0x40] sm:$0xff]
    %v4157 = vld [vmem:[%s4147 + $0x48] sm:$0xff]
    %v4158 = vld [vmem:[%s4147 + $0x50] sm:$0xff]
    %v4159 = vld [vmem:[%s4147 + $0x58] sm:$0xff]
    %v4160 = vld [vmem:[%s4147 + $0x60] sm:$0xff]
    %v4161 = vld [vmem:[%s4147 + $0x68] sm:$0xff]
    %v4162 = vld [vmem:[%s4147 + $0x70] sm:$0xff]
    %v4163 = vld [vmem:[%s4147 + $0x78] sm:$0xff]
    %v4164 = vld [vmem:[%s4147 + $0x80] sm:$0xff]
    %v4165 = vld [vmem:[%s4147 + $0x88] sm:$0xff]
    %v4166 = vld [vmem:[%s4147 + $0x90] sm:$0xff]
    %v4167 = vld [vmem:[%s4147 + $0x98] sm:$0xff]
    %v4168 = vld [vmem:[%s4147 + $0xa0] sm:$0xff]
    %v4169 = vld [vmem:[%s4147 + $0xa8] sm:$0xff]
    %v4170 = vld [vmem:[%s4147 + $0xb0] sm:$0xff]
    %v4171 = vld [vmem:[%s4147 + $0xb8] sm:$0xff]
    %v4172 = vld [vmem:[%s4147 + $0xc0] sm:$0xff]
    %v4173 = vld [vmem:[%s4147 + $0xc8] sm:$0xff]
    %v4174 = vld [vmem:[%s4147 + $0xd0] sm:$0xff]
    %v4175 = vld [vmem:[%s4147 + $0xd8] sm:$0xff]
    %v4176 = vld [vmem:[%s4147 + $0xe0] sm:$0xff]
    %v4177 = vld [vmem:[%s4147 + $0xe8] sm:$0xff]
    %v4178 = vld [vmem:[%s4147 + $0xf0] sm:$0xff]
    %v4179 = vld [vmem:[%s4147 + $0xf8] sm:$0xff]
    %v4180 = vld [vmem:[%s4147 + $0x100] sm:$0xff]
    %v4181 = vld [vmem:[%s4147 + $0x108] sm:$0xff]
    %v4182 = vld [vmem:[%s4147 + $0x110] sm:$0xff]
    %v4183 = vld [vmem:[%s4147 + $0x118] sm:$0xff]
    %v4184 = vld [vmem:[%s4147 + $0x120] sm:$0xff]
    %v4185 = vld [vmem:[%s4147 + $0x128] sm:$0xff]
    %v4186 = vld [vmem:[%s4147 + $0x130] sm:$0xff]
    %v4187 = vld [vmem:[%s4147 + $0x138] sm:$0xff]
    %v4188 = vld [vmem:[%s4147 + $0x140] sm:$0xff]
    %v4189 = vld [vmem:[%s4147 + $0x148] sm:$0xff]
    %v4190 = vld [vmem:[%s4147 + $0x150] sm:$0xff]
    %v4191 = vld [vmem:[%s4147 + $0x158] sm:$0xff]
    %v4192 = vld [vmem:[%s4147 + $0x160] sm:$0xff]
    %v4193 = vld [vmem:[%s4147 + $0x168] sm:$0xff]
    %v4194 = vld [vmem:[%s4147 + $0x170] sm:$0xff]
    %v4195 = vld [vmem:[%s4147 + $0x178] sm:$0xff]
    %v4196 = vld [vmem:[%s4147 + $0x180] sm:$0xff]
    %v4197 = vld [vmem:[%s4147 + $0x188] sm:$0xff]
    %v4198 = vld [vmem:[%s4147 + $0x190] sm:$0xff]
    %v4199 = vld [vmem:[%s4147 + $0x198] sm:$0xff]
    %v4200 = vld [vmem:[%s4147 + $0x1a0] sm:$0xff]
    %v4201 = vld [vmem:[%s4147 + $0x1a8] sm:$0xff]
    %v4202 = vld [vmem:[%s4147 + $0x1b0] sm:$0xff]
    %v4203 = vld [vmem:[%s4147 + $0x1b8] sm:$0xff]
    %v4204 = vld [vmem:[%s4147 + $0x1c0] sm:$0xff]
    %v4205 = vld [vmem:[%s4147 + $0x1c8] sm:$0xff]
    %v4206 = vld [vmem:[%s4147 + $0x1d0] sm:$0xff]
    %v4207 = vld [vmem:[%s4147 + $0x1d8] sm:$0xff]
    %v4208 = vld [vmem:[%s4147 + $0x1e0] sm:$0xff]
    %v4209 = vld [vmem:[%s4147 + $0x1e8] sm:$0xff]
    %v4210 = vld [vmem:[%s4147 + $0x1f0] sm:$0xff]
    %v4211 = vld [vmem:[%s4147 + $0x1f8] sm:$0xff]
    %v4212 = vld [vmem:[%s4147 + $0x200] sm:$0xff]
    %v4213 = vld [vmem:[%s4147 + $0x208] sm:$0xff]
    %v4214 = vld [vmem:[%s4147 + $0x210] sm:$0xff]
    %v4215 = vld [vmem:[%s4147 + $0x218] sm:$0xff]
    %v4216 = vld [vmem:[%s4147 + $0x220] sm:$0xff]
    %v4217 = vld [vmem:[%s4147 + $0x228] sm:$0xff]
    %v4218 = vld [vmem:[%s4147 + $0x230] sm:$0xff]
    %v4219 = vld [vmem:[%s4147 + $0x238] sm:$0xff]
    %v4220 = vld [vmem:[%s4147 + $0x240] sm:$0xff]
    %v4221 = vld [vmem:[%s4147 + $0x248] sm:$0xff]
    %v4222 = vld [vmem:[%s4147 + $0x250] sm:$0xff]
    %v4223 = vld [vmem:[%s4147 + $0x258] sm:$0xff]
    %v4224 = vld [vmem:[%s4147 + $0x260] sm:$0xff]
    %v4225 = vld [vmem:[%s4147 + $0x268] sm:$0xff]
    %v4226 = vld [vmem:[%s4147 + $0x270] sm:$0xff]
    %v4227 = vld [vmem:[%s4147 + $0x278] sm:$0xff]
    %v4228 = vld [vmem:[%s4147 + $0x280] sm:$0xff]
    %v4229 = vld [vmem:[%s4147 + $0x288] sm:$0xff]
    %v4230 = vld [vmem:[%s4147 + $0x290] sm:$0xff]
    %v4231 = vld [vmem:[%s4147 + $0x298] sm:$0xff]
    %v4232 = vld [vmem:[%s4147 + $0x2a0] sm:$0xff]
    %v4233 = vld [vmem:[%s4147 + $0x2a8] sm:$0xff]
    %v4234 = vld [vmem:[%s4147 + $0x2b0] sm:$0xff]
    %v4235 = vld [vmem:[%s4147 + $0x2b8] sm:$0xff]
    %v4236 = vld [vmem:[%s4147 + $0x2c0] sm:$0xff]
    %v4237 = vld [vmem:[%s4147 + $0x2c8] sm:$0xff]
    %v4238 = vld [vmem:[%s4147 + $0x2d0] sm:$0xff]
    %v4239 = vld [vmem:[%s4147 + $0x2d8] sm:$0xff]
    %v4240 = vld [vmem:[%s4147 + $0x2e0] sm:$0xff]
    %v4241 = vld [vmem:[%s4147 + $0x2e8] sm:$0xff]
    %v4242 = vld [vmem:[%s4147 + $0x2f0] sm:$0xff]
    %v4243 = vld [vmem:[%s4147 + $0x2f8] sm:$0xff]
    %v4244 = vld [vmem:[%s4147 + $0x300] sm:$0xff]
    %v4245 = vld [vmem:[%s4147 + $0x308] sm:$0xff]
    %v4246 = vld [vmem:[%s4147 + $0x310] sm:$0xff]
    %v4247 = vld [vmem:[%s4147 + $0x318] sm:$0xff]
    %v4248 = vld [vmem:[%s4147 + $0x320] sm:$0xff]
    %v4249 = vld [vmem:[%s4147 + $0x328] sm:$0xff]
    %v4250 = vld [vmem:[%s4147 + $0x330] sm:$0xff]
    %v4251 = vld [vmem:[%s4147 + $0x338] sm:$0xff]
    %v4252 = vld [vmem:[%s4147 + $0x340] sm:$0xff]
    %v4253 = vld [vmem:[%s4147 + $0x348] sm:$0xff]
    %v4254 = vld [vmem:[%s4147 + $0x350] sm:$0xff]
    %v4255 = vld [vmem:[%s4147 + $0x358] sm:$0xff]
    %v4256 = vld [vmem:[%s4147 + $0x360] sm:$0xff]
    %v4257 = vld [vmem:[%s4147 + $0x368] sm:$0xff]
    %v4258 = vld [vmem:[%s4147 + $0x370] sm:$0xff]
    %v4259 = vld [vmem:[%s4147 + $0x378] sm:$0xff]
    %v4260 = vld [vmem:[%s4147 + $0x380] sm:$0xff]
    %v4261 = vld [vmem:[%s4147 + $0x388] sm:$0xff]
    %v4262 = vld [vmem:[%s4147 + $0x390] sm:$0xff]
    %v4263 = vld [vmem:[%s4147 + $0x398] sm:$0xff]
    %v4264 = vld [vmem:[%s4147 + $0x3a0] sm:$0xff]
    %v4265 = vld [vmem:[%s4147 + $0x3a8] sm:$0xff]
    %v4266 = vld [vmem:[%s4147 + $0x3b0] sm:$0xff]
    %v4267 = vld [vmem:[%s4147 + $0x3b8] sm:$0xff]
    %v4268 = vld [vmem:[%s4147 + $0x3c0] sm:$0xff]
    %v4269 = vld [vmem:[%s4147 + $0x3c8] sm:$0xff]
    %v4270 = vld [vmem:[%s4147 + $0x3d0] sm:$0xff]
    %v4271 = vld [vmem:[%s4147 + $0x3d8] sm:$0xff]
    %v4272 = vld [vmem:[%s4147 + $0x3e0] sm:$0xff]
    %v4273 = vld [vmem:[%s4147 + $0x3e8] sm:$0xff]
    %v4274 = vld [vmem:[%s4147 + $0x3f0] sm:$0xff]
    %v4275 = vld [vmem:[%s4147 + $0x3f8] sm:$0xff]
    %v4276 = vld [vmem:[%s4147 + $0x400] sm:$0xff]
    %v4277 = vld [vmem:[%s4147 + $0x408] sm:$0xff]
    %v4278 = vld [vmem:[%s4147 + $0x410] sm:$0xff]
    %v4279 = vld [vmem:[%s4147 + $0x418] sm:$0xff]
    %v4280 = vld [vmem:[%s4147 + $0x420] sm:$0xff]
    %v4281 = vld [vmem:[%s4147 + $0x428] sm:$0xff]
    %v4282 = vld [vmem:[%s4147 + $0x430] sm:$0xff]
    %v4283 = vld [vmem:[%s4147 + $0x438] sm:$0xff]
    %v4284 = vld [vmem:[%s4147 + $0x440] sm:$0xff]
    %v4285 = vld [vmem:[%s4147 + $0x448] sm:$0xff]
    %v4286 = vld [vmem:[%s4147 + $0x450] sm:$0xff]
    %v4287 = vld [vmem:[%s4147 + $0x458] sm:$0xff]
    %v4288 = vld [vmem:[%s4147 + $0x460] sm:$0xff]
    %v4289 = vld [vmem:[%s4147 + $0x468] sm:$0xff]
    %v4290 = vld [vmem:[%s4147 + $0x470] sm:$0xff]
    %v4291 = vld [vmem:[%s4147 + $0x478] sm:$0xff]
    %v4292 = vld [vmem:[%s4147 + $0x480] sm:$0xff]
    %v4293 = vld [vmem:[%s4147 + $0x488] sm:$0xff]
    %v4294 = vld [vmem:[%s4147 + $0x490] sm:$0xff]
    %v4295 = vld [vmem:[%s4147 + $0x498] sm:$0xff]
    %v4296 = vld [vmem:[%s4147 + $0x4a0] sm:$0xff]
    %v4297 = vld [vmem:[%s4147 + $0x4a8] sm:$0xff]
    %v4298 = vld [vmem:[%s4147 + $0x4b0] sm:$0xff]
    %v4299 = vld [vmem:[%s4147 + $0x4b8] sm:$0xff]
    %v4300 = vld [vmem:[%s4147 + $0x4c0] sm:$0xff]
    %v4301 = vld [vmem:[%s4147 + $0x4c8] sm:$0xff]
    %v4302 = vld [vmem:[%s4147 + $0x4d0] sm:$0xff]
    %v4303 = vld [vmem:[%s4147 + $0x4d8] sm:$0xff]
    %v4304 = vld [vmem:[%s4147 + $0x4e0] sm:$0xff]
    %v4305 = vld [vmem:[%s4147 + $0x4e8] sm:$0xff]
    %v4306 = vld [vmem:[%s4147 + $0x4f0] sm:$0xff]
    %v4307 = vld [vmem:[%s4147 + $0x4f8] sm:$0xff]
    %v4308 = vld [vmem:[%s4147 + $0x500] sm:$0xff]
    %v4309 = vld [vmem:[%s4147 + $0x508] sm:$0xff]
    %v4310 = vld [vmem:[%s4147 + $0x510] sm:$0xff]
    %v4311 = vld [vmem:[%s4147 + $0x518] sm:$0xff]
    %v4312 = vld [vmem:[%s4147 + $0x520] sm:$0xff]
    %v4313 = vld [vmem:[%s4147 + $0x528] sm:$0xff]
    %v4314 = vld [vmem:[%s4147 + $0x530] sm:$0xff]
    %v4315 = vld [vmem:[%s4147 + $0x538] sm:$0xff]
    %v4316 = vld [vmem:[%s4147 + $0x540] sm:$0xff]
    %v4317 = vld [vmem:[%s4147 + $0x548] sm:$0xff]
    %v4318 = vld [vmem:[%s4147 + $0x550] sm:$0xff]
    %v4319 = vld [vmem:[%s4147 + $0x558] sm:$0xff]
    %v4320 = vld [vmem:[%s4147 + $0x560] sm:$0xff]
    %v4321 = vld [vmem:[%s4147 + $0x568] sm:$0xff]
    %v4322 = vld [vmem:[%s4147 + $0x570] sm:$0xff]
    %v4323 = vld [vmem:[%s4147 + $0x578] sm:$0xff]
    %v4324 = vld [vmem:[%s4147 + $0x580] sm:$0xff]
    %v4325 = vld [vmem:[%s4147 + $0x588] sm:$0xff]
    %v4326 = vld [vmem:[%s4147 + $0x590] sm:$0xff]
    %v4327 = vld [vmem:[%s4147 + $0x598] sm:$0xff]
    %v4328 = vld [vmem:[%s4147 + $0x5a0] sm:$0xff]
    %v4329 = vld [vmem:[%s4147 + $0x5a8] sm:$0xff]
    %v4330 = vld [vmem:[%s4147 + $0x5b0] sm:$0xff]
    %v4331 = vld [vmem:[%s4147 + $0x5b8] sm:$0xff]
    %v4332 = vld [vmem:[%s4147 + $0x5c0] sm:$0xff]
    %v4333 = vld [vmem:[%s4147 + $0x5c8] sm:$0xff]
    %v4334 = vld [vmem:[%s4147 + $0x5d0] sm:$0xff]
    %v4335 = vld [vmem:[%s4147 + $0x5d8] sm:$0xff]
    %v4336 = vld [vmem:[%s4147 + $0x5e0] sm:$0xff]
    %v4337 = vld [vmem:[%s4147 + $0x5e8] sm:$0xff]
    %v4338 = vld [vmem:[%s4147 + $0x5f0] sm:$0xff]
    %v4339 = vld [vmem:[%s4147 + $0x5f8] sm:$0xff]
    %v4340 = vld [vmem:[%s4147 + $0x600] sm:$0xff]
    %v4341 = vld [vmem:[%s4147 + $0x608] sm:$0xff]
    %v4342 = vld [vmem:[%s4147 + $0x610] sm:$0xff]
    %v4343 = vld [vmem:[%s4147 + $0x618] sm:$0xff]
    %v4344 = vld [vmem:[%s4147 + $0x620] sm:$0xff]
    %v4345 = vld [vmem:[%s4147 + $0x628] sm:$0xff]
    %v4346 = vld [vmem:[%s4147 + $0x630] sm:$0xff]
    %v4347 = vld [vmem:[%s4147 + $0x638] sm:$0xff]
    %v4348 = vld [vmem:[%s4147 + $0x640] sm:$0xff]
    %v4349 = vld [vmem:[%s4147 + $0x648] sm:$0xff]
    %v4350 = vld [vmem:[%s4147 + $0x650] sm:$0xff]
    %v4351 = vld [vmem:[%s4147 + $0x658] sm:$0xff]
    %v4352 = vld [vmem:[%s4147 + $0x660] sm:$0xff]
    %v4353 = vld [vmem:[%s4147 + $0x668] sm:$0xff]
    %v4354 = vld [vmem:[%s4147 + $0x670] sm:$0xff]
    %v4355 = vld [vmem:[%s4147 + $0x678] sm:$0xff]
    %v4356 = vld [vmem:[%s4147 + $0x680] sm:$0xff]
    %v4357 = vld [vmem:[%s4147 + $0x688] sm:$0xff]
    %v4358 = vld [vmem:[%s4147 + $0x690] sm:$0xff]
    %v4359 = vld [vmem:[%s4147 + $0x698] sm:$0xff]
    %v4360 = vld [vmem:[%s4147 + $0x6a0] sm:$0xff]
    %v4361 = vld [vmem:[%s4147 + $0x6a8] sm:$0xff]
    %v4362 = vld [vmem:[%s4147 + $0x6b0] sm:$0xff]
    %v4363 = vld [vmem:[%s4147 + $0x6b8] sm:$0xff]
    %v4364 = vld [vmem:[%s4147 + $0x6c0] sm:$0xff]
    %v4365 = vld [vmem:[%s4147 + $0x6c8] sm:$0xff]
    %v4366 = vld [vmem:[%s4147 + $0x6d0] sm:$0xff]
    %v4367 = vld [vmem:[%s4147 + $0x6d8] sm:$0xff]
    %v4368 = vld [vmem:[%s4147 + $0x6e0] sm:$0xff]
    %v4369 = vld [vmem:[%s4147 + $0x6e8] sm:$0xff]
    %v4370 = vld [vmem:[%s4147 + $0x6f0] sm:$0xff]
    %v4371 = vld [vmem:[%s4147 + $0x6f8] sm:$0xff]
    %v4372 = vld [vmem:[%s4147 + $0x700] sm:$0xff]
    %v4373 = vld [vmem:[%s4147 + $0x708] sm:$0xff]
    %v4374 = vld [vmem:[%s4147 + $0x710] sm:$0xff]
    %v4375 = vld [vmem:[%s4147 + $0x718] sm:$0xff]
    %v4376 = vld [vmem:[%s4147 + $0x720] sm:$0xff]
    %v4377 = vld [vmem:[%s4147 + $0x728] sm:$0xff]
    %v4378 = vld [vmem:[%s4147 + $0x730] sm:$0xff]
    %v4379 = vld [vmem:[%s4147 + $0x738] sm:$0xff]
    %v4380 = vld [vmem:[%s4147 + $0x740] sm:$0xff]
    %v4381 = vld [vmem:[%s4147 + $0x748] sm:$0xff]
    %v4382 = vld [vmem:[%s4147 + $0x750] sm:$0xff]
    %v4383 = vld [vmem:[%s4147 + $0x758] sm:$0xff]
    %v4384 = vld [vmem:[%s4147 + $0x760] sm:$0xff]
    %v4385 = vld [vmem:[%s4147 + $0x768] sm:$0xff]
    %v4386 = vld [vmem:[%s4147 + $0x770] sm:$0xff]
    %v4387 = vld [vmem:[%s4147 + $0x778] sm:$0xff]
    %v4388 = vld [vmem:[%s4147 + $0x780] sm:$0xff]
    %v4389 = vld [vmem:[%s4147 + $0x788] sm:$0xff]
    %v4390 = vld [vmem:[%s4147 + $0x790] sm:$0xff]
    %v4391 = vld [vmem:[%s4147 + $0x798] sm:$0xff]
    %v4392 = vld [vmem:[%s4147 + $0x7a0] sm:$0xff]
    %v4393 = vld [vmem:[%s4147 + $0x7a8] sm:$0xff]
    %v4394 = vld [vmem:[%s4147 + $0x7b0] sm:$0xff]
    %v4395 = vld [vmem:[%s4147 + $0x7b8] sm:$0xff]
    %v4396 = vld [vmem:[%s4147 + $0x7c0] sm:$0xff]
    %v4397 = vld [vmem:[%s4147 + $0x7c8] sm:$0xff]
    %v4398 = vld [vmem:[%s4147 + $0x7d0] sm:$0xff]
    %v4399 = vld [vmem:[%s4147 + $0x7d8] sm:$0xff]
    %v4400 = vld [vmem:[%s4147 + $0x7e0] sm:$0xff]
    %v4401 = vld [vmem:[%s4147 + $0x7e8] sm:$0xff]
    %v4402 = vld [vmem:[%s4147 + $0x7f0] sm:$0xff]
    %v4403 = vld [vmem:[%s4147 + $0x7f8] sm:$0xff]
    %v4404 = vld [vmem:[%s4147 + $0x800] sm:$0xff]
    %v4405 = vld [vmem:[%s4147 + $0x808] sm:$0xff]
    %v4406 = vld [vmem:[%s4147 + $0x810] sm:$0xff]
    %v4407 = vld [vmem:[%s4147 + $0x818] sm:$0xff]
    %v4408 = vld [vmem:[%s4147 + $0x820] sm:$0xff]
    %v4409 = vld [vmem:[%s4147 + $0x828] sm:$0xff]
    %v4410 = vld [vmem:[%s4147 + $0x830] sm:$0xff]
    %v4411 = vld [vmem:[%s4147 + $0x838] sm:$0xff]
    %v4412 = vld [vmem:[%s4147 + $0x840] sm:$0xff]
    %v4413 = vld [vmem:[%s4147 + $0x848] sm:$0xff]
    %v4414 = vld [vmem:[%s4147 + $0x850] sm:$0xff]
    %v4415 = vld [vmem:[%s4147 + $0x858] sm:$0xff]
    %v4416 = vld [vmem:[%s4147 + $0x860] sm:$0xff]
    %v4417 = vld [vmem:[%s4147 + $0x868] sm:$0xff]
    %v4418 = vld [vmem:[%s4147 + $0x870] sm:$0xff]
    %v4419 = vld [vmem:[%s4147 + $0x878] sm:$0xff]
    %v4420 = vld [vmem:[%s4147 + $0x880] sm:$0xff]
    %v4421 = vld [vmem:[%s4147 + $0x888] sm:$0xff]
    %v4422 = vld [vmem:[%s4147 + $0x890] sm:$0xff]
    %v4423 = vld [vmem:[%s4147 + $0x898] sm:$0xff]
    %v4424 = vld [vmem:[%s4147 + $0x8a0] sm:$0xff]
    %v4425 = vld [vmem:[%s4147 + $0x8a8] sm:$0xff]
    %v4426 = vld [vmem:[%s4147 + $0x8b0] sm:$0xff]
    %v4427 = vld [vmem:[%s4147 + $0x8b8] sm:$0xff]
    %v4428 = vld [vmem:[%s4147 + $0x8c0] sm:$0xff]
    %v4429 = vld [vmem:[%s4147 + $0x8c8] sm:$0xff]
    %v4430 = vld [vmem:[%s4147 + $0x8d0] sm:$0xff]
    %v4431 = vld [vmem:[%s4147 + $0x8d8] sm:$0xff]
    %v4432 = vld [vmem:[%s4147 + $0x8e0] sm:$0xff]
    %v4433 = vld [vmem:[%s4147 + $0x8e8] sm:$0xff]
    %v4434 = vld [vmem:[%s4147 + $0x8f0] sm:$0xff]
    %v4435 = vld [vmem:[%s4147 + $0x8f8] sm:$0xff]
    %v4436 = vld [vmem:[%s4147 + $0x900] sm:$0xff]
    %v4437 = vld [vmem:[%s4147 + $0x908] sm:$0xff]
    %v4438 = vld [vmem:[%s4147 + $0x910] sm:$0xff]
    %v4439 = vld [vmem:[%s4147 + $0x918] sm:$0xff]
    %v4440 = vld [vmem:[%s4147 + $0x920] sm:$0xff]
    %v4441 = vld [vmem:[%s4147 + $0x928] sm:$0xff]
    %v4442 = vld [vmem:[%s4147 + $0x930] sm:$0xff]
    %v4443 = vld [vmem:[%s4147 + $0x938] sm:$0xff]
    %v4444 = vld [vmem:[%s4147 + $0x940] sm:$0xff]
    %v4445 = vld [vmem:[%s4147 + $0x948] sm:$0xff]
    %v4446 = vld [vmem:[%s4147 + $0x950] sm:$0xff]
    %v4447 = vld [vmem:[%s4147 + $0x958] sm:$0xff]
    %v4448 = vld [vmem:[%s4147 + $0x960] sm:$0xff]
    %v4449 = vld [vmem:[%s4147 + $0x968] sm:$0xff]
    %v4450 = vld [vmem:[%s4147 + $0x970] sm:$0xff]
    %v4451 = vld [vmem:[%s4147 + $0x978] sm:$0xff]
    %v4452 = vld [vmem:[%s4147 + $0x980] sm:$0xff]
    %v4453 = vld [vmem:[%s4147 + $0x988] sm:$0xff]
    %v4454 = vld [vmem:[%s4147 + $0x990] sm:$0xff]
    %v4455 = vld [vmem:[%s4147 + $0x998] sm:$0xff]
    %v4456 = vld [vmem:[%s4147 + $0x9a0] sm:$0xff]
    %v4457 = vld [vmem:[%s4147 + $0x9a8] sm:$0xff]
    %v4458 = vld [vmem:[%s4147 + $0x9b0] sm:$0xff]
    %v4459 = vld [vmem:[%s4147 + $0x9b8] sm:$0xff]
    %v4460 = vld [vmem:[%s4147 + $0x9c0] sm:$0xff]
    %v4461 = vld [vmem:[%s4147 + $0x9c8] sm:$0xff]
    %v4462 = vld [vmem:[%s4147 + $0x9d0] sm:$0xff]
    %v4463 = vld [vmem:[%s4147 + $0x9d8] sm:$0xff]
    %v4464 = vld [vmem:[%s4147 + $0x9e0] sm:$0xff]
    %v4465 = vld [vmem:[%s4147 + $0x9e8] sm:$0xff]
    %v4466 = vld [vmem:[%s4147 + $0x9f0] sm:$0xff]
    %v4467 = vld [vmem:[%s4147 + $0x9f8] sm:$0xff]
    %v4468 = vld [vmem:[%s4147 + $0xa00] sm:$0xff]
    %v4469 = vld [vmem:[%s4147 + $0xa08] sm:$0xff]
    %v4470 = vld [vmem:[%s4147 + $0xa10] sm:$0xff]
    %v4471 = vld [vmem:[%s4147 + $0xa18] sm:$0xff]
    %v4472 = vld [vmem:[%s4147 + $0xa20] sm:$0xff]
    %v4473 = vld [vmem:[%s4147 + $0xa28] sm:$0xff]
    %v4474 = vld [vmem:[%s4147 + $0xa30] sm:$0xff]
    %v4475 = vld [vmem:[%s4147 + $0xa38] sm:$0xff]
    %v4476 = vld [vmem:[%s4147 + $0xa40] sm:$0xff]
    %v4477 = vld [vmem:[%s4147 + $0xa48] sm:$0xff]
    %v4478 = vld [vmem:[%s4147 + $0xa50] sm:$0xff]
    %v4479 = vld [vmem:[%s4147 + $0xa58] sm:$0xff]
    %v4480 = vld [vmem:[%s4147 + $0xa60] sm:$0xff]
    %v4481 = vld [vmem:[%s4147 + $0xa68] sm:$0xff]
    %v4482 = vld [vmem:[%s4147 + $0xa70] sm:$0xff]
    %v4483 = vld [vmem:[%s4147 + $0xa78] sm:$0xff]
    %v4484 = vld [vmem:[%s4147 + $0xa80] sm:$0xff]
    %v4485 = vld [vmem:[%s4147 + $0xa88] sm:$0xff]
    %v4486 = vld [vmem:[%s4147 + $0xa90] sm:$0xff]
    %v4487 = vld [vmem:[%s4147 + $0xa98] sm:$0xff]
    %v4488 = vld [vmem:[%s4147 + $0xaa0] sm:$0xff]
    %v4489 = vld [vmem:[%s4147 + $0xaa8] sm:$0xff]
    %v4490 = vld [vmem:[%s4147 + $0xab0] sm:$0xff]
    %v4491 = vld [vmem:[%s4147 + $0xab8] sm:$0xff]
    %v4492 = vld [vmem:[%s4147 + $0xac0] sm:$0xff]
    %v4493 = vld [vmem:[%s4147 + $0xac8] sm:$0xff]
    %v4494 = vld [vmem:[%s4147 + $0xad0] sm:$0xff]
    %v4495 = vld [vmem:[%s4147 + $0xad8] sm:$0xff]
    %v4496 = vld [vmem:[%s4147 + $0xae0] sm:$0xff]
    %v4497 = vld [vmem:[%s4147 + $0xae8] sm:$0xff]
    %v4498 = vld [vmem:[%s4147 + $0xaf0] sm:$0xff]
    %v4499 = vld [vmem:[%s4147 + $0xaf8] sm:$0xff]
    %v4500 = vld [vmem:[%s4147 + $0xb00] sm:$0xff]
    %v4501 = vld [vmem:[%s4147 + $0xb08] sm:$0xff]
    %v4502 = vld [vmem:[%s4147 + $0xb10] sm:$0xff]
    %v4503 = vld [vmem:[%s4147 + $0xb18] sm:$0xff]
    %v4504 = vld [vmem:[%s4147 + $0xb20] sm:$0xff]
    %v4505 = vld [vmem:[%s4147 + $0xb28] sm:$0xff]
    %v4506 = vld [vmem:[%s4147 + $0xb30] sm:$0xff]
    %v4507 = vld [vmem:[%s4147 + $0xb38] sm:$0xff]
    %v4508 = vld [vmem:[%s4147 + $0xb40] sm:$0xff]
    %v4509 = vld [vmem:[%s4147 + $0xb48] sm:$0xff]
    %v4510 = vld [vmem:[%s4147 + $0xb50] sm:$0xff]
    %v4511 = vld [vmem:[%s4147 + $0xb58] sm:$0xff]
    %v4512 = vld [vmem:[%s4147 + $0xb60] sm:$0xff]
    %v4513 = vld [vmem:[%s4147 + $0xb68] sm:$0xff]
    %v4514 = vld [vmem:[%s4147 + $0xb70] sm:$0xff]
    %v4515 = vld [vmem:[%s4147 + $0xb78] sm:$0xff]
    %v4516 = vld [vmem:[%s4147 + $0xb80] sm:$0xff]
    %v4517 = vld [vmem:[%s4147 + $0xb88] sm:$0xff]
    %v4518 = vld [vmem:[%s4147 + $0xb90] sm:$0xff]
    %v4519 = vld [vmem:[%s4147 + $0xb98] sm:$0xff]
    %v4520 = vld [vmem:[%s4147 + $0xba0] sm:$0xff]
    %v4521 = vld [vmem:[%s4147 + $0xba8] sm:$0xff]
    %v4522 = vld [vmem:[%s4147 + $0xbb0] sm:$0xff]
    %v4523 = vld [vmem:[%s4147 + $0xbb8] sm:$0xff]
    %v4524 = vld [vmem:[%s4147 + $0xbc0] sm:$0xff]
    %v4525 = vld [vmem:[%s4147 + $0xbc8] sm:$0xff]
    %v4526 = vld [vmem:[%s4147 + $0xbd0] sm:$0xff]
    %v4527 = vld [vmem:[%s4147 + $0xbd8] sm:$0xff]
    %v4528 = vld [vmem:[%s4147 + $0xbe0] sm:$0xff]
    %v4529 = vld [vmem:[%s4147 + $0xbe8] sm:$0xff]
    %v4530 = vld [vmem:[%s4147 + $0xbf0] sm:$0xff]
    %v4531 = vld [vmem:[%s4147 + $0xbf8] sm:$0xff]
    %v4532 = vld [vmem:[%s4147 + $0xc00] sm:$0xff]
    %v4533 = vld [vmem:[%s4147 + $0xc08] sm:$0xff]
    %v4534 = vld [vmem:[%s4147 + $0xc10] sm:$0xff]
    %v4535 = vld [vmem:[%s4147 + $0xc18] sm:$0xff]
    %v4536 = vld [vmem:[%s4147 + $0xc20] sm:$0xff]
    %v4537 = vld [vmem:[%s4147 + $0xc28] sm:$0xff]
    %v4538 = vld [vmem:[%s4147 + $0xc30] sm:$0xff]
    %v4539 = vld [vmem:[%s4147 + $0xc38] sm:$0xff]
    %v4540 = vld [vmem:[%s4147 + $0xc40] sm:$0xff]
    %v4541 = vld [vmem:[%s4147 + $0xc48] sm:$0xff]
    %v4542 = vld [vmem:[%s4147 + $0xc50] sm:$0xff]
    %v4543 = vld [vmem:[%s4147 + $0xc58] sm:$0xff]
    %v4544 = vld [vmem:[%s4147 + $0xc60] sm:$0xff]
    %v4545 = vld [vmem:[%s4147 + $0xc68] sm:$0xff]
    %v4546 = vld [vmem:[%s4147 + $0xc70] sm:$0xff]
    %v4547 = vld [vmem:[%s4147 + $0xc78] sm:$0xff]
    %v4548 = vld [vmem:[%s4147 + $0xc80] sm:$0xff]
    %v4549 = vld [vmem:[%s4147 + $0xc88] sm:$0xff]
    %v4550 = vld [vmem:[%s4147 + $0xc90] sm:$0xff]
    %v4551 = vld [vmem:[%s4147 + $0xc98] sm:$0xff]
    %v4552 = vld [vmem:[%s4147 + $0xca0] sm:$0xff]
    %v4553 = vld [vmem:[%s4147 + $0xca8] sm:$0xff]
    %v4554 = vld [vmem:[%s4147 + $0xcb0] sm:$0xff]
    %v4555 = vld [vmem:[%s4147 + $0xcb8] sm:$0xff]
    %v4556 = vld [vmem:[%s4147 + $0xcc0] sm:$0xff]
    %v4557 = vld [vmem:[%s4147 + $0xcc8] sm:$0xff]
    %v4558 = vld [vmem:[%s4147 + $0xcd0] sm:$0xff]
    %v4559 = vld [vmem:[%s4147 + $0xcd8] sm:$0xff]
    %v4560 = vld [vmem:[%s4147 + $0xce0] sm:$0xff]
    %v4561 = vld [vmem:[%s4147 + $0xce8] sm:$0xff]
    %v4562 = vld [vmem:[%s4147 + $0xcf0] sm:$0xff]
    %v4563 = vld [vmem:[%s4147 + $0xcf8] sm:$0xff]
    %v4564 = vld [vmem:[%s4147 + $0xd00] sm:$0xff]
    %v4565 = vld [vmem:[%s4147 + $0xd08] sm:$0xff]
    %v4566 = vld [vmem:[%s4147 + $0xd10] sm:$0xff]
    %v4567 = vld [vmem:[%s4147 + $0xd18] sm:$0xff]
    %v4568 = vld [vmem:[%s4147 + $0xd20] sm:$0xff]
    %v4569 = vld [vmem:[%s4147 + $0xd28] sm:$0xff]
    %v4570 = vld [vmem:[%s4147 + $0xd30] sm:$0xff]
    %v4571 = vld [vmem:[%s4147 + $0xd38] sm:$0xff]
    %v4572 = vld [vmem:[%s4147 + $0xd40] sm:$0xff]
    %v4573 = vld [vmem:[%s4147 + $0xd48] sm:$0xff]
    %v4574 = vld [vmem:[%s4147 + $0xd50] sm:$0xff]
    %v4575 = vld [vmem:[%s4147 + $0xd58] sm:$0xff]
    %v4576 = vld [vmem:[%s4147 + $0xd60] sm:$0xff]
    %v4577 = vld [vmem:[%s4147 + $0xd68] sm:$0xff]
    %v4578 = vld [vmem:[%s4147 + $0xd70] sm:$0xff]
    %v4579 = vld [vmem:[%s4147 + $0xd78] sm:$0xff]
    %v4580 = vld [vmem:[%s4147 + $0xd80] sm:$0xff]
    %v4581 = vld [vmem:[%s4147 + $0xd88] sm:$0xff]
    %v4582 = vld [vmem:[%s4147 + $0xd90] sm:$0xff]
    %v4583 = vld [vmem:[%s4147 + $0xd98] sm:$0xff]
    %v4584 = vld [vmem:[%s4147 + $0xda0] sm:$0xff]
    %v4585 = vld [vmem:[%s4147 + $0xda8] sm:$0xff]
    %v4586 = vld [vmem:[%s4147 + $0xdb0] sm:$0xff]
    %v4587 = vld [vmem:[%s4147 + $0xdb8] sm:$0xff]
    %v4588 = vld [vmem:[%s4147 + $0xdc0] sm:$0xff]
    %v4589 = vld [vmem:[%s4147 + $0xdc8] sm:$0xff]
    %v4590 = vld [vmem:[%s4147 + $0xdd0] sm:$0xff]
    %v4591 = vld [vmem:[%s4147 + $0xdd8] sm:$0xff]
    %v4592 = vld [vmem:[%s4147 + $0xde0] sm:$0xff]
    %v4593 = vld [vmem:[%s4147 + $0xde8] sm:$0xff]
    %v4594 = vld [vmem:[%s4147 + $0xdf0] sm:$0xff]
    %v4595 = vld [vmem:[%s4147 + $0xdf8] sm:$0xff]
    %v4596 = vld [vmem:[%s4147 + $0xe00] sm:$0xff]
    %v4597 = vld [vmem:[%s4147 + $0xe08] sm:$0xff]
    %v4598 = vld [vmem:[%s4147 + $0xe10] sm:$0xff]
    %v4599 = vld [vmem:[%s4147 + $0xe18] sm:$0xff]
    %v4600 = vld [vmem:[%s4147 + $0xe20] sm:$0xff]
    %v4601 = vld [vmem:[%s4147 + $0xe28] sm:$0xff]
    %v4602 = vld [vmem:[%s4147 + $0xe30] sm:$0xff]
    %v4603 = vld [vmem:[%s4147 + $0xe38] sm:$0xff]
    %v4604 = vld [vmem:[%s4147 + $0xe40] sm:$0xff]
    %v4605 = vld [vmem:[%s4147 + $0xe48] sm:$0xff]
    %v4606 = vld [vmem:[%s4147 + $0xe50] sm:$0xff]
    %v4607 = vld [vmem:[%s4147 + $0xe58] sm:$0xff]
    %v4608 = vld [vmem:[%s4147 + $0xe60] sm:$0xff]
    %v4609 = vld [vmem:[%s4147 + $0xe68] sm:$0xff]
    %v4610 = vld [vmem:[%s4147 + $0xe70] sm:$0xff]
    %v4611 = vld [vmem:[%s4147 + $0xe78] sm:$0xff]
    %v4612 = vld [vmem:[%s4147 + $0xe80] sm:$0xff]
    %v4613 = vld [vmem:[%s4147 + $0xe88] sm:$0xff]
    %v4614 = vld [vmem:[%s4147 + $0xe90] sm:$0xff]
    %v4615 = vld [vmem:[%s4147 + $0xe98] sm:$0xff]
    %v4616 = vld [vmem:[%s4147 + $0xea0] sm:$0xff]
    %v4617 = vld [vmem:[%s4147 + $0xea8] sm:$0xff]
    %v4618 = vld [vmem:[%s4147 + $0xeb0] sm:$0xff]
    %v4619 = vld [vmem:[%s4147 + $0xeb8] sm:$0xff]
    %v4620 = vld [vmem:[%s4147 + $0xec0] sm:$0xff]
    %v4621 = vld [vmem:[%s4147 + $0xec8] sm:$0xff]
    %v4622 = vld [vmem:[%s4147 + $0xed0] sm:$0xff]
    %v4623 = vld [vmem:[%s4147 + $0xed8] sm:$0xff]
    %v4624 = vld [vmem:[%s4147 + $0xee0] sm:$0xff]
    %v4625 = vld [vmem:[%s4147 + $0xee8] sm:$0xff]
    %v4626 = vld [vmem:[%s4147 + $0xef0] sm:$0xff]
    %v4627 = vld [vmem:[%s4147 + $0xef8] sm:$0xff]
    %v4628 = vld [vmem:[%s4147 + $0xf00] sm:$0xff]
    %v4629 = vld [vmem:[%s4147 + $0xf08] sm:$0xff]
    %v4630 = vld [vmem:[%s4147 + $0xf10] sm:$0xff]
    %v4631 = vld [vmem:[%s4147 + $0xf18] sm:$0xff]
    %v4632 = vld [vmem:[%s4147 + $0xf20] sm:$0xff]
    %v4633 = vld [vmem:[%s4147 + $0xf28] sm:$0xff]
    %v4634 = vld [vmem:[%s4147 + $0xf30] sm:$0xff]
    %v4635 = vld [vmem:[%s4147 + $0xf38] sm:$0xff]
    %v4636 = vld [vmem:[%s4147 + $0xf40] sm:$0xff]
    %v4637 = vld [vmem:[%s4147 + $0xf48] sm:$0xff]
    %v4638 = vld [vmem:[%s4147 + $0xf50] sm:$0xff]
    %v4639 = vld [vmem:[%s4147 + $0xf58] sm:$0xff]
    %v4640 = vld [vmem:[%s4147 + $0xf60] sm:$0xff]
    %v4641 = vld [vmem:[%s4147 + $0xf68] sm:$0xff]
    %v4642 = vld [vmem:[%s4147 + $0xf70] sm:$0xff]
    %v4643 = vld [vmem:[%s4147 + $0xf78] sm:$0xff]
    %v4644 = vld [vmem:[%s4147 + $0xf80] sm:$0xff]
    %v4645 = vld [vmem:[%s4147 + $0xf88] sm:$0xff]
    %v4646 = vld [vmem:[%s4147 + $0xf90] sm:$0xff]
    %v4647 = vld [vmem:[%s4147 + $0xf98] sm:$0xff]
    %v4648 = vld [vmem:[%s4147 + $0xfa0] sm:$0xff]
    %v4649 = vld [vmem:[%s4147 + $0xfa8] sm:$0xff]
    %v4650 = vld [vmem:[%s4147 + $0xfb0] sm:$0xff]
    %v4651 = vld [vmem:[%s4147 + $0xfb8] sm:$0xff]
    %v4652 = vld [vmem:[%s4147 + $0xfc0] sm:$0xff]
    %v4653 = vld [vmem:[%s4147 + $0xfc8] sm:$0xff]
    %v4654 = vld [vmem:[%s4147 + $0xfd0] sm:$0xff]
    %v4655 = vld [vmem:[%s4147 + $0xfd8] sm:$0xff]
    %v4656 = vld [vmem:[%s4147 + $0xfe0] sm:$0xff]
    %v4657 = vld [vmem:[%s4147 + $0xfe8] sm:$0xff]
    %v4658 = vld [vmem:[%s4147 + $0xff0] sm:$0xff]
    %v4659 = vld [vmem:[%s4147 + $0xff8] sm:$0xff]
    %v4660 = vld [vmem:[%s4147 + $0x1000] sm:$0xff]
    %v4661 = vld [vmem:[%s4147 + $0x1008] sm:$0xff]
    %v4662 = vld [vmem:[%s4147 + $0x1010] sm:$0xff]
    %v4663 = vld [vmem:[%s4147 + $0x1018] sm:$0xff]
    %v4664 = vld [vmem:[%s4147 + $0x1020] sm:$0xff]
    %v4665 = vld [vmem:[%s4147 + $0x1028] sm:$0xff]
    %v4666 = vld [vmem:[%s4147 + $0x1030] sm:$0xff]
    %v4667 = vld [vmem:[%s4147 + $0x1038] sm:$0xff]
    %v4668 = vld [vmem:[%s4147 + $0x1040] sm:$0xff]
    %v4669 = vld [vmem:[%s4147 + $0x1048] sm:$0xff]
    %v4670 = vld [vmem:[%s4147 + $0x1050] sm:$0xff]
    %v4671 = vld [vmem:[%s4147 + $0x1058] sm:$0xff]
    %v4672 = vld [vmem:[%s4147 + $0x1060] sm:$0xff]
    %v4673 = vld [vmem:[%s4147 + $0x1068] sm:$0xff]
    %v4674 = vld [vmem:[%s4147 + $0x1070] sm:$0xff]
    %v4675 = vld [vmem:[%s4147 + $0x1078] sm:$0xff]
    %v4676 = vld [vmem:[%s4147 + $0x1080] sm:$0xff]
    %v4677 = vld [vmem:[%s4147 + $0x1088] sm:$0xff]
    %v4678 = vld [vmem:[%s4147 + $0x1090] sm:$0xff]
    %v4679 = vld [vmem:[%s4147 + $0x1098] sm:$0xff]
    %v4680 = vld [vmem:[%s4147 + $0x10a0] sm:$0xff]
    %v4681 = vld [vmem:[%s4147 + $0x10a8] sm:$0xff]
    %v4682 = vld [vmem:[%s4147 + $0x10b0] sm:$0xff]
    %v4683 = vld [vmem:[%s4147 + $0x10b8] sm:$0xff]
    %v4684 = vld [vmem:[%s4147 + $0x10c0] sm:$0xff]
    %v4685 = vld [vmem:[%s4147 + $0x10c8] sm:$0xff]
    %v4686 = vld [vmem:[%s4147 + $0x10d0] sm:$0xff]
    %v4687 = vld [vmem:[%s4147 + $0x10d8] sm:$0xff]
    %v4688 = vld [vmem:[%s4147 + $0x10e0] sm:$0xff]
    %v4689 = vld [vmem:[%s4147 + $0x10e8] sm:$0xff]
    %v4690 = vld [vmem:[%s4147 + $0x10f0] sm:$0xff]
    %v4691 = vld [vmem:[%s4147 + $0x10f8] sm:$0xff]
    %v4692 = vld [vmem:[%s4147 + $0x1100] sm:$0xff]
    %v4693 = vld [vmem:[%s4147 + $0x1108] sm:$0xff]
    %v4694 = vld [vmem:[%s4147 + $0x1110] sm:$0xff]
    %v4695 = vld [vmem:[%s4147 + $0x1118] sm:$0xff]
    %v4696 = vld [vmem:[%s4147 + $0x1120] sm:$0xff]
    %v4697 = vld [vmem:[%s4147 + $0x1128] sm:$0xff]
    %v4698 = vld [vmem:[%s4147 + $0x1130] sm:$0xff]
    %v4699 = vld [vmem:[%s4147 + $0x1138] sm:$0xff]
    %v4700 = vld [vmem:[%s4147 + $0x1140] sm:$0xff]
    %v4701 = vld [vmem:[%s4147 + $0x1148] sm:$0xff]
    %v4702 = vld [vmem:[%s4147 + $0x1150] sm:$0xff]
    %v4703 = vld [vmem:[%s4147 + $0x1158] sm:$0xff]
    %v4704 = vld [vmem:[%s4147 + $0x1160] sm:$0xff]
    %v4705 = vld [vmem:[%s4147 + $0x1168] sm:$0xff]
    %v4706 = vld [vmem:[%s4147 + $0x1170] sm:$0xff]
    %v4707 = vld [vmem:[%s4147 + $0x1178] sm:$0xff]
    %v4708 = vld [vmem:[%s4147 + $0x1180] sm:$0xff]
    %v4709 = vld [vmem:[%s4147 + $0x1188] sm:$0xff]
    %v4710 = vld [vmem:[%s4147 + $0x1190] sm:$0xff]
    %v4711 = vld [vmem:[%s4147 + $0x1198] sm:$0xff]
    %v4712 = vld [vmem:[%s4147 + $0x11a0] sm:$0xff]
    %v4713 = vld [vmem:[%s4147 + $0x11a8] sm:$0xff]
    %v4714 = vld [vmem:[%s4147 + $0x11b0] sm:$0xff]
    %v4715 = vld [vmem:[%s4147 + $0x11b8] sm:$0xff]
    %v4716 = vld [vmem:[%s4147 + $0x11c0] sm:$0xff]
    %v4717 = vld [vmem:[%s4147 + $0x11c8] sm:$0xff]
    %v4718 = vld [vmem:[%s4147 + $0x11d0] sm:$0xff]
    %v4719 = vld [vmem:[%s4147 + $0x11d8] sm:$0xff]
    %v4720 = vld [vmem:[%s4147 + $0x11e0] sm:$0xff]
    %v4721 = vld [vmem:[%s4147 + $0x11e8] sm:$0xff]
    %v4722 = vld [vmem:[%s4147 + $0x11f0] sm:$0xff]
    %v4723 = vld [vmem:[%s4147 + $0x11f8] sm:$0xff]
    %v4724 = vld [vmem:[%s4147 + $0x1200] sm:$0xff]
    %v4725 = vld [vmem:[%s4147 + $0x1208] sm:$0xff]
    %v4726 = vld [vmem:[%s4147 + $0x1210] sm:$0xff]
    %v4727 = vld [vmem:[%s4147 + $0x1218] sm:$0xff]
    %v4728 = vld [vmem:[%s4147 + $0x1220] sm:$0xff]
    %v4729 = vld [vmem:[%s4147 + $0x1228] sm:$0xff]
    %v4730 = vld [vmem:[%s4147 + $0x1230] sm:$0xff]
    %v4731 = vld [vmem:[%s4147 + $0x1238] sm:$0xff]
    %v4732 = vld [vmem:[%s4147 + $0x1240] sm:$0xff]
    %v4733 = vld [vmem:[%s4147 + $0x1248] sm:$0xff]
    %v4734 = vld [vmem:[%s4147 + $0x1250] sm:$0xff]
    %v4735 = vld [vmem:[%s4147 + $0x1258] sm:$0xff]
    %v4736 = vld [vmem:[%s4147 + $0x1260] sm:$0xff]
    %v4737 = vld [vmem:[%s4147 + $0x1268] sm:$0xff]
    %v4738 = vld [vmem:[%s4147 + $0x1270] sm:$0xff]
    %v4739 = vld [vmem:[%s4147 + $0x1278] sm:$0xff]
    %v4740 = vld [vmem:[%s4147 + $0x1280] sm:$0xff]
    %v4741 = vld [vmem:[%s4147 + $0x1288] sm:$0xff]
    %v4742 = vld [vmem:[%s4147 + $0x1290] sm:$0xff]
    %v4743 = vld [vmem:[%s4147 + $0x1298] sm:$0xff]
    %v4744 = vld [vmem:[%s4147 + $0x12a0] sm:$0xff]
    %v4745 = vld [vmem:[%s4147 + $0x12a8] sm:$0xff]
    %v4746 = vld [vmem:[%s4147 + $0x12b0] sm:$0xff]
    %v4747 = vld [vmem:[%s4147 + $0x12b8] sm:$0xff]
    %v4748 = vld [vmem:[%s4147 + $0x12c0] sm:$0xff]
    %v4749 = vld [vmem:[%s4147 + $0x12c8] sm:$0xff]
    %v4750 = vld [vmem:[%s4147 + $0x12d0] sm:$0xff]
    %v4751 = vld [vmem:[%s4147 + $0x12d8] sm:$0xff]
    %v4752 = vld [vmem:[%s4147 + $0x12e0] sm:$0xff]
    %v4753 = vld [vmem:[%s4147 + $0x12e8] sm:$0xff]
    %v4754 = vld [vmem:[%s4147 + $0x12f0] sm:$0xff]
    %v4755 = vld [vmem:[%s4147 + $0x12f8] sm:$0xff]
    %v4756 = vld [vmem:[%s4147 + $0x1300] sm:$0xff]
    %v4757 = vld [vmem:[%s4147 + $0x1308] sm:$0xff]
    %v4758 = vld [vmem:[%s4147 + $0x1310] sm:$0xff]
    %v4759 = vld [vmem:[%s4147 + $0x1318] sm:$0xff]
    %v4760 = vld [vmem:[%s4147 + $0x1320] sm:$0xff]
    %v4761 = vld [vmem:[%s4147 + $0x1328] sm:$0xff]
    %v4762 = vld [vmem:[%s4147 + $0x1330] sm:$0xff]
    %v4763 = vld [vmem:[%s4147 + $0x1338] sm:$0xff]
    %v4764 = vld [vmem:[%s4147 + $0x1340] sm:$0xff]
    %v4765 = vld [vmem:[%s4147 + $0x1348] sm:$0xff]
    %v4766 = vld [vmem:[%s4147 + $0x1350] sm:$0xff]
    %v4767 = vld [vmem:[%s4147 + $0x1358] sm:$0xff]
    %v4768 = vld [vmem:[%s4147 + $0x1360] sm:$0xff]
    %v4769 = vld [vmem:[%s4147 + $0x1368] sm:$0xff]
    %v4770 = vld [vmem:[%s4147 + $0x1370] sm:$0xff]
    %v4771 = vld [vmem:[%s4147 + $0x1378] sm:$0xff]
    %v4772 = vld [vmem:[%s4147 + $0x1380] sm:$0xff]
    %v4773 = vld [vmem:[%s4147 + $0x1388] sm:$0xff]
    %v4774 = vld [vmem:[%s4147 + $0x1390] sm:$0xff]
    %v4775 = vld [vmem:[%s4147 + $0x1398] sm:$0xff]
    %v4776 = vld [vmem:[%s4147 + $0x13a0] sm:$0xff]
    %v4777 = vld [vmem:[%s4147 + $0x13a8] sm:$0xff]
    %v4778 = vld [vmem:[%s4147 + $0x13b0] sm:$0xff]
    %v4779 = vld [vmem:[%s4147 + $0x13b8] sm:$0xff]
    %v4780 = vld [vmem:[%s4147 + $0x13c0] sm:$0xff]
    %v4781 = vld [vmem:[%s4147 + $0x13c8] sm:$0xff]
    %v4782 = vld [vmem:[%s4147 + $0x13d0] sm:$0xff]
    %v4783 = vld [vmem:[%s4147 + $0x13d8] sm:$0xff]
    %v4784 = vld [vmem:[%s4147 + $0x13e0] sm:$0xff]
    %v4785 = vld [vmem:[%s4147 + $0x13e8] sm:$0xff]
    %v4786 = vld [vmem:[%s4147 + $0x13f0] sm:$0xff]
    %v4787 = vld [vmem:[%s4147 + $0x13f8] sm:$0xff]
    %v4788 = vld [vmem:[%s4147 + $0x1400] sm:$0xff]
    %v4789 = vld [vmem:[%s4147 + $0x1408] sm:$0xff]
    %v4790 = vld [vmem:[%s4147 + $0x1410] sm:$0xff]
    %v4791 = vld [vmem:[%s4147 + $0x1418] sm:$0xff]
    %v4792 = vld [vmem:[%s4147 + $0x1420] sm:$0xff]
    %v4793 = vld [vmem:[%s4147 + $0x1428] sm:$0xff]
    %v4794 = vld [vmem:[%s4147 + $0x1430] sm:$0xff]
    %v4795 = vld [vmem:[%s4147 + $0x1438] sm:$0xff]
    %v4796 = vld [vmem:[%s4147 + $0x1440] sm:$0xff]
    %v4797 = vld [vmem:[%s4147 + $0x1448] sm:$0xff]
    %v4798 = vld [vmem:[%s4147 + $0x1450] sm:$0xff]
    %v4799 = vld [vmem:[%s4147 + $0x1458] sm:$0xff]
    %v4800 = vld [vmem:[%s4147 + $0x1460] sm:$0xff]
    %v4801 = vld [vmem:[%s4147 + $0x1468] sm:$0xff]
    %v4802 = vld [vmem:[%s4147 + $0x1470] sm:$0xff]
    %v4803 = vld [vmem:[%s4147 + $0x1478] sm:$0xff]
    %v4804 = vld [vmem:[%s4147 + $0x1480] sm:$0xff]
    %v4805 = vld [vmem:[%s4147 + $0x1488] sm:$0xff]
    %v4806 = vld [vmem:[%s4147 + $0x1490] sm:$0xff]
    %v4807 = vld [vmem:[%s4147 + $0x1498] sm:$0xff]
    %v4808 = vld [vmem:[%s4147 + $0x14a0] sm:$0xff]
    %v4809 = vld [vmem:[%s4147 + $0x14a8] sm:$0xff]
    %v4810 = vld [vmem:[%s4147 + $0x14b0] sm:$0xff]
    %v4811 = vld [vmem:[%s4147 + $0x14b8] sm:$0xff]
    %v4812 = vld [vmem:[%s4147 + $0x14c0] sm:$0xff]
    %v4813 = vld [vmem:[%s4147 + $0x14c8] sm:$0xff]
    %v4814 = vld [vmem:[%s4147 + $0x14d0] sm:$0xff]
    %v4815 = vld [vmem:[%s4147 + $0x14d8] sm:$0xff]
    %v4816 = vld [vmem:[%s4147 + $0x14e0] sm:$0xff]
    %v4817 = vld [vmem:[%s4147 + $0x14e8] sm:$0xff]
    %v4818 = vld [vmem:[%s4147 + $0x14f0] sm:$0xff]
    %v4819 = vld [vmem:[%s4147 + $0x14f8] sm:$0xff]
    %v4820 = vld [vmem:[%s4147 + $0x1500] sm:$0xff]
    %v4821 = vld [vmem:[%s4147 + $0x1508] sm:$0xff]
    %v4822 = vld [vmem:[%s4147 + $0x1510] sm:$0xff]
    %v4823 = vld [vmem:[%s4147 + $0x1518] sm:$0xff]
    %v4824 = vld [vmem:[%s4147 + $0x1520] sm:$0xff]
    %v4825 = vld [vmem:[%s4147 + $0x1528] sm:$0xff]
    %v4826 = vld [vmem:[%s4147 + $0x1530] sm:$0xff]
    %v4827 = vld [vmem:[%s4147 + $0x1538] sm:$0xff]
    %v4828 = vld [vmem:[%s4147 + $0x1540] sm:$0xff]
    %v4829 = vld [vmem:[%s4147 + $0x1548] sm:$0xff]
    %v4830 = vld [vmem:[%s4147 + $0x1550] sm:$0xff]
    %v4831 = vld [vmem:[%s4147 + $0x1558] sm:$0xff]
    %v4832 = vld [vmem:[%s4147 + $0x1560] sm:$0xff]
    %v4833 = vld [vmem:[%s4147 + $0x1568] sm:$0xff]
    %v4834 = vld [vmem:[%s4147 + $0x1570] sm:$0xff]
    %v4835 = vld [vmem:[%s4147 + $0x1578] sm:$0xff]
    %v4836 = vld [vmem:[%s4147 + $0x1580] sm:$0xff]
    %v4837 = vld [vmem:[%s4147 + $0x1588] sm:$0xff]
    %v4838 = vld [vmem:[%s4147 + $0x1590] sm:$0xff]
    %v4839 = vld [vmem:[%s4147 + $0x1598] sm:$0xff]
    %v4840 = vld [vmem:[%s4147 + $0x15a0] sm:$0xff]
    %v4841 = vld [vmem:[%s4147 + $0x15a8] sm:$0xff]
    %v4842 = vld [vmem:[%s4147 + $0x15b0] sm:$0xff]
    %v4843 = vld [vmem:[%s4147 + $0x15b8] sm:$0xff]
    %v4844 = vld [vmem:[%s4147 + $0x15c0] sm:$0xff]
    %v4845 = vld [vmem:[%s4147 + $0x15c8] sm:$0xff]
    %v4846 = vld [vmem:[%s4147 + $0x15d0] sm:$0xff]
    %v4847 = vld [vmem:[%s4147 + $0x15d8] sm:$0xff]
    %v4848 = vld [vmem:[%s4147 + $0x15e0] sm:$0xff]
    %v4849 = vld [vmem:[%s4147 + $0x15e8] sm:$0xff]
    %v4850 = vld [vmem:[%s4147 + $0x15f0] sm:$0xff]
    %v4851 = vld [vmem:[%s4147 + $0x15f8] sm:$0xff]
    %v4852 = vld [vmem:[%s4147 + $0x1600] sm:$0xff]
    %v4853 = vld [vmem:[%s4147 + $0x1608] sm:$0xff]
    %v4854 = vld [vmem:[%s4147 + $0x1610] sm:$0xff]
    %v4855 = vld [vmem:[%s4147 + $0x1618] sm:$0xff]
    %v4856 = vld [vmem:[%s4147 + $0x1620] sm:$0xff]
    %v4857 = vld [vmem:[%s4147 + $0x1628] sm:$0xff]
    %v4858 = vld [vmem:[%s4147 + $0x1630] sm:$0xff]
    %v4859 = vld [vmem:[%s4147 + $0x1638] sm:$0xff]
    %v4860 = vld [vmem:[%s4147 + $0x1640] sm:$0xff]
    %v4861 = vld [vmem:[%s4147 + $0x1648] sm:$0xff]
    %v4862 = vld [vmem:[%s4147 + $0x1650] sm:$0xff]
    %v4863 = vld [vmem:[%s4147 + $0x1658] sm:$0xff]
    %v4864 = vld [vmem:[%s4147 + $0x1660] sm:$0xff]
    %v4865 = vld [vmem:[%s4147 + $0x1668] sm:$0xff]
    %v4866 = vld [vmem:[%s4147 + $0x1670] sm:$0xff]
    %v4867 = vld [vmem:[%s4147 + $0x1678] sm:$0xff]
    %v4868 = vld [vmem:[%s4147 + $0x1680] sm:$0xff]
    %v4869 = vld [vmem:[%s4147 + $0x1688] sm:$0xff]
    %v4870 = vld [vmem:[%s4147 + $0x1690] sm:$0xff]
    %v4871 = vld [vmem:[%s4147 + $0x1698] sm:$0xff]
    %v4872 = vld [vmem:[%s4147 + $0x16a0] sm:$0xff]
    %v4873 = vld [vmem:[%s4147 + $0x16a8] sm:$0xff]
    %v4874 = vld [vmem:[%s4147 + $0x16b0] sm:$0xff]
    %v4875 = vld [vmem:[%s4147 + $0x16b8] sm:$0xff]
    %v4876 = vld [vmem:[%s4147 + $0x16c0] sm:$0xff]
    %v4877 = vld [vmem:[%s4147 + $0x16c8] sm:$0xff]
    %v4878 = vld [vmem:[%s4147 + $0x16d0] sm:$0xff]
    %v4879 = vld [vmem:[%s4147 + $0x16d8] sm:$0xff]
    %v4880 = vld [vmem:[%s4147 + $0x16e0] sm:$0xff]
    %v4881 = vld [vmem:[%s4147 + $0x16e8] sm:$0xff]
    %v4882 = vld [vmem:[%s4147 + $0x16f0] sm:$0xff]
    %v4883 = vld [vmem:[%s4147 + $0x16f8] sm:$0xff]
    %v4884 = vld [vmem:[%s4147 + $0x1700] sm:$0xff]
    %v4885 = vld [vmem:[%s4147 + $0x1708] sm:$0xff]
    %v4886 = vld [vmem:[%s4147 + $0x1710] sm:$0xff]
    %v4887 = vld [vmem:[%s4147 + $0x1718] sm:$0xff]
    %v4888 = vld [vmem:[%s4147 + $0x1720] sm:$0xff]
    %v4889 = vld [vmem:[%s4147 + $0x1728] sm:$0xff]
    %v4890 = vld [vmem:[%s4147 + $0x1730] sm:$0xff]
    %v4891 = vld [vmem:[%s4147 + $0x1738] sm:$0xff]
    %v4892 = vld [vmem:[%s4147 + $0x1740] sm:$0xff]
    %v4893 = vld [vmem:[%s4147 + $0x1748] sm:$0xff]
    %v4894 = vld [vmem:[%s4147 + $0x1750] sm:$0xff]
    %v4895 = vld [vmem:[%s4147 + $0x1758] sm:$0xff]
    %v4896 = vld [vmem:[%s4147 + $0x1760] sm:$0xff]
    %v4897 = vld [vmem:[%s4147 + $0x1768] sm:$0xff]
    %v4898 = vld [vmem:[%s4147 + $0x1770] sm:$0xff]
    %v4899 = vld [vmem:[%s4147 + $0x1778] sm:$0xff]
    %v4900 = vld [vmem:[%s4147 + $0x1780] sm:$0xff]
    %v4901 = vld [vmem:[%s4147 + $0x1788] sm:$0xff]
    %v4902 = vld [vmem:[%s4147 + $0x1790] sm:$0xff]
    %v4903 = vld [vmem:[%s4147 + $0x1798] sm:$0xff]
    %v4904 = vld [vmem:[%s4147 + $0x17a0] sm:$0xff]
    %v4905 = vld [vmem:[%s4147 + $0x17a8] sm:$0xff]
    %v4906 = vld [vmem:[%s4147 + $0x17b0] sm:$0xff]
    %v4907 = vld [vmem:[%s4147 + $0x17b8] sm:$0xff]
    %v4908 = vld [vmem:[%s4147 + $0x17c0] sm:$0xff]
    %v4909 = vld [vmem:[%s4147 + $0x17c8] sm:$0xff]
    %v4910 = vld [vmem:[%s4147 + $0x17d0] sm:$0xff]
    %v4911 = vld [vmem:[%s4147 + $0x17d8] sm:$0xff]
    %v4912 = vld [vmem:[%s4147 + $0x17e0] sm:$0xff]
    %v4913 = vld [vmem:[%s4147 + $0x17e8] sm:$0xff]
    %v4914 = vld [vmem:[%s4147 + $0x17f0] sm:$0xff]
    %v4915 = vld [vmem:[%s4147 + $0x17f8] sm:$0xff]
    %s4916 = scalar_lea.vmem %s2, 8
    %v4917 = vld [vmem:[%s4916] sm:$0xf]
    %v4919 = vperm.slane %v4917, 0
    %v4920 = vperm.slane %v4917, 1
    %v4921 = vperm.slane %v4917, 2
    %v4922 = vperm.slane %v4917, 3
    %4927 = vmatpush.msra.mxu0 %v4208
    %4928 = vmatpush.msra.mxu0 %v4204
    %4929 = vmatpush.msra.mxu0 %v4200
    %4930 = vmatpush.msra.mxu0 %v4196
    %4931 = vmatpush.msra.mxu0 %v4192
    %4932 = vmatpush.msra.mxu0 %v4188
    %4933 = vmatpush.msra.mxu0 %v4184
    %4934 = vmatpush.msra.mxu0 %v4180
    %4935 = vmatpush.msra.mxu0 %v4176
    %4936 = vmatpush.msra.mxu0 %v4172
    %4937 = vmatpush.msra.mxu0 %v4168
    %4938 = vmatpush.msra.mxu0 %v4164
    %4939 = vmatpush.msra.mxu0 %v4160
    %4940 = vmatpush.msra.mxu0 %v4156
    %4941 = vmatpush.msra.mxu0 %v4152
    %4942 = vmatpush.msra.mxu0 %v4148
    %4943 = vmatmul.f32.gmra.mxu0 %v1115
    %v4944 = vpop.f32.mrf.mxu0
    %v4945 = vadd.f32 %v4919, %v4944
    %4946 = vdwg.mxu0
    %4947 = vmatpush.msra.mxu0 %v4272
    %4948 = vmatpush.msra.mxu0 %v4268
    %4949 = vmatpush.msra.mxu0 %v4264
    %4950 = vmatpush.msra.mxu0 %v4260
    %4951 = vmatpush.msra.mxu0 %v4256
    %4952 = vmatpush.msra.mxu0 %v4252
    %4953 = vmatpush.msra.mxu0 %v4248
    %4954 = vmatpush.msra.mxu0 %v4244
    %4955 = vmatpush.msra.mxu0 %v4240
    %4956 = vmatpush.msra.mxu0 %v4236
    %4957 = vmatpush.msra.mxu0 %v4232
    %4958 = vmatpush.msra.mxu0 %v4228
    %4959 = vmatpush.msra.mxu0 %v4224
    %4960 = vmatpush.msra.mxu0 %v4220
    %4961 = vmatpush.msra.mxu0 %v4216
    %4962 = vmatpush.msra.mxu0 %v4212
    %4963 = vmatmul.f32.gmra.mxu0 %v1116
    %v4964 = vpop.f32.mrf.mxu0
    %v4965 = vadd.f32 %v4945, %v4964
    %4966 = vdwg.mxu0
    %4967 = vmatpush.msra.mxu0 %v4336
    %4968 = vmatpush.msra.mxu0 %v4332
    %4969 = vmatpush.msra.mxu0 %v4328
    %4970 = vmatpush.msra.mxu0 %v4324
    %4971 = vmatpush.msra.mxu0 %v4320
    %4972 = vmatpush.msra.mxu0 %v4316
    %4973 = vmatpush.msra.mxu0 %v4312
    %4974 = vmatpush.msra.mxu0 %v4308
    %4975 = vmatpush.msra.mxu0 %v4304
    %4976 = vmatpush.msra.mxu0 %v4300
    %4977 = vmatpush.msra.mxu0 %v4296
    %4978 = vmatpush.msra.mxu0 %v4292
    %4979 = vmatpush.msra.mxu0 %v4288
    %4980 = vmatpush.msra.mxu0 %v4284
    %4981 = vmatpush.msra.mxu0 %v4280
    %4982 = vmatpush.msra.mxu0 %v4276
    %4983 = vmatmul.f32.gmra.mxu0 %v1117
    %v4984 = vpop.f32.mrf.mxu0
    %v4985 = vadd.f32 %v4965, %v4984
    %4986 = vdwg.mxu0
    %4987 = vmatpush.msra.mxu0 %v4400
    %4988 = vmatpush.msra.mxu0 %v4396
    %4989 = vmatpush.msra.mxu0 %v4392
    %4990 = vmatpush.msra.mxu0 %v4388
    %4991 = vmatpush.msra.mxu0 %v4384
    %4992 = vmatpush.msra.mxu0 %v4380
    %4993 = vmatpush.msra.mxu0 %v4376
    %4994 = vmatpush.msra.mxu0 %v4372
    %4995 = vmatpush.msra.mxu0 %v4368
    %4996 = vmatpush.msra.mxu0 %v4364
    %4997 = vmatpush.msra.mxu0 %v4360
    %4998 = vmatpush.msra.mxu0 %v4356
    %4999 = vmatpush.msra.mxu0 %v4352
    %5000 = vmatpush.msra.mxu0 %v4348
    %5001 = vmatpush.msra.mxu0 %v4344
    %5002 = vmatpush.msra.mxu0 %v4340
    %5003 = vmatmul.f32.gmra.mxu0 %v1118
    %v5004 = vpop.f32.mrf.mxu0
    %v5005 = vadd.f32 %v4985, %v5004
    %5006 = vdwg.mxu0
    %5007 = vmatpush.msra.mxu0 %v4464
    %5008 = vmatpush.msra.mxu0 %v4460
    %5009 = vmatpush.msra.mxu0 %v4456
    %5010 = vmatpush.msra.mxu0 %v4452
    %5011 = vmatpush.msra.mxu0 %v4448
    %5012 = vmatpush.msra.mxu0 %v4444
    %5013 = vmatpush.msra.mxu0 %v4440
    %5014 = vmatpush.msra.mxu0 %v4436
    %5015 = vmatpush.msra.mxu0 %v4432
    %5016 = vmatpush.msra.mxu0 %v4428
    %5017 = vmatpush.msra.mxu0 %v4424
    %5018 = vmatpush.msra.mxu0 %v4420
    %5019 = vmatpush.msra.mxu0 %v4416
    %5020 = vmatpush.msra.mxu0 %v4412
    %5021 = vmatpush.msra.mxu0 %v4408
    %5022 = vmatpush.msra.mxu0 %v4404
    %5023 = vmatmul.f32.gmra.mxu0 %v1119
    %v5024 = vpop.f32.mrf.mxu0
    %v5025 = vadd.f32 %v5005, %v5024
    %5026 = vdwg.mxu0
    %5027 = vmatpush.msra.mxu0 %v4528
    %5028 = vmatpush.msra.mxu0 %v4524
    %5029 = vmatpush.msra.mxu0 %v4520
    %5030 = vmatpush.msra.mxu0 %v4516
    %5031 = vmatpush.msra.mxu0 %v4512
    %5032 = vmatpush.msra.mxu0 %v4508
    %5033 = vmatpush.msra.mxu0 %v4504
    %5034 = vmatpush.msra.mxu0 %v4500
    %5035 = vmatpush.msra.mxu0 %v4496
    %5036 = vmatpush.msra.mxu0 %v4492
    %5037 = vmatpush.msra.mxu0 %v4488
    %5038 = vmatpush.msra.mxu0 %v4484
    %5039 = vmatpush.msra.mxu0 %v4480
    %5040 = vmatpush.msra.mxu0 %v4476
    %5041 = vmatpush.msra.mxu0 %v4472
    %5042 = vmatpush.msra.mxu0 %v4468
    %5043 = vmatmul.f32.gmra.mxu0 %v1120
    %v5044 = vpop.f32.mrf.mxu0
    %v5045 = vadd.f32 %v5025, %v5044
    %5046 = vdwg.mxu0
    %5047 = vmatpush.msra.mxu0 %v4592
    %5048 = vmatpush.msra.mxu0 %v4588
    %5049 = vmatpush.msra.mxu0 %v4584
    %5050 = vmatpush.msra.mxu0 %v4580
    %5051 = vmatpush.msra.mxu0 %v4576
    %5052 = vmatpush.msra.mxu0 %v4572
    %5053 = vmatpush.msra.mxu0 %v4568
    %5054 = vmatpush.msra.mxu0 %v4564
    %5055 = vmatpush.msra.mxu0 %v4560
    %5056 = vmatpush.msra.mxu0 %v4556
    %5057 = vmatpush.msra.mxu0 %v4552
    %5058 = vmatpush.msra.mxu0 %v4548
    %5059 = vmatpush.msra.mxu0 %v4544
    %5060 = vmatpush.msra.mxu0 %v4540
    %5061 = vmatpush.msra.mxu0 %v4536
    %5062 = vmatpush.msra.mxu0 %v4532
    %5063 = vmatmul.f32.gmra.mxu0 %v1121
    %v5064 = vpop.f32.mrf.mxu0
    %v5065 = vadd.f32 %v5045, %v5064
    %5066 = vdwg.mxu0
    %5067 = vmatpush.msra.mxu0 %v4656
    %5068 = vmatpush.msra.mxu0 %v4652
    %5069 = vmatpush.msra.mxu0 %v4648
    %5070 = vmatpush.msra.mxu0 %v4644
    %5071 = vmatpush.msra.mxu0 %v4640
    %5072 = vmatpush.msra.mxu0 %v4636
    %5073 = vmatpush.msra.mxu0 %v4632
    %5074 = vmatpush.msra.mxu0 %v4628
    %5075 = vmatpush.msra.mxu0 %v4624
    %5076 = vmatpush.msra.mxu0 %v4620
    %5077 = vmatpush.msra.mxu0 %v4616
    %5078 = vmatpush.msra.mxu0 %v4612
    %5079 = vmatpush.msra.mxu0 %v4608
    %5080 = vmatpush.msra.mxu0 %v4604
    %5081 = vmatpush.msra.mxu0 %v4600
    %5082 = vmatpush.msra.mxu0 %v4596
    %5083 = vmatmul.f32.gmra.mxu0 %v1122
    %v5084 = vpop.f32.mrf.mxu0
    %v5085 = vadd.f32 %v5065, %v5084
    %5086 = vdwg.mxu0
    %5087 = vmatpush.msra.mxu0 %v4720
    %5088 = vmatpush.msra.mxu0 %v4716
    %5089 = vmatpush.msra.mxu0 %v4712
    %5090 = vmatpush.msra.mxu0 %v4708
    %5091 = vmatpush.msra.mxu0 %v4704
    %5092 = vmatpush.msra.mxu0 %v4700
    %5093 = vmatpush.msra.mxu0 %v4696
    %5094 = vmatpush.msra.mxu0 %v4692
    %5095 = vmatpush.msra.mxu0 %v4688
    %5096 = vmatpush.msra.mxu0 %v4684
    %5097 = vmatpush.msra.mxu0 %v4680
    %5098 = vmatpush.msra.mxu0 %v4676
    %5099 = vmatpush.msra.mxu0 %v4672
    %5100 = vmatpush.msra.mxu0 %v4668
    %5101 = vmatpush.msra.mxu0 %v4664
    %5102 = vmatpush.msra.mxu0 %v4660
    %5103 = vmatmul.f32.gmra.mxu0 %v1123
    %v5104 = vpop.f32.mrf.mxu0
    %v5105 = vadd.f32 %v5085, %v5104
    %5106 = vdwg.mxu0
    %5107 = vmatpush.msra.mxu0 %v4784
    %5108 = vmatpush.msra.mxu0 %v4780
    %5109 = vmatpush.msra.mxu0 %v4776
    %5110 = vmatpush.msra.mxu0 %v4772
    %5111 = vmatpush.msra.mxu0 %v4768
    %5112 = vmatpush.msra.mxu0 %v4764
    %5113 = vmatpush.msra.mxu0 %v4760
    %5114 = vmatpush.msra.mxu0 %v4756
    %5115 = vmatpush.msra.mxu0 %v4752
    %5116 = vmatpush.msra.mxu0 %v4748
    %5117 = vmatpush.msra.mxu0 %v4744
    %5118 = vmatpush.msra.mxu0 %v4740
    %5119 = vmatpush.msra.mxu0 %v4736
    %5120 = vmatpush.msra.mxu0 %v4732
    %5121 = vmatpush.msra.mxu0 %v4728
    %5122 = vmatpush.msra.mxu0 %v4724
    %5123 = vmatmul.f32.gmra.mxu0 %v1124
    %v5124 = vpop.f32.mrf.mxu0
    %v5125 = vadd.f32 %v5105, %v5124
    %5126 = vdwg.mxu0
    %5127 = vmatpush.msra.mxu0 %v4848
    %5128 = vmatpush.msra.mxu0 %v4844
    %5129 = vmatpush.msra.mxu0 %v4840
    %5130 = vmatpush.msra.mxu0 %v4836
    %5131 = vmatpush.msra.mxu0 %v4832
    %5132 = vmatpush.msra.mxu0 %v4828
    %5133 = vmatpush.msra.mxu0 %v4824
    %5134 = vmatpush.msra.mxu0 %v4820
    %5135 = vmatpush.msra.mxu0 %v4816
    %5136 = vmatpush.msra.mxu0 %v4812
    %5137 = vmatpush.msra.mxu0 %v4808
    %5138 = vmatpush.msra.mxu0 %v4804
    %5139 = vmatpush.msra.mxu0 %v4800
    %5140 = vmatpush.msra.mxu0 %v4796
    %5141 = vmatpush.msra.mxu0 %v4792
    %5142 = vmatpush.msra.mxu0 %v4788
    %5143 = vmatmul.f32.gmra.mxu0 %v1125
    %v5144 = vpop.f32.mrf.mxu0
    %v5145 = vadd.f32 %v5125, %v5144
    %5146 = vdwg.mxu0
    %5147 = vmatpush.msra.mxu0 %v4912
    %5148 = vmatpush.msra.mxu0 %v4908
    %5149 = vmatpush.msra.mxu0 %v4904
    %5150 = vmatpush.msra.mxu0 %v4900
    %5151 = vmatpush.msra.mxu0 %v4896
    %5152 = vmatpush.msra.mxu0 %v4892
    %5153 = vmatpush.msra.mxu0 %v4888
    %5154 = vmatpush.msra.mxu0 %v4884
    %5155 = vmatpush.msra.mxu0 %v4880
    %5156 = vmatpush.msra.mxu0 %v4876
    %5157 = vmatpush.msra.mxu0 %v4872
    %5158 = vmatpush.msra.mxu0 %v4868
    %5159 = vmatpush.msra.mxu0 %v4864
    %5160 = vmatpush.msra.mxu0 %v4860
    %5161 = vmatpush.msra.mxu0 %v4856
    %5162 = vmatpush.msra.mxu0 %v4852
    %5163 = vmatmul.f32.gmra.mxu0 %v1126
    %v5164 = vpop.f32.mrf.mxu0
    %v5165 = vadd.f32 %v5145, %v5164
    %5166 = vdwg.mxu0
    %5167 = vmatpush.msra.mxu0 %v4209
    %5168 = vmatpush.msra.mxu0 %v4205
    %5169 = vmatpush.msra.mxu0 %v4201
    %5170 = vmatpush.msra.mxu0 %v4197
    %5171 = vmatpush.msra.mxu0 %v4193
    %5172 = vmatpush.msra.mxu0 %v4189
    %5173 = vmatpush.msra.mxu0 %v4185
    %5174 = vmatpush.msra.mxu0 %v4181
    %5175 = vmatpush.msra.mxu0 %v4177
    %5176 = vmatpush.msra.mxu0 %v4173
    %5177 = vmatpush.msra.mxu0 %v4169
    %5178 = vmatpush.msra.mxu0 %v4165
    %5179 = vmatpush.msra.mxu0 %v4161
    %5180 = vmatpush.msra.mxu0 %v4157
    %5181 = vmatpush.msra.mxu0 %v4153
    %5182 = vmatpush.msra.mxu0 %v4149
    %5183 = vmatmul.f32.gmra.mxu0 %v1115
    %v5184 = vpop.f32.mrf.mxu0
    %v5185 = vadd.f32 %v4920, %v5184
    %5186 = vdwg.mxu0
    %5187 = vmatpush.msra.mxu0 %v4273
    %5188 = vmatpush.msra.mxu0 %v4269
    %5189 = vmatpush.msra.mxu0 %v4265
    %5190 = vmatpush.msra.mxu0 %v4261
    %5191 = vmatpush.msra.mxu0 %v4257
    %5192 = vmatpush.msra.mxu0 %v4253
    %5193 = vmatpush.msra.mxu0 %v4249
    %5194 = vmatpush.msra.mxu0 %v4245
    %5195 = vmatpush.msra.mxu0 %v4241
    %5196 = vmatpush.msra.mxu0 %v4237
    %5197 = vmatpush.msra.mxu0 %v4233
    %5198 = vmatpush.msra.mxu0 %v4229
    %5199 = vmatpush.msra.mxu0 %v4225
    %5200 = vmatpush.msra.mxu0 %v4221
    %5201 = vmatpush.msra.mxu0 %v4217
    %5202 = vmatpush.msra.mxu0 %v4213
    %5203 = vmatmul.f32.gmra.mxu0 %v1116
    %v5204 = vpop.f32.mrf.mxu0
    %v5205 = vadd.f32 %v5185, %v5204
    %5206 = vdwg.mxu0
    %5207 = vmatpush.msra.mxu0 %v4337
    %5208 = vmatpush.msra.mxu0 %v4333
    %5209 = vmatpush.msra.mxu0 %v4329
    %5210 = vmatpush.msra.mxu0 %v4325
    %5211 = vmatpush.msra.mxu0 %v4321
    %5212 = vmatpush.msra.mxu0 %v4317
    %5213 = vmatpush.msra.mxu0 %v4313
    %5214 = vmatpush.msra.mxu0 %v4309
    %5215 = vmatpush.msra.mxu0 %v4305
    %5216 = vmatpush.msra.mxu0 %v4301
    %5217 = vmatpush.msra.mxu0 %v4297
    %5218 = vmatpush.msra.mxu0 %v4293
    %5219 = vmatpush.msra.mxu0 %v4289
    %5220 = vmatpush.msra.mxu0 %v4285
    %5221 = vmatpush.msra.mxu0 %v4281
    %5222 = vmatpush.msra.mxu0 %v4277
    %5223 = vmatmul.f32.gmra.mxu0 %v1117
    %v5224 = vpop.f32.mrf.mxu0
    %v5225 = vadd.f32 %v5205, %v5224
    %5226 = vdwg.mxu0
    %5227 = vmatpush.msra.mxu0 %v4401
    %5228 = vmatpush.msra.mxu0 %v4397
    %5229 = vmatpush.msra.mxu0 %v4393
    %5230 = vmatpush.msra.mxu0 %v4389
    %5231 = vmatpush.msra.mxu0 %v4385
    %5232 = vmatpush.msra.mxu0 %v4381
    %5233 = vmatpush.msra.mxu0 %v4377
    %5234 = vmatpush.msra.mxu0 %v4373
    %5235 = vmatpush.msra.mxu0 %v4369
    %5236 = vmatpush.msra.mxu0 %v4365
    %5237 = vmatpush.msra.mxu0 %v4361
    %5238 = vmatpush.msra.mxu0 %v4357
    %5239 = vmatpush.msra.mxu0 %v4353
    %5240 = vmatpush.msra.mxu0 %v4349
    %5241 = vmatpush.msra.mxu0 %v4345
    %5242 = vmatpush.msra.mxu0 %v4341
    %5243 = vmatmul.f32.gmra.mxu0 %v1118
    %v5244 = vpop.f32.mrf.mxu0
    %v5245 = vadd.f32 %v5225, %v5244
    %5246 = vdwg.mxu0
    %5247 = vmatpush.msra.mxu0 %v4465
    %5248 = vmatpush.msra.mxu0 %v4461
    %5249 = vmatpush.msra.mxu0 %v4457
    %5250 = vmatpush.msra.mxu0 %v4453
    %5251 = vmatpush.msra.mxu0 %v4449
    %5252 = vmatpush.msra.mxu0 %v4445
    %5253 = vmatpush.msra.mxu0 %v4441
    %5254 = vmatpush.msra.mxu0 %v4437
    %5255 = vmatpush.msra.mxu0 %v4433
    %5256 = vmatpush.msra.mxu0 %v4429
    %5257 = vmatpush.msra.mxu0 %v4425
    %5258 = vmatpush.msra.mxu0 %v4421
    %5259 = vmatpush.msra.mxu0 %v4417
    %5260 = vmatpush.msra.mxu0 %v4413
    %5261 = vmatpush.msra.mxu0 %v4409
    %5262 = vmatpush.msra.mxu0 %v4405
    %5263 = vmatmul.f32.gmra.mxu0 %v1119
    %v5264 = vpop.f32.mrf.mxu0
    %v5265 = vadd.f32 %v5245, %v5264
    %5266 = vdwg.mxu0
    %5267 = vmatpush.msra.mxu0 %v4529
    %5268 = vmatpush.msra.mxu0 %v4525
    %5269 = vmatpush.msra.mxu0 %v4521
    %5270 = vmatpush.msra.mxu0 %v4517
    %5271 = vmatpush.msra.mxu0 %v4513
    %5272 = vmatpush.msra.mxu0 %v4509
    %5273 = vmatpush.msra.mxu0 %v4505
    %5274 = vmatpush.msra.mxu0 %v4501
    %5275 = vmatpush.msra.mxu0 %v4497
    %5276 = vmatpush.msra.mxu0 %v4493
    %5277 = vmatpush.msra.mxu0 %v4489
    %5278 = vmatpush.msra.mxu0 %v4485
    %5279 = vmatpush.msra.mxu0 %v4481
    %5280 = vmatpush.msra.mxu0 %v4477
    %5281 = vmatpush.msra.mxu0 %v4473
    %5282 = vmatpush.msra.mxu0 %v4469
    %5283 = vmatmul.f32.gmra.mxu0 %v1120
    %v5284 = vpop.f32.mrf.mxu0
    %v5285 = vadd.f32 %v5265, %v5284
    %5286 = vdwg.mxu0
    %5287 = vmatpush.msra.mxu0 %v4593
    %5288 = vmatpush.msra.mxu0 %v4589
    %5289 = vmatpush.msra.mxu0 %v4585
    %5290 = vmatpush.msra.mxu0 %v4581
    %5291 = vmatpush.msra.mxu0 %v4577
    %5292 = vmatpush.msra.mxu0 %v4573
    %5293 = vmatpush.msra.mxu0 %v4569
    %5294 = vmatpush.msra.mxu0 %v4565
    %5295 = vmatpush.msra.mxu0 %v4561
    %5296 = vmatpush.msra.mxu0 %v4557
    %5297 = vmatpush.msra.mxu0 %v4553
    %5298 = vmatpush.msra.mxu0 %v4549
    %5299 = vmatpush.msra.mxu0 %v4545
    %5300 = vmatpush.msra.mxu0 %v4541
    %5301 = vmatpush.msra.mxu0 %v4537
    %5302 = vmatpush.msra.mxu0 %v4533
    %5303 = vmatmul.f32.gmra.mxu0 %v1121
    %v5304 = vpop.f32.mrf.mxu0
    %v5305 = vadd.f32 %v5285, %v5304
    %5306 = vdwg.mxu0
    %5307 = vmatpush.msra.mxu0 %v4657
    %5308 = vmatpush.msra.mxu0 %v4653
    %5309 = vmatpush.msra.mxu0 %v4649
    %5310 = vmatpush.msra.mxu0 %v4645
    %5311 = vmatpush.msra.mxu0 %v4641
    %5312 = vmatpush.msra.mxu0 %v4637
    %5313 = vmatpush.msra.mxu0 %v4633
    %5314 = vmatpush.msra.mxu0 %v4629
    %5315 = vmatpush.msra.mxu0 %v4625
    %5316 = vmatpush.msra.mxu0 %v4621
    %5317 = vmatpush.msra.mxu0 %v4617
    %5318 = vmatpush.msra.mxu0 %v4613
    %5319 = vmatpush.msra.mxu0 %v4609
    %5320 = vmatpush.msra.mxu0 %v4605
    %5321 = vmatpush.msra.mxu0 %v4601
    %5322 = vmatpush.msra.mxu0 %v4597
    %5323 = vmatmul.f32.gmra.mxu0 %v1122
    %v5324 = vpop.f32.mrf.mxu0
    %v5325 = vadd.f32 %v5305, %v5324
    %5326 = vdwg.mxu0
    %5327 = vmatpush.msra.mxu0 %v4721
    %5328 = vmatpush.msra.mxu0 %v4717
    %5329 = vmatpush.msra.mxu0 %v4713
    %5330 = vmatpush.msra.mxu0 %v4709
    %5331 = vmatpush.msra.mxu0 %v4705
    %5332 = vmatpush.msra.mxu0 %v4701
    %5333 = vmatpush.msra.mxu0 %v4697
    %5334 = vmatpush.msra.mxu0 %v4693
    %5335 = vmatpush.msra.mxu0 %v4689
    %5336 = vmatpush.msra.mxu0 %v4685
    %5337 = vmatpush.msra.mxu0 %v4681
    %5338 = vmatpush.msra.mxu0 %v4677
    %5339 = vmatpush.msra.mxu0 %v4673
    %5340 = vmatpush.msra.mxu0 %v4669
    %5341 = vmatpush.msra.mxu0 %v4665
    %5342 = vmatpush.msra.mxu0 %v4661
    %5343 = vmatmul.f32.gmra.mxu0 %v1123
    %v5344 = vpop.f32.mrf.mxu0
    %v5345 = vadd.f32 %v5325, %v5344
    %5346 = vdwg.mxu0
    %5347 = vmatpush.msra.mxu0 %v4785
    %5348 = vmatpush.msra.mxu0 %v4781
    %5349 = vmatpush.msra.mxu0 %v4777
    %5350 = vmatpush.msra.mxu0 %v4773
    %5351 = vmatpush.msra.mxu0 %v4769
    %5352 = vmatpush.msra.mxu0 %v4765
    %5353 = vmatpush.msra.mxu0 %v4761
    %5354 = vmatpush.msra.mxu0 %v4757
    %5355 = vmatpush.msra.mxu0 %v4753
    %5356 = vmatpush.msra.mxu0 %v4749
    %5357 = vmatpush.msra.mxu0 %v4745
    %5358 = vmatpush.msra.mxu0 %v4741
    %5359 = vmatpush.msra.mxu0 %v4737
    %5360 = vmatpush.msra.mxu0 %v4733
    %5361 = vmatpush.msra.mxu0 %v4729
    %5362 = vmatpush.msra.mxu0 %v4725
    %5363 = vmatmul.f32.gmra.mxu0 %v1124
    %v5364 = vpop.f32.mrf.mxu0
    %v5365 = vadd.f32 %v5345, %v5364
    %5366 = vdwg.mxu0
    %5367 = vmatpush.msra.mxu0 %v4849
    %5368 = vmatpush.msra.mxu0 %v4845
    %5369 = vmatpush.msra.mxu0 %v4841
    %5370 = vmatpush.msra.mxu0 %v4837
    %5371 = vmatpush.msra.mxu0 %v4833
    %5372 = vmatpush.msra.mxu0 %v4829
    %5373 = vmatpush.msra.mxu0 %v4825
    %5374 = vmatpush.msra.mxu0 %v4821
    %5375 = vmatpush.msra.mxu0 %v4817
    %5376 = vmatpush.msra.mxu0 %v4813
    %5377 = vmatpush.msra.mxu0 %v4809
    %5378 = vmatpush.msra.mxu0 %v4805
    %5379 = vmatpush.msra.mxu0 %v4801
    %5380 = vmatpush.msra.mxu0 %v4797
    %5381 = vmatpush.msra.mxu0 %v4793
    %5382 = vmatpush.msra.mxu0 %v4789
    %5383 = vmatmul.f32.gmra.mxu0 %v1125
    %v5384 = vpop.f32.mrf.mxu0
    %v5385 = vadd.f32 %v5365, %v5384
    %5386 = vdwg.mxu0
    %5387 = vmatpush.msra.mxu0 %v4913
    %5388 = vmatpush.msra.mxu0 %v4909
    %5389 = vmatpush.msra.mxu0 %v4905
    %5390 = vmatpush.msra.mxu0 %v4901
    %5391 = vmatpush.msra.mxu0 %v4897
    %5392 = vmatpush.msra.mxu0 %v4893
    %5393 = vmatpush.msra.mxu0 %v4889
    %5394 = vmatpush.msra.mxu0 %v4885
    %5395 = vmatpush.msra.mxu0 %v4881
    %5396 = vmatpush.msra.mxu0 %v4877
    %5397 = vmatpush.msra.mxu0 %v4873
    %5398 = vmatpush.msra.mxu0 %v4869
    %5399 = vmatpush.msra.mxu0 %v4865
    %5400 = vmatpush.msra.mxu0 %v4861
    %5401 = vmatpush.msra.mxu0 %v4857
    %5402 = vmatpush.msra.mxu0 %v4853
    %5403 = vmatmul.f32.gmra.mxu0 %v1126
    %v5404 = vpop.f32.mrf.mxu0
    %v5405 = vadd.f32 %v5385, %v5404
    %5406 = vdwg.mxu0
    %5407 = vmatpush.msra.mxu0 %v4210
    %5408 = vmatpush.msra.mxu0 %v4206
    %5409 = vmatpush.msra.mxu0 %v4202
    %5410 = vmatpush.msra.mxu0 %v4198
    %5411 = vmatpush.msra.mxu0 %v4194
    %5412 = vmatpush.msra.mxu0 %v4190
    %5413 = vmatpush.msra.mxu0 %v4186
    %5414 = vmatpush.msra.mxu0 %v4182
    %5415 = vmatpush.msra.mxu0 %v4178
    %5416 = vmatpush.msra.mxu0 %v4174
    %5417 = vmatpush.msra.mxu0 %v4170
    %5418 = vmatpush.msra.mxu0 %v4166
    %5419 = vmatpush.msra.mxu0 %v4162
    %5420 = vmatpush.msra.mxu0 %v4158
    %5421 = vmatpush.msra.mxu0 %v4154
    %5422 = vmatpush.msra.mxu0 %v4150
    %5423 = vmatmul.f32.gmra.mxu0 %v1115
    %v5424 = vpop.f32.mrf.mxu0
    %v5425 = vadd.f32 %v4921, %v5424
    %5426 = vdwg.mxu0
    %5427 = vmatpush.msra.mxu0 %v4274
    %5428 = vmatpush.msra.mxu0 %v4270
    %5429 = vmatpush.msra.mxu0 %v4266
    %5430 = vmatpush.msra.mxu0 %v4262
    %5431 = vmatpush.msra.mxu0 %v4258
    %5432 = vmatpush.msra.mxu0 %v4254
    %5433 = vmatpush.msra.mxu0 %v4250
    %5434 = vmatpush.msra.mxu0 %v4246
    %5435 = vmatpush.msra.mxu0 %v4242
    %5436 = vmatpush.msra.mxu0 %v4238
    %5437 = vmatpush.msra.mxu0 %v4234
    %5438 = vmatpush.msra.mxu0 %v4230
    %5439 = vmatpush.msra.mxu0 %v4226
    %5440 = vmatpush.msra.mxu0 %v4222
    %5441 = vmatpush.msra.mxu0 %v4218
    %5442 = vmatpush.msra.mxu0 %v4214
    %5443 = vmatmul.f32.gmra.mxu0 %v1116
    %v5444 = vpop.f32.mrf.mxu0
    %v5445 = vadd.f32 %v5425, %v5444
    %5446 = vdwg.mxu0
    %5447 = vmatpush.msra.mxu0 %v4338
    %5448 = vmatpush.msra.mxu0 %v4334
    %5449 = vmatpush.msra.mxu0 %v4330
    %5450 = vmatpush.msra.mxu0 %v4326
    %5451 = vmatpush.msra.mxu0 %v4322
    %5452 = vmatpush.msra.mxu0 %v4318
    %5453 = vmatpush.msra.mxu0 %v4314
    %5454 = vmatpush.msra.mxu0 %v4310
    %5455 = vmatpush.msra.mxu0 %v4306
    %5456 = vmatpush.msra.mxu0 %v4302
    %5457 = vmatpush.msra.mxu0 %v4298
    %5458 = vmatpush.msra.mxu0 %v4294
    %5459 = vmatpush.msra.mxu0 %v4290
    %5460 = vmatpush.msra.mxu0 %v4286
    %5461 = vmatpush.msra.mxu0 %v4282
    %5462 = vmatpush.msra.mxu0 %v4278
    %5463 = vmatmul.f32.gmra.mxu0 %v1117
    %v5464 = vpop.f32.mrf.mxu0
    %v5465 = vadd.f32 %v5445, %v5464
    %5466 = vdwg.mxu0
    %5467 = vmatpush.msra.mxu0 %v4402
    %5468 = vmatpush.msra.mxu0 %v4398
    %5469 = vmatpush.msra.mxu0 %v4394
    %5470 = vmatpush.msra.mxu0 %v4390
    %5471 = vmatpush.msra.mxu0 %v4386
    %5472 = vmatpush.msra.mxu0 %v4382
    %5473 = vmatpush.msra.mxu0 %v4378
    %5474 = vmatpush.msra.mxu0 %v4374
    %5475 = vmatpush.msra.mxu0 %v4370
    %5476 = vmatpush.msra.mxu0 %v4366
    %5477 = vmatpush.msra.mxu0 %v4362
    %5478 = vmatpush.msra.mxu0 %v4358
    %5479 = vmatpush.msra.mxu0 %v4354
    %5480 = vmatpush.msra.mxu0 %v4350
    %5481 = vmatpush.msra.mxu0 %v4346
    %5482 = vmatpush.msra.mxu0 %v4342
    %5483 = vmatmul.f32.gmra.mxu0 %v1118
    %v5484 = vpop.f32.mrf.mxu0
    %v5485 = vadd.f32 %v5465, %v5484
    %5486 = vdwg.mxu0
    %5487 = vmatpush.msra.mxu0 %v4466
    %5488 = vmatpush.msra.mxu0 %v4462
    %5489 = vmatpush.msra.mxu0 %v4458
    %5490 = vmatpush.msra.mxu0 %v4454
    %5491 = vmatpush.msra.mxu0 %v4450
    %5492 = vmatpush.msra.mxu0 %v4446
    %5493 = vmatpush.msra.mxu0 %v4442
    %5494 = vmatpush.msra.mxu0 %v4438
    %5495 = vmatpush.msra.mxu0 %v4434
    %5496 = vmatpush.msra.mxu0 %v4430
    %5497 = vmatpush.msra.mxu0 %v4426
    %5498 = vmatpush.msra.mxu0 %v4422
    %5499 = vmatpush.msra.mxu0 %v4418
    %5500 = vmatpush.msra.mxu0 %v4414
    %5501 = vmatpush.msra.mxu0 %v4410
    %5502 = vmatpush.msra.mxu0 %v4406
    %5503 = vmatmul.f32.gmra.mxu0 %v1119
    %v5504 = vpop.f32.mrf.mxu0
    %v5505 = vadd.f32 %v5485, %v5504
    %5506 = vdwg.mxu0
    %5507 = vmatpush.msra.mxu0 %v4530
    %5508 = vmatpush.msra.mxu0 %v4526
    %5509 = vmatpush.msra.mxu0 %v4522
    %5510 = vmatpush.msra.mxu0 %v4518
    %5511 = vmatpush.msra.mxu0 %v4514
    %5512 = vmatpush.msra.mxu0 %v4510
    %5513 = vmatpush.msra.mxu0 %v4506
    %5514 = vmatpush.msra.mxu0 %v4502
    %5515 = vmatpush.msra.mxu0 %v4498
    %5516 = vmatpush.msra.mxu0 %v4494
    %5517 = vmatpush.msra.mxu0 %v4490
    %5518 = vmatpush.msra.mxu0 %v4486
    %5519 = vmatpush.msra.mxu0 %v4482
    %5520 = vmatpush.msra.mxu0 %v4478
    %5521 = vmatpush.msra.mxu0 %v4474
    %5522 = vmatpush.msra.mxu0 %v4470
    %5523 = vmatmul.f32.gmra.mxu0 %v1120
    %v5524 = vpop.f32.mrf.mxu0
    %v5525 = vadd.f32 %v5505, %v5524
    %5526 = vdwg.mxu0
    %5527 = vmatpush.msra.mxu0 %v4594
    %5528 = vmatpush.msra.mxu0 %v4590
    %5529 = vmatpush.msra.mxu0 %v4586
    %5530 = vmatpush.msra.mxu0 %v4582
    %5531 = vmatpush.msra.mxu0 %v4578
    %5532 = vmatpush.msra.mxu0 %v4574
    %5533 = vmatpush.msra.mxu0 %v4570
    %5534 = vmatpush.msra.mxu0 %v4566
    %5535 = vmatpush.msra.mxu0 %v4562
    %5536 = vmatpush.msra.mxu0 %v4558
    %5537 = vmatpush.msra.mxu0 %v4554
    %5538 = vmatpush.msra.mxu0 %v4550
    %5539 = vmatpush.msra.mxu0 %v4546
    %5540 = vmatpush.msra.mxu0 %v4542
    %5541 = vmatpush.msra.mxu0 %v4538
    %5542 = vmatpush.msra.mxu0 %v4534
    %5543 = vmatmul.f32.gmra.mxu0 %v1121
    %v5544 = vpop.f32.mrf.mxu0
    %v5545 = vadd.f32 %v5525, %v5544
    %5546 = vdwg.mxu0
    %5547 = vmatpush.msra.mxu0 %v4658
    %5548 = vmatpush.msra.mxu0 %v4654
    %5549 = vmatpush.msra.mxu0 %v4650
    %5550 = vmatpush.msra.mxu0 %v4646
    %5551 = vmatpush.msra.mxu0 %v4642
    %5552 = vmatpush.msra.mxu0 %v4638
    %5553 = vmatpush.msra.mxu0 %v4634
    %5554 = vmatpush.msra.mxu0 %v4630
    %5555 = vmatpush.msra.mxu0 %v4626
    %5556 = vmatpush.msra.mxu0 %v4622
    %5557 = vmatpush.msra.mxu0 %v4618
    %5558 = vmatpush.msra.mxu0 %v4614
    %5559 = vmatpush.msra.mxu0 %v4610
    %5560 = vmatpush.msra.mxu0 %v4606
    %5561 = vmatpush.msra.mxu0 %v4602
    %5562 = vmatpush.msra.mxu0 %v4598
    %5563 = vmatmul.f32.gmra.mxu0 %v1122
    %v5564 = vpop.f32.mrf.mxu0
    %v5565 = vadd.f32 %v5545, %v5564
    %5566 = vdwg.mxu0
    %5567 = vmatpush.msra.mxu0 %v4722
    %5568 = vmatpush.msra.mxu0 %v4718
    %5569 = vmatpush.msra.mxu0 %v4714
    %5570 = vmatpush.msra.mxu0 %v4710
    %5571 = vmatpush.msra.mxu0 %v4706
    %5572 = vmatpush.msra.mxu0 %v4702
    %5573 = vmatpush.msra.mxu0 %v4698
    %5574 = vmatpush.msra.mxu0 %v4694
    %5575 = vmatpush.msra.mxu0 %v4690
    %5576 = vmatpush.msra.mxu0 %v4686
    %5577 = vmatpush.msra.mxu0 %v4682
    %5578 = vmatpush.msra.mxu0 %v4678
    %5579 = vmatpush.msra.mxu0 %v4674
    %5580 = vmatpush.msra.mxu0 %v4670
    %5581 = vmatpush.msra.mxu0 %v4666
    %5582 = vmatpush.msra.mxu0 %v4662
    %5583 = vmatmul.f32.gmra.mxu0 %v1123
    %v5584 = vpop.f32.mrf.mxu0
    %v5585 = vadd.f32 %v5565, %v5584
    %5586 = vdwg.mxu0
    %5587 = vmatpush.msra.mxu0 %v4786
    %5588 = vmatpush.msra.mxu0 %v4782
    %5589 = vmatpush.msra.mxu0 %v4778
    %5590 = vmatpush.msra.mxu0 %v4774
    %5591 = vmatpush.msra.mxu0 %v4770
    %5592 = vmatpush.msra.mxu0 %v4766
    %5593 = vmatpush.msra.mxu0 %v4762
    %5594 = vmatpush.msra.mxu0 %v4758
    %5595 = vmatpush.msra.mxu0 %v4754
    %5596 = vmatpush.msra.mxu0 %v4750
    %5597 = vmatpush.msra.mxu0 %v4746
    %5598 = vmatpush.msra.mxu0 %v4742
    %5599 = vmatpush.msra.mxu0 %v4738
    %5600 = vmatpush.msra.mxu0 %v4734
    %5601 = vmatpush.msra.mxu0 %v4730
    %5602 = vmatpush.msra.mxu0 %v4726
    %5603 = vmatmul.f32.gmra.mxu0 %v1124
    %v5604 = vpop.f32.mrf.mxu0
    %v5605 = vadd.f32 %v5585, %v5604
    %5606 = vdwg.mxu0
    %5607 = vmatpush.msra.mxu0 %v4850
    %5608 = vmatpush.msra.mxu0 %v4846
    %5609 = vmatpush.msra.mxu0 %v4842
    %5610 = vmatpush.msra.mxu0 %v4838
    %5611 = vmatpush.msra.mxu0 %v4834
    %5612 = vmatpush.msra.mxu0 %v4830
    %5613 = vmatpush.msra.mxu0 %v4826
    %5614 = vmatpush.msra.mxu0 %v4822
    %5615 = vmatpush.msra.mxu0 %v4818
    %5616 = vmatpush.msra.mxu0 %v4814
    %5617 = vmatpush.msra.mxu0 %v4810
    %5618 = vmatpush.msra.mxu0 %v4806
    %5619 = vmatpush.msra.mxu0 %v4802
    %5620 = vmatpush.msra.mxu0 %v4798
    %5621 = vmatpush.msra.mxu0 %v4794
    %5622 = vmatpush.msra.mxu0 %v4790
    %5623 = vmatmul.f32.gmra.mxu0 %v1125
    %v5624 = vpop.f32.mrf.mxu0
    %v5625 = vadd.f32 %v5605, %v5624
    %5626 = vdwg.mxu0
    %5627 = vmatpush.msra.mxu0 %v4914
    %5628 = vmatpush.msra.mxu0 %v4910
    %5629 = vmatpush.msra.mxu0 %v4906
    %5630 = vmatpush.msra.mxu0 %v4902
    %5631 = vmatpush.msra.mxu0 %v4898
    %5632 = vmatpush.msra.mxu0 %v4894
    %5633 = vmatpush.msra.mxu0 %v4890
    %5634 = vmatpush.msra.mxu0 %v4886
    %5635 = vmatpush.msra.mxu0 %v4882
    %5636 = vmatpush.msra.mxu0 %v4878
    %5637 = vmatpush.msra.mxu0 %v4874
    %5638 = vmatpush.msra.mxu0 %v4870
    %5639 = vmatpush.msra.mxu0 %v4866
    %5640 = vmatpush.msra.mxu0 %v4862
    %5641 = vmatpush.msra.mxu0 %v4858
    %5642 = vmatpush.msra.mxu0 %v4854
    %5643 = vmatmul.f32.gmra.mxu0 %v1126
    %v5644 = vpop.f32.mrf.mxu0
    %v5645 = vadd.f32 %v5625, %v5644
    %5646 = vdwg.mxu0
    %5647 = vmatpush.msra.mxu0 %v4211
    %5648 = vmatpush.msra.mxu0 %v4207
    %5649 = vmatpush.msra.mxu0 %v4203
    %5650 = vmatpush.msra.mxu0 %v4199
    %5651 = vmatpush.msra.mxu0 %v4195
    %5652 = vmatpush.msra.mxu0 %v4191
    %5653 = vmatpush.msra.mxu0 %v4187
    %5654 = vmatpush.msra.mxu0 %v4183
    %5655 = vmatpush.msra.mxu0 %v4179
    %5656 = vmatpush.msra.mxu0 %v4175
    %5657 = vmatpush.msra.mxu0 %v4171
    %5658 = vmatpush.msra.mxu0 %v4167
    %5659 = vmatpush.msra.mxu0 %v4163
    %5660 = vmatpush.msra.mxu0 %v4159
    %5661 = vmatpush.msra.mxu0 %v4155
    %5662 = vmatpush.msra.mxu0 %v4151
    %5663 = vmatmul.f32.gmra.mxu0 %v1115
    %v5664 = vpop.f32.mrf.mxu0
    %v5665 = vadd.f32 %v4922, %v5664
    %5666 = vdwg.mxu0
    %5667 = vmatpush.msra.mxu0 %v4275
    %5668 = vmatpush.msra.mxu0 %v4271
    %5669 = vmatpush.msra.mxu0 %v4267
    %5670 = vmatpush.msra.mxu0 %v4263
    %5671 = vmatpush.msra.mxu0 %v4259
    %5672 = vmatpush.msra.mxu0 %v4255
    %5673 = vmatpush.msra.mxu0 %v4251
    %5674 = vmatpush.msra.mxu0 %v4247
    %5675 = vmatpush.msra.mxu0 %v4243
    %5676 = vmatpush.msra.mxu0 %v4239
    %5677 = vmatpush.msra.mxu0 %v4235
    %5678 = vmatpush.msra.mxu0 %v4231
    %5679 = vmatpush.msra.mxu0 %v4227
    %5680 = vmatpush.msra.mxu0 %v4223
    %5681 = vmatpush.msra.mxu0 %v4219
    %5682 = vmatpush.msra.mxu0 %v4215
    %5683 = vmatmul.f32.gmra.mxu0 %v1116
    %v5684 = vpop.f32.mrf.mxu0
    %v5685 = vadd.f32 %v5665, %v5684
    %5686 = vdwg.mxu0
    %5687 = vmatpush.msra.mxu0 %v4339
    %5688 = vmatpush.msra.mxu0 %v4335
    %5689 = vmatpush.msra.mxu0 %v4331
    %5690 = vmatpush.msra.mxu0 %v4327
    %5691 = vmatpush.msra.mxu0 %v4323
    %5692 = vmatpush.msra.mxu0 %v4319
    %5693 = vmatpush.msra.mxu0 %v4315
    %5694 = vmatpush.msra.mxu0 %v4311
    %5695 = vmatpush.msra.mxu0 %v4307
    %5696 = vmatpush.msra.mxu0 %v4303
    %5697 = vmatpush.msra.mxu0 %v4299
    %5698 = vmatpush.msra.mxu0 %v4295
    %5699 = vmatpush.msra.mxu0 %v4291
    %5700 = vmatpush.msra.mxu0 %v4287
    %5701 = vmatpush.msra.mxu0 %v4283
    %5702 = vmatpush.msra.mxu0 %v4279
    %5703 = vmatmul.f32.gmra.mxu0 %v1117
    %v5704 = vpop.f32.mrf.mxu0
    %v5705 = vadd.f32 %v5685, %v5704
    %5706 = vdwg.mxu0
    %5707 = vmatpush.msra.mxu0 %v4403
    %5708 = vmatpush.msra.mxu0 %v4399
    %5709 = vmatpush.msra.mxu0 %v4395
    %5710 = vmatpush.msra.mxu0 %v4391
    %5711 = vmatpush.msra.mxu0 %v4387
    %5712 = vmatpush.msra.mxu0 %v4383
    %5713 = vmatpush.msra.mxu0 %v4379
    %5714 = vmatpush.msra.mxu0 %v4375
    %5715 = vmatpush.msra.mxu0 %v4371
    %5716 = vmatpush.msra.mxu0 %v4367
    %5717 = vmatpush.msra.mxu0 %v4363
    %5718 = vmatpush.msra.mxu0 %v4359
    %5719 = vmatpush.msra.mxu0 %v4355
    %5720 = vmatpush.msra.mxu0 %v4351
    %5721 = vmatpush.msra.mxu0 %v4347
    %5722 = vmatpush.msra.mxu0 %v4343
    %5723 = vmatmul.f32.gmra.mxu0 %v1118
    %v5724 = vpop.f32.mrf.mxu0
    %v5725 = vadd.f32 %v5705, %v5724
    %5726 = vdwg.mxu0
    %5727 = vmatpush.msra.mxu0 %v4467
    %5728 = vmatpush.msra.mxu0 %v4463
    %5729 = vmatpush.msra.mxu0 %v4459
    %5730 = vmatpush.msra.mxu0 %v4455
    %5731 = vmatpush.msra.mxu0 %v4451
    %5732 = vmatpush.msra.mxu0 %v4447
    %5733 = vmatpush.msra.mxu0 %v4443
    %5734 = vmatpush.msra.mxu0 %v4439
    %5735 = vmatpush.msra.mxu0 %v4435
    %5736 = vmatpush.msra.mxu0 %v4431
    %5737 = vmatpush.msra.mxu0 %v4427
    %5738 = vmatpush.msra.mxu0 %v4423
    %5739 = vmatpush.msra.mxu0 %v4419
    %5740 = vmatpush.msra.mxu0 %v4415
    %5741 = vmatpush.msra.mxu0 %v4411
    %5742 = vmatpush.msra.mxu0 %v4407
    %5743 = vmatmul.f32.gmra.mxu0 %v1119
    %v5744 = vpop.f32.mrf.mxu0
    %v5745 = vadd.f32 %v5725, %v5744
    %5746 = vdwg.mxu0
    %5747 = vmatpush.msra.mxu0 %v4531
    %5748 = vmatpush.msra.mxu0 %v4527
    %5749 = vmatpush.msra.mxu0 %v4523
    %5750 = vmatpush.msra.mxu0 %v4519
    %5751 = vmatpush.msra.mxu0 %v4515
    %5752 = vmatpush.msra.mxu0 %v4511
    %5753 = vmatpush.msra.mxu0 %v4507
    %5754 = vmatpush.msra.mxu0 %v4503
    %5755 = vmatpush.msra.mxu0 %v4499
    %5756 = vmatpush.msra.mxu0 %v4495
    %5757 = vmatpush.msra.mxu0 %v4491
    %5758 = vmatpush.msra.mxu0 %v4487
    %5759 = vmatpush.msra.mxu0 %v4483
    %5760 = vmatpush.msra.mxu0 %v4479
    %5761 = vmatpush.msra.mxu0 %v4475
    %5762 = vmatpush.msra.mxu0 %v4471
    %5763 = vmatmul.f32.gmra.mxu0 %v1120
    %v5764 = vpop.f32.mrf.mxu0
    %v5765 = vadd.f32 %v5745, %v5764
    %5766 = vdwg.mxu0
    %5767 = vmatpush.msra.mxu0 %v4595
    %5768 = vmatpush.msra.mxu0 %v4591
    %5769 = vmatpush.msra.mxu0 %v4587
    %5770 = vmatpush.msra.mxu0 %v4583
    %5771 = vmatpush.msra.mxu0 %v4579
    %5772 = vmatpush.msra.mxu0 %v4575
    %5773 = vmatpush.msra.mxu0 %v4571
    %5774 = vmatpush.msra.mxu0 %v4567
    %5775 = vmatpush.msra.mxu0 %v4563
    %5776 = vmatpush.msra.mxu0 %v4559
    %5777 = vmatpush.msra.mxu0 %v4555
    %5778 = vmatpush.msra.mxu0 %v4551
    %5779 = vmatpush.msra.mxu0 %v4547
    %5780 = vmatpush.msra.mxu0 %v4543
    %5781 = vmatpush.msra.mxu0 %v4539
    %5782 = vmatpush.msra.mxu0 %v4535
    %5783 = vmatmul.f32.gmra.mxu0 %v1121
    %v5784 = vpop.f32.mrf.mxu0
    %v5785 = vadd.f32 %v5765, %v5784
    %5786 = vdwg.mxu0
    %5787 = vmatpush.msra.mxu0 %v4659
    %5788 = vmatpush.msra.mxu0 %v4655
    %5789 = vmatpush.msra.mxu0 %v4651
    %5790 = vmatpush.msra.mxu0 %v4647
    %5791 = vmatpush.msra.mxu0 %v4643
    %5792 = vmatpush.msra.mxu0 %v4639
    %5793 = vmatpush.msra.mxu0 %v4635
    %5794 = vmatpush.msra.mxu0 %v4631
    %5795 = vmatpush.msra.mxu0 %v4627
    %5796 = vmatpush.msra.mxu0 %v4623
    %5797 = vmatpush.msra.mxu0 %v4619
    %5798 = vmatpush.msra.mxu0 %v4615
    %5799 = vmatpush.msra.mxu0 %v4611
    %5800 = vmatpush.msra.mxu0 %v4607
    %5801 = vmatpush.msra.mxu0 %v4603
    %5802 = vmatpush.msra.mxu0 %v4599
    %5803 = vmatmul.f32.gmra.mxu0 %v1122
    %v5804 = vpop.f32.mrf.mxu0
    %v5805 = vadd.f32 %v5785, %v5804
    %5806 = vdwg.mxu0
    %5807 = vmatpush.msra.mxu0 %v4723
    %5808 = vmatpush.msra.mxu0 %v4719
    %5809 = vmatpush.msra.mxu0 %v4715
    %5810 = vmatpush.msra.mxu0 %v4711
    %5811 = vmatpush.msra.mxu0 %v4707
    %5812 = vmatpush.msra.mxu0 %v4703
    %5813 = vmatpush.msra.mxu0 %v4699
    %5814 = vmatpush.msra.mxu0 %v4695
    %5815 = vmatpush.msra.mxu0 %v4691
    %5816 = vmatpush.msra.mxu0 %v4687
    %5817 = vmatpush.msra.mxu0 %v4683
    %5818 = vmatpush.msra.mxu0 %v4679
    %5819 = vmatpush.msra.mxu0 %v4675
    %5820 = vmatpush.msra.mxu0 %v4671
    %5821 = vmatpush.msra.mxu0 %v4667
    %5822 = vmatpush.msra.mxu0 %v4663
    %5823 = vmatmul.f32.gmra.mxu0 %v1123
    %v5824 = vpop.f32.mrf.mxu0
    %v5825 = vadd.f32 %v5805, %v5824
    %5826 = vdwg.mxu0
    %5827 = vmatpush.msra.mxu0 %v4787
    %5828 = vmatpush.msra.mxu0 %v4783
    %5829 = vmatpush.msra.mxu0 %v4779
    %5830 = vmatpush.msra.mxu0 %v4775
    %5831 = vmatpush.msra.mxu0 %v4771
    %5832 = vmatpush.msra.mxu0 %v4767
    %5833 = vmatpush.msra.mxu0 %v4763
    %5834 = vmatpush.msra.mxu0 %v4759
    %5835 = vmatpush.msra.mxu0 %v4755
    %5836 = vmatpush.msra.mxu0 %v4751
    %5837 = vmatpush.msra.mxu0 %v4747
    %5838 = vmatpush.msra.mxu0 %v4743
    %5839 = vmatpush.msra.mxu0 %v4739
    %5840 = vmatpush.msra.mxu0 %v4735
    %5841 = vmatpush.msra.mxu0 %v4731
    %5842 = vmatpush.msra.mxu0 %v4727
    %5843 = vmatmul.f32.gmra.mxu0 %v1124
    %v5844 = vpop.f32.mrf.mxu0
    %v5845 = vadd.f32 %v5825, %v5844
    %5846 = vdwg.mxu0
    %5847 = vmatpush.msra.mxu0 %v4851
    %5848 = vmatpush.msra.mxu0 %v4847
    %5849 = vmatpush.msra.mxu0 %v4843
    %5850 = vmatpush.msra.mxu0 %v4839
    %5851 = vmatpush.msra.mxu0 %v4835
    %5852 = vmatpush.msra.mxu0 %v4831
    %5853 = vmatpush.msra.mxu0 %v4827
    %5854 = vmatpush.msra.mxu0 %v4823
    %5855 = vmatpush.msra.mxu0 %v4819
    %5856 = vmatpush.msra.mxu0 %v4815
    %5857 = vmatpush.msra.mxu0 %v4811
    %5858 = vmatpush.msra.mxu0 %v4807
    %5859 = vmatpush.msra.mxu0 %v4803
    %5860 = vmatpush.msra.mxu0 %v4799
    %5861 = vmatpush.msra.mxu0 %v4795
    %5862 = vmatpush.msra.mxu0 %v4791
    %5863 = vmatmul.f32.gmra.mxu0 %v1125
    %v5864 = vpop.f32.mrf.mxu0
    %v5865 = vadd.f32 %v5845, %v5864
    %5866 = vdwg.mxu0
    %5867 = vmatpush.msra.mxu0 %v4915
    %5868 = vmatpush.msra.mxu0 %v4911
    %5869 = vmatpush.msra.mxu0 %v4907
    %5870 = vmatpush.msra.mxu0 %v4903
    %5871 = vmatpush.msra.mxu0 %v4899
    %5872 = vmatpush.msra.mxu0 %v4895
    %5873 = vmatpush.msra.mxu0 %v4891
    %5874 = vmatpush.msra.mxu0 %v4887
    %5875 = vmatpush.msra.mxu0 %v4883
    %5876 = vmatpush.msra.mxu0 %v4879
    %5877 = vmatpush.msra.mxu0 %v4875
    %5878 = vmatpush.msra.mxu0 %v4871
    %5879 = vmatpush.msra.mxu0 %v4867
    %5880 = vmatpush.msra.mxu0 %v4863
    %5881 = vmatpush.msra.mxu0 %v4859
    %5882 = vmatpush.msra.mxu0 %v4855
    %5883 = vmatmul.f32.gmra.mxu0 %v1126
    %v5884 = vpop.f32.mrf.mxu0
    %v5885 = vadd.f32 %v5865, %v5884
    %5886 = vdwg.mxu0
    %v5887 = vmax.f32 %v5165, 0.0
    %v5888 = vmax.f32 %v5405, 0.0
    %v5889 = vmax.f32 %v5645, 0.0
    %v5890 = vmax.f32 %v5885, 0.0
    %s5891 = scalar_lea.vmem %s3, 960
    %v5892 = vld [vmem:[%s5891] sm:$0xff]
    %v5893 = vld [vmem:[%s5891 + $0x8] sm:$0xff]
    %v5894 = vld [vmem:[%s5891 + $0x10] sm:$0xff]
    %v5895 = vld [vmem:[%s5891 + $0x18] sm:$0xff]
    %v5896 = vld [vmem:[%s5891 + $0x20] sm:$0xff]
    %v5897 = vld [vmem:[%s5891 + $0x28] sm:$0xff]
    %v5898 = vld [vmem:[%s5891 + $0x30] sm:$0xff]
    %v5899 = vld [vmem:[%s5891 + $0x38] sm:$0xff]
    %v5900 = vld [vmem:[%s5891 + $0x40] sm:$0xff]
    %v5901 = vld [vmem:[%s5891 + $0x48] sm:$0xff]
    %v5902 = vld [vmem:[%s5891 + $0x50] sm:$0xff]
    %v5903 = vld [vmem:[%s5891 + $0x58] sm:$0xff]
    %v5904 = vld [vmem:[%s5891 + $0x60] sm:$0xff]
    %v5905 = vld [vmem:[%s5891 + $0x68] sm:$0xff]
    %v5906 = vld [vmem:[%s5891 + $0x70] sm:$0xff]
    %v5907 = vld [vmem:[%s5891 + $0x78] sm:$0xff]
    %v5908 = vld [vmem:[%s5891 + $0x80] sm:$0xff]
    %v5909 = vld [vmem:[%s5891 + $0x88] sm:$0xff]
    %v5910 = vld [vmem:[%s5891 + $0x90] sm:$0xff]
    %v5911 = vld [vmem:[%s5891 + $0x98] sm:$0xff]
    %v5912 = vld [vmem:[%s5891 + $0xa0] sm:$0xff]
    %v5913 = vld [vmem:[%s5891 + $0xa8] sm:$0xff]
    %v5914 = vld [vmem:[%s5891 + $0xb0] sm:$0xff]
    %v5915 = vld [vmem:[%s5891 + $0xb8] sm:$0xff]
    %v5916 = vld [vmem:[%s5891 + $0xc0] sm:$0xff]
    %v5917 = vld [vmem:[%s5891 + $0xc8] sm:$0xff]
    %v5918 = vld [vmem:[%s5891 + $0xd0] sm:$0xff]
    %v5919 = vld [vmem:[%s5891 + $0xd8] sm:$0xff]
    %v5920 = vld [vmem:[%s5891 + $0xe0] sm:$0xff]
    %v5921 = vld [vmem:[%s5891 + $0xe8] sm:$0xff]
    %v5922 = vld [vmem:[%s5891 + $0xf0] sm:$0xff]
    %v5923 = vld [vmem:[%s5891 + $0xf8] sm:$0xff]
    %v5924 = vld [vmem:[%s5891 + $0x100] sm:$0xff]
    %v5925 = vld [vmem:[%s5891 + $0x108] sm:$0xff]
    %v5926 = vld [vmem:[%s5891 + $0x110] sm:$0xff]
    %v5927 = vld [vmem:[%s5891 + $0x118] sm:$0xff]
    %v5928 = vld [vmem:[%s5891 + $0x120] sm:$0xff]
    %v5929 = vld [vmem:[%s5891 + $0x128] sm:$0xff]
    %v5930 = vld [vmem:[%s5891 + $0x130] sm:$0xff]
    %v5931 = vld [vmem:[%s5891 + $0x138] sm:$0xff]
    %v5932 = vld [vmem:[%s5891 + $0x140] sm:$0xff]
    %v5933 = vld [vmem:[%s5891 + $0x148] sm:$0xff]
    %v5934 = vld [vmem:[%s5891 + $0x150] sm:$0xff]
    %v5935 = vld [vmem:[%s5891 + $0x158] sm:$0xff]
    %v5936 = vld [vmem:[%s5891 + $0x160] sm:$0xff]
    %v5937 = vld [vmem:[%s5891 + $0x168] sm:$0xff]
    %v5938 = vld [vmem:[%s5891 + $0x170] sm:$0xff]
    %v5939 = vld [vmem:[%s5891 + $0x178] sm:$0xff]
    %v5940 = vld [vmem:[%s5891 + $0x180] sm:$0xff]
    %v5941 = vld [vmem:[%s5891 + $0x188] sm:$0xff]
    %v5942 = vld [vmem:[%s5891 + $0x190] sm:$0xff]
    %v5943 = vld [vmem:[%s5891 + $0x198] sm:$0xff]
    %v5944 = vld [vmem:[%s5891 + $0x1a0] sm:$0xff]
    %v5945 = vld [vmem:[%s5891 + $0x1a8] sm:$0xff]
    %v5946 = vld [vmem:[%s5891 + $0x1b0] sm:$0xff]
    %v5947 = vld [vmem:[%s5891 + $0x1b8] sm:$0xff]
    %v5948 = vld [vmem:[%s5891 + $0x1c0] sm:$0xff]
    %v5949 = vld [vmem:[%s5891 + $0x1c8] sm:$0xff]
    %v5950 = vld [vmem:[%s5891 + $0x1d0] sm:$0xff]
    %v5951 = vld [vmem:[%s5891 + $0x1d8] sm:$0xff]
    %s5952 = scalar_lea.vmem %s4, 2
    %v5953 = vld [vmem:[%s5952] sm:$0x1]
    %v5955 = vperm.slane %v5953, 0
    %v5958 = vsel %vm2167, %v5890, 0
    %5960 = vmatpush.msra.mxu0 %v5907
    %5961 = vmatpush.msra.mxu0 %v5906
    %5962 = vmatpush.msra.mxu0 %v5905
    %5963 = vmatpush.msra.mxu0 %v5904
    %5964 = vmatpush.msra.mxu0 %v5903
    %5965 = vmatpush.msra.mxu0 %v5902
    %5966 = vmatpush.msra.mxu0 %v5901
    %5967 = vmatpush.msra.mxu0 %v5900
    %5968 = vmatpush.msra.mxu0 %v5899
    %5969 = vmatpush.msra.mxu0 %v5898
    %5970 = vmatpush.msra.mxu0 %v5897
    %5971 = vmatpush.msra.mxu0 %v5896
    %5972 = vmatpush.msra.mxu0 %v5895
    %5973 = vmatpush.msra.mxu0 %v5894
    %5974 = vmatpush.msra.mxu0 %v5893
    %5975 = vmatpush.msra.mxu0 %v5892
    %5976 = vmatmul.f32.gmra.mxu0 %v5887
    %v5977 = vpop.f32.mrf.mxu0
    %v5978 = vadd.f32 %v5955, %v5977
    %5979 = vdwg.mxu0
    %5980 = vmatpush.msra.mxu0 %v5923
    %5981 = vmatpush.msra.mxu0 %v5922
    %5982 = vmatpush.msra.mxu0 %v5921
    %5983 = vmatpush.msra.mxu0 %v5920
    %5984 = vmatpush.msra.mxu0 %v5919
    %5985 = vmatpush.msra.mxu0 %v5918
    %5986 = vmatpush.msra.mxu0 %v5917
    %5987 = vmatpush.msra.mxu0 %v5916
    %5988 = vmatpush.msra.mxu0 %v5915
    %5989 = vmatpush.msra.mxu0 %v5914
    %5990 = vmatpush.msra.mxu0 %v5913
    %5991 = vmatpush.msra.mxu0 %v5912
    %5992 = vmatpush.msra.mxu0 %v5911
    %5993 = vmatpush.msra.mxu0 %v5910
    %5994 = vmatpush.msra.mxu0 %v5909
    %5995 = vmatpush.msra.mxu0 %v5908
    %5996 = vmatmul.f32.gmra.mxu0 %v5888
    %v5997 = vpop.f32.mrf.mxu0
    %v5998 = vadd.f32 %v5978, %v5997
    %5999 = vdwg.mxu0
    %6000 = vmatpush.msra.mxu0 %v5939
    %6001 = vmatpush.msra.mxu0 %v5938
    %6002 = vmatpush.msra.mxu0 %v5937
    %6003 = vmatpush.msra.mxu0 %v5936
    %6004 = vmatpush.msra.mxu0 %v5935
    %6005 = vmatpush.msra.mxu0 %v5934
    %6006 = vmatpush.msra.mxu0 %v5933
    %6007 = vmatpush.msra.mxu0 %v5932
    %6008 = vmatpush.msra.mxu0 %v5931
    %6009 = vmatpush.msra.mxu0 %v5930
    %6010 = vmatpush.msra.mxu0 %v5929
    %6011 = vmatpush.msra.mxu0 %v5928
    %6012 = vmatpush.msra.mxu0 %v5927
    %6013 = vmatpush.msra.mxu0 %v5926
    %6014 = vmatpush.msra.mxu0 %v5925
    %6015 = vmatpush.msra.mxu0 %v5924
    %6016 = vmatmul.f32.gmra.mxu0 %v5889
    %v6017 = vpop.f32.mrf.mxu0
    %v6018 = vadd.f32 %v5998, %v6017
    %6019 = vdwg.mxu0
    %6020 = vmatpush.msra.mxu0 0.0
    %6021 = vmatpush.msra.mxu0 0.0
    %6022 = vmatpush.msra.mxu0 0.0
    %6023 = vmatpush.msra.mxu0 0.0
    %6024 = vmatpush.msra.mxu0 %v5951
    %6025 = vmatpush.msra.mxu0 %v5950
    %6026 = vmatpush.msra.mxu0 %v5949
    %6027 = vmatpush.msra.mxu0 %v5948
    %6028 = vmatpush.msra.mxu0 %v5947
    %6029 = vmatpush.msra.mxu0 %v5946
    %6030 = vmatpush.msra.mxu0 %v5945
    %6031 = vmatpush.msra.mxu0 %v5944
    %6032 = vmatpush.msra.mxu0 %v5943
    %6033 = vmatpush.msra.mxu0 %v5942
    %6034 = vmatpush.msra.mxu0 %v5941
    %6035 = vmatpush.msra.mxu0 %v5940
    %6036 = vmatmul.f32.gmra.mxu0 %v5958
    %v6037 = vpop.f32.mrf.mxu0
    %v6038 = vadd.f32 %v6018, %v6037
    %6039 = vdwg.mxu0
    %6040 = vst.msk [vmem:[#allocation6] sm:$0x3] %vm2251, %v6038
    // Predicated region
    $region22: #{forward.3} parent=1 // pred_check
      _
    $region23: #{forward.3} parent=1 // pred_check_branch
      %6042 = sbr.rel (0) target = $region25
    $region24: #{forward.3} parent=1 // pred_region
      %6044 = vsyncadd [#allocation3], 0
      %s6046 = sshll.u32 [#allocation2], 4
      %s6047 = int_to_ptr.vmem [resolvable:$true] %s6046
      %s6048 = sshll.u32 %s5, 4
      %s6049 = int_to_ptr.hbm [resolvable:$true] %s6048
      %6051 = dma.vmem_to_hbm [thread:$0]  %s6047, 32, %s6049, [#allocation3]
    $region25: #{forward.3} parent=1 // pred_fallthru
      _
    // Predicated region
    $region26: #{forward.3} parent=1 // pred_check
      _
    $region27: #{forward.3} parent=1 // pred_check_branch
      %6053 = sbr.rel (0) target = $region29
    $region28: #{forward.3} parent=1 // pred_region
      %6055 = vsyncadd [#allocation5], 0
      %s6057 = sshll.u32 [#allocation4], 4
      %s6058 = int_to_ptr.vmem [resolvable:$true] %s6057
      %s6059 = sshll.u32 %s6, 4
      %s6060 = int_to_ptr.hbm [resolvable:$true] %s6059
      %6062 = dma.vmem_to_hbm [thread:$0]  %s6058, 32, %s6060, [#allocation5]
    $region29: #{forward.3} parent=1 // pred_fallthru
      _
    // Predicated region
    $region30: #{forward.3} parent=1 // pred_check
      _
    $region31: #{forward.3} parent=1 // pred_check_branch
      %6064 = sbr.rel (0) target = $region33
    $region32: #{forward.3} parent=1 // pred_region
      %6066 = vsyncadd [#allocation5], 0
      %s6068 = sshll.u32 [#allocation6], 4
      %s6069 = int_to_ptr.vmem [resolvable:$true] %s6068
      %s6070 = sshll.u32 %s7, 4
      %s6071 = int_to_ptr.hbm [resolvable:$true] %s6070
      %6073 = dma.vmem_to_hbm [thread:$0]  %s6069, 32, %s6071, [#allocation5]
    $region33: #{forward.3} parent=1 // pred_fallthru
      _
    // Predicated region
    $region34: #{forward.3} parent=1 // pred_check
      _
    $region35: #{forward.3} parent=1 // pred_check_branch
      %6075 = sbr.rel (0) target = $region37
    $region36: #{forward.3} parent=1 // pred_region
      %6077 = dma.done [#allocation3], 32
    $region37: #{forward.3} parent=1 // pred_fallthru
      _
    // Predicated region
    $region38: #{forward.3} parent=1 // pred_check
      _
    $region39: #{forward.3} parent=1 // pred_check_branch
      %6079 = sbr.rel (0) target = $region41
    $region40: #{forward.3} parent=1 // pred_region
      %6081 = dma.done [#allocation5], 32
    $region41: #{forward.3} parent=1 // pred_fallthru
      _
    // Predicated region
    $region42: #{forward.3} parent=1 // pred_check
      _
    $region43: #{forward.3} parent=1 // pred_check_branch
      %6083 = sbr.rel (0) target = $region45
    $region44: #{forward.3} parent=1 // pred_region
      %6085 = dma.done [#allocation5], 32
    $region45: #{forward.3} parent=1 // pred_fallthru
      _
    %6086 = vsyncpa [#allocation3], 1
    %6087 = vsyncpa [#allocation5], 1

</llo_original>
